<compile_context>
chip_gen: v5e
topology: v5e:2x2
jax: 0.10.0
libtpu: 0.0.40
codegen_flags: <defaults>
</compile_context>

<pallas_src>
import jax
import jax.numpy as jnp
from jax import lax
from jax.experimental import pallas as pl
from jax.experimental.pallas import tpu as pltpu

IMG_BLK = 8  # images per grid step in the conv kernel


# --------------------------------------------------------------------------
# Kernel 1: conv1 -> pool1 -> relu -> conv2 -> pool2 -> relu  (IMG_BLK images)
# --------------------------------------------------------------------------
def _conv_pool_kernel(x_ref, t1_ref, b1_ref, t2_ref, b2_ref, sa_ref, sb_ref, o_ref):
    blk = x_ref.shape[0]

    # ---- conv1 as ONE wide-K matmul: (blk*24, 140) @ (140, 768), K = 5*28 ----
    xc = x_ref[...].reshape(blk * 24, 140)
    y1 = jnp.dot(xc, t1_ref[...], preferred_element_type=jnp.float32)
    y1 = y1.reshape(blk, 24, 768)        # rows 0..11: even conv rows, 12..23: odd

    # ---- pool1: H pair-max via parity halves, W pair-max via 32-lane shift ----
    mh = jnp.maximum(y1[:, 0:12, :], y1[:, 12:24, :])          # (blk, 12, 768)
    mw = jnp.maximum(mh[:, :, 0:736], mh[:, :, 32:768])        # (blk, 12, 736)
    # odd-w lanes of mw are junk; they are zeroed by the conv2 Toeplitz weights
    u = jnp.maximum(mw + b1_ref[...].reshape(1, 1, 736), 0.0).astype(jnp.bfloat16)

    # ---- conv2: 5 kh-banded matmuls, each (blk*8, 736) @ (736, 512) ----
    acc2 = jnp.dot(u[:, 0:8, :].reshape(blk * 8, 736), t2_ref[0],
                   preferred_element_type=jnp.float32)
    for kh in range(1, 5):
        acc2 = acc2 + jnp.dot(u[:, kh:kh + 8, :].reshape(blk * 8, 736), t2_ref[kh],
                              preferred_element_type=jnp.float32)
    y2 = (acc2 + b2_ref[...]).astype(jnp.bfloat16)             # (blk*8, 512)

    # ---- pool2: H pair-max via hoisted 0/1 row-selector matmuls, W via shift ----
    ph = jnp.maximum(
        jnp.dot(sa_ref[...], y2, preferred_element_type=jnp.float32),
        jnp.dot(sb_ref[...], y2, preferred_element_type=jnp.float32))   # (blk*4, 512)
    p2 = jnp.maximum(jnp.maximum(ph[:, 0:448], ph[:, 64:512]), 0.0)     # (blk*4, 448)

    # ---- even-w selection -> per-image NHWC (4, 4, 64), lane-dense 256 ----
    sel = jnp.concatenate([p2[:, 0:64], p2[:, 128:192],
                           p2[:, 256:320], p2[:, 384:448]], axis=1)     # (blk*4, 256)
    o_ref[...] = sel.reshape(blk, 4, 256).astype(o_ref.dtype)


def conv_pool(xcol, t1, b1t, t2, b2t, sa, sb, *, blk):
    n_pad = xcol.shape[0]
    return pl.pallas_call(
        _conv_pool_kernel,
        out_shape=jax.ShapeDtypeStruct((n_pad, 4, 256), jnp.bfloat16),
        grid=(n_pad // blk,),
        in_specs=[
            pl.BlockSpec((blk, 24, 140), lambda i: (i, 0, 0)),
            pl.BlockSpec((140, 768), lambda i: (0, 0)),        # grid-invariant
            pl.BlockSpec((1, 736), lambda i: (0, 0)),
            pl.BlockSpec((5, 736, 512), lambda i: (0, 0, 0)),  # grid-invariant
            pl.BlockSpec((1, 512), lambda i: (0, 0)),
            pl.BlockSpec((blk * 4, blk * 8), lambda i: (0, 0)),
            pl.BlockSpec((blk * 4, blk * 8), lambda i: (0, 0)),
        ],
        out_specs=pl.BlockSpec((blk, 4, 256), lambda i: (i, 0, 0)),
        compiler_params=pltpu.CompilerParams(
            dimension_semantics=("parallel",),
            vmem_limit_bytes=32 * 1024 * 1024),
    )(xcol, t1, b1t, t2, b2t, sa, sb)


# --------------------------------------------------------------------------
# Kernel 2: fc1 -> relu -> BatchNorm1d(batch stats) -> fc3 -> relu -> fc2
# --------------------------------------------------------------------------
def _mlp_kernel(x_ref, w1_ref, b1_ref, g_ref, bt_ref, w3_ref, b3_ref,
                w2_ref, b2_ref, o_ref):
    h1 = jnp.dot(x_ref[...], w1_ref[...],
                 preferred_element_type=jnp.float32) + b1_ref[...]
    h1 = jnp.maximum(h1, 0.0)
    # BatchNorm1d(128), training mode: biased batch statistics (f32).
    mu = jnp.mean(h1, axis=0, keepdims=True)
    var = jnp.mean(jnp.square(h1 - mu), axis=0, keepdims=True)
    hn = (h1 - mu) * lax.rsqrt(var + 1e-5) * g_ref[...] + bt_ref[...]
    h3 = jnp.dot(hn.astype(jnp.bfloat16), w3_ref[...],
                 preferred_element_type=jnp.float32) + b3_ref[...]
    h3 = jnp.maximum(h3, 0.0)
    o_ref[...] = (jnp.dot(h3.astype(jnp.bfloat16), w2_ref[...],
                          preferred_element_type=jnp.float32) + b2_ref[...]
                  ).astype(o_ref.dtype)


def mlp_head(x, w1, b1, gamma, beta, w3, b3, w2, b2):
    bsz = x.shape[0]
    args = (x, w1, b1.reshape(1, -1), gamma.reshape(1, -1), beta.reshape(1, -1),
            w3, b3.reshape(1, -1), w2, b2.reshape(1, -1))
    return pl.pallas_call(
        _mlp_kernel,
        out_shape=jax.ShapeDtypeStruct((bsz, 128), jnp.float32),   # lane-dense (pad of 10)
        grid=(1,),
        in_specs=[pl.BlockSpec(a.shape, lambda i: (0, 0)) for a in args],
        out_specs=pl.BlockSpec((bsz, 128), lambda i: (0, 0)),
        compiler_params=pltpu.CompilerParams(
            dimension_semantics=("arbitrary",),
            vmem_limit_bytes=32 * 1024 * 1024),
    )(*args)


# --------------------------------------------------------------------------
# Glue: Toeplitz weight expansion, selectors, im2col, init, end-to-end forward
# --------------------------------------------------------------------------
def _toeplitz_conv1(w1):
    """conv1 (5,5,32) -> (140, 768) bf16 so conv1 is a single K=140 matmul.
    Row = kh*28 + i (input col), col = w*32 + c (output col, channel)."""
    ind = (jnp.arange(28)[:, None, None]
           == jnp.arange(24)[None, None, :] + jnp.arange(5)[None, :, None])
    t = jnp.einsum("ikw,hkc->hiwc", ind.astype(jnp.float32), w1)   # (5,28,24,32)
    return t.reshape(140, 768).astype(jnp.bfloat16)


def _toeplitz_conv2(w2):
    """conv2 (5,5,32,64) -> banded (5, 23*32, 8*64) bf16; rows at odd pre-pool W
    positions are zero, folding pool1's even-W selection into conv2."""
    ind = (jnp.arange(23)[:, None, None]
           == 2 * (jnp.arange(8)[None, None, :] + jnp.arange(5)[None, :, None]))
    t = jnp.einsum("iko,hkcd->hicod", ind.astype(jnp.float32), w2)  # (5,23,32,8,64)
    return t.reshape(5, 736, 512).astype(jnp.bfloat16)


def _pool2_row_selectors(blk):
    """0/1 matrices picking even / odd rows of the (blk*8, 512) conv2 output."""
    r = jnp.arange(blk * 4)[:, None]
    c = jnp.arange(blk * 8)[None, :]
    sa = (c == 2 * r).astype(jnp.bfloat16)
    sb = (c == 2 * r + 1).astype(jnp.bfloat16)
    return sa, sb


def _im2col_conv1(x2):
    """(N, 28, 28) -> (N, 24, 140): row j<12 holds input rows 2j..2j+4 (even conv
    rows), row 12+j holds rows 2j+1..2j+5 (odd conv rows), flattened over kh."""
    oh = jnp.concatenate([jnp.arange(0, 24, 2), jnp.arange(1, 24, 2)])
    rows = oh[:, None] + jnp.arange(5)[None, :]                     # (24, 5)
    return x2[:, rows, :].reshape(x2.shape[0], 24, 140)


def init_params(key):
    ks = jax.random.split(key, 10)

    def wgt(k, shape, fan_in):
        return jax.random.normal(k, shape, jnp.float32) / jnp.sqrt(fan_in)

    def bias(k, shape):
        return 0.01 * jax.random.normal(k, shape, jnp.float32)

    return {
        "conv1_w": wgt(ks[0], (5, 5, 32), 25.0),       # [kh, kw, c_out]  (c_in = 1)
        "conv1_b": bias(ks[1], (32,)),
        "conv2_w": wgt(ks[2], (5, 5, 32, 64), 800.0),  # [kh, kw, c_in, c_out]
        "conv2_b": bias(ks[3], (64,)),
        "fc1_w": wgt(ks[4], (64, 128), 64.0),
        "fc1_b": bias(ks[5], (128,)),
        "fc3_w": wgt(ks[6], (128, 256), 128.0),
        "fc3_b": bias(ks[7], (256,)),
        "fc2_w": wgt(ks[8], (256, 10), 256.0),
        "fc2_b": bias(ks[9], (10,)),
        "bn_gamma": jnp.ones((128,), jnp.float32),
        "bn_beta": jnp.zeros((128,), jnp.float32),
    }


def net_forward(x_nchw, p):
    n = x_nchw.shape[0]
    x2 = x_nchw[:, 0, :, :].astype(jnp.bfloat16)                 # (N, 28, 28) bf16

    blk = max(1, min(IMG_BLK, n))
    n_pad = pl.cdiv(n, blk) * blk

    xcol = _im2col_conv1(x2)                                     # (N, 24, 140)
    if n_pad != n:
        xcol = jnp.pad(xcol, ((0, n_pad - n), (0, 0), (0, 0)))

    t1 = _toeplitz_conv1(p["conv1_w"])
    t2 = _toeplitz_conv2(p["conv2_w"])
    b1t = jnp.tile(p["conv1_b"], 23)[None, :]                    # (1, 736)
    b2t = jnp.tile(p["conv2_b"], 8)[None, :]                     # (1, 512)
    sa, sb = _pool2_row_selectors(blk)

    z = conv_pool(xcol, t1, b1t, t2, b2t, sa, sb, blk=blk)       # (n_pad, 4, 256) bf16
    z = z[:n].reshape(n, 4, 4, 64)                               # NHWC
    flat = jnp.transpose(z, (0, 3, 1, 2)).reshape(n * 16, 64)    # == PyTorch .view(-1, 64)
    flat = jnp.pad(flat, ((0, 0), (0, 64)))                      # lane-dense K=128

    w1p = jnp.pad(p["fc1_w"], ((0, 64), (0, 0))).astype(jnp.bfloat16)
    w2p = jnp.pad(p["fc2_w"], ((0, 0), (0, 118))).astype(jnp.bfloat16)  # lane-dense fc2
    b2p = jnp.pad(p["fc2_b"], (0, 118))
    out = mlp_head(flat,
                   w1p, p["fc1_b"],
                   p["bn_gamma"], p["bn_beta"],
                   p["fc3_w"].astype(jnp.bfloat16), p["fc3_b"],
                   w2p, b2p)                                     # (N*16, 128)
    return out[:, :10]


# --------------------------------------------------------------------------
# Pure-JAX reference (correctness check only)
# --------------------------------------------------------------------------
def reference_forward(x, p):
    hp = lax.Precision.HIGHEST

    def pool_relu(y):
        y = lax.reduce_window(y, -jnp.inf, lax.max, (1, 1, 2, 2), (1, 1, 2, 2), "VALID")
        return jnp.maximum(y, 0.0)

    w1 = jnp.transpose(p["conv1_w"], (2, 0, 1))[:, None, :, :]          # (32,1,5,5) OIHW
    y = lax.conv_general_dilated(x, w1, (1, 1), "VALID",
                                 dimension_numbers=("NCHW", "OIHW", "NCHW"),
                                 precision=hp) + p["conv1_b"][None, :, None, None]
    y = pool_relu(y)
    w2 = jnp.transpose(p["conv2_w"], (3, 2, 0, 1))                      # (64,32,5,5) OIHW
    y = lax.conv_general_dilated(y, w2, (1, 1), "VALID",
                                 dimension_numbers=("NCHW", "OIHW", "NCHW"),
                                 precision=hp) + p["conv2_b"][None, :, None, None]
    y = pool_relu(y)
    h = y.reshape(-1, 64)
    h = jnp.maximum(jnp.dot(h, p["fc1_w"], precision=hp) + p["fc1_b"], 0.0)
    mu = h.mean(0, keepdims=True)
    var = ((h - mu) ** 2).mean(0, keepdims=True)
    h = (h - mu) / jnp.sqrt(var + 1e-5) * p["bn_gamma"] + p["bn_beta"]
    h = jnp.maximum(jnp.dot(h, p["fc3_w"], precision=hp) + p["fc3_b"], 0.0)
    return jnp.dot(h, p["fc2_w"], precision=hp) + p["fc2_b"]


if __name__ == "__main__":
    key = jax.random.PRNGKey(0)
    kx, kp = jax.random.split(key)
    x = jax.random.normal(kx, (2, 1, 28, 28), jnp.float32)   # batch=2, MNIST-size
    params = init_params(kp)

    fwd = jax.jit(net_forward)
    out = jax.block_until_ready(fwd(x, params))
    assert out.shape == (32, 10), out.shape

    ref = reference_forward(x, params)
    max_err = float(jnp.max(jnp.abs(out - ref)))
    # bf16 MXU everywhere (with f32 accumulation) -> loose-ish tolerance; any
    # structural/layout bug would produce O(1) errors and still fail here.
    if not jnp.allclose(out, ref, atol=1e-1, rtol=1e-1):
        raise AssertionError(f"Pallas output mismatch vs reference, max_err={max_err}")

    print("KERNEL_OK")
</pallas_src>

<mosaic_0001>
module attributes {stable_mosaic.version = 11 : i64} {
  func.func @_conv_pool_kernel(%arg0: i32, %arg1: memref<2x24x140xbf16, #tpu.memory_space<vmem>>, %arg2: memref<140x768xbf16, #tpu.memory_space<vmem>>, %arg3: memref<1x736xf32, #tpu.memory_space<vmem>>, %arg4: memref<5x736x512xbf16, #tpu.memory_space<vmem>>, %arg5: memref<1x512xf32, #tpu.memory_space<vmem>>, %arg6: memref<8x16xbf16, #tpu.memory_space<vmem>>, %arg7: memref<8x16xbf16, #tpu.memory_space<vmem>>, %arg8: memref<2x4x256xbf16, #tpu.memory_space<vmem>>) attributes {dimension_semantics = [#tpu.dimension_semantics<parallel>], iteration_bounds = array<i64: 1>, scalar_prefetch = 0 : i64, scratch_operands = 0 : i64, tpu.core_type = #tpu.core_type<tc>, window_params = [{transform_indices = @transform_0, window_bounds = array<i64: 2, 24, 140>}, {pipeline_mode = #tpu.pipeline_mode<synchronous>, transform_indices = @transform_1, window_bounds = array<i64: 140, 768>}, {pipeline_mode = #tpu.pipeline_mode<synchronous>, transform_indices = @transform_2, window_bounds = array<i64: 1, 736>}, {pipeline_mode = #tpu.pipeline_mode<synchronous>, transform_indices = @transform_3, window_bounds = array<i64: 5, 736, 512>}, {pipeline_mode = #tpu.pipeline_mode<synchronous>, transform_indices = @transform_4, window_bounds = array<i64: 1, 512>}, {pipeline_mode = #tpu.pipeline_mode<synchronous>, transform_indices = @transform_5, window_bounds = array<i64: 8, 16>}, {pipeline_mode = #tpu.pipeline_mode<synchronous>, transform_indices = @transform_6, window_bounds = array<i64: 8, 16>}, {transform_indices = @transform_7, window_bounds = array<i64: 2, 4, 256>}]} {
    %c0 = arith.constant 0 : index
    %c0_0 = arith.constant 0 : index
    %c0_1 = arith.constant 0 : index
    %0 = vector.load %arg1[%c0, %c0_0, %c0_1] : memref<2x24x140xbf16, #tpu.memory_space<vmem>>, vector<2x24x140xbf16>
    %1 = vector.shape_cast %0 : vector<2x24x140xbf16> to vector<48x140xbf16>
    %c0_2 = arith.constant 0 : index
    %c0_3 = arith.constant 0 : index
    %2 = vector.load %arg2[%c0_2, %c0_3] : memref<140x768xbf16, #tpu.memory_space<vmem>>, vector<140x768xbf16>
    %cst = arith.constant dense<0.000000e+00> : vector<48x768xf32>
    %3 = tpu.matmul %1, %2, %cst {dimension_numbers = #tpu.dot_dimension_numbers<[1], [0], [0], [1], [0, 0, 1, 1], [], []>} : vector<48x140xbf16>, vector<140x768xbf16>, vector<48x768xf32> -> vector<48x768xf32>
    %4 = vector.shape_cast %3 : vector<48x768xf32> to vector<2x24x768xf32>
    %5 = vector.extract_strided_slice %4 {offsets = [0, 0, 0], sizes = [2, 12, 768], strides = [1, 1, 1]} : vector<2x24x768xf32> to vector<2x12x768xf32>
    %6 = vector.extract_strided_slice %4 {offsets = [0, 12, 0], sizes = [2, 12, 768], strides = [1, 1, 1]} : vector<2x24x768xf32> to vector<2x12x768xf32>
    %7 = arith.maximumf %5, %6 : vector<2x12x768xf32>
    %8 = vector.extract_strided_slice %7 {offsets = [0, 0, 0], sizes = [2, 12, 736], strides = [1, 1, 1]} : vector<2x12x768xf32> to vector<2x12x736xf32>
    %9 = vector.extract_strided_slice %7 {offsets = [0, 0, 32], sizes = [2, 12, 736], strides = [1, 1, 1]} : vector<2x12x768xf32> to vector<2x12x736xf32>
    %10 = arith.maximumf %8, %9 : vector<2x12x736xf32>
    %c0_4 = arith.constant 0 : index
    %c0_5 = arith.constant 0 : index
    %11 = vector.load %arg3[%c0_4, %c0_5] : memref<1x736xf32, #tpu.memory_space<vmem>>, vector<1x736xf32>
    %12 = vector.shape_cast %11 : vector<1x736xf32> to vector<1x1x736xf32>
    %13 = vector.broadcast %12 : vector<1x1x736xf32> to vector<2x12x736xf32>
    %14 = arith.addf %10, %13 : vector<2x12x736xf32>
    %cst_6 = arith.constant 0.000000e+00 : f32
    %15 = vector.broadcast %cst_6 : f32 to vector<2x12x736xf32>
    %16 = arith.maximumf %14, %15 : vector<2x12x736xf32>
    %17 = arith.truncf %16 : vector<2x12x736xf32> to vector<2x12x736xbf16>
    %18 = vector.extract_strided_slice %17 {offsets = [0, 0, 0], sizes = [2, 8, 736], strides = [1, 1, 1]} : vector<2x12x736xbf16> to vector<2x8x736xbf16>
    %19 = vector.shape_cast %18 : vector<2x8x736xbf16> to vector<16x736xbf16>
    %c0_7 = arith.constant 0 : index
    %c0_8 = arith.constant 0 : index
    %c0_9 = arith.constant 0 : index
    %20 = vector.load %arg4[%c0_7, %c0_8, %c0_9] : memref<5x736x512xbf16, #tpu.memory_space<vmem>>, vector<1x736x512xbf16>
    %21 = vector.shape_cast %20 : vector<1x736x512xbf16> to vector<736x512xbf16>
    %cst_10 = arith.constant dense<0.000000e+00> : vector<16x512xf32>
    %22 = tpu.matmul %19, %21, %cst_10 {dimension_numbers = #tpu.dot_dimension_numbers<[1], [0], [0], [1], [0, 0, 1, 1], [], []>} : vector<16x736xbf16>, vector<736x512xbf16>, vector<16x512xf32> -> vector<16x512xf32>
    %23 = vector.extract_strided_slice %17 {offsets = [0, 1, 0], sizes = [2, 8, 736], strides = [1, 1, 1]} : vector<2x12x736xbf16> to vector<2x8x736xbf16>
    %24 = vector.shape_cast %23 : vector<2x8x736xbf16> to vector<16x736xbf16>
    %c1 = arith.constant 1 : index
    %c0_11 = arith.constant 0 : index
    %c0_12 = arith.constant 0 : index
    %25 = vector.load %arg4[%c1, %c0_11, %c0_12] : memref<5x736x512xbf16, #tpu.memory_space<vmem>>, vector<1x736x512xbf16>
    %26 = vector.shape_cast %25 : vector<1x736x512xbf16> to vector<736x512xbf16>
    %cst_13 = arith.constant dense<0.000000e+00> : vector<16x512xf32>
    %27 = tpu.matmul %24, %26, %cst_13 {dimension_numbers = #tpu.dot_dimension_numbers<[1], [0], [0], [1], [0, 0, 1, 1], [], []>} : vector<16x736xbf16>, vector<736x512xbf16>, vector<16x512xf32> -> vector<16x512xf32>
    %28 = arith.addf %22, %27 : vector<16x512xf32>
    %29 = vector.extract_strided_slice %17 {offsets = [0, 2, 0], sizes = [2, 8, 736], strides = [1, 1, 1]} : vector<2x12x736xbf16> to vector<2x8x736xbf16>
    %30 = vector.shape_cast %29 : vector<2x8x736xbf16> to vector<16x736xbf16>
    %c2 = arith.constant 2 : index
    %c0_14 = arith.constant 0 : index
    %c0_15 = arith.constant 0 : index
    %31 = vector.load %arg4[%c2, %c0_14, %c0_15] : memref<5x736x512xbf16, #tpu.memory_space<vmem>>, vector<1x736x512xbf16>
    %32 = vector.shape_cast %31 : vector<1x736x512xbf16> to vector<736x512xbf16>
    %cst_16 = arith.constant dense<0.000000e+00> : vector<16x512xf32>
    %33 = tpu.matmul %30, %32, %cst_16 {dimension_numbers = #tpu.dot_dimension_numbers<[1], [0], [0], [1], [0, 0, 1, 1], [], []>} : vector<16x736xbf16>, vector<736x512xbf16>, vector<16x512xf32> -> vector<16x512xf32>
    %34 = arith.addf %28, %33 : vector<16x512xf32>
    %35 = vector.extract_strided_slice %17 {offsets = [0, 3, 0], sizes = [2, 8, 736], strides = [1, 1, 1]} : vector<2x12x736xbf16> to vector<2x8x736xbf16>
    %36 = vector.shape_cast %35 : vector<2x8x736xbf16> to vector<16x736xbf16>
    %c3 = arith.constant 3 : index
    %c0_17 = arith.constant 0 : index
    %c0_18 = arith.constant 0 : index
    %37 = vector.load %arg4[%c3, %c0_17, %c0_18] : memref<5x736x512xbf16, #tpu.memory_space<vmem>>, vector<1x736x512xbf16>
    %38 = vector.shape_cast %37 : vector<1x736x512xbf16> to vector<736x512xbf16>
    %cst_19 = arith.constant dense<0.000000e+00> : vector<16x512xf32>
    %39 = tpu.matmul %36, %38, %cst_19 {dimension_numbers = #tpu.dot_dimension_numbers<[1], [0], [0], [1], [0, 0, 1, 1], [], []>} : vector<16x736xbf16>, vector<736x512xbf16>, vector<16x512xf32> -> vector<16x512xf32>
    %40 = arith.addf %34, %39 : vector<16x512xf32>
    %41 = vector.extract_strided_slice %17 {offsets = [0, 4, 0], sizes = [2, 8, 736], strides = [1, 1, 1]} : vector<2x12x736xbf16> to vector<2x8x736xbf16>
    %42 = vector.shape_cast %41 : vector<2x8x736xbf16> to vector<16x736xbf16>
    %c4 = arith.constant 4 : index
    %c0_20 = arith.constant 0 : index
    %c0_21 = arith.constant 0 : index
    %43 = vector.load %arg4[%c4, %c0_20, %c0_21] : memref<5x736x512xbf16, #tpu.memory_space<vmem>>, vector<1x736x512xbf16>
    %44 = vector.shape_cast %43 : vector<1x736x512xbf16> to vector<736x512xbf16>
    %cst_22 = arith.constant dense<0.000000e+00> : vector<16x512xf32>
    %45 = tpu.matmul %42, %44, %cst_22 {dimension_numbers = #tpu.dot_dimension_numbers<[1], [0], [0], [1], [0, 0, 1, 1], [], []>} : vector<16x736xbf16>, vector<736x512xbf16>, vector<16x512xf32> -> vector<16x512xf32>
    %46 = arith.addf %40, %45 : vector<16x512xf32>
    %c0_23 = arith.constant 0 : index
    %c0_24 = arith.constant 0 : index
    %47 = vector.load %arg5[%c0_23, %c0_24] : memref<1x512xf32, #tpu.memory_space<vmem>>, vector<1x512xf32>
    %48 = vector.broadcast %47 : vector<1x512xf32> to vector<16x512xf32>
    %49 = arith.addf %46, %48 : vector<16x512xf32>
    %50 = arith.truncf %49 : vector<16x512xf32> to vector<16x512xbf16>
    %c0_25 = arith.constant 0 : index
    %c0_26 = arith.constant 0 : index
    %51 = vector.load %arg6[%c0_25, %c0_26] : memref<8x16xbf16, #tpu.memory_space<vmem>>, vector<8x16xbf16>
    %cst_27 = arith.constant dense<0.000000e+00> : vector<8x512xf32>
    %52 = tpu.matmul %51, %50, %cst_27 {dimension_numbers = #tpu.dot_dimension_numbers<[1], [0], [0], [1], [0, 0, 1, 1], [], []>} : vector<8x16xbf16>, vector<16x512xbf16>, vector<8x512xf32> -> vector<8x512xf32>
    %c0_28 = arith.constant 0 : index
    %c0_29 = arith.constant 0 : index
    %53 = vector.load %arg7[%c0_28, %c0_29] : memref<8x16xbf16, #tpu.memory_space<vmem>>, vector<8x16xbf16>
    %cst_30 = arith.constant dense<0.000000e+00> : vector<8x512xf32>
    %54 = tpu.matmul %53, %50, %cst_30 {dimension_numbers = #tpu.dot_dimension_numbers<[1], [0], [0], [1], [0, 0, 1, 1], [], []>} : vector<8x16xbf16>, vector<16x512xbf16>, vector<8x512xf32> -> vector<8x512xf32>
    %55 = arith.maximumf %52, %54 : vector<8x512xf32>
    %56 = vector.extract_strided_slice %55 {offsets = [0, 0], sizes = [8, 448], strides = [1, 1]} : vector<8x512xf32> to vector<8x448xf32>
    %57 = vector.extract_strided_slice %55 {offsets = [0, 64], sizes = [8, 448], strides = [1, 1]} : vector<8x512xf32> to vector<8x448xf32>
    %58 = arith.maximumf %56, %57 : vector<8x448xf32>
    %cst_31 = arith.constant 0.000000e+00 : f32
    %59 = vector.broadcast %cst_31 : f32 to vector<8x448xf32>
    %60 = arith.maximumf %58, %59 : vector<8x448xf32>
    %61 = vector.extract_strided_slice %60 {offsets = [0, 0], sizes = [8, 64], strides = [1, 1]} : vector<8x448xf32> to vector<8x64xf32>
    %62 = vector.extract_strided_slice %60 {offsets = [0, 128], sizes = [8, 64], strides = [1, 1]} : vector<8x448xf32> to vector<8x64xf32>
    %63 = vector.extract_strided_slice %60 {offsets = [0, 256], sizes = [8, 64], strides = [1, 1]} : vector<8x448xf32> to vector<8x64xf32>
    %64 = vector.extract_strided_slice %60 {offsets = [0, 384], sizes = [8, 64], strides = [1, 1]} : vector<8x448xf32> to vector<8x64xf32>
    %65 = tpu.concatenate %61, %62, %63, %64 in 1 : vector<8x64xf32>, vector<8x64xf32>, vector<8x64xf32>, vector<8x64xf32> -> vector<8x256xf32>
    %66 = vector.shape_cast %65 : vector<8x256xf32> to vector<2x4x256xf32>
    %67 = arith.truncf %66 : vector<2x4x256xf32> to vector<2x4x256xbf16>
    %c0_32 = arith.constant 0 : index
    %c0_33 = arith.constant 0 : index
    %c0_34 = arith.constant 0 : index
    %68 = vector.load %arg8[%c0_32, %c0_33, %c0_34] : memref<2x4x256xbf16, #tpu.memory_space<vmem>>, vector<2x4x256xbf16>
    tpu.vector_store %arg8[%c0_32, %c0_33, %c0_34], %67 {strides = array<i32>} : memref<2x4x256xbf16, #tpu.memory_space<vmem>>, vector<2x4x256xbf16>,
    return
  }
  func.func @transform_0(%arg0: i32) -> (i32, i32, i32) {
    %c0_i32 = arith.constant 0 : i32
    %c0_i32_0 = arith.constant 0 : i32
    %c0_i32_1 = arith.constant 0 : i32
    return %arg0, %c0_i32, %c0_i32_0 : i32, i32, i32
  }
  func.func @transform_1(%arg0: i32) -> (i32, i32) {
    %c0_i32 = arith.constant 0 : i32
    %c0_i32_0 = arith.constant 0 : i32
    %c0_i32_1 = arith.constant 0 : i32
    return %c0_i32, %c0_i32_0 : i32, i32
  }
  func.func @transform_2(%arg0: i32) -> (i32, i32) {
    %c0_i32 = arith.constant 0 : i32
    %c0_i32_0 = arith.constant 0 : i32
    %c0_i32_1 = arith.constant 0 : i32
    return %c0_i32, %c0_i32_0 : i32, i32
  }
  func.func @transform_3(%arg0: i32) -> (i32, i32, i32) {
    %c0_i32 = arith.constant 0 : i32
    %c0_i32_0 = arith.constant 0 : i32
    %c0_i32_1 = arith.constant 0 : i32
    %c0_i32_2 = arith.constant 0 : i32
    return %c0_i32, %c0_i32_0, %c0_i32_1 : i32, i32, i32
  }
  func.func @transform_4(%arg0: i32) -> (i32, i32) {
    %c0_i32 = arith.constant 0 : i32
    %c0_i32_0 = arith.constant 0 : i32
    %c0_i32_1 = arith.constant 0 : i32
    return %c0_i32, %c0_i32_0 : i32, i32
  }
  func.func @transform_5(%arg0: i32) -> (i32, i32) {
    %c0_i32 = arith.constant 0 : i32
    %c0_i32_0 = arith.constant 0 : i32
    %c0_i32_1 = arith.constant 0 : i32
    return %c0_i32, %c0_i32_0 : i32, i32
  }
  func.func @transform_6(%arg0: i32) -> (i32, i32) {
    %c0_i32 = arith.constant 0 : i32
    %c0_i32_0 = arith.constant 0 : i32
    %c0_i32_1 = arith.constant 0 : i32
    return %c0_i32, %c0_i32_0 : i32, i32
  }
  func.func @transform_7(%arg0: i32) -> (i32, i32, i32) {
    %c0_i32 = arith.constant 0 : i32
    %c0_i32_0 = arith.constant 0 : i32
    %c0_i32_1 = arith.constant 0 : i32
    return %arg0, %c0_i32, %c0_i32_0 : i32, i32, i32
  }
}

module attributes {stable_mosaic.version = 11 : i64} {
  func.func @_mlp_kernel(%arg0: i32, %arg1: memref<32x128xbf16, #tpu.memory_space<vmem>>, %arg2: memref<128x128xbf16, #tpu.memory_space<vmem>>, %arg3: memref<1x128xf32, #tpu.memory_space<vmem>>, %arg4: memref<1x128xf32, #tpu.memory_space<vmem>>, %arg5: memref<1x128xf32, #tpu.memory_space<vmem>>, %arg6: memref<128x256xbf16, #tpu.memory_space<vmem>>, %arg7: memref<1x256xf32, #tpu.memory_space<vmem>>, %arg8: memref<256x128xbf16, #tpu.memory_space<vmem>>, %arg9: memref<1x128xf32, #tpu.memory_space<vmem>>, %arg10: memref<32x128xf32, #tpu.memory_space<vmem>>) attributes {dimension_semantics = [#tpu.dimension_semantics<arbitrary>], iteration_bounds = array<i64: 1>, scalar_prefetch = 0 : i64, scratch_operands = 0 : i64, tpu.core_type = #tpu.core_type<tc>, window_params = [{pipeline_mode = #tpu.pipeline_mode<synchronous>, transform_indices = @transform_0, window_bounds = array<i64: 32, 128>}, {pipeline_mode = #tpu.pipeline_mode<synchronous>, transform_indices = @transform_1, window_bounds = array<i64: 128, 128>}, {pipeline_mode = #tpu.pipeline_mode<synchronous>, transform_indices = @transform_2, window_bounds = array<i64: 1, 128>}, {pipeline_mode = #tpu.pipeline_mode<synchronous>, transform_indices = @transform_3, window_bounds = array<i64: 1, 128>}, {pipeline_mode = #tpu.pipeline_mode<synchronous>, transform_indices = @transform_4, window_bounds = array<i64: 1, 128>}, {pipeline_mode = #tpu.pipeline_mode<synchronous>, transform_indices = @transform_5, window_bounds = array<i64: 128, 256>}, {pipeline_mode = #tpu.pipeline_mode<synchronous>, transform_indices = @transform_6, window_bounds = array<i64: 1, 256>}, {pipeline_mode = #tpu.pipeline_mode<synchronous>, transform_indices = @transform_7, window_bounds = array<i64: 256, 128>}, {pipeline_mode = #tpu.pipeline_mode<synchronous>, transform_indices = @transform_8, window_bounds = array<i64: 1, 128>}, {pipeline_mode = #tpu.pipeline_mode<synchronous>, transform_indices = @transform_9, window_bounds = array<i64: 32, 128>}]} {
    %c0 = arith.constant 0 : index
    %c0_0 = arith.constant 0 : index
    %0 = vector.load %arg1[%c0, %c0_0] : memref<32x128xbf16, #tpu.memory_space<vmem>>, vector<32x128xbf16>
    %c0_1 = arith.constant 0 : index
    %c0_2 = arith.constant 0 : index
    %1 = vector.load %arg2[%c0_1, %c0_2] : memref<128x128xbf16, #tpu.memory_space<vmem>>, vector<128x128xbf16>
    %cst = arith.constant dense<0.000000e+00> : vector<32x128xf32>
    %2 = tpu.matmul %0, %1, %cst {dimension_numbers = #tpu.dot_dimension_numbers<[1], [0], [0], [1], [0, 0, 1, 1], [], []>} : vector<32x128xbf16>, vector<128x128xbf16>, vector<32x128xf32> -> vector<32x128xf32>
    %c0_3 = arith.constant 0 : index
    %c0_4 = arith.constant 0 : index
    %3 = vector.load %arg3[%c0_3, %c0_4] : memref<1x128xf32, #tpu.memory_space<vmem>>, vector<1x128xf32>
    %4 = vector.broadcast %3 : vector<1x128xf32> to vector<32x128xf32>
    %5 = arith.addf %2, %4 : vector<32x128xf32>
    %cst_5 = arith.constant 0.000000e+00 : f32
    %6 = vector.broadcast %cst_5 : f32 to vector<32x128xf32>
    %7 = arith.maximumf %5, %6 : vector<32x128xf32>
    %cst_6 = arith.constant dense<0.000000e+00> : vector<128xf32>
    %8 = vector.multi_reduction <add>, %7, %cst_6 [0] : vector<32x128xf32> to vector<128xf32>
    %9 = vector.shape_cast %8 : vector<128xf32> to vector<1x128xf32>
    %cst_7 = arith.constant 3.200000e+01 : f32
    %10 = vector.broadcast %cst_7 : f32 to vector<1x128xf32>
    %11 = arith.divf %9, %10 : vector<1x128xf32>
    %12 = vector.broadcast %11 : vector<1x128xf32> to vector<32x128xf32>
    %13 = arith.subf %7, %12 : vector<32x128xf32>
    %14 = arith.mulf %13, %13 : vector<32x128xf32>
    %cst_8 = arith.constant dense<0.000000e+00> : vector<128xf32>
    %15 = vector.multi_reduction <add>, %14, %cst_8 [0] : vector<32x128xf32> to vector<128xf32>
    %16 = vector.shape_cast %15 : vector<128xf32> to vector<1x128xf32>
    %cst_9 = arith.constant 3.200000e+01 : f32
    %17 = vector.broadcast %cst_9 : f32 to vector<1x128xf32>
    %18 = arith.divf %16, %17 : vector<1x128xf32>
    %19 = vector.broadcast %11 : vector<1x128xf32> to vector<32x128xf32>
    %20 = arith.subf %7, %19 : vector<32x128xf32>
    %cst_10 = arith.constant 9.99999974E-6 : f32
    %21 = vector.broadcast %cst_10 : f32 to vector<1x128xf32>
    %22 = arith.addf %18, %21 : vector<1x128xf32>
    %23 = math.rsqrt %22 : vector<1x128xf32>
    %24 = vector.broadcast %23 : vector<1x128xf32> to vector<32x128xf32>
    %25 = arith.mulf %20, %24 : vector<32x128xf32>
    %c0_11 = arith.constant 0 : index
    %c0_12 = arith.constant 0 : index
    %26 = vector.load %arg4[%c0_11, %c0_12] : memref<1x128xf32, #tpu.memory_space<vmem>>, vector<1x128xf32>
    %27 = vector.broadcast %26 : vector<1x128xf32> to vector<32x128xf32>
    %28 = arith.mulf %25, %27 : vector<32x128xf32>
    %c0_13 = arith.constant 0 : index
    %c0_14 = arith.constant 0 : index
    %29 = vector.load %arg5[%c0_13, %c0_14] : memref<1x128xf32, #tpu.memory_space<vmem>>, vector<1x128xf32>
    %30 = vector.broadcast %29 : vector<1x128xf32> to vector<32x128xf32>
    %31 = arith.addf %28, %30 : vector<32x128xf32>
    %32 = arith.truncf %31 : vector<32x128xf32> to vector<32x128xbf16>
    %c0_15 = arith.constant 0 : index
    %c0_16 = arith.constant 0 : index
    %33 = vector.load %arg6[%c0_15, %c0_16] : memref<128x256xbf16, #tpu.memory_space<vmem>>, vector<128x256xbf16>
    %cst_17 = arith.constant dense<0.000000e+00> : vector<32x256xf32>
    %34 = tpu.matmul %32, %33, %cst_17 {dimension_numbers = #tpu.dot_dimension_numbers<[1], [0], [0], [1], [0, 0, 1, 1], [], []>} : vector<32x128xbf16>, vector<128x256xbf16>, vector<32x256xf32> -> vector<32x256xf32>
    %c0_18 = arith.constant 0 : index
    %c0_19 = arith.constant 0 : index
    %35 = vector.load %arg7[%c0_18, %c0_19] : memref<1x256xf32, #tpu.memory_space<vmem>>, vector<1x256xf32>
    %36 = vector.broadcast %35 : vector<1x256xf32> to vector<32x256xf32>
    %37 = arith.addf %34, %36 : vector<32x256xf32>
    %cst_20 = arith.constant 0.000000e+00 : f32
    %38 = vector.broadcast %cst_20 : f32 to vector<32x256xf32>
    %39 = arith.maximumf %37, %38 : vector<32x256xf32>
    %40 = arith.truncf %39 : vector<32x256xf32> to vector<32x256xbf16>
    %c0_21 = arith.constant 0 : index
    %c0_22 = arith.constant 0 : index
    %41 = vector.load %arg8[%c0_21, %c0_22] : memref<256x128xbf16, #tpu.memory_space<vmem>>, vector<256x128xbf16>
    %cst_23 = arith.constant dense<0.000000e+00> : vector<32x128xf32>
    %42 = tpu.matmul %40, %41, %cst_23 {dimension_numbers = #tpu.dot_dimension_numbers<[1], [0], [0], [1], [0, 0, 1, 1], [], []>} : vector<32x256xbf16>, vector<256x128xbf16>, vector<32x128xf32> -> vector<32x128xf32>
    %c0_24 = arith.constant 0 : index
    %c0_25 = arith.constant 0 : index
    %43 = vector.load %arg9[%c0_24, %c0_25] : memref<1x128xf32, #tpu.memory_space<vmem>>, vector<1x128xf32>
    %44 = vector.broadcast %43 : vector<1x128xf32> to vector<32x128xf32>
    %45 = arith.addf %42, %44 : vector<32x128xf32>
    %c0_26 = arith.constant 0 : index
    %c0_27 = arith.constant 0 : index
    %46 = vector.load %arg10[%c0_26, %c0_27] : memref<32x128xf32, #tpu.memory_space<vmem>>, vector<32x128xf32>
    tpu.vector_store %arg10[%c0_26, %c0_27], %45 {strides = array<i32>} : memref<32x128xf32, #tpu.memory_space<vmem>>, vector<32x128xf32>,
    return
  }
  func.func @transform_0(%arg0: i32) -> (i32, i32) {
    %c0_i32 = arith.constant 0 : i32
    %c0_i32_0 = arith.constant 0 : i32
    %c0_i32_1 = arith.constant 0 : i32
    return %c0_i32, %c0_i32_0 : i32, i32
  }
  func.func @transform_1(%arg0: i32) -> (i32, i32) {
    %c0_i32 = arith.constant 0 : i32
    %c0_i32_0 = arith.constant 0 : i32
    %c0_i32_1 = arith.constant 0 : i32
    return %c0_i32, %c0_i32_0 : i32, i32
  }
  func.func @transform_2(%arg0: i32) -> (i32, i32) {
    %c0_i32 = arith.constant 0 : i32
    %c0_i32_0 = arith.constant 0 : i32
    %c0_i32_1 = arith.constant 0 : i32
    return %c0_i32, %c0_i32_0 : i32, i32
  }
  func.func @transform_3(%arg0: i32) -> (i32, i32) {
    %c0_i32 = arith.constant 0 : i32
    %c0_i32_0 = arith.constant 0 : i32
    %c0_i32_1 = arith.constant 0 : i32
    return %c0_i32, %c0_i32_0 : i32, i32
  }
  func.func @transform_4(%arg0: i32) -> (i32, i32) {
    %c0_i32 = arith.constant 0 : i32
    %c0_i32_0 = arith.constant 0 : i32
    %c0_i32_1 = arith.constant 0 : i32
    return %c0_i32, %c0_i32_0 : i32, i32
  }
  func.func @transform_5(%arg0: i32) -> (i32, i32) {
    %c0_i32 = arith.constant 0 : i32
    %c0_i32_0 = arith.constant 0 : i32
    %c0_i32_1 = arith.constant 0 : i32
    return %c0_i32, %c0_i32_0 : i32, i32
  }
  func.func @transform_6(%arg0: i32) -> (i32, i32) {
    %c0_i32 = arith.constant 0 : i32
    %c0_i32_0 = arith.constant 0 : i32
    %c0_i32_1 = arith.constant 0 : i32
    return %c0_i32, %c0_i32_0 : i32, i32
  }
  func.func @transform_7(%arg0: i32) -> (i32, i32) {
    %c0_i32 = arith.constant 0 : i32
    %c0_i32_0 = arith.constant 0 : i32
    %c0_i32_1 = arith.constant 0 : i32
    return %c0_i32, %c0_i32_0 : i32, i32
  }
  func.func @transform_8(%arg0: i32) -> (i32, i32) {
    %c0_i32 = arith.constant 0 : i32
    %c0_i32_0 = arith.constant 0 : i32
    %c0_i32_1 = arith.constant 0 : i32
    return %c0_i32, %c0_i32_0 : i32, i32
  }
  func.func @transform_9(%arg0: i32) -> (i32, i32) {
    %c0_i32 = arith.constant 0 : i32
    %c0_i32_0 = arith.constant 0 : i32
    %c0_i32_1 = arith.constant 0 : i32
    return %c0_i32, %c0_i32_0 : i32, i32
  }
}

</mosaic_0001>

<llo_original>
// kernel: tile.13
$region0: #{tile.13}
  #allocation0 [shape = 's32[1]{0}', space=sflag, size = 0x4, scoped, tag = 'scoped memory for tile.13']
  %s0 = inlined_call_operand.vmem [shape: f32[32], index: 0, kind: input, shape index: {}]
  %s1 = inlined_call_operand.vmem [shape: f32[23,32], index: 1, kind: output, shape index: {}]
  // Predicated region
  $region2: #{tile.13} parent=0 // pred_check
    _
  $region3: #{tile.13} parent=0 // pred_check_branch
    %3 = sbr.rel (0) target = $region5
  $region4: #{tile.13} parent=0 // pred_region
    _
  $region5: #{tile.13} parent=0 // pred_fallthru
    _
  %v4 = vld [vmem:[%s0] ss:$0 sm:$0xff]
  %5 = vst [vmem:[%s1] sm:$0xff] %v4
  %s6 = scalar_lea.vmem %s1, 8
  %7 = vst [vmem:[%s6] sm:$0xff] %v4
  %s8 = scalar_lea.vmem %s1, 16
  %9 = vst [vmem:[%s8] sm:$0xff] %v4

// kernel: tile.14
$region0: #{tile.14}
  %s0 = inlined_call_operand.vmem [shape: f32[23,32], index: 0, kind: input, shape index: {}]
  %s1 = inlined_call_operand.vmem [shape: f32[1,736], index: 1, kind: output, shape index: {}]
  $region1: #{tile.14} parent=0
    #allocation0 [shape = 'u8[24576]{0}', space=vmem, size = 0x6000, scoped, tag = 'scoped mem for output reshape']
    %v2 = vld [vmem:[%s0] ss:$4 sm:$0x3f]
    %vm3 = vcmask 261120
    %4 = vst.msk [vmem:[#allocation0] ss:$8 sm:$0xf] %vm3, %v2
    %5 = vst.msk [vmem:[#allocation0] ss:$8 sm:$0x30] %vm3, %v2
    %s6 = scalar_lea.vmem %s0, 3
    %v7 = vld [vmem:[%s6] ss:$4 sm:$0x1f]
    %8 = vrot.lane.b32.xlu0 %v7, 96
    %v9 = vpop.permute.xlu0 %8
    %vm10 = vcmask 1048320
    %11 = vst.msk [vmem:[#allocation0] ss:$8 sm:$0xf] %vm10, %v9
    %s12 = scalar_lea.vmem [#allocation0], 28
    %13 = vst.msk [vmem:[%s12] sm:$0x10] %vm10, %v9
    %s14 = scalar_lea.vmem %s0, 2
    %v15 = vld [vmem:[%s14] ss:$4 sm:$0x3f]
    %16 = vrot.lane.b32.xlu0 %v15, 64
    %v17 = vpop.permute.xlu0 %16
    %vm18 = vcmask 785920
    %19 = vst.msk [vmem:[#allocation0] ss:$8 sm:$0xf] %vm18, %v17
    %20 = vst.msk [vmem:[#allocation0] ss:$8 sm:$0x30] %vm18, %v17
    %s21 = scalar_lea.vmem %s0, 1
    %v22 = vld [vmem:[%s21] ss:$4 sm:$0x3f]
    %23 = vrot.lane.b32.xlu0 %v22, 32
    %v24 = vpop.permute.xlu0 %23
    %vm25 = vcmask 523520
    %26 = vst.msk [vmem:[#allocation0] ss:$8 sm:$0xf] %vm25, %v24
    %27 = vst.msk [vmem:[#allocation0] ss:$8 sm:$0x30] %vm25, %v24
    %s29 = ssub.s32 2, 1
    %v30 = vld [vmem:[#allocation0] sm:%s29]
    %s32 = ssub.s32 2, 1
    %33 = vst [vmem:[%s1] sm:%s32] %v30
    %s34 = scalar_lea.vmem [#allocation0], 8
    %v35 = vld [vmem:[%s34] sm:%s29]
    %s37 = ssub.s32 2, 1
    %s38 = scalar_lea.vmem %s1, 1
    %39 = vst [vmem:[%s38] sm:%s37] %v35
    %s40 = scalar_lea.vmem [#allocation0], 16
    %v41 = vld [vmem:[%s40] sm:%s29]
    %s43 = ssub.s32 2, 1
    %s44 = scalar_lea.vmem %s1, 2
    %45 = vst [vmem:[%s44] sm:%s43] %v41
    %s46 = scalar_lea.vmem [#allocation0], 24
    %v47 = vld [vmem:[%s46] sm:%s29]
    %s49 = ssub.s32 2, 1
    %s50 = scalar_lea.vmem %s1, 3
    %51 = vst [vmem:[%s50] sm:%s49] %v47
    %s52 = scalar_lea.vmem [#allocation0], 32
    %v53 = vld [vmem:[%s52] sm:%s29]
    %s55 = ssub.s32 2, 1
    %s56 = scalar_lea.vmem %s1, 4
    %57 = vst [vmem:[%s56] sm:%s55] %v53
    %s58 = scalar_lea.vmem [#allocation0], 40
    %v59 = vld [vmem:[%s58] sm:%s29]
    %s61 = ssub.s32 2, 1
    %s62 = scalar_lea.vmem %s1, 5
    %63 = vst [vmem:[%s62] sm:%s61] %v59

// kernel: tile.18
$region0: #{tile.18}
  #allocation0 [shape = 's32[1]{0}', space=sflag, size = 0x4, scoped, tag = 'scoped memory for tile.18']
  %s0 = inlined_call_operand.vmem [shape: f32[64], index: 0, kind: input, shape index: {}]
  %s1 = inlined_call_operand.vmem [shape: f32[8,64], index: 1, kind: output, shape index: {}]
  // Predicated region
  $region2: #{tile.18} parent=0 // pred_check
    _
  $region3: #{tile.18} parent=0 // pred_check_branch
    %3 = sbr.rel (0) target = $region5
  $region4: #{tile.18} parent=0 // pred_region
    _
  $region5: #{tile.18} parent=0 // pred_fallthru
    _
  %v4 = vld [vmem:[%s0] ss:$0 sm:$0xff]
  %5 = vst [vmem:[%s1] sm:$0xff] %v4

// kernel: tile.19
$region0: #{tile.19}
  %s0 = inlined_call_operand.vmem [shape: f32[8,64], index: 0, kind: input, shape index: {}]
  %s1 = inlined_call_operand.vmem [shape: f32[1,512], index: 1, kind: output, shape index: {}]
  $region1: #{tile.19} parent=0
    #allocation0 [shape = 'u8[16384]{0}', space=vmem, size = 0x4000, scoped, tag = 'scoped mem for output reshape']
    %v2 = vld [vmem:[%s0] ss:$2 sm:$0xf]
    %vm3 = vcmask 523264
    %4 = vst.msk [vmem:[#allocation0] ss:$8 sm:$0xf] %vm3, %v2
    %s5 = scalar_lea.vmem %s0, 1
    %v6 = vld [vmem:[%s5] ss:$2 sm:$0xf]
    %7 = vrot.lane.b32.xlu0 %v6, 64
    %v8 = vpop.permute.xlu0 %7
    %vm9 = vcmask 1048064
    %10 = vst.msk [vmem:[#allocation0] ss:$8 sm:$0xf] %vm9, %v8
    %s12 = ssub.s32 2, 1
    %v13 = vld [vmem:[#allocation0] sm:%s12]
    %s15 = ssub.s32 2, 1
    %16 = vst [vmem:[%s1] sm:%s15] %v13
    %s17 = scalar_lea.vmem [#allocation0], 8
    %v18 = vld [vmem:[%s17] sm:%s12]
    %s20 = ssub.s32 2, 1
    %s21 = scalar_lea.vmem %s1, 1
    %22 = vst [vmem:[%s21] sm:%s20] %v18
    %s23 = scalar_lea.vmem [#allocation0], 16
    %v24 = vld [vmem:[%s23] sm:%s12]
    %s26 = ssub.s32 2, 1
    %s27 = scalar_lea.vmem %s1, 2
    %28 = vst [vmem:[%s27] sm:%s26] %v24
    %s29 = scalar_lea.vmem [#allocation0], 24
    %v30 = vld [vmem:[%s29] sm:%s12]
    %s32 = ssub.s32 2, 1
    %s33 = scalar_lea.vmem %s1, 3
    %34 = vst [vmem:[%s33] sm:%s32] %v30

// kernel: net_forward.3
$region0: #{net_forward.3}
  #allocation0 [shape = 'u32[]', space=smem, size = 0x4, offset = 0x4, fixed_abs, tag = 'smem constant byte address 0x4 - core index']
  #allocation1 [shape = 'u32[72,128]{1,0:T(1,128)}', space=vmem, size = 0x9000, scoped, tag = 'internal scratch']
  %s0 = inlined_call_operand.vmem [shape: bf16[32,128], index: 0, kind: input, shape index: {}]
  %s1 = inlined_call_operand.vmem [shape: bf16[128,128], index: 1, kind: input, shape index: {}]
  %s2 = inlined_call_operand.vmem [shape: f32[1,128], index: 2, kind: input, shape index: {}]
  %s3 = inlined_call_operand.vmem [shape: f32[1,128], index: 3, kind: input, shape index: {}]
  %s4 = inlined_call_operand.vmem [shape: f32[1,128], index: 4, kind: input, shape index: {}]
  %s5 = inlined_call_operand.vmem [shape: bf16[128,256], index: 5, kind: input, shape index: {}]
  %s6 = inlined_call_operand.vmem [shape: f32[1,256], index: 6, kind: input, shape index: {}]
  %s7 = inlined_call_operand.vmem [shape: bf16[256,128], index: 7, kind: input, shape index: {}]
  %s8 = inlined_call_operand.vmem [shape: f32[1,128], index: 8, kind: input, shape index: {}]
  %s9 = inlined_call_operand.vmem [shape: f32[32,128], index: 9, kind: output, shape index: {}]
  %s10 = sld [smem:[#allocation0]]
  $region46: #{net_forward.3} parent=0
    _
  %s12 = ssub.s32 1, %s10
  %s13 = scalar_select 0, %s12, %s10
  // Predicated region
  $region2: #{net_forward.3} parent=0 // pred_check
    _
  $region3: #{net_forward.3} parent=0 // pred_check_branch
    %15 = sbr.rel (0) target = $region5
  $region4: #{net_forward.3} parent=0 // pred_region
    _
  $region5: #{net_forward.3} parent=0 // pred_fallthru
    _
  // Predicated region
  $region6: #{net_forward.3} parent=0 // pred_check
    _
  $region7: #{net_forward.3} parent=0 // pred_check_branch
    %17 = sbr.rel (0) target = $region9
  $region8: #{net_forward.3} parent=0 // pred_region
    _
  $region9: #{net_forward.3} parent=0 // pred_fallthru
    _
  // Predicated region
  $region10: #{net_forward.3} parent=0 // pred_check
    _
  $region11: #{net_forward.3} parent=0 // pred_check_branch
    %19 = sbr.rel (0) target = $region13
  $region12: #{net_forward.3} parent=0 // pred_region
    _
  $region13: #{net_forward.3} parent=0 // pred_fallthru
    _
  // Predicated region
  $region14: #{net_forward.3} parent=0 // pred_check
    _
  $region15: #{net_forward.3} parent=0 // pred_check_branch
    %21 = sbr.rel (0) target = $region17
  $region16: #{net_forward.3} parent=0 // pred_region
    _
  $region17: #{net_forward.3} parent=0 // pred_fallthru
    _
  // Predicated region
  $region18: #{net_forward.3} parent=0 // pred_check
    _
  $region19: #{net_forward.3} parent=0 // pred_check_branch
    %23 = sbr.rel (0) target = $region21
  $region20: #{net_forward.3} parent=0 // pred_region
    _
  $region21: #{net_forward.3} parent=0 // pred_fallthru
    _
  // Predicated region
  $region22: #{net_forward.3} parent=0 // pred_check
    _
  $region23: #{net_forward.3} parent=0 // pred_check_branch
    %25 = sbr.rel (0) target = $region25
  $region24: #{net_forward.3} parent=0 // pred_region
    _
  $region25: #{net_forward.3} parent=0 // pred_fallthru
    _
  // Predicated region
  $region26: #{net_forward.3} parent=0 // pred_check
    _
  $region27: #{net_forward.3} parent=0 // pred_check_branch
    %27 = sbr.rel (0) target = $region29
  $region28: #{net_forward.3} parent=0 // pred_region
    _
  $region29: #{net_forward.3} parent=0 // pred_fallthru
    _
  // Predicated region
  $region30: #{net_forward.3} parent=0 // pred_check
    _
  $region31: #{net_forward.3} parent=0 // pred_check_branch
    %29 = sbr.rel (0) target = $region33
  $region32: #{net_forward.3} parent=0 // pred_region
    _
  $region33: #{net_forward.3} parent=0 // pred_fallthru
    _
  // Predicated region
  $region34: #{net_forward.3} parent=0 // pred_check
    _
  $region35: #{net_forward.3} parent=0 // pred_check_branch
    %31 = sbr.rel (0) target = $region37
  $region36: #{net_forward.3} parent=0 // pred_region
    _
  $region37: #{net_forward.3} parent=0 // pred_fallthru
    _
  %v32 = vld [vmem:[%s0] sm:$0xf]
  %v33 = vld [vmem:[%s0 + $0x4] sm:$0xf]
  %v34 = vld [vmem:[%s0 + $0x8] sm:$0xf]
  %v35 = vld [vmem:[%s0 + $0xc] sm:$0xf]
  %v36 = vld [vmem:[%s1] sm:$0xf]
  %v37 = vld [vmem:[%s1 + $0x4] sm:$0xf]
  %v38 = vld [vmem:[%s1 + $0x8] sm:$0xf]
  %v39 = vld [vmem:[%s1 + $0xc] sm:$0xf]
  %v40 = vld [vmem:[%s1 + $0x10] sm:$0xf]
  %v41 = vld [vmem:[%s1 + $0x14] sm:$0xf]
  %v42 = vld [vmem:[%s1 + $0x18] sm:$0xf]
  %v43 = vld [vmem:[%s1 + $0x1c] sm:$0xf]
  %v44 = vld [vmem:[%s1 + $0x20] sm:$0xf]
  %v45 = vld [vmem:[%s1 + $0x24] sm:$0xf]
  %v46 = vld [vmem:[%s1 + $0x28] sm:$0xf]
  %v47 = vld [vmem:[%s1 + $0x2c] sm:$0xf]
  %v48 = vld [vmem:[%s1 + $0x30] sm:$0xf]
  %v49 = vld [vmem:[%s1 + $0x34] sm:$0xf]
  %v50 = vld [vmem:[%s1 + $0x38] sm:$0xf]
  %v51 = vld [vmem:[%s1 + $0x3c] sm:$0xf]
  %v52 = vld [vmem:[%s2] sm:$0x1]
  %v54 = vperm.slane %v52, 0
  %v60 = vunpack.c.l.b16 %v32
  %v61 = vunpack.c.l.b16 %v33
  %v62 = vunpack.c.l.b16 %v34
  %v63 = vunpack.c.l.b16 %v35
  %v64 = vpack.c.b16 %v61, %v60
  %v65 = vpack.c.b16 %v63, %v62
  %v84 = vunpack.c.l.b16 %v36
  %v85 = vunpack.c.l.b16 %v37
  %v86 = vunpack.c.l.b16 %v38
  %v87 = vunpack.c.l.b16 %v39
  %v88 = vunpack.c.l.b16 %v40
  %v89 = vunpack.c.l.b16 %v41
  %v90 = vunpack.c.l.b16 %v42
  %v91 = vunpack.c.l.b16 %v43
  %v92 = vunpack.c.l.b16 %v44
  %v93 = vunpack.c.l.b16 %v45
  %v94 = vunpack.c.l.b16 %v46
  %v95 = vunpack.c.l.b16 %v47
  %v96 = vunpack.c.l.b16 %v48
  %v97 = vunpack.c.l.b16 %v49
  %v98 = vunpack.c.l.b16 %v50
  %v99 = vunpack.c.l.b16 %v51
  %v100 = vpack.c.b16 %v85, %v84
  %v101 = vpack.c.b16 %v87, %v86
  %v102 = vpack.c.b16 %v89, %v88
  %v103 = vpack.c.b16 %v91, %v90
  %v104 = vpack.c.b16 %v93, %v92
  %v105 = vpack.c.b16 %v95, %v94
  %v106 = vpack.c.b16 %v97, %v96
  %v107 = vpack.c.b16 %v99, %v98
  %116 = vmatpush.bf16.msra.mxu0 %v107
  %117 = vmatpush.bf16.msra.mxu0 %v106
  %118 = vmatpush.bf16.msra.mxu0 %v105
  %119 = vmatpush.bf16.msra.mxu0 %v104
  %120 = vmatpush.bf16.msra.mxu0 %v103
  %121 = vmatpush.bf16.msra.mxu0 %v102
  %122 = vmatpush.bf16.msra.mxu0 %v101
  %123 = vmatpush.bf16.msra.mxu0 %v100
  %124 = vmatmul.bf16.gmra.mxu0 %v64
  %v125 = vpop.f32.mrf.mxu0
  %v126 = vadd.f32 %v54, %v125
  %v127 = vpop.f32.mrf.mxu0
  %v128 = vadd.f32 %v54, %v127
  %129 = vmatmul.bf16.gmra.mxu0 %v65
  %v130 = vpop.f32.mrf.mxu0
  %v131 = vadd.f32 %v54, %v130
  %v132 = vpop.f32.mrf.mxu0
  %v133 = vadd.f32 %v54, %v132
  %134 = vdwg.mxu0
  %v135 = vmax.f32 %v126, 0.0
  %v136 = vmax.f32 %v128, 0.0
  %v137 = vmax.f32 %v131, 0.0
  %v138 = vmax.f32 %v133, 0.0
  %v139 = vadd.f32 %v135, %v136
  %v140 = vadd.f32 %v139, %v137
  %v141 = vadd.f32 %v140, %v138
  %v142 = vrot.slane %v141, 4
  %v143 = vadd.f32 %v141, %v142
  %v144 = vrot.slane %v143, 2
  %v145 = vadd.f32 %v143, %v144
  %v146 = vrot.slane %v145, 1
  %v147 = vadd.f32 %v145, %v146
  %v148 = vrcp.pop 32.0
  %v149 = vmul.f32 32.0, %v148
  %v150 = vsub.f32 1.0, %v149
  %v151 = vmul.f32 %v148, %v150
  %v152 = vadd.f32 %v148, %v151
  %vm153 = vweird.f32 %v148
  %v154 = vsel %vm153, %v148, %v152
  %v155 = vmul.f32 %v147, %v154
  %v156 = vsub.f32 %v135, %v155
  %v157 = vsub.f32 %v136, %v155
  %v158 = vsub.f32 %v137, %v155
  %v159 = vsub.f32 %v138, %v155
  %v160 = vmul.f32 %v156, %v156
  %v161 = vmul.f32 %v157, %v157
  %v162 = vmul.f32 %v158, %v158
  %v163 = vmul.f32 %v159, %v159
  %v164 = vadd.f32 %v160, %v161
  %v165 = vadd.f32 %v164, %v162
  %v166 = vadd.f32 %v165, %v163
  %v167 = vrot.slane %v166, 4
  %v168 = vadd.f32 %v166, %v167
  %v169 = vrot.slane %v168, 2
  %v170 = vadd.f32 %v168, %v169
  %v171 = vrot.slane %v170, 1
  %v172 = vadd.f32 %v170, %v171
  %v173 = vmul.f32 %v172, %v154
  %v174 = vadd.f32 %v173, 1e-05
  %v175 = vrsqrt.pop %v174
  %v176 = vmul.f32 %v175, %v174
  %v177 = vmul.f32 %v176, %v175
  %v178 = vmul.f32 0.5, %v177
  %v179 = vsub.f32 1.5, %v178
  %v180 = vmul.f32 %v175, %v179
  %vm181 = vweird.f32 %v174
  %vm182 = vweird.f32 %v175
  %vm183 = vmor %vm181, %vm182
  %v184 = vsel %vm183, %v175, %v180
  %v185 = vmul.f32 %v156, %v184
  %v186 = vmul.f32 %v157, %v184
  %v187 = vmul.f32 %v158, %v184
  %v188 = vmul.f32 %v159, %v184
  %v189 = vld [vmem:[%s3] sm:$0x1]
  %v191 = vperm.slane %v189, 0
  %v193 = vmul.f32 %v185, %v191
  %v194 = vmul.f32 %v186, %v191
  %v195 = vmul.f32 %v187, %v191
  %v196 = vmul.f32 %v188, %v191
  %v197 = vld [vmem:[%s4] sm:$0x1]
  %v199 = vperm.slane %v197, 0
  %v201 = vadd.f32 %v193, %v199
  %v202 = vadd.f32 %v194, %v199
  %v203 = vadd.f32 %v195, %v199
  %v204 = vadd.f32 %v196, %v199
  %v205 = vpack.c.bf16 %v202, %v201
  %v206 = vpack.c.bf16 %v204, %v203
  %v207 = vld [vmem:[%s5] sm:$0xff]
  %v208 = vld [vmem:[%s5 + $0x8] sm:$0xff]
  %v209 = vld [vmem:[%s5 + $0x10] sm:$0xff]
  %v210 = vld [vmem:[%s5 + $0x18] sm:$0xff]
  %v211 = vld [vmem:[%s5 + $0x20] sm:$0xff]
  %v212 = vld [vmem:[%s5 + $0x28] sm:$0xff]
  %v213 = vld [vmem:[%s5 + $0x30] sm:$0xff]
  %v214 = vld [vmem:[%s5 + $0x38] sm:$0xff]
  %v215 = vld [vmem:[%s5 + $0x40] sm:$0xff]
  %v216 = vld [vmem:[%s5 + $0x48] sm:$0xff]
  %v217 = vld [vmem:[%s5 + $0x50] sm:$0xff]
  %v218 = vld [vmem:[%s5 + $0x58] sm:$0xff]
  %v219 = vld [vmem:[%s5 + $0x60] sm:$0xff]
  %v220 = vld [vmem:[%s5 + $0x68] sm:$0xff]
  %v221 = vld [vmem:[%s5 + $0x70] sm:$0xff]
  %v222 = vld [vmem:[%s5 + $0x78] sm:$0xff]
  %v223 = vld [vmem:[%s6] sm:$0x3]
  %v225 = vperm.slane %v223, 0
  %v226 = vperm.slane %v223, 1
  %v245 = vunpack.c.l.b16 %v207
  %v246 = vunpack.c.h.b16 %v207
  %v247 = vunpack.c.l.b16 %v208
  %v248 = vunpack.c.h.b16 %v208
  %v249 = vunpack.c.l.b16 %v209
  %v250 = vunpack.c.h.b16 %v209
  %v251 = vunpack.c.l.b16 %v210
  %v252 = vunpack.c.h.b16 %v210
  %v253 = vunpack.c.l.b16 %v211
  %v254 = vunpack.c.h.b16 %v211
  %v255 = vunpack.c.l.b16 %v212
  %v256 = vunpack.c.h.b16 %v212
  %v257 = vunpack.c.l.b16 %v213
  %v258 = vunpack.c.h.b16 %v213
  %v259 = vunpack.c.l.b16 %v214
  %v260 = vunpack.c.h.b16 %v214
  %v261 = vunpack.c.l.b16 %v215
  %v262 = vunpack.c.h.b16 %v215
  %v263 = vunpack.c.l.b16 %v216
  %v264 = vunpack.c.h.b16 %v216
  %v265 = vunpack.c.l.b16 %v217
  %v266 = vunpack.c.h.b16 %v217
  %v267 = vunpack.c.l.b16 %v218
  %v268 = vunpack.c.h.b16 %v218
  %v269 = vunpack.c.l.b16 %v219
  %v270 = vunpack.c.h.b16 %v219
  %v271 = vunpack.c.l.b16 %v220
  %v272 = vunpack.c.h.b16 %v220
  %v273 = vunpack.c.l.b16 %v221
  %v274 = vunpack.c.h.b16 %v221
  %v275 = vunpack.c.l.b16 %v222
  %v276 = vunpack.c.h.b16 %v222
  %v277 = vpack.c.b16 %v247, %v245
  %v278 = vpack.c.b16 %v248, %v246
  %v279 = vpack.c.b16 %v251, %v249
  %v280 = vpack.c.b16 %v252, %v250
  %v281 = vpack.c.b16 %v255, %v253
  %v282 = vpack.c.b16 %v256, %v254
  %v283 = vpack.c.b16 %v259, %v257
  %v284 = vpack.c.b16 %v260, %v258
  %v285 = vpack.c.b16 %v263, %v261
  %v286 = vpack.c.b16 %v264, %v262
  %v287 = vpack.c.b16 %v267, %v265
  %v288 = vpack.c.b16 %v268, %v266
  %v289 = vpack.c.b16 %v271, %v269
  %v290 = vpack.c.b16 %v272, %v270
  %v291 = vpack.c.b16 %v275, %v273
  %v292 = vpack.c.b16 %v276, %v274
  %309 = vmatpush.bf16.msra.mxu0 %v291
  %310 = vmatpush.bf16.msra.mxu0 %v289
  %311 = vmatpush.bf16.msra.mxu0 %v287
  %312 = vmatpush.bf16.msra.mxu0 %v285
  %313 = vmatpush.bf16.msra.mxu0 %v283
  %314 = vmatpush.bf16.msra.mxu0 %v281
  %315 = vmatpush.bf16.msra.mxu0 %v279
  %316 = vmatpush.bf16.msra.mxu0 %v277
  %317 = vmatmul.bf16.gmra.mxu0 %v205
  %v318 = vpop.f32.mrf.mxu0
  %v319 = vadd.f32 %v225, %v318
  %v320 = vpop.f32.mrf.mxu0
  %v321 = vadd.f32 %v225, %v320
  %322 = vmatmul.bf16.gmra.mxu0 %v206
  %v323 = vpop.f32.mrf.mxu0
  %v324 = vadd.f32 %v225, %v323
  %v325 = vpop.f32.mrf.mxu0
  %v326 = vadd.f32 %v225, %v325
  %327 = vdwg.mxu0
  %328 = vmatpush.bf16.msra.mxu0 %v292
  %329 = vmatpush.bf16.msra.mxu0 %v290
  %330 = vmatpush.bf16.msra.mxu0 %v288
  %331 = vmatpush.bf16.msra.mxu0 %v286
  %332 = vmatpush.bf16.msra.mxu0 %v284
  %333 = vmatpush.bf16.msra.mxu0 %v282
  %334 = vmatpush.bf16.msra.mxu0 %v280
  %335 = vmatpush.bf16.msra.mxu0 %v278
  %336 = vmatmul.bf16.gmra.mxu0 %v205
  %v337 = vpop.f32.mrf.mxu0
  %v338 = vadd.f32 %v226, %v337
  %v339 = vpop.f32.mrf.mxu0
  %v340 = vadd.f32 %v226, %v339
  %341 = vmatmul.bf16.gmra.mxu0 %v206
  %v342 = vpop.f32.mrf.mxu0
  %v343 = vadd.f32 %v226, %v342
  %v344 = vpop.f32.mrf.mxu0
  %v345 = vadd.f32 %v226, %v344
  %346 = vdwg.mxu0
  %v347 = vmax.f32 %v319, 0.0
  %v348 = vmax.f32 %v338, 0.0
  %v349 = vmax.f32 %v321, 0.0
  %v350 = vmax.f32 %v340, 0.0
  %v351 = vmax.f32 %v324, 0.0
  %v352 = vmax.f32 %v343, 0.0
  %v353 = vmax.f32 %v326, 0.0
  %v354 = vmax.f32 %v345, 0.0
  %v355 = vpack.c.bf16 %v349, %v347
  %v356 = vpack.c.bf16 %v350, %v348
  %v357 = vpack.c.bf16 %v353, %v351
  %v358 = vpack.c.bf16 %v354, %v352
  %v359 = vld [vmem:[%s7] sm:$0xf]
  %v360 = vld [vmem:[%s7 + $0x4] sm:$0xf]
  %v361 = vld [vmem:[%s7 + $0x8] sm:$0xf]
  %v362 = vld [vmem:[%s7 + $0xc] sm:$0xf]
  %v363 = vld [vmem:[%s7 + $0x10] sm:$0xf]
  %v364 = vld [vmem:[%s7 + $0x14] sm:$0xf]
  %v365 = vld [vmem:[%s7 + $0x18] sm:$0xf]
  %v366 = vld [vmem:[%s7 + $0x1c] sm:$0xf]
  %v367 = vld [vmem:[%s7 + $0x20] sm:$0xf]
  %v368 = vld [vmem:[%s7 + $0x24] sm:$0xf]
  %v369 = vld [vmem:[%s7 + $0x28] sm:$0xf]
  %v370 = vld [vmem:[%s7 + $0x2c] sm:$0xf]
  %v371 = vld [vmem:[%s7 + $0x30] sm:$0xf]
  %v372 = vld [vmem:[%s7 + $0x34] sm:$0xf]
  %v373 = vld [vmem:[%s7 + $0x38] sm:$0xf]
  %v374 = vld [vmem:[%s7 + $0x3c] sm:$0xf]
  %v375 = vld [vmem:[%s7 + $0x40] sm:$0xf]
  %v376 = vld [vmem:[%s7 + $0x44] sm:$0xf]
  %v377 = vld [vmem:[%s7 + $0x48] sm:$0xf]
  %v378 = vld [vmem:[%s7 + $0x4c] sm:$0xf]
  %v379 = vld [vmem:[%s7 + $0x50] sm:$0xf]
  %v380 = vld [vmem:[%s7 + $0x54] sm:$0xf]
  %v381 = vld [vmem:[%s7 + $0x58] sm:$0xf]
  %v382 = vld [vmem:[%s7 + $0x5c] sm:$0xf]
  %v383 = vld [vmem:[%s7 + $0x60] sm:$0xf]
  %v384 = vld [vmem:[%s7 + $0x64] sm:$0xf]
  %v385 = vld [vmem:[%s7 + $0x68] sm:$0xf]
  %v386 = vld [vmem:[%s7 + $0x6c] sm:$0xf]
  %v387 = vld [vmem:[%s7 + $0x70] sm:$0xf]
  %v388 = vld [vmem:[%s7 + $0x74] sm:$0xf]
  %v389 = vld [vmem:[%s7 + $0x78] sm:$0xf]
  %v390 = vld [vmem:[%s7 + $0x7c] sm:$0xf]
  %v391 = vld [vmem:[%s8] sm:$0x1]
  %v393 = vperm.slane %v391, 0
  %v427 = vunpack.c.l.b16 %v359
  %v428 = vunpack.c.l.b16 %v360
  %v429 = vunpack.c.l.b16 %v361
  %v430 = vunpack.c.l.b16 %v362
  %v431 = vunpack.c.l.b16 %v363
  %v432 = vunpack.c.l.b16 %v364
  %v433 = vunpack.c.l.b16 %v365
  %v434 = vunpack.c.l.b16 %v366
  %v435 = vunpack.c.l.b16 %v367
  %v436 = vunpack.c.l.b16 %v368
  %v437 = vunpack.c.l.b16 %v369
  %v438 = vunpack.c.l.b16 %v370
  %v439 = vunpack.c.l.b16 %v371
  %v440 = vunpack.c.l.b16 %v372
  %v441 = vunpack.c.l.b16 %v373
  %v442 = vunpack.c.l.b16 %v374
  %v443 = vunpack.c.l.b16 %v375
  %v444 = vunpack.c.l.b16 %v376
  %v445 = vunpack.c.l.b16 %v377
  %v446 = vunpack.c.l.b16 %v378
  %v447 = vunpack.c.l.b16 %v379
  %v448 = vunpack.c.l.b16 %v380
  %v449 = vunpack.c.l.b16 %v381
  %v450 = vunpack.c.l.b16 %v382
  %v451 = vunpack.c.l.b16 %v383
  %v452 = vunpack.c.l.b16 %v384
  %v453 = vunpack.c.l.b16 %v385
  %v454 = vunpack.c.l.b16 %v386
  %v455 = vunpack.c.l.b16 %v387
  %v456 = vunpack.c.l.b16 %v388
  %v457 = vunpack.c.l.b16 %v389
  %v458 = vunpack.c.l.b16 %v390
  %v459 = vpack.c.b16 %v428, %v427
  %v460 = vpack.c.b16 %v430, %v429
  %v461 = vpack.c.b16 %v432, %v431
  %v462 = vpack.c.b16 %v434, %v433
  %v463 = vpack.c.b16 %v436, %v435
  %v464 = vpack.c.b16 %v438, %v437
  %v465 = vpack.c.b16 %v440, %v439
  %v466 = vpack.c.b16 %v442, %v441
  %v467 = vpack.c.b16 %v444, %v443
  %v468 = vpack.c.b16 %v446, %v445
  %v469 = vpack.c.b16 %v448, %v447
  %v470 = vpack.c.b16 %v450, %v449
  %v471 = vpack.c.b16 %v452, %v451
  %v472 = vpack.c.b16 %v454, %v453
  %v473 = vpack.c.b16 %v456, %v455
  %v474 = vpack.c.b16 %v458, %v457
  %491 = vmatpush.bf16.msra.mxu0 %v466
  %492 = vmatpush.bf16.msra.mxu0 %v465
  %493 = vmatpush.bf16.msra.mxu0 %v464
  %494 = vmatpush.bf16.msra.mxu0 %v463
  %495 = vmatpush.bf16.msra.mxu0 %v462
  %496 = vmatpush.bf16.msra.mxu0 %v461
  %497 = vmatpush.bf16.msra.mxu0 %v460
  %498 = vmatpush.bf16.msra.mxu0 %v459
  %499 = vmatmul.bf16.gmra.mxu0 %v355
  %v500 = vpop.f32.mrf.mxu0
  %v501 = vadd.f32 %v393, %v500
  %v502 = vpop.f32.mrf.mxu0
  %v503 = vadd.f32 %v393, %v502
  %504 = vmatmul.bf16.gmra.mxu0 %v357
  %v505 = vpop.f32.mrf.mxu0
  %v506 = vadd.f32 %v393, %v505
  %v507 = vpop.f32.mrf.mxu0
  %v508 = vadd.f32 %v393, %v507
  %509 = vdwg.mxu0
  %510 = vmatpush.bf16.msra.mxu0 %v474
  %511 = vmatpush.bf16.msra.mxu0 %v473
  %512 = vmatpush.bf16.msra.mxu0 %v472
  %513 = vmatpush.bf16.msra.mxu0 %v471
  %514 = vmatpush.bf16.msra.mxu0 %v470
  %515 = vmatpush.bf16.msra.mxu0 %v469
  %516 = vmatpush.bf16.msra.mxu0 %v468
  %517 = vmatpush.bf16.msra.mxu0 %v467
  %518 = vmatmul.bf16.gmra.mxu0 %v356
  %v519 = vpop.f32.mrf.mxu0
  %v520 = vadd.f32 %v501, %v519
  %v521 = vpop.f32.mrf.mxu0
  %v522 = vadd.f32 %v503, %v521
  %523 = vmatmul.bf16.gmra.mxu0 %v358
  %v524 = vpop.f32.mrf.mxu0
  %v525 = vadd.f32 %v506, %v524
  %v526 = vpop.f32.mrf.mxu0
  %v527 = vadd.f32 %v508, %v526
  %528 = vdwg.mxu0
  %529 = vst [vmem:[%s9] sm:$0xff] %v520
  %530 = vst [vmem:[%s9 + $0x8] sm:$0xff] %v522
  %531 = vst [vmem:[%s9 + $0x10] sm:$0xff] %v525
  %532 = vst [vmem:[%s9 + $0x18] sm:$0xff] %v527
  // Predicated region
  $region38: #{net_forward.3} parent=0 // pred_check
    _
  $region39: #{net_forward.3} parent=0 // pred_check_branch
    %534 = sbr.rel (0) target = $region41
  $region40: #{net_forward.3} parent=0 // pred_region
    _
  $region41: #{net_forward.3} parent=0 // pred_fallthru
    _
  // Predicated region
  $region42: #{net_forward.3} parent=0 // pred_check
    _
  $region43: #{net_forward.3} parent=0 // pred_check_branch
    %536 = sbr.rel (0) target = $region45
  $region44: #{net_forward.3} parent=0 // pred_region
    _
  $region45: #{net_forward.3} parent=0 // pred_fallthru
    _

// kernel: net_forward.2
$region0: #{net_forward.2}
  #allocation0 [shape = 'u32[]', space=smem, size = 0x4, offset = 0x4, fixed_abs, tag = 'smem constant byte address 0x4 - core index']
  #allocation1 [shape = 'u32[72,128]{1,0:T(1,128)}', space=vmem, size = 0x9000, scoped, tag = 'internal scratch']
  %s0 = inlined_call_operand.vmem [shape: bf16[2,24,140], index: 0, kind: input, shape index: {}]
  %s1 = inlined_call_operand.vmem [shape: bf16[140,768], index: 1, kind: input, shape index: {}]
  %s2 = inlined_call_operand.vmem [shape: f32[1,736], index: 2, kind: input, shape index: {}]
  %s3 = inlined_call_operand.vmem [shape: bf16[5,736,512], index: 3, kind: input, shape index: {}]
  %s4 = inlined_call_operand.vmem [shape: f32[1,512], index: 4, kind: input, shape index: {}]
  %s5 = inlined_call_operand.vmem [shape: bf16[8,16], index: 5, kind: input, shape index: {}]
  %s6 = inlined_call_operand.vmem [shape: bf16[8,16], index: 6, kind: input, shape index: {}]
  %s7 = inlined_call_operand.vmem [shape: bf16[2,4,256], index: 7, kind: output, shape index: {}]
  %s8 = sld [smem:[#allocation0]]
  $region38: #{net_forward.2} parent=0
    _
  %s10 = ssub.s32 1, %s8
  %s11 = scalar_select 0, %s10, %s8
  // Predicated region
  $region2: #{net_forward.2} parent=0 // pred_check
    _
  $region3: #{net_forward.2} parent=0 // pred_check_branch
    %13 = sbr.rel (0) target = $region5
  $region4: #{net_forward.2} parent=0 // pred_region
    _
  $region5: #{net_forward.2} parent=0 // pred_fallthru
    _
  // Predicated region
  $region6: #{net_forward.2} parent=0 // pred_check
    _
  $region7: #{net_forward.2} parent=0 // pred_check_branch
    %15 = sbr.rel (0) target = $region9
  $region8: #{net_forward.2} parent=0 // pred_region
    _
  $region9: #{net_forward.2} parent=0 // pred_fallthru
    _
  // Predicated region
  $region10: #{net_forward.2} parent=0 // pred_check
    _
  $region11: #{net_forward.2} parent=0 // pred_check_branch
    %17 = sbr.rel (0) target = $region13
  $region12: #{net_forward.2} parent=0 // pred_region
    _
  $region13: #{net_forward.2} parent=0 // pred_fallthru
    _
  // Predicated region
  $region14: #{net_forward.2} parent=0 // pred_check
    _
  $region15: #{net_forward.2} parent=0 // pred_check_branch
    %19 = sbr.rel (0) target = $region17
  $region16: #{net_forward.2} parent=0 // pred_region
    _
  $region17: #{net_forward.2} parent=0 // pred_fallthru
    _
  // Predicated region
  $region18: #{net_forward.2} parent=0 // pred_check
    _
  $region19: #{net_forward.2} parent=0 // pred_check_branch
    %21 = sbr.rel (0) target = $region21
  $region20: #{net_forward.2} parent=0 // pred_region
    _
  $region21: #{net_forward.2} parent=0 // pred_fallthru
    _
  // Predicated region
  $region22: #{net_forward.2} parent=0 // pred_check
    _
  $region23: #{net_forward.2} parent=0 // pred_check_branch
    %23 = sbr.rel (0) target = $region25
  $region24: #{net_forward.2} parent=0 // pred_region
    _
  $region25: #{net_forward.2} parent=0 // pred_fallthru
    _
  // Predicated region
  $region26: #{net_forward.2} parent=0 // pred_check
    _
  $region27: #{net_forward.2} parent=0 // pred_check_branch
    %25 = sbr.rel (0) target = $region29
  $region28: #{net_forward.2} parent=0 // pred_region
    _
  $region29: #{net_forward.2} parent=0 // pred_fallthru
    _
  %v27 = vld [vmem:[%s0] sm:$0xff]
  %v28 = vld [vmem:[%s0 + $0x8] sm:$0xff]
  %v29 = vld [vmem:[%s0 + $0x10] sm:$0xff]
  %v30 = vld [vmem:[%s0 + $0x18] sm:$0xff]
  %v31 = vld [vmem:[%s0 + $0x20] sm:$0xff]
  %v32 = vld [vmem:[%s0 + $0x28] sm:$0xff]
  %v33 = vld [vmem:[%s1] sm:$0xff]
  %v34 = vld [vmem:[%s1 + $0x8] sm:$0xff]
  %v35 = vld [vmem:[%s1 + $0x10] sm:$0xff]
  %v36 = vld [vmem:[%s1 + $0x18] sm:$0xff]
  %v37 = vld [vmem:[%s1 + $0x20] sm:$0xff]
  %v38 = vld [vmem:[%s1 + $0x28] sm:$0xff]
  %v39 = vld [vmem:[%s1 + $0x30] sm:$0xff]
  %v40 = vld [vmem:[%s1 + $0x38] sm:$0xff]
  %v41 = vld [vmem:[%s1 + $0x40] sm:$0xff]
  %v42 = vld [vmem:[%s1 + $0x48] sm:$0xff]
  %v43 = vld [vmem:[%s1 + $0x50] sm:$0xff]
  %v44 = vld [vmem:[%s1 + $0x58] sm:$0xff]
  %v45 = vld [vmem:[%s1 + $0x60] sm:$0xff]
  %v46 = vld [vmem:[%s1 + $0x68] sm:$0xff]
  %v47 = vld [vmem:[%s1 + $0x70] sm:$0xff]
  %v48 = vld [vmem:[%s1 + $0x78] sm:$0xff]
  %v49 = vld [vmem:[%s1 + $0x80] sm:$0xff]
  %v50 = vld [vmem:[%s1 + $0x88] sm:$0xff]
  %v51 = vld [vmem:[%s1 + $0x90] sm:$0xff]
  %v52 = vld [vmem:[%s1 + $0x98] sm:$0xff]
  %v53 = vld [vmem:[%s1 + $0xa0] sm:$0xff]
  %v54 = vld [vmem:[%s1 + $0xa8] sm:$0xff]
  %v55 = vld [vmem:[%s1 + $0xb0] sm:$0xff]
  %v56 = vld [vmem:[%s1 + $0xb8] sm:$0xff]
  %v57 = vld [vmem:[%s1 + $0xc0] sm:$0xff]
  %v58 = vld [vmem:[%s1 + $0xc8] sm:$0xff]
  %v59 = vld [vmem:[%s1 + $0xd0] sm:$0xff]
  %v60 = vld [vmem:[%s1 + $0xd8] sm:$0xff]
  %v61 = vld [vmem:[%s1 + $0xe0] sm:$0xff]
  %v62 = vld [vmem:[%s1 + $0xe8] sm:$0xff]
  %v63 = vld [vmem:[%s1 + $0xf0] sm:$0xff]
  %v64 = vld [vmem:[%s1 + $0xf8] sm:$0xff]
  %v65 = vld [vmem:[%s1 + $0x100] sm:$0xff]
  %v66 = vld [vmem:[%s1 + $0x108] sm:$0xff]
  %v67 = vld [vmem:[%s1 + $0x110] sm:$0xff]
  %v68 = vld [vmem:[%s1 + $0x118] sm:$0xff]
  %v69 = vld [vmem:[%s1 + $0x120] sm:$0xff]
  %v70 = vld [vmem:[%s1 + $0x128] sm:$0xff]
  %v71 = vld [vmem:[%s1 + $0x130] sm:$0xff]
  %v72 = vld [vmem:[%s1 + $0x138] sm:$0xff]
  %v73 = vld [vmem:[%s1 + $0x140] sm:$0xff]
  %v74 = vld [vmem:[%s1 + $0x148] sm:$0xff]
  %v75 = vld [vmem:[%s1 + $0x150] sm:$0xff]
  %v76 = vld [vmem:[%s1 + $0x158] sm:$0xff]
  %v77 = vld [vmem:[%s1 + $0x160] sm:$0xff]
  %v78 = vld [vmem:[%s1 + $0x168] sm:$0xff]
  %v79 = vld [vmem:[%s1 + $0x170] sm:$0xff]
  %v80 = vld [vmem:[%s1 + $0x178] sm:$0xff]
  %v81 = vld [vmem:[%s1 + $0x180] sm:$0xff]
  %v82 = vld [vmem:[%s1 + $0x188] sm:$0xff]
  %v83 = vld [vmem:[%s1 + $0x190] sm:$0xff]
  %v84 = vld [vmem:[%s1 + $0x198] sm:$0x33]
  %v85 = vld [vmem:[%s1 + $0x1a0] sm:$0x33]
  %v86 = vld [vmem:[%s1 + $0x1a8] sm:$0x33]
  %v93 = vunpack.c.l.b16 %v27
  %v94 = vunpack.c.h.b16 %v27
  %v95 = vunpack.c.l.b16 %v28
  %v96 = vunpack.c.h.b16 %v28
  %v97 = vunpack.c.l.b16 %v29
  %v98 = vunpack.c.h.b16 %v29
  %v99 = vunpack.c.l.b16 %v30
  %v100 = vunpack.c.h.b16 %v30
  %v101 = vunpack.c.l.b16 %v31
  %v102 = vunpack.c.h.b16 %v31
  %v103 = vunpack.c.l.b16 %v32
  %v104 = vunpack.c.h.b16 %v32
  %v105 = vpack.c.b16 %v95, %v93
  %v106 = vpack.c.b16 %v96, %v94
  %v107 = vpack.c.b16 %v99, %v97
  %v108 = vpack.c.b16 %v100, %v98
  %v109 = vpack.c.b16 %v103, %v101
  %v110 = vpack.c.b16 %v104, %v102
  %v168 = vunpack.c.l.b16 %v33
  %v169 = vunpack.c.h.b16 %v33
  %v170 = vunpack.c.l.b16 %v34
  %v171 = vunpack.c.h.b16 %v34
  %v172 = vunpack.c.l.b16 %v35
  %v173 = vunpack.c.h.b16 %v35
  %v174 = vunpack.c.l.b16 %v36
  %v175 = vunpack.c.h.b16 %v36
  %v176 = vunpack.c.l.b16 %v37
  %v177 = vunpack.c.h.b16 %v37
  %v178 = vunpack.c.l.b16 %v38
  %v179 = vunpack.c.h.b16 %v38
  %v180 = vunpack.c.l.b16 %v39
  %v181 = vunpack.c.h.b16 %v39
  %v182 = vunpack.c.l.b16 %v40
  %v183 = vunpack.c.h.b16 %v40
  %v184 = vunpack.c.l.b16 %v41
  %v185 = vunpack.c.h.b16 %v41
  %v186 = vunpack.c.l.b16 %v42
  %v187 = vunpack.c.h.b16 %v42
  %v188 = vunpack.c.l.b16 %v43
  %v189 = vunpack.c.h.b16 %v43
  %v190 = vunpack.c.l.b16 %v44
  %v191 = vunpack.c.h.b16 %v44
  %v192 = vunpack.c.l.b16 %v45
  %v193 = vunpack.c.h.b16 %v45
  %v194 = vunpack.c.l.b16 %v46
  %v195 = vunpack.c.h.b16 %v46
  %v196 = vunpack.c.l.b16 %v47
  %v197 = vunpack.c.h.b16 %v47
  %v198 = vunpack.c.l.b16 %v48
  %v199 = vunpack.c.h.b16 %v48
  %v200 = vunpack.c.l.b16 %v49
  %v201 = vunpack.c.h.b16 %v49
  %v202 = vunpack.c.l.b16 %v50
  %v203 = vunpack.c.h.b16 %v50
  %v204 = vunpack.c.l.b16 %v51
  %v205 = vunpack.c.h.b16 %v51
  %v206 = vunpack.c.l.b16 %v52
  %v207 = vunpack.c.h.b16 %v52
  %v208 = vunpack.c.l.b16 %v53
  %v209 = vunpack.c.h.b16 %v53
  %v210 = vunpack.c.l.b16 %v54
  %v211 = vunpack.c.h.b16 %v54
  %v212 = vunpack.c.l.b16 %v55
  %v213 = vunpack.c.h.b16 %v55
  %v214 = vunpack.c.l.b16 %v56
  %v215 = vunpack.c.h.b16 %v56
  %v216 = vunpack.c.l.b16 %v57
  %v217 = vunpack.c.h.b16 %v57
  %v218 = vunpack.c.l.b16 %v58
  %v219 = vunpack.c.h.b16 %v58
  %v220 = vunpack.c.l.b16 %v59
  %v221 = vunpack.c.h.b16 %v59
  %v222 = vunpack.c.l.b16 %v60
  %v223 = vunpack.c.h.b16 %v60
  %v224 = vunpack.c.l.b16 %v61
  %v225 = vunpack.c.h.b16 %v61
  %v226 = vunpack.c.l.b16 %v62
  %v227 = vunpack.c.h.b16 %v62
  %v228 = vunpack.c.l.b16 %v63
  %v229 = vunpack.c.h.b16 %v63
  %v230 = vunpack.c.l.b16 %v64
  %v231 = vunpack.c.h.b16 %v64
  %v232 = vunpack.c.l.b16 %v65
  %v233 = vunpack.c.h.b16 %v65
  %v234 = vunpack.c.l.b16 %v66
  %v235 = vunpack.c.h.b16 %v66
  %v236 = vunpack.c.l.b16 %v67
  %v237 = vunpack.c.h.b16 %v67
  %v238 = vunpack.c.l.b16 %v68
  %v239 = vunpack.c.h.b16 %v68
  %v240 = vunpack.c.l.b16 %v69
  %v241 = vunpack.c.h.b16 %v69
  %v242 = vunpack.c.l.b16 %v70
  %v243 = vunpack.c.h.b16 %v70
  %v244 = vunpack.c.l.b16 %v71
  %v245 = vunpack.c.h.b16 %v71
  %v246 = vunpack.c.l.b16 %v72
  %v247 = vunpack.c.h.b16 %v72
  %v248 = vunpack.c.l.b16 %v73
  %v249 = vunpack.c.h.b16 %v73
  %v250 = vunpack.c.l.b16 %v74
  %v251 = vunpack.c.h.b16 %v74
  %v252 = vunpack.c.l.b16 %v75
  %v253 = vunpack.c.h.b16 %v75
  %v254 = vunpack.c.l.b16 %v76
  %v255 = vunpack.c.h.b16 %v76
  %v256 = vunpack.c.l.b16 %v77
  %v257 = vunpack.c.h.b16 %v77
  %v258 = vunpack.c.l.b16 %v78
  %v259 = vunpack.c.h.b16 %v78
  %v260 = vunpack.c.l.b16 %v79
  %v261 = vunpack.c.h.b16 %v79
  %v262 = vunpack.c.l.b16 %v80
  %v263 = vunpack.c.h.b16 %v80
  %v264 = vunpack.c.l.b16 %v81
  %v265 = vunpack.c.h.b16 %v81
  %v266 = vunpack.c.l.b16 %v82
  %v267 = vunpack.c.h.b16 %v82
  %v268 = vunpack.c.l.b16 %v83
  %v269 = vunpack.c.h.b16 %v83
  %v270 = vunpack.c.l.b16 %v84
  %v271 = vunpack.c.h.b16 %v84
  %v272 = vunpack.c.l.b16 %v85
  %v273 = vunpack.c.h.b16 %v85
  %v274 = vunpack.c.l.b16 %v86
  %v275 = vunpack.c.h.b16 %v86
  %v276 = vpack.c.b16 %v174, %v168
  %v277 = vpack.c.b16 %v175, %v169
  %v278 = vpack.c.b16 %v176, %v170
  %v279 = vpack.c.b16 %v177, %v171
  %v280 = vpack.c.b16 %v178, %v172
  %v281 = vpack.c.b16 %v179, %v173
  %v282 = vpack.c.b16 %v186, %v180
  %v283 = vpack.c.b16 %v187, %v181
  %v284 = vpack.c.b16 %v188, %v182
  %v285 = vpack.c.b16 %v189, %v183
  %v286 = vpack.c.b16 %v190, %v184
  %v287 = vpack.c.b16 %v191, %v185
  %v288 = vpack.c.b16 %v198, %v192
  %v289 = vpack.c.b16 %v199, %v193
  %v290 = vpack.c.b16 %v200, %v194
  %v291 = vpack.c.b16 %v201, %v195
  %v292 = vpack.c.b16 %v202, %v196
  %v293 = vpack.c.b16 %v203, %v197
  %v294 = vpack.c.b16 %v210, %v204
  %v295 = vpack.c.b16 %v211, %v205
  %v296 = vpack.c.b16 %v212, %v206
  %v297 = vpack.c.b16 %v213, %v207
  %v298 = vpack.c.b16 %v214, %v208
  %v299 = vpack.c.b16 %v215, %v209
  %v300 = vpack.c.b16 %v222, %v216
  %v301 = vpack.c.b16 %v223, %v217
  %v302 = vpack.c.b16 %v224, %v218
  %v303 = vpack.c.b16 %v225, %v219
  %v304 = vpack.c.b16 %v226, %v220
  %v305 = vpack.c.b16 %v227, %v221
  %v306 = vpack.c.b16 %v234, %v228
  %v307 = vpack.c.b16 %v235, %v229
  %v308 = vpack.c.b16 %v236, %v230
  %v309 = vpack.c.b16 %v237, %v231
  %v310 = vpack.c.b16 %v238, %v232
  %v311 = vpack.c.b16 %v239, %v233
  %v312 = vpack.c.b16 %v246, %v240
  %v313 = vpack.c.b16 %v247, %v241
  %v314 = vpack.c.b16 %v248, %v242
  %v315 = vpack.c.b16 %v249, %v243
  %v316 = vpack.c.b16 %v250, %v244
  %v317 = vpack.c.b16 %v251, %v245
  %v318 = vpack.c.b16 %v258, %v252
  %v319 = vpack.c.b16 %v259, %v253
  %v320 = vpack.c.b16 %v260, %v254
  %v321 = vpack.c.b16 %v261, %v255
  %v322 = vpack.c.b16 %v262, %v256
  %v323 = vpack.c.b16 %v263, %v257
  %v324 = vpack.c.b16 %v270, %v264
  %v325 = vpack.c.b16 %v271, %v265
  %v326 = vpack.c.b16 %v272, %v266
  %v327 = vpack.c.b16 %v273, %v267
  %v328 = vpack.c.b16 %v274, %v268
  %v329 = vpack.c.b16 %v275, %v269
  %vm378 = vcmask 97280
  %v380 = vsel %vm378, %v106, 0
  %v383 = vsel %vm378, %v108, 0
  %v386 = vsel %vm378, %v110, 0
  %vm388 = vcmask 1045504
  %v390 = vsel %vm388, %v324, 0
  %v393 = vsel %vm388, %v325, 0
  %v396 = vsel %vm388, %v326, 0
  %v399 = vsel %vm388, %v327, 0
  %v402 = vsel %vm388, %v328, 0
  %v405 = vsel %vm388, %v329, 0
  %407 = vmatpush.bf16.msra.mxu0 %v318
  %408 = vmatpush.bf16.msra.mxu0 %v312
  %409 = vmatpush.bf16.msra.mxu0 %v306
  %410 = vmatpush.bf16.msra.mxu0 %v300
  %411 = vmatpush.bf16.msra.mxu0 %v294
  %412 = vmatpush.bf16.msra.mxu0 %v288
  %413 = vmatpush.bf16.msra.mxu0 %v282
  %414 = vmatpush.bf16.msra.mxu0 %v276
  %415 = vmatmul.bf16.gmra.mxu0 %v105
  %v416 = vpop.f32.mrf.mxu0
  %v417 = vadd.f32 0.0, %v416
  %v418 = vpop.f32.mrf.mxu0
  %v419 = vadd.f32 0.0, %v418
  %420 = vmatmul.bf16.gmra.mxu0 %v107
  %v421 = vpop.f32.mrf.mxu0
  %v422 = vadd.f32 0.0, %v421
  %v423 = vpop.f32.mrf.mxu0
  %v424 = vadd.f32 0.0, %v423
  %425 = vmatmul.bf16.gmra.mxu0 %v109
  %v426 = vpop.f32.mrf.mxu0
  %v427 = vadd.f32 0.0, %v426
  %v428 = vpop.f32.mrf.mxu0
  %v429 = vadd.f32 0.0, %v428
  %430 = vdwg.mxu0
  %431 = vmatpush.bf16.msra.mxu0 0
  %432 = vmatpush.bf16.msra.mxu0 0
  %433 = vmatpush.bf16.msra.mxu0 0
  %434 = vmatpush.bf16.msra.mxu0 0
  %435 = vmatpush.bf16.msra.mxu0 0
  %436 = vmatpush.bf16.msra.mxu0 0
  %437 = vmatpush.bf16.msra.mxu0 0
  %438 = vmatpush.bf16.msra.mxu0 %v390
  %439 = vmatmul.bf16.gmra.mxu0 %v380
  %v440 = vpop.f32.mrf.mxu0
  %v441 = vadd.f32 %v417, %v440
  %v442 = vpop.f32.mrf.mxu0
  %v443 = vadd.f32 %v419, %v442
  %444 = vmatmul.bf16.gmra.mxu0 %v383
  %v445 = vpop.f32.mrf.mxu0
  %v446 = vadd.f32 %v422, %v445
  %v447 = vpop.f32.mrf.mxu0
  %v448 = vadd.f32 %v424, %v447
  %449 = vmatmul.bf16.gmra.mxu0 %v386
  %v450 = vpop.f32.mrf.mxu0
  %v451 = vadd.f32 %v427, %v450
  %v452 = vpop.f32.mrf.mxu0
  %v453 = vadd.f32 %v429, %v452
  %454 = vdwg.mxu0
  %455 = vmatpush.bf16.msra.mxu0 %v319
  %456 = vmatpush.bf16.msra.mxu0 %v313
  %457 = vmatpush.bf16.msra.mxu0 %v307
  %458 = vmatpush.bf16.msra.mxu0 %v301
  %459 = vmatpush.bf16.msra.mxu0 %v295
  %460 = vmatpush.bf16.msra.mxu0 %v289
  %461 = vmatpush.bf16.msra.mxu0 %v283
  %462 = vmatpush.bf16.msra.mxu0 %v277
  %463 = vmatmul.bf16.gmra.mxu0 %v105
  %v464 = vpop.f32.mrf.mxu0
  %v465 = vadd.f32 0.0, %v464
  %v466 = vpop.f32.mrf.mxu0
  %v467 = vadd.f32 0.0, %v466
  %468 = vmatmul.bf16.gmra.mxu0 %v107
  %v469 = vpop.f32.mrf.mxu0
  %v470 = vadd.f32 0.0, %v469
  %v471 = vpop.f32.mrf.mxu0
  %v472 = vadd.f32 0.0, %v471
  %473 = vmatmul.bf16.gmra.mxu0 %v109
  %v474 = vpop.f32.mrf.mxu0
  %v475 = vadd.f32 0.0, %v474
  %v476 = vpop.f32.mrf.mxu0
  %v477 = vadd.f32 0.0, %v476
  %478 = vdwg.mxu0
  %479 = vmatpush.bf16.msra.mxu0 0
  %480 = vmatpush.bf16.msra.mxu0 0
  %481 = vmatpush.bf16.msra.mxu0 0
  %482 = vmatpush.bf16.msra.mxu0 0
  %483 = vmatpush.bf16.msra.mxu0 0
  %484 = vmatpush.bf16.msra.mxu0 0
  %485 = vmatpush.bf16.msra.mxu0 0
  %486 = vmatpush.bf16.msra.mxu0 %v393
  %487 = vmatmul.bf16.gmra.mxu0 %v380
  %v488 = vpop.f32.mrf.mxu0
  %v489 = vadd.f32 %v465, %v488
  %v490 = vpop.f32.mrf.mxu0
  %v491 = vadd.f32 %v467, %v490
  %492 = vmatmul.bf16.gmra.mxu0 %v383
  %v493 = vpop.f32.mrf.mxu0
  %v494 = vadd.f32 %v470, %v493
  %v495 = vpop.f32.mrf.mxu0
  %v496 = vadd.f32 %v472, %v495
  %497 = vmatmul.bf16.gmra.mxu0 %v386
  %v498 = vpop.f32.mrf.mxu0
  %v499 = vadd.f32 %v475, %v498
  %v500 = vpop.f32.mrf.mxu0
  %v501 = vadd.f32 %v477, %v500
  %502 = vdwg.mxu0
  %503 = vmatpush.bf16.msra.mxu0 %v320
  %504 = vmatpush.bf16.msra.mxu0 %v314
  %505 = vmatpush.bf16.msra.mxu0 %v308
  %506 = vmatpush.bf16.msra.mxu0 %v302
  %507 = vmatpush.bf16.msra.mxu0 %v296
  %508 = vmatpush.bf16.msra.mxu0 %v290
  %509 = vmatpush.bf16.msra.mxu0 %v284
  %510 = vmatpush.bf16.msra.mxu0 %v278
  %511 = vmatmul.bf16.gmra.mxu0 %v105
  %v512 = vpop.f32.mrf.mxu0
  %v513 = vadd.f32 0.0, %v512
  %v514 = vpop.f32.mrf.mxu0
  %v515 = vadd.f32 0.0, %v514
  %516 = vmatmul.bf16.gmra.mxu0 %v107
  %v517 = vpop.f32.mrf.mxu0
  %v518 = vadd.f32 0.0, %v517
  %v519 = vpop.f32.mrf.mxu0
  %v520 = vadd.f32 0.0, %v519
  %521 = vmatmul.bf16.gmra.mxu0 %v109
  %v522 = vpop.f32.mrf.mxu0
  %v523 = vadd.f32 0.0, %v522
  %v524 = vpop.f32.mrf.mxu0
  %v525 = vadd.f32 0.0, %v524
  %526 = vdwg.mxu0
  %527 = vmatpush.bf16.msra.mxu0 0
  %528 = vmatpush.bf16.msra.mxu0 0
  %529 = vmatpush.bf16.msra.mxu0 0
  %530 = vmatpush.bf16.msra.mxu0 0
  %531 = vmatpush.bf16.msra.mxu0 0
  %532 = vmatpush.bf16.msra.mxu0 0
  %533 = vmatpush.bf16.msra.mxu0 0
  %534 = vmatpush.bf16.msra.mxu0 %v396
  %535 = vmatmul.bf16.gmra.mxu0 %v380
  %v536 = vpop.f32.mrf.mxu0
  %v537 = vadd.f32 %v513, %v536
  %v538 = vpop.f32.mrf.mxu0
  %v539 = vadd.f32 %v515, %v538
  %540 = vmatmul.bf16.gmra.mxu0 %v383
  %v541 = vpop.f32.mrf.mxu0
  %v542 = vadd.f32 %v518, %v541
  %v543 = vpop.f32.mrf.mxu0
  %v544 = vadd.f32 %v520, %v543
  %545 = vmatmul.bf16.gmra.mxu0 %v386
  %v546 = vpop.f32.mrf.mxu0
  %v547 = vadd.f32 %v523, %v546
  %v548 = vpop.f32.mrf.mxu0
  %v549 = vadd.f32 %v525, %v548
  %550 = vdwg.mxu0
  %551 = vmatpush.bf16.msra.mxu0 %v321
  %552 = vmatpush.bf16.msra.mxu0 %v315
  %553 = vmatpush.bf16.msra.mxu0 %v309
  %554 = vmatpush.bf16.msra.mxu0 %v303
  %555 = vmatpush.bf16.msra.mxu0 %v297
  %556 = vmatpush.bf16.msra.mxu0 %v291
  %557 = vmatpush.bf16.msra.mxu0 %v285
  %558 = vmatpush.bf16.msra.mxu0 %v279
  %559 = vmatmul.bf16.gmra.mxu0 %v105
  %v560 = vpop.f32.mrf.mxu0
  %v561 = vadd.f32 0.0, %v560
  %v562 = vpop.f32.mrf.mxu0
  %v563 = vadd.f32 0.0, %v562
  %564 = vmatmul.bf16.gmra.mxu0 %v107
  %v565 = vpop.f32.mrf.mxu0
  %v566 = vadd.f32 0.0, %v565
  %v567 = vpop.f32.mrf.mxu0
  %v568 = vadd.f32 0.0, %v567
  %569 = vmatmul.bf16.gmra.mxu0 %v109
  %v570 = vpop.f32.mrf.mxu0
  %v571 = vadd.f32 0.0, %v570
  %v572 = vpop.f32.mrf.mxu0
  %v573 = vadd.f32 0.0, %v572
  %574 = vdwg.mxu0
  %575 = vmatpush.bf16.msra.mxu0 0
  %576 = vmatpush.bf16.msra.mxu0 0
  %577 = vmatpush.bf16.msra.mxu0 0
  %578 = vmatpush.bf16.msra.mxu0 0
  %579 = vmatpush.bf16.msra.mxu0 0
  %580 = vmatpush.bf16.msra.mxu0 0
  %581 = vmatpush.bf16.msra.mxu0 0
  %582 = vmatpush.bf16.msra.mxu0 %v399
  %583 = vmatmul.bf16.gmra.mxu0 %v380
  %v584 = vpop.f32.mrf.mxu0
  %v585 = vadd.f32 %v561, %v584
  %v586 = vpop.f32.mrf.mxu0
  %v587 = vadd.f32 %v563, %v586
  %588 = vmatmul.bf16.gmra.mxu0 %v383
  %v589 = vpop.f32.mrf.mxu0
  %v590 = vadd.f32 %v566, %v589
  %v591 = vpop.f32.mrf.mxu0
  %v592 = vadd.f32 %v568, %v591
  %593 = vmatmul.bf16.gmra.mxu0 %v386
  %v594 = vpop.f32.mrf.mxu0
  %v595 = vadd.f32 %v571, %v594
  %v596 = vpop.f32.mrf.mxu0
  %v597 = vadd.f32 %v573, %v596
  %598 = vdwg.mxu0
  %599 = vmatpush.bf16.msra.mxu0 %v322
  %600 = vmatpush.bf16.msra.mxu0 %v316
  %601 = vmatpush.bf16.msra.mxu0 %v310
  %602 = vmatpush.bf16.msra.mxu0 %v304
  %603 = vmatpush.bf16.msra.mxu0 %v298
  %604 = vmatpush.bf16.msra.mxu0 %v292
  %605 = vmatpush.bf16.msra.mxu0 %v286
  %606 = vmatpush.bf16.msra.mxu0 %v280
  %607 = vmatmul.bf16.gmra.mxu0 %v105
  %v608 = vpop.f32.mrf.mxu0
  %v609 = vadd.f32 0.0, %v608
  %v610 = vpop.f32.mrf.mxu0
  %v611 = vadd.f32 0.0, %v610
  %612 = vmatmul.bf16.gmra.mxu0 %v107
  %v613 = vpop.f32.mrf.mxu0
  %v614 = vadd.f32 0.0, %v613
  %v615 = vpop.f32.mrf.mxu0
  %v616 = vadd.f32 0.0, %v615
  %617 = vmatmul.bf16.gmra.mxu0 %v109
  %v618 = vpop.f32.mrf.mxu0
  %v619 = vadd.f32 0.0, %v618
  %v620 = vpop.f32.mrf.mxu0
  %v621 = vadd.f32 0.0, %v620
  %622 = vdwg.mxu0
  %623 = vmatpush.bf16.msra.mxu0 0
  %624 = vmatpush.bf16.msra.mxu0 0
  %625 = vmatpush.bf16.msra.mxu0 0
  %626 = vmatpush.bf16.msra.mxu0 0
  %627 = vmatpush.bf16.msra.mxu0 0
  %628 = vmatpush.bf16.msra.mxu0 0
  %629 = vmatpush.bf16.msra.mxu0 0
  %630 = vmatpush.bf16.msra.mxu0 %v402
  %631 = vmatmul.bf16.gmra.mxu0 %v380
  %v632 = vpop.f32.mrf.mxu0
  %v633 = vadd.f32 %v609, %v632
  %v634 = vpop.f32.mrf.mxu0
  %v635 = vadd.f32 %v611, %v634
  %636 = vmatmul.bf16.gmra.mxu0 %v383
  %v637 = vpop.f32.mrf.mxu0
  %v638 = vadd.f32 %v614, %v637
  %v639 = vpop.f32.mrf.mxu0
  %v640 = vadd.f32 %v616, %v639
  %641 = vmatmul.bf16.gmra.mxu0 %v386
  %v642 = vpop.f32.mrf.mxu0
  %v643 = vadd.f32 %v619, %v642
  %v644 = vpop.f32.mrf.mxu0
  %v645 = vadd.f32 %v621, %v644
  %646 = vdwg.mxu0
  %647 = vmatpush.bf16.msra.mxu0 %v323
  %648 = vmatpush.bf16.msra.mxu0 %v317
  %649 = vmatpush.bf16.msra.mxu0 %v311
  %650 = vmatpush.bf16.msra.mxu0 %v305
  %651 = vmatpush.bf16.msra.mxu0 %v299
  %652 = vmatpush.bf16.msra.mxu0 %v293
  %653 = vmatpush.bf16.msra.mxu0 %v287
  %654 = vmatpush.bf16.msra.mxu0 %v281
  %655 = vmatmul.bf16.gmra.mxu0 %v105
  %v656 = vpop.f32.mrf.mxu0
  %v657 = vadd.f32 0.0, %v656
  %v658 = vpop.f32.mrf.mxu0
  %v659 = vadd.f32 0.0, %v658
  %660 = vmatmul.bf16.gmra.mxu0 %v107
  %v661 = vpop.f32.mrf.mxu0
  %v662 = vadd.f32 0.0, %v661
  %v663 = vpop.f32.mrf.mxu0
  %v664 = vadd.f32 0.0, %v663
  %665 = vmatmul.bf16.gmra.mxu0 %v109
  %v666 = vpop.f32.mrf.mxu0
  %v667 = vadd.f32 0.0, %v666
  %v668 = vpop.f32.mrf.mxu0
  %v669 = vadd.f32 0.0, %v668
  %670 = vdwg.mxu0
  %671 = vmatpush.bf16.msra.mxu0 0
  %672 = vmatpush.bf16.msra.mxu0 0
  %673 = vmatpush.bf16.msra.mxu0 0
  %674 = vmatpush.bf16.msra.mxu0 0
  %675 = vmatpush.bf16.msra.mxu0 0
  %676 = vmatpush.bf16.msra.mxu0 0
  %677 = vmatpush.bf16.msra.mxu0 0
  %678 = vmatpush.bf16.msra.mxu0 %v405
  %679 = vmatmul.bf16.gmra.mxu0 %v380
  %v680 = vpop.f32.mrf.mxu0
  %v681 = vadd.f32 %v657, %v680
  %v682 = vpop.f32.mrf.mxu0
  %v683 = vadd.f32 %v659, %v682
  %684 = vmatmul.bf16.gmra.mxu0 %v383
  %v685 = vpop.f32.mrf.mxu0
  %v686 = vadd.f32 %v662, %v685
  %v687 = vpop.f32.mrf.mxu0
  %v688 = vadd.f32 %v664, %v687
  %689 = vmatmul.bf16.gmra.mxu0 %v386
  %v690 = vpop.f32.mrf.mxu0
  %v691 = vadd.f32 %v667, %v690
  %v692 = vpop.f32.mrf.mxu0
  %v693 = vadd.f32 %v669, %v692
  %694 = vdwg.mxu0
  %vm719 = vcmask 1043456
  %v720 = vrot.slane %v443, 4
  %v721 = vrot.slane %v446, 4
  %v722 = vsel %vm719, %v720, %v721
  %v723 = vrot.slane %v491, 4
  %v724 = vrot.slane %v494, 4
  %v725 = vsel %vm719, %v723, %v724
  %v726 = vrot.slane %v539, 4
  %v727 = vrot.slane %v542, 4
  %v728 = vsel %vm719, %v726, %v727
  %v729 = vrot.slane %v587, 4
  %v730 = vrot.slane %v590, 4
  %v731 = vsel %vm719, %v729, %v730
  %v732 = vrot.slane %v635, 4
  %v733 = vrot.slane %v638, 4
  %v734 = vsel %vm719, %v732, %v733
  %v735 = vrot.slane %v683, 4
  %v736 = vrot.slane %v686, 4
  %v737 = vsel %vm719, %v735, %v736
  %v738 = vrot.slane %v451, 4
  %v739 = vrot.slane %v453, 4
  %v740 = vsel %vm719, %v738, %v739
  %v741 = vrot.slane %v499, 4
  %v742 = vrot.slane %v501, 4
  %v743 = vsel %vm719, %v741, %v742
  %v744 = vrot.slane %v547, 4
  %v745 = vrot.slane %v549, 4
  %v746 = vsel %vm719, %v744, %v745
  %v747 = vrot.slane %v595, 4
  %v748 = vrot.slane %v597, 4
  %v749 = vsel %vm719, %v747, %v748
  %v750 = vrot.slane %v643, 4
  %v751 = vrot.slane %v645, 4
  %v752 = vsel %vm719, %v750, %v751
  %v753 = vrot.slane %v691, 4
  %v754 = vrot.slane %v693, 4
  %v755 = vsel %vm719, %v753, %v754
  %v780 = vmax.f32 %v441, %v722
  %v781 = vmax.f32 %v489, %v725
  %v782 = vmax.f32 %v537, %v728
  %v783 = vmax.f32 %v585, %v731
  %v784 = vmax.f32 %v633, %v734
  %v785 = vmax.f32 %v681, %v737
  %v786 = vmax.f32 %v443, %v721
  %v787 = vmax.f32 %v491, %v724
  %v788 = vmax.f32 %v539, %v727
  %v789 = vmax.f32 %v587, %v730
  %v790 = vmax.f32 %v635, %v733
  %v791 = vmax.f32 %v683, %v736
  %v792 = vmax.f32 %v448, %v740
  %v793 = vmax.f32 %v496, %v743
  %v794 = vmax.f32 %v544, %v746
  %v795 = vmax.f32 %v592, %v749
  %v796 = vmax.f32 %v640, %v752
  %v797 = vmax.f32 %v688, %v755
  %v798 = vmax.f32 %v451, %v739
  %v799 = vmax.f32 %v499, %v742
  %v800 = vmax.f32 %v547, %v745
  %v801 = vmax.f32 %v595, %v748
  %v802 = vmax.f32 %v643, %v751
  %v803 = vmax.f32 %v691, %v754
  %828 = vrot.lane.b32.xlu0 %v780, 96
  %v829 = vpop.permute.xlu0 %828
  %830 = vrot.lane.b32.xlu0 %v781, 96
  %v831 = vpop.permute.xlu0 %830
  %832 = vrot.lane.b32.xlu0 %v782, 96
  %v833 = vpop.permute.xlu0 %832
  %834 = vrot.lane.b32.xlu0 %v783, 96
  %v835 = vpop.permute.xlu0 %834
  %836 = vrot.lane.b32.xlu0 %v784, 96
  %v837 = vpop.permute.xlu0 %836
  %838 = vrot.lane.b32.xlu0 %v785, 96
  %v839 = vpop.permute.xlu0 %838
  %840 = vrot.lane.b32.xlu0 %v786, 96
  %v841 = vpop.permute.xlu0 %840
  %842 = vrot.lane.b32.xlu0 %v787, 96
  %v843 = vpop.permute.xlu0 %842
  %844 = vrot.lane.b32.xlu0 %v788, 96
  %v845 = vpop.permute.xlu0 %844
  %846 = vrot.lane.b32.xlu0 %v789, 96
  %v847 = vpop.permute.xlu0 %846
  %848 = vrot.lane.b32.xlu0 %v790, 96
  %v849 = vpop.permute.xlu0 %848
  %850 = vrot.lane.b32.xlu0 %v791, 96
  %v851 = vpop.permute.xlu0 %850
  %852 = vrot.lane.b32.xlu0 %v792, 96
  %v853 = vpop.permute.xlu0 %852
  %854 = vrot.lane.b32.xlu0 %v793, 96
  %v855 = vpop.permute.xlu0 %854
  %856 = vrot.lane.b32.xlu0 %v794, 96
  %v857 = vpop.permute.xlu0 %856
  %858 = vrot.lane.b32.xlu0 %v795, 96
  %v859 = vpop.permute.xlu0 %858
  %860 = vrot.lane.b32.xlu0 %v796, 96
  %v861 = vpop.permute.xlu0 %860
  %862 = vrot.lane.b32.xlu0 %v797, 96
  %v863 = vpop.permute.xlu0 %862
  %864 = vrot.lane.b32.xlu0 %v798, 96
  %v865 = vpop.permute.xlu0 %864
  %866 = vrot.lane.b32.xlu0 %v799, 96
  %v867 = vpop.permute.xlu0 %866
  %868 = vrot.lane.b32.xlu0 %v800, 96
  %v869 = vpop.permute.xlu0 %868
  %870 = vrot.lane.b32.xlu0 %v801, 96
  %v871 = vpop.permute.xlu0 %870
  %872 = vrot.lane.b32.xlu0 %v802, 96
  %v873 = vpop.permute.xlu0 %872
  %874 = vrot.lane.b32.xlu0 %v803, 96
  %v875 = vpop.permute.xlu0 %874
  %vm876 = vcmask 785408
  %v877 = vsel %vm876, %v829, %v831
  %v878 = vsel %vm876, %v831, %v833
  %v879 = vsel %vm876, %v833, %v835
  %v880 = vsel %vm876, %v835, %v837
  %v881 = vsel %vm876, %v837, %v839
  %v882 = vsel %vm876, %v841, %v843
  %v883 = vsel %vm876, %v843, %v845
  %v884 = vsel %vm876, %v845, %v847
  %v885 = vsel %vm876, %v847, %v849
  %v886 = vsel %vm876, %v849, %v851
  %v887 = vsel %vm876, %v853, %v855
  %v888 = vsel %vm876, %v855, %v857
  %v889 = vsel %vm876, %v857, %v859
  %v890 = vsel %vm876, %v859, %v861
  %v891 = vsel %vm876, %v861, %v863
  %v892 = vsel %vm876, %v865, %v867
  %v893 = vsel %vm876, %v867, %v869
  %v894 = vsel %vm876, %v869, %v871
  %v895 = vsel %vm876, %v871, %v873
  %v896 = vsel %vm876, %v873, %v875
  %v921 = vmax.f32 %v780, %v877
  %v922 = vmax.f32 %v781, %v878
  %v923 = vmax.f32 %v782, %v879
  %v924 = vmax.f32 %v783, %v880
  %v925 = vmax.f32 %v784, %v881
  %v926 = vmax.f32 %v785, %v839
  %v927 = vmax.f32 %v786, %v882
  %v928 = vmax.f32 %v787, %v883
  %v929 = vmax.f32 %v788, %v884
  %v930 = vmax.f32 %v789, %v885
  %v931 = vmax.f32 %v790, %v886
  %v932 = vmax.f32 %v791, %v851
  %v933 = vmax.f32 %v792, %v887
  %v934 = vmax.f32 %v793, %v888
  %v935 = vmax.f32 %v794, %v889
  %v936 = vmax.f32 %v795, %v890
  %v937 = vmax.f32 %v796, %v891
  %v938 = vmax.f32 %v797, %v863
  %v939 = vmax.f32 %v798, %v892
  %v940 = vmax.f32 %v799, %v893
  %v941 = vmax.f32 %v800, %v894
  %v942 = vmax.f32 %v801, %v895
  %v943 = vmax.f32 %v802, %v896
  %v944 = vmax.f32 %v803, %v875
  %v945 = vld [vmem:[%s2] sm:$0x3f]
  %v947 = vperm.slane %v945, 0
  %v948 = vperm.slane %v945, 1
  %v949 = vperm.slane %v945, 2
  %v950 = vperm.slane %v945, 3
  %v951 = vperm.slane %v945, 4
  %v952 = vperm.slane %v945, 5
  %v959 = vadd.f32 %v921, %v947
  %v960 = vadd.f32 %v922, %v948
  %v961 = vadd.f32 %v923, %v949
  %v962 = vadd.f32 %v924, %v950
  %v963 = vadd.f32 %v925, %v951
  %v964 = vadd.f32 %v926, %v952
  %v965 = vadd.f32 %v927, %v947
  %v966 = vadd.f32 %v928, %v948
  %v967 = vadd.f32 %v929, %v949
  %v968 = vadd.f32 %v930, %v950
  %v969 = vadd.f32 %v931, %v951
  %v970 = vadd.f32 %v932, %v952
  %v971 = vadd.f32 %v933, %v947
  %v972 = vadd.f32 %v934, %v948
  %v973 = vadd.f32 %v935, %v949
  %v974 = vadd.f32 %v936, %v950
  %v975 = vadd.f32 %v937, %v951
  %v976 = vadd.f32 %v938, %v952
  %v977 = vadd.f32 %v939, %v947
  %v978 = vadd.f32 %v940, %v948
  %v979 = vadd.f32 %v941, %v949
  %v980 = vadd.f32 %v942, %v950
  %v981 = vadd.f32 %v943, %v951
  %v982 = vadd.f32 %v944, %v952
  %v983 = vmax.f32 %v959, 0.0
  %v984 = vmax.f32 %v960, 0.0
  %v985 = vmax.f32 %v961, 0.0
  %v986 = vmax.f32 %v962, 0.0
  %v987 = vmax.f32 %v963, 0.0
  %v988 = vmax.f32 %v964, 0.0
  %v989 = vmax.f32 %v965, 0.0
  %v990 = vmax.f32 %v966, 0.0
  %v991 = vmax.f32 %v967, 0.0
  %v992 = vmax.f32 %v968, 0.0
  %v993 = vmax.f32 %v969, 0.0
  %v994 = vmax.f32 %v970, 0.0
  %v995 = vmax.f32 %v971, 0.0
  %v996 = vmax.f32 %v972, 0.0
  %v997 = vmax.f32 %v973, 0.0
  %v998 = vmax.f32 %v974, 0.0
  %v999 = vmax.f32 %v975, 0.0
  %v1000 = vmax.f32 %v976, 0.0
  %v1001 = vmax.f32 %v977, 0.0
  %v1002 = vmax.f32 %v978, 0.0
  %v1003 = vmax.f32 %v979, 0.0
  %v1004 = vmax.f32 %v980, 0.0
  %v1005 = vmax.f32 %v981, 0.0
  %v1006 = vmax.f32 %v982, 0.0
  %v1007 = vpack.c.bf16 %v984, %v983
  %v1008 = vpack.c.bf16 %v986, %v985
  %v1009 = vpack.c.bf16 %v988, %v987
  %v1010 = vpack.c.bf16 %v990, %v989
  %v1011 = vpack.c.bf16 %v992, %v991
  %v1012 = vpack.c.bf16 %v994, %v993
  %v1013 = vpack.c.bf16 %v996, %v995
  %v1014 = vpack.c.bf16 %v998, %v997
  %v1015 = vpack.c.bf16 %v1000, %v999
  %v1016 = vpack.c.bf16 %v1002, %v1001
  %v1017 = vpack.c.bf16 %v1004, %v1003
  %v1018 = vpack.c.bf16 %v1006, %v1005
  %v1019 = vld [vmem:[%s3] sm:$0xff]
  %v1020 = vld [vmem:[%s3 + $0x8] sm:$0xff]
  %v1021 = vld [vmem:[%s3 + $0x10] sm:$0xff]
  %v1022 = vld [vmem:[%s3 + $0x18] sm:$0xff]
  %v1023 = vld [vmem:[%s3 + $0x20] sm:$0xff]
  %v1024 = vld [vmem:[%s3 + $0x28] sm:$0xff]
  %v1025 = vld [vmem:[%s3 + $0x30] sm:$0xff]
  %v1026 = vld [vmem:[%s3 + $0x38] sm:$0xff]
  %v1027 = vld [vmem:[%s3 + $0x40] sm:$0xff]
  %v1028 = vld [vmem:[%s3 + $0x48] sm:$0xff]
  %v1029 = vld [vmem:[%s3 + $0x50] sm:$0xff]
  %v1030 = vld [vmem:[%s3 + $0x58] sm:$0xff]
  %v1031 = vld [vmem:[%s3 + $0x60] sm:$0xff]
  %v1032 = vld [vmem:[%s3 + $0x68] sm:$0xff]
  %v1033 = vld [vmem:[%s3 + $0x70] sm:$0xff]
  %v1034 = vld [vmem:[%s3 + $0x78] sm:$0xff]
  %v1035 = vld [vmem:[%s3 + $0x80] sm:$0xff]
  %v1036 = vld [vmem:[%s3 + $0x88] sm:$0xff]
  %v1037 = vld [vmem:[%s3 + $0x90] sm:$0xff]
  %v1038 = vld [vmem:[%s3 + $0x98] sm:$0xff]
  %v1039 = vld [vmem:[%s3 + $0xa0] sm:$0xff]
  %v1040 = vld [vmem:[%s3 + $0xa8] sm:$0xff]
  %v1041 = vld [vmem:[%s3 + $0xb0] sm:$0xff]
  %v1042 = vld [vmem:[%s3 + $0xb8] sm:$0xff]
  %v1043 = vld [vmem:[%s3 + $0xc0] sm:$0xff]
  %v1044 = vld [vmem:[%s3 + $0xc8] sm:$0xff]
  %v1045 = vld [vmem:[%s3 + $0xd0] sm:$0xff]
  %v1046 = vld [vmem:[%s3 + $0xd8] sm:$0xff]
  %v1047 = vld [vmem:[%s3 + $0xe0] sm:$0xff]
  %v1048 = vld [vmem:[%s3 + $0xe8] sm:$0xff]
  %v1049 = vld [vmem:[%s3 + $0xf0] sm:$0xff]
  %v1050 = vld [vmem:[%s3 + $0xf8] sm:$0xff]
  %v1051 = vld [vmem:[%s3 + $0x100] sm:$0xff]
  %v1052 = vld [vmem:[%s3 + $0x108] sm:$0xff]
  %v1053 = vld [vmem:[%s3 + $0x110] sm:$0xff]
  %v1054 = vld [vmem:[%s3 + $0x118] sm:$0xff]
  %v1055 = vld [vmem:[%s3 + $0x120] sm:$0xff]
  %v1056 = vld [vmem:[%s3 + $0x128] sm:$0xff]
  %v1057 = vld [vmem:[%s3 + $0x130] sm:$0xff]
  %v1058 = vld [vmem:[%s3 + $0x138] sm:$0xff]
  %v1059 = vld [vmem:[%s3 + $0x140] sm:$0xff]
  %v1060 = vld [vmem:[%s3 + $0x148] sm:$0xff]
  %v1061 = vld [vmem:[%s3 + $0x150] sm:$0xff]
  %v1062 = vld [vmem:[%s3 + $0x158] sm:$0xff]
  %v1063 = vld [vmem:[%s3 + $0x160] sm:$0xff]
  %v1064 = vld [vmem:[%s3 + $0x168] sm:$0xff]
  %v1065 = vld [vmem:[%s3 + $0x170] sm:$0xff]
  %v1066 = vld [vmem:[%s3 + $0x178] sm:$0xff]
  %v1067 = vld [vmem:[%s3 + $0x180] sm:$0xff]
  %v1068 = vld [vmem:[%s3 + $0x188] sm:$0xff]
  %v1069 = vld [vmem:[%s3 + $0x190] sm:$0xff]
  %v1070 = vld [vmem:[%s3 + $0x198] sm:$0xff]
  %v1071 = vld [vmem:[%s3 + $0x1a0] sm:$0xff]
  %v1072 = vld [vmem:[%s3 + $0x1a8] sm:$0xff]
  %v1073 = vld [vmem:[%s3 + $0x1b0] sm:$0xff]
  %v1074 = vld [vmem:[%s3 + $0x1b8] sm:$0xff]
  %v1075 = vld [vmem:[%s3 + $0x1c0] sm:$0xff]
  %v1076 = vld [vmem:[%s3 + $0x1c8] sm:$0xff]
  %v1077 = vld [vmem:[%s3 + $0x1d0] sm:$0xff]
  %v1078 = vld [vmem:[%s3 + $0x1d8] sm:$0xff]
  %v1079 = vld [vmem:[%s3 + $0x1e0] sm:$0xff]
  %v1080 = vld [vmem:[%s3 + $0x1e8] sm:$0xff]
  %v1081 = vld [vmem:[%s3 + $0x1f0] sm:$0xff]
  %v1082 = vld [vmem:[%s3 + $0x1f8] sm:$0xff]
  %v1083 = vld [vmem:[%s3 + $0x200] sm:$0xff]
  %v1084 = vld [vmem:[%s3 + $0x208] sm:$0xff]
  %v1085 = vld [vmem:[%s3 + $0x210] sm:$0xff]
  %v1086 = vld [vmem:[%s3 + $0x218] sm:$0xff]
  %v1087 = vld [vmem:[%s3 + $0x220] sm:$0xff]
  %v1088 = vld [vmem:[%s3 + $0x228] sm:$0xff]
  %v1089 = vld [vmem:[%s3 + $0x230] sm:$0xff]
  %v1090 = vld [vmem:[%s3 + $0x238] sm:$0xff]
  %v1091 = vld [vmem:[%s3 + $0x240] sm:$0xff]
  %v1092 = vld [vmem:[%s3 + $0x248] sm:$0xff]
  %v1093 = vld [vmem:[%s3 + $0x250] sm:$0xff]
  %v1094 = vld [vmem:[%s3 + $0x258] sm:$0xff]
  %v1095 = vld [vmem:[%s3 + $0x260] sm:$0xff]
  %v1096 = vld [vmem:[%s3 + $0x268] sm:$0xff]
  %v1097 = vld [vmem:[%s3 + $0x270] sm:$0xff]
  %v1098 = vld [vmem:[%s3 + $0x278] sm:$0xff]
  %v1099 = vld [vmem:[%s3 + $0x280] sm:$0xff]
  %v1100 = vld [vmem:[%s3 + $0x288] sm:$0xff]
  %v1101 = vld [vmem:[%s3 + $0x290] sm:$0xff]
  %v1102 = vld [vmem:[%s3 + $0x298] sm:$0xff]
  %v1103 = vld [vmem:[%s3 + $0x2a0] sm:$0xff]
  %v1104 = vld [vmem:[%s3 + $0x2a8] sm:$0xff]
  %v1105 = vld [vmem:[%s3 + $0x2b0] sm:$0xff]
  %v1106 = vld [vmem:[%s3 + $0x2b8] sm:$0xff]
  %v1107 = vld [vmem:[%s3 + $0x2c0] sm:$0xff]
  %v1108 = vld [vmem:[%s3 + $0x2c8] sm:$0xff]
  %v1109 = vld [vmem:[%s3 + $0x2d0] sm:$0xff]
  %v1110 = vld [vmem:[%s3 + $0x2d8] sm:$0xff]
  %v1111 = vld [vmem:[%s3 + $0x2e0] sm:$0xff]
  %v1112 = vld [vmem:[%s3 + $0x2e8] sm:$0xff]
  %v1113 = vld [vmem:[%s3 + $0x2f0] sm:$0xff]
  %v1114 = vld [vmem:[%s3 + $0x2f8] sm:$0xff]
  %v1115 = vld [vmem:[%s3 + $0x300] sm:$0xff]
  %v1116 = vld [vmem:[%s3 + $0x308] sm:$0xff]
  %v1117 = vld [vmem:[%s3 + $0x310] sm:$0xff]
  %v1118 = vld [vmem:[%s3 + $0x318] sm:$0xff]
  %v1119 = vld [vmem:[%s3 + $0x320] sm:$0xff]
  %v1120 = vld [vmem:[%s3 + $0x328] sm:$0xff]
  %v1121 = vld [vmem:[%s3 + $0x330] sm:$0xff]
  %v1122 = vld [vmem:[%s3 + $0x338] sm:$0xff]
  %v1123 = vld [vmem:[%s3 + $0x340] sm:$0xff]
  %v1124 = vld [vmem:[%s3 + $0x348] sm:$0xff]
  %v1125 = vld [vmem:[%s3 + $0x350] sm:$0xff]
  %v1126 = vld [vmem:[%s3 + $0x358] sm:$0xff]
  %v1127 = vld [vmem:[%s3 + $0x360] sm:$0xff]
  %v1128 = vld [vmem:[%s3 + $0x368] sm:$0xff]
  %v1129 = vld [vmem:[%s3 + $0x370] sm:$0xff]
  %v1130 = vld [vmem:[%s3 + $0x378] sm:$0xff]
  %v1131 = vld [vmem:[%s3 + $0x380] sm:$0xff]
  %v1132 = vld [vmem:[%s3 + $0x388] sm:$0xff]
  %v1133 = vld [vmem:[%s3 + $0x390] sm:$0xff]
  %v1134 = vld [vmem:[%s3 + $0x398] sm:$0xff]
  %v1135 = vld [vmem:[%s3 + $0x3a0] sm:$0xff]
  %v1136 = vld [vmem:[%s3 + $0x3a8] sm:$0xff]
  %v1137 = vld [vmem:[%s3 + $0x3b0] sm:$0xff]
  %v1138 = vld [vmem:[%s3 + $0x3b8] sm:$0xff]
  %v1139 = vld [vmem:[%s3 + $0x3c0] sm:$0xff]
  %v1140 = vld [vmem:[%s3 + $0x3c8] sm:$0xff]
  %v1141 = vld [vmem:[%s3 + $0x3d0] sm:$0xff]
  %v1142 = vld [vmem:[%s3 + $0x3d8] sm:$0xff]
  %v1143 = vld [vmem:[%s3 + $0x3e0] sm:$0xff]
  %v1144 = vld [vmem:[%s3 + $0x3e8] sm:$0xff]
  %v1145 = vld [vmem:[%s3 + $0x3f0] sm:$0xff]
  %v1146 = vld [vmem:[%s3 + $0x3f8] sm:$0xff]
  %v1147 = vld [vmem:[%s3 + $0x400] sm:$0xff]
  %v1148 = vld [vmem:[%s3 + $0x408] sm:$0xff]
  %v1149 = vld [vmem:[%s3 + $0x410] sm:$0xff]
  %v1150 = vld [vmem:[%s3 + $0x418] sm:$0xff]
  %v1151 = vld [vmem:[%s3 + $0x420] sm:$0xff]
  %v1152 = vld [vmem:[%s3 + $0x428] sm:$0xff]
  %v1153 = vld [vmem:[%s3 + $0x430] sm:$0xff]
  %v1154 = vld [vmem:[%s3 + $0x438] sm:$0xff]
  %v1155 = vld [vmem:[%s3 + $0x440] sm:$0xff]
  %v1156 = vld [vmem:[%s3 + $0x448] sm:$0xff]
  %v1157 = vld [vmem:[%s3 + $0x450] sm:$0xff]
  %v1158 = vld [vmem:[%s3 + $0x458] sm:$0xff]
  %v1159 = vld [vmem:[%s3 + $0x460] sm:$0xff]
  %v1160 = vld [vmem:[%s3 + $0x468] sm:$0xff]
  %v1161 = vld [vmem:[%s3 + $0x470] sm:$0xff]
  %v1162 = vld [vmem:[%s3 + $0x478] sm:$0xff]
  %v1163 = vld [vmem:[%s3 + $0x480] sm:$0xff]
  %v1164 = vld [vmem:[%s3 + $0x488] sm:$0xff]
  %v1165 = vld [vmem:[%s3 + $0x490] sm:$0xff]
  %v1166 = vld [vmem:[%s3 + $0x498] sm:$0xff]
  %v1167 = vld [vmem:[%s3 + $0x4a0] sm:$0xff]
  %v1168 = vld [vmem:[%s3 + $0x4a8] sm:$0xff]
  %v1169 = vld [vmem:[%s3 + $0x4b0] sm:$0xff]
  %v1170 = vld [vmem:[%s3 + $0x4b8] sm:$0xff]
  %v1171 = vld [vmem:[%s3 + $0x4c0] sm:$0xff]
  %v1172 = vld [vmem:[%s3 + $0x4c8] sm:$0xff]
  %v1173 = vld [vmem:[%s3 + $0x4d0] sm:$0xff]
  %v1174 = vld [vmem:[%s3 + $0x4d8] sm:$0xff]
  %v1175 = vld [vmem:[%s3 + $0x4e0] sm:$0xff]
  %v1176 = vld [vmem:[%s3 + $0x4e8] sm:$0xff]
  %v1177 = vld [vmem:[%s3 + $0x4f0] sm:$0xff]
  %v1178 = vld [vmem:[%s3 + $0x4f8] sm:$0xff]
  %v1179 = vld [vmem:[%s3 + $0x500] sm:$0xff]
  %v1180 = vld [vmem:[%s3 + $0x508] sm:$0xff]
  %v1181 = vld [vmem:[%s3 + $0x510] sm:$0xff]
  %v1182 = vld [vmem:[%s3 + $0x518] sm:$0xff]
  %v1183 = vld [vmem:[%s3 + $0x520] sm:$0xff]
  %v1184 = vld [vmem:[%s3 + $0x528] sm:$0xff]
  %v1185 = vld [vmem:[%s3 + $0x530] sm:$0xff]
  %v1186 = vld [vmem:[%s3 + $0x538] sm:$0xff]
  %v1187 = vld [vmem:[%s3 + $0x540] sm:$0xff]
  %v1188 = vld [vmem:[%s3 + $0x548] sm:$0xff]
  %v1189 = vld [vmem:[%s3 + $0x550] sm:$0xff]
  %v1190 = vld [vmem:[%s3 + $0x558] sm:$0xff]
  %v1191 = vld [vmem:[%s3 + $0x560] sm:$0xff]
  %v1192 = vld [vmem:[%s3 + $0x568] sm:$0xff]
  %v1193 = vld [vmem:[%s3 + $0x570] sm:$0xff]
  %v1194 = vld [vmem:[%s3 + $0x578] sm:$0xff]
  %v1195 = vld [vmem:[%s3 + $0x580] sm:$0xff]
  %v1196 = vld [vmem:[%s3 + $0x588] sm:$0xff]
  %v1197 = vld [vmem:[%s3 + $0x590] sm:$0xff]
  %v1198 = vld [vmem:[%s3 + $0x598] sm:$0xff]
  %v1199 = vld [vmem:[%s3 + $0x5a0] sm:$0xff]
  %v1200 = vld [vmem:[%s3 + $0x5a8] sm:$0xff]
  %v1201 = vld [vmem:[%s3 + $0x5b0] sm:$0xff]
  %v1202 = vld [vmem:[%s3 + $0x5b8] sm:$0xff]
  %vm1203 = vsmask.f32 3328
  %vm1204 = vsmask.f32 7440
  %vm1205 = vmor %vm1203, %vm1204
  %v1207 = vshrl.u32 %v1007, 16
  %v1209 = vrot.slane %v1207, 4
  %v1210 = vshll.u32 %v1007, 16
  %v1212 = vrot.slane %v1210, 5
  %v1213 = vor.u32 %v1209, %v1212
  %v1214 = vrot.slane %v1213, 4
  %v1216 = vshll.u32 %v1010, 16
  %v1218 = vrot.slane %v1216, 5
  %v1219 = vsel %vm1205, %v1214, %v1218
  %v1221 = vshrl.u32 %v1008, 16
  %v1223 = vrot.slane %v1221, 4
  %v1224 = vshll.u32 %v1008, 16
  %v1226 = vrot.slane %v1224, 5
  %v1227 = vor.u32 %v1223, %v1226
  %v1228 = vrot.slane %v1227, 4
  %v1230 = vshll.u32 %v1011, 16
  %v1232 = vrot.slane %v1230, 5
  %v1233 = vsel %vm1205, %v1228, %v1232
  %v1235 = vshrl.u32 %v1009, 16
  %v1237 = vrot.slane %v1235, 4
  %v1238 = vshll.u32 %v1009, 16
  %v1240 = vrot.slane %v1238, 5
  %v1241 = vor.u32 %v1237, %v1240
  %v1242 = vrot.slane %v1241, 4
  %v1244 = vshll.u32 %v1012, 16
  %v1246 = vrot.slane %v1244, 5
  %v1247 = vsel %vm1205, %v1242, %v1246
  %v1249 = vshrl.u32 %v1013, 16
  %v1251 = vrot.slane %v1249, 4
  %v1252 = vshll.u32 %v1013, 16
  %v1254 = vrot.slane %v1252, 5
  %v1255 = vor.u32 %v1251, %v1254
  %v1256 = vrot.slane %v1255, 4
  %v1258 = vshll.u32 %v1016, 16
  %v1260 = vrot.slane %v1258, 5
  %v1261 = vsel %vm1205, %v1256, %v1260
  %v1263 = vshrl.u32 %v1014, 16
  %v1265 = vrot.slane %v1263, 4
  %v1266 = vshll.u32 %v1014, 16
  %v1268 = vrot.slane %v1266, 5
  %v1269 = vor.u32 %v1265, %v1268
  %v1270 = vrot.slane %v1269, 4
  %v1272 = vshll.u32 %v1017, 16
  %v1274 = vrot.slane %v1272, 5
  %v1275 = vsel %vm1205, %v1270, %v1274
  %v1277 = vshrl.u32 %v1015, 16
  %v1279 = vrot.slane %v1277, 4
  %v1280 = vshll.u32 %v1015, 16
  %v1282 = vrot.slane %v1280, 5
  %v1283 = vor.u32 %v1279, %v1282
  %v1284 = vrot.slane %v1283, 4
  %v1286 = vshll.u32 %v1018, 16
  %v1288 = vrot.slane %v1286, 5
  %v1289 = vsel %vm1205, %v1284, %v1288
  %s1290 = scalar_lea.vmem %s3, 1472
  %v1291 = vld [vmem:[%s1290] sm:$0xff]
  %v1292 = vld [vmem:[%s1290 + $0x8] sm:$0xff]
  %v1293 = vld [vmem:[%s1290 + $0x10] sm:$0xff]
  %v1294 = vld [vmem:[%s1290 + $0x18] sm:$0xff]
  %v1295 = vld [vmem:[%s1290 + $0x20] sm:$0xff]
  %v1296 = vld [vmem:[%s1290 + $0x28] sm:$0xff]
  %v1297 = vld [vmem:[%s1290 + $0x30] sm:$0xff]
  %v1298 = vld [vmem:[%s1290 + $0x38] sm:$0xff]
  %v1299 = vld [vmem:[%s1290 + $0x40] sm:$0xff]
  %v1300 = vld [vmem:[%s1290 + $0x48] sm:$0xff]
  %v1301 = vld [vmem:[%s1290 + $0x50] sm:$0xff]
  %v1302 = vld [vmem:[%s1290 + $0x58] sm:$0xff]
  %v1303 = vld [vmem:[%s1290 + $0x60] sm:$0xff]
  %v1304 = vld [vmem:[%s1290 + $0x68] sm:$0xff]
  %v1305 = vld [vmem:[%s1290 + $0x70] sm:$0xff]
  %v1306 = vld [vmem:[%s1290 + $0x78] sm:$0xff]
  %v1307 = vld [vmem:[%s1290 + $0x80] sm:$0xff]
  %v1308 = vld [vmem:[%s1290 + $0x88] sm:$0xff]
  %v1309 = vld [vmem:[%s1290 + $0x90] sm:$0xff]
  %v1310 = vld [vmem:[%s1290 + $0x98] sm:$0xff]
  %v1311 = vld [vmem:[%s1290 + $0xa0] sm:$0xff]
  %v1312 = vld [vmem:[%s1290 + $0xa8] sm:$0xff]
  %v1313 = vld [vmem:[%s1290 + $0xb0] sm:$0xff]
  %v1314 = vld [vmem:[%s1290 + $0xb8] sm:$0xff]
  %v1315 = vld [vmem:[%s1290 + $0xc0] sm:$0xff]
  %v1316 = vld [vmem:[%s1290 + $0xc8] sm:$0xff]
  %v1317 = vld [vmem:[%s1290 + $0xd0] sm:$0xff]
  %v1318 = vld [vmem:[%s1290 + $0xd8] sm:$0xff]
  %v1319 = vld [vmem:[%s1290 + $0xe0] sm:$0xff]
  %v1320 = vld [vmem:[%s1290 + $0xe8] sm:$0xff]
  %v1321 = vld [vmem:[%s1290 + $0xf0] sm:$0xff]
  %v1322 = vld [vmem:[%s1290 + $0xf8] sm:$0xff]
  %v1323 = vld [vmem:[%s1290 + $0x100] sm:$0xff]
  %v1324 = vld [vmem:[%s1290 + $0x108] sm:$0xff]
  %v1325 = vld [vmem:[%s1290 + $0x110] sm:$0xff]
  %v1326 = vld [vmem:[%s1290 + $0x118] sm:$0xff]
  %v1327 = vld [vmem:[%s1290 + $0x120] sm:$0xff]
  %v1328 = vld [vmem:[%s1290 + $0x128] sm:$0xff]
  %v1329 = vld [vmem:[%s1290 + $0x130] sm:$0xff]
  %v1330 = vld [vmem:[%s1290 + $0x138] sm:$0xff]
  %v1331 = vld [vmem:[%s1290 + $0x140] sm:$0xff]
  %v1332 = vld [vmem:[%s1290 + $0x148] sm:$0xff]
  %v1333 = vld [vmem:[%s1290 + $0x150] sm:$0xff]
  %v1334 = vld [vmem:[%s1290 + $0x158] sm:$0xff]
  %v1335 = vld [vmem:[%s1290 + $0x160] sm:$0xff]
  %v1336 = vld [vmem:[%s1290 + $0x168] sm:$0xff]
  %v1337 = vld [vmem:[%s1290 + $0x170] sm:$0xff]
  %v1338 = vld [vmem:[%s1290 + $0x178] sm:$0xff]
  %v1339 = vld [vmem:[%s1290 + $0x180] sm:$0xff]
  %v1340 = vld [vmem:[%s1290 + $0x188] sm:$0xff]
  %v1341 = vld [vmem:[%s1290 + $0x190] sm:$0xff]
  %v1342 = vld [vmem:[%s1290 + $0x198] sm:$0xff]
  %v1343 = vld [vmem:[%s1290 + $0x1a0] sm:$0xff]
  %v1344 = vld [vmem:[%s1290 + $0x1a8] sm:$0xff]
  %v1345 = vld [vmem:[%s1290 + $0x1b0] sm:$0xff]
  %v1346 = vld [vmem:[%s1290 + $0x1b8] sm:$0xff]
  %v1347 = vld [vmem:[%s1290 + $0x1c0] sm:$0xff]
  %v1348 = vld [vmem:[%s1290 + $0x1c8] sm:$0xff]
  %v1349 = vld [vmem:[%s1290 + $0x1d0] sm:$0xff]
  %v1350 = vld [vmem:[%s1290 + $0x1d8] sm:$0xff]
  %v1351 = vld [vmem:[%s1290 + $0x1e0] sm:$0xff]
  %v1352 = vld [vmem:[%s1290 + $0x1e8] sm:$0xff]
  %v1353 = vld [vmem:[%s1290 + $0x1f0] sm:$0xff]
  %v1354 = vld [vmem:[%s1290 + $0x1f8] sm:$0xff]
  %v1355 = vld [vmem:[%s1290 + $0x200] sm:$0xff]
  %v1356 = vld [vmem:[%s1290 + $0x208] sm:$0xff]
  %v1357 = vld [vmem:[%s1290 + $0x210] sm:$0xff]
  %v1358 = vld [vmem:[%s1290 + $0x218] sm:$0xff]
  %v1359 = vld [vmem:[%s1290 + $0x220] sm:$0xff]
  %v1360 = vld [vmem:[%s1290 + $0x228] sm:$0xff]
  %v1361 = vld [vmem:[%s1290 + $0x230] sm:$0xff]
  %v1362 = vld [vmem:[%s1290 + $0x238] sm:$0xff]
  %v1363 = vld [vmem:[%s1290 + $0x240] sm:$0xff]
  %v1364 = vld [vmem:[%s1290 + $0x248] sm:$0xff]
  %v1365 = vld [vmem:[%s1290 + $0x250] sm:$0xff]
  %v1366 = vld [vmem:[%s1290 + $0x258] sm:$0xff]
  %v1367 = vld [vmem:[%s1290 + $0x260] sm:$0xff]
  %v1368 = vld [vmem:[%s1290 + $0x268] sm:$0xff]
  %v1369 = vld [vmem:[%s1290 + $0x270] sm:$0xff]
  %v1370 = vld [vmem:[%s1290 + $0x278] sm:$0xff]
  %v1371 = vld [vmem:[%s1290 + $0x280] sm:$0xff]
  %v1372 = vld [vmem:[%s1290 + $0x288] sm:$0xff]
  %v1373 = vld [vmem:[%s1290 + $0x290] sm:$0xff]
  %v1374 = vld [vmem:[%s1290 + $0x298] sm:$0xff]
  %v1375 = vld [vmem:[%s1290 + $0x2a0] sm:$0xff]
  %v1376 = vld [vmem:[%s1290 + $0x2a8] sm:$0xff]
  %v1377 = vld [vmem:[%s1290 + $0x2b0] sm:$0xff]
  %v1378 = vld [vmem:[%s1290 + $0x2b8] sm:$0xff]
  %v1379 = vld [vmem:[%s1290 + $0x2c0] sm:$0xff]
  %v1380 = vld [vmem:[%s1290 + $0x2c8] sm:$0xff]
  %v1381 = vld [vmem:[%s1290 + $0x2d0] sm:$0xff]
  %v1382 = vld [vmem:[%s1290 + $0x2d8] sm:$0xff]
  %v1383 = vld [vmem:[%s1290 + $0x2e0] sm:$0xff]
  %v1384 = vld [vmem:[%s1290 + $0x2e8] sm:$0xff]
  %v1385 = vld [vmem:[%s1290 + $0x2f0] sm:$0xff]
  %v1386 = vld [vmem:[%s1290 + $0x2f8] sm:$0xff]
  %v1387 = vld [vmem:[%s1290 + $0x300] sm:$0xff]
  %v1388 = vld [vmem:[%s1290 + $0x308] sm:$0xff]
  %v1389 = vld [vmem:[%s1290 + $0x310] sm:$0xff]
  %v1390 = vld [vmem:[%s1290 + $0x318] sm:$0xff]
  %v1391 = vld [vmem:[%s1290 + $0x320] sm:$0xff]
  %v1392 = vld [vmem:[%s1290 + $0x328] sm:$0xff]
  %v1393 = vld [vmem:[%s1290 + $0x330] sm:$0xff]
  %v1394 = vld [vmem:[%s1290 + $0x338] sm:$0xff]
  %v1395 = vld [vmem:[%s1290 + $0x340] sm:$0xff]
  %v1396 = vld [vmem:[%s1290 + $0x348] sm:$0xff]
  %v1397 = vld [vmem:[%s1290 + $0x350] sm:$0xff]
  %v1398 = vld [vmem:[%s1290 + $0x358] sm:$0xff]
  %v1399 = vld [vmem:[%s1290 + $0x360] sm:$0xff]
  %v1400 = vld [vmem:[%s1290 + $0x368] sm:$0xff]
  %v1401 = vld [vmem:[%s1290 + $0x370] sm:$0xff]
  %v1402 = vld [vmem:[%s1290 + $0x378] sm:$0xff]
  %v1403 = vld [vmem:[%s1290 + $0x380] sm:$0xff]
  %v1404 = vld [vmem:[%s1290 + $0x388] sm:$0xff]
  %v1405 = vld [vmem:[%s1290 + $0x390] sm:$0xff]
  %v1406 = vld [vmem:[%s1290 + $0x398] sm:$0xff]
  %v1407 = vld [vmem:[%s1290 + $0x3a0] sm:$0xff]
  %v1408 = vld [vmem:[%s1290 + $0x3a8] sm:$0xff]
  %v1409 = vld [vmem:[%s1290 + $0x3b0] sm:$0xff]
  %v1410 = vld [vmem:[%s1290 + $0x3b8] sm:$0xff]
  %v1411 = vld [vmem:[%s1290 + $0x3c0] sm:$0xff]
  %v1412 = vld [vmem:[%s1290 + $0x3c8] sm:$0xff]
  %v1413 = vld [vmem:[%s1290 + $0x3d0] sm:$0xff]
  %v1414 = vld [vmem:[%s1290 + $0x3d8] sm:$0xff]
  %v1415 = vld [vmem:[%s1290 + $0x3e0] sm:$0xff]
  %v1416 = vld [vmem:[%s1290 + $0x3e8] sm:$0xff]
  %v1417 = vld [vmem:[%s1290 + $0x3f0] sm:$0xff]
  %v1418 = vld [vmem:[%s1290 + $0x3f8] sm:$0xff]
  %v1419 = vld [vmem:[%s1290 + $0x400] sm:$0xff]
  %v1420 = vld [vmem:[%s1290 + $0x408] sm:$0xff]
  %v1421 = vld [vmem:[%s1290 + $0x410] sm:$0xff]
  %v1422 = vld [vmem:[%s1290 + $0x418] sm:$0xff]
  %v1423 = vld [vmem:[%s1290 + $0x420] sm:$0xff]
  %v1424 = vld [vmem:[%s1290 + $0x428] sm:$0xff]
  %v1425 = vld [vmem:[%s1290 + $0x430] sm:$0xff]
  %v1426 = vld [vmem:[%s1290 + $0x438] sm:$0xff]
  %v1427 = vld [vmem:[%s1290 + $0x440] sm:$0xff]
  %v1428 = vld [vmem:[%s1290 + $0x448] sm:$0xff]
  %v1429 = vld [vmem:[%s1290 + $0x450] sm:$0xff]
  %v1430 = vld [vmem:[%s1290 + $0x458] sm:$0xff]
  %v1431 = vld [vmem:[%s1290 + $0x460] sm:$0xff]
  %v1432 = vld [vmem:[%s1290 + $0x468] sm:$0xff]
  %v1433 = vld [vmem:[%s1290 + $0x470] sm:$0xff]
  %v1434 = vld [vmem:[%s1290 + $0x478] sm:$0xff]
  %v1435 = vld [vmem:[%s1290 + $0x480] sm:$0xff]
  %v1436 = vld [vmem:[%s1290 + $0x488] sm:$0xff]
  %v1437 = vld [vmem:[%s1290 + $0x490] sm:$0xff]
  %v1438 = vld [vmem:[%s1290 + $0x498] sm:$0xff]
  %v1439 = vld [vmem:[%s1290 + $0x4a0] sm:$0xff]
  %v1440 = vld [vmem:[%s1290 + $0x4a8] sm:$0xff]
  %v1441 = vld [vmem:[%s1290 + $0x4b0] sm:$0xff]
  %v1442 = vld [vmem:[%s1290 + $0x4b8] sm:$0xff]
  %v1443 = vld [vmem:[%s1290 + $0x4c0] sm:$0xff]
  %v1444 = vld [vmem:[%s1290 + $0x4c8] sm:$0xff]
  %v1445 = vld [vmem:[%s1290 + $0x4d0] sm:$0xff]
  %v1446 = vld [vmem:[%s1290 + $0x4d8] sm:$0xff]
  %v1447 = vld [vmem:[%s1290 + $0x4e0] sm:$0xff]
  %v1448 = vld [vmem:[%s1290 + $0x4e8] sm:$0xff]
  %v1449 = vld [vmem:[%s1290 + $0x4f0] sm:$0xff]
  %v1450 = vld [vmem:[%s1290 + $0x4f8] sm:$0xff]
  %v1451 = vld [vmem:[%s1290 + $0x500] sm:$0xff]
  %v1452 = vld [vmem:[%s1290 + $0x508] sm:$0xff]
  %v1453 = vld [vmem:[%s1290 + $0x510] sm:$0xff]
  %v1454 = vld [vmem:[%s1290 + $0x518] sm:$0xff]
  %v1455 = vld [vmem:[%s1290 + $0x520] sm:$0xff]
  %v1456 = vld [vmem:[%s1290 + $0x528] sm:$0xff]
  %v1457 = vld [vmem:[%s1290 + $0x530] sm:$0xff]
  %v1458 = vld [vmem:[%s1290 + $0x538] sm:$0xff]
  %v1459 = vld [vmem:[%s1290 + $0x540] sm:$0xff]
  %v1460 = vld [vmem:[%s1290 + $0x548] sm:$0xff]
  %v1461 = vld [vmem:[%s1290 + $0x550] sm:$0xff]
  %v1462 = vld [vmem:[%s1290 + $0x558] sm:$0xff]
  %v1463 = vld [vmem:[%s1290 + $0x560] sm:$0xff]
  %v1464 = vld [vmem:[%s1290 + $0x568] sm:$0xff]
  %v1465 = vld [vmem:[%s1290 + $0x570] sm:$0xff]
  %v1466 = vld [vmem:[%s1290 + $0x578] sm:$0xff]
  %v1467 = vld [vmem:[%s1290 + $0x580] sm:$0xff]
  %v1468 = vld [vmem:[%s1290 + $0x588] sm:$0xff]
  %v1469 = vld [vmem:[%s1290 + $0x590] sm:$0xff]
  %v1470 = vld [vmem:[%s1290 + $0x598] sm:$0xff]
  %v1471 = vld [vmem:[%s1290 + $0x5a0] sm:$0xff]
  %v1472 = vld [vmem:[%s1290 + $0x5a8] sm:$0xff]
  %v1473 = vld [vmem:[%s1290 + $0x5b0] sm:$0xff]
  %v1474 = vld [vmem:[%s1290 + $0x5b8] sm:$0xff]
  %v1475 = vunpack.c.l.b16 %v1219
  %v1476 = vunpack.c.h.b16 %v1219
  %v1477 = vunpack.c.l.b16 %v1233
  %v1478 = vunpack.c.h.b16 %v1233
  %v1479 = vunpack.c.l.b16 %v1247
  %v1480 = vunpack.c.h.b16 %v1247
  %v1481 = vunpack.c.l.b16 %v1261
  %v1482 = vunpack.c.h.b16 %v1261
  %v1483 = vunpack.c.l.b16 %v1275
  %v1484 = vunpack.c.h.b16 %v1275
  %v1485 = vunpack.c.l.b16 %v1289
  %v1486 = vunpack.c.h.b16 %v1289
  %v1487 = vpack.c.b16 %v1481, %v1475
  %v1488 = vpack.c.b16 %v1482, %v1476
  %v1489 = vpack.c.b16 %v1483, %v1477
  %v1490 = vpack.c.b16 %v1484, %v1478
  %v1491 = vpack.c.b16 %v1485, %v1479
  %v1492 = vpack.c.b16 %v1486, %v1480
  %v1682 = vunpack.c.l.b16 %v1291
  %v1683 = vunpack.c.h.b16 %v1291
  %v1684 = vunpack.c.l.b16 %v1292
  %v1685 = vunpack.c.h.b16 %v1292
  %v1686 = vunpack.c.l.b16 %v1293
  %v1687 = vunpack.c.h.b16 %v1293
  %v1688 = vunpack.c.l.b16 %v1294
  %v1689 = vunpack.c.h.b16 %v1294
  %v1690 = vunpack.c.l.b16 %v1295
  %v1691 = vunpack.c.h.b16 %v1295
  %v1692 = vunpack.c.l.b16 %v1296
  %v1693 = vunpack.c.h.b16 %v1296
  %v1694 = vunpack.c.l.b16 %v1297
  %v1695 = vunpack.c.h.b16 %v1297
  %v1696 = vunpack.c.l.b16 %v1298
  %v1697 = vunpack.c.h.b16 %v1298
  %v1698 = vunpack.c.l.b16 %v1299
  %v1699 = vunpack.c.h.b16 %v1299
  %v1700 = vunpack.c.l.b16 %v1300
  %v1701 = vunpack.c.h.b16 %v1300
  %v1702 = vunpack.c.l.b16 %v1301
  %v1703 = vunpack.c.h.b16 %v1301
  %v1704 = vunpack.c.l.b16 %v1302
  %v1705 = vunpack.c.h.b16 %v1302
  %v1706 = vunpack.c.l.b16 %v1303
  %v1707 = vunpack.c.h.b16 %v1303
  %v1708 = vunpack.c.l.b16 %v1304
  %v1709 = vunpack.c.h.b16 %v1304
  %v1710 = vunpack.c.l.b16 %v1305
  %v1711 = vunpack.c.h.b16 %v1305
  %v1712 = vunpack.c.l.b16 %v1306
  %v1713 = vunpack.c.h.b16 %v1306
  %v1714 = vunpack.c.l.b16 %v1307
  %v1715 = vunpack.c.h.b16 %v1307
  %v1716 = vunpack.c.l.b16 %v1308
  %v1717 = vunpack.c.h.b16 %v1308
  %v1718 = vunpack.c.l.b16 %v1309
  %v1719 = vunpack.c.h.b16 %v1309
  %v1720 = vunpack.c.l.b16 %v1310
  %v1721 = vunpack.c.h.b16 %v1310
  %v1722 = vunpack.c.l.b16 %v1311
  %v1723 = vunpack.c.h.b16 %v1311
  %v1724 = vunpack.c.l.b16 %v1312
  %v1725 = vunpack.c.h.b16 %v1312
  %v1726 = vunpack.c.l.b16 %v1313
  %v1727 = vunpack.c.h.b16 %v1313
  %v1728 = vunpack.c.l.b16 %v1314
  %v1729 = vunpack.c.h.b16 %v1314
  %v1730 = vunpack.c.l.b16 %v1315
  %v1731 = vunpack.c.h.b16 %v1315
  %v1732 = vunpack.c.l.b16 %v1316
  %v1733 = vunpack.c.h.b16 %v1316
  %v1734 = vunpack.c.l.b16 %v1317
  %v1735 = vunpack.c.h.b16 %v1317
  %v1736 = vunpack.c.l.b16 %v1318
  %v1737 = vunpack.c.h.b16 %v1318
  %v1738 = vunpack.c.l.b16 %v1319
  %v1739 = vunpack.c.h.b16 %v1319
  %v1740 = vunpack.c.l.b16 %v1320
  %v1741 = vunpack.c.h.b16 %v1320
  %v1742 = vunpack.c.l.b16 %v1321
  %v1743 = vunpack.c.h.b16 %v1321
  %v1744 = vunpack.c.l.b16 %v1322
  %v1745 = vunpack.c.h.b16 %v1322
  %v1746 = vunpack.c.l.b16 %v1323
  %v1747 = vunpack.c.h.b16 %v1323
  %v1748 = vunpack.c.l.b16 %v1324
  %v1749 = vunpack.c.h.b16 %v1324
  %v1750 = vunpack.c.l.b16 %v1325
  %v1751 = vunpack.c.h.b16 %v1325
  %v1752 = vunpack.c.l.b16 %v1326
  %v1753 = vunpack.c.h.b16 %v1326
  %v1754 = vunpack.c.l.b16 %v1327
  %v1755 = vunpack.c.h.b16 %v1327
  %v1756 = vunpack.c.l.b16 %v1328
  %v1757 = vunpack.c.h.b16 %v1328
  %v1758 = vunpack.c.l.b16 %v1329
  %v1759 = vunpack.c.h.b16 %v1329
  %v1760 = vunpack.c.l.b16 %v1330
  %v1761 = vunpack.c.h.b16 %v1330
  %v1762 = vunpack.c.l.b16 %v1331
  %v1763 = vunpack.c.h.b16 %v1331
  %v1764 = vunpack.c.l.b16 %v1332
  %v1765 = vunpack.c.h.b16 %v1332
  %v1766 = vunpack.c.l.b16 %v1333
  %v1767 = vunpack.c.h.b16 %v1333
  %v1768 = vunpack.c.l.b16 %v1334
  %v1769 = vunpack.c.h.b16 %v1334
  %v1770 = vunpack.c.l.b16 %v1335
  %v1771 = vunpack.c.h.b16 %v1335
  %v1772 = vunpack.c.l.b16 %v1336
  %v1773 = vunpack.c.h.b16 %v1336
  %v1774 = vunpack.c.l.b16 %v1337
  %v1775 = vunpack.c.h.b16 %v1337
  %v1776 = vunpack.c.l.b16 %v1338
  %v1777 = vunpack.c.h.b16 %v1338
  %v1778 = vunpack.c.l.b16 %v1339
  %v1779 = vunpack.c.h.b16 %v1339
  %v1780 = vunpack.c.l.b16 %v1340
  %v1781 = vunpack.c.h.b16 %v1340
  %v1782 = vunpack.c.l.b16 %v1341
  %v1783 = vunpack.c.h.b16 %v1341
  %v1784 = vunpack.c.l.b16 %v1342
  %v1785 = vunpack.c.h.b16 %v1342
  %v1786 = vunpack.c.l.b16 %v1343
  %v1787 = vunpack.c.h.b16 %v1343
  %v1788 = vunpack.c.l.b16 %v1344
  %v1789 = vunpack.c.h.b16 %v1344
  %v1790 = vunpack.c.l.b16 %v1345
  %v1791 = vunpack.c.h.b16 %v1345
  %v1792 = vunpack.c.l.b16 %v1346
  %v1793 = vunpack.c.h.b16 %v1346
  %v1794 = vunpack.c.l.b16 %v1347
  %v1795 = vunpack.c.h.b16 %v1347
  %v1796 = vunpack.c.l.b16 %v1348
  %v1797 = vunpack.c.h.b16 %v1348
  %v1798 = vunpack.c.l.b16 %v1349
  %v1799 = vunpack.c.h.b16 %v1349
  %v1800 = vunpack.c.l.b16 %v1350
  %v1801 = vunpack.c.h.b16 %v1350
  %v1802 = vunpack.c.l.b16 %v1351
  %v1803 = vunpack.c.h.b16 %v1351
  %v1804 = vunpack.c.l.b16 %v1352
  %v1805 = vunpack.c.h.b16 %v1352
  %v1806 = vunpack.c.l.b16 %v1353
  %v1807 = vunpack.c.h.b16 %v1353
  %v1808 = vunpack.c.l.b16 %v1354
  %v1809 = vunpack.c.h.b16 %v1354
  %v1810 = vunpack.c.l.b16 %v1355
  %v1811 = vunpack.c.h.b16 %v1355
  %v1812 = vunpack.c.l.b16 %v1356
  %v1813 = vunpack.c.h.b16 %v1356
  %v1814 = vunpack.c.l.b16 %v1357
  %v1815 = vunpack.c.h.b16 %v1357
  %v1816 = vunpack.c.l.b16 %v1358
  %v1817 = vunpack.c.h.b16 %v1358
  %v1818 = vunpack.c.l.b16 %v1359
  %v1819 = vunpack.c.h.b16 %v1359
  %v1820 = vunpack.c.l.b16 %v1360
  %v1821 = vunpack.c.h.b16 %v1360
  %v1822 = vunpack.c.l.b16 %v1361
  %v1823 = vunpack.c.h.b16 %v1361
  %v1824 = vunpack.c.l.b16 %v1362
  %v1825 = vunpack.c.h.b16 %v1362
  %v1826 = vunpack.c.l.b16 %v1363
  %v1827 = vunpack.c.h.b16 %v1363
  %v1828 = vunpack.c.l.b16 %v1364
  %v1829 = vunpack.c.h.b16 %v1364
  %v1830 = vunpack.c.l.b16 %v1365
  %v1831 = vunpack.c.h.b16 %v1365
  %v1832 = vunpack.c.l.b16 %v1366
  %v1833 = vunpack.c.h.b16 %v1366
  %v1834 = vunpack.c.l.b16 %v1367
  %v1835 = vunpack.c.h.b16 %v1367
  %v1836 = vunpack.c.l.b16 %v1368
  %v1837 = vunpack.c.h.b16 %v1368
  %v1838 = vunpack.c.l.b16 %v1369
  %v1839 = vunpack.c.h.b16 %v1369
  %v1840 = vunpack.c.l.b16 %v1370
  %v1841 = vunpack.c.h.b16 %v1370
  %v1842 = vunpack.c.l.b16 %v1371
  %v1843 = vunpack.c.h.b16 %v1371
  %v1844 = vunpack.c.l.b16 %v1372
  %v1845 = vunpack.c.h.b16 %v1372
  %v1846 = vunpack.c.l.b16 %v1373
  %v1847 = vunpack.c.h.b16 %v1373
  %v1848 = vunpack.c.l.b16 %v1374
  %v1849 = vunpack.c.h.b16 %v1374
  %v1850 = vunpack.c.l.b16 %v1375
  %v1851 = vunpack.c.h.b16 %v1375
  %v1852 = vunpack.c.l.b16 %v1376
  %v1853 = vunpack.c.h.b16 %v1376
  %v1854 = vunpack.c.l.b16 %v1377
  %v1855 = vunpack.c.h.b16 %v1377
  %v1856 = vunpack.c.l.b16 %v1378
  %v1857 = vunpack.c.h.b16 %v1378
  %v1858 = vunpack.c.l.b16 %v1379
  %v1859 = vunpack.c.h.b16 %v1379
  %v1860 = vunpack.c.l.b16 %v1380
  %v1861 = vunpack.c.h.b16 %v1380
  %v1862 = vunpack.c.l.b16 %v1381
  %v1863 = vunpack.c.h.b16 %v1381
  %v1864 = vunpack.c.l.b16 %v1382
  %v1865 = vunpack.c.h.b16 %v1382
  %v1866 = vunpack.c.l.b16 %v1383
  %v1867 = vunpack.c.h.b16 %v1383
  %v1868 = vunpack.c.l.b16 %v1384
  %v1869 = vunpack.c.h.b16 %v1384
  %v1870 = vunpack.c.l.b16 %v1385
  %v1871 = vunpack.c.h.b16 %v1385
  %v1872 = vunpack.c.l.b16 %v1386
  %v1873 = vunpack.c.h.b16 %v1386
  %v1874 = vunpack.c.l.b16 %v1387
  %v1875 = vunpack.c.h.b16 %v1387
  %v1876 = vunpack.c.l.b16 %v1388
  %v1877 = vunpack.c.h.b16 %v1388
  %v1878 = vunpack.c.l.b16 %v1389
  %v1879 = vunpack.c.h.b16 %v1389
  %v1880 = vunpack.c.l.b16 %v1390
  %v1881 = vunpack.c.h.b16 %v1390
  %v1882 = vunpack.c.l.b16 %v1391
  %v1883 = vunpack.c.h.b16 %v1391
  %v1884 = vunpack.c.l.b16 %v1392
  %v1885 = vunpack.c.h.b16 %v1392
  %v1886 = vunpack.c.l.b16 %v1393
  %v1887 = vunpack.c.h.b16 %v1393
  %v1888 = vunpack.c.l.b16 %v1394
  %v1889 = vunpack.c.h.b16 %v1394
  %v1890 = vunpack.c.l.b16 %v1395
  %v1891 = vunpack.c.h.b16 %v1395
  %v1892 = vunpack.c.l.b16 %v1396
  %v1893 = vunpack.c.h.b16 %v1396
  %v1894 = vunpack.c.l.b16 %v1397
  %v1895 = vunpack.c.h.b16 %v1397
  %v1896 = vunpack.c.l.b16 %v1398
  %v1897 = vunpack.c.h.b16 %v1398
  %v1898 = vunpack.c.l.b16 %v1399
  %v1899 = vunpack.c.h.b16 %v1399
  %v1900 = vunpack.c.l.b16 %v1400
  %v1901 = vunpack.c.h.b16 %v1400
  %v1902 = vunpack.c.l.b16 %v1401
  %v1903 = vunpack.c.h.b16 %v1401
  %v1904 = vunpack.c.l.b16 %v1402
  %v1905 = vunpack.c.h.b16 %v1402
  %v1906 = vunpack.c.l.b16 %v1403
  %v1907 = vunpack.c.h.b16 %v1403
  %v1908 = vunpack.c.l.b16 %v1404
  %v1909 = vunpack.c.h.b16 %v1404
  %v1910 = vunpack.c.l.b16 %v1405
  %v1911 = vunpack.c.h.b16 %v1405
  %v1912 = vunpack.c.l.b16 %v1406
  %v1913 = vunpack.c.h.b16 %v1406
  %v1914 = vunpack.c.l.b16 %v1407
  %v1915 = vunpack.c.h.b16 %v1407
  %v1916 = vunpack.c.l.b16 %v1408
  %v1917 = vunpack.c.h.b16 %v1408
  %v1918 = vunpack.c.l.b16 %v1409
  %v1919 = vunpack.c.h.b16 %v1409
  %v1920 = vunpack.c.l.b16 %v1410
  %v1921 = vunpack.c.h.b16 %v1410
  %v1922 = vunpack.c.l.b16 %v1411
  %v1923 = vunpack.c.h.b16 %v1411
  %v1924 = vunpack.c.l.b16 %v1412
  %v1925 = vunpack.c.h.b16 %v1412
  %v1926 = vunpack.c.l.b16 %v1413
  %v1927 = vunpack.c.h.b16 %v1413
  %v1928 = vunpack.c.l.b16 %v1414
  %v1929 = vunpack.c.h.b16 %v1414
  %v1930 = vunpack.c.l.b16 %v1415
  %v1931 = vunpack.c.h.b16 %v1415
  %v1932 = vunpack.c.l.b16 %v1416
  %v1933 = vunpack.c.h.b16 %v1416
  %v1934 = vunpack.c.l.b16 %v1417
  %v1935 = vunpack.c.h.b16 %v1417
  %v1936 = vunpack.c.l.b16 %v1418
  %v1937 = vunpack.c.h.b16 %v1418
  %v1938 = vunpack.c.l.b16 %v1419
  %v1939 = vunpack.c.h.b16 %v1419
  %v1940 = vunpack.c.l.b16 %v1420
  %v1941 = vunpack.c.h.b16 %v1420
  %v1942 = vunpack.c.l.b16 %v1421
  %v1943 = vunpack.c.h.b16 %v1421
  %v1944 = vunpack.c.l.b16 %v1422
  %v1945 = vunpack.c.h.b16 %v1422
  %v1946 = vunpack.c.l.b16 %v1423
  %v1947 = vunpack.c.h.b16 %v1423
  %v1948 = vunpack.c.l.b16 %v1424
  %v1949 = vunpack.c.h.b16 %v1424
  %v1950 = vunpack.c.l.b16 %v1425
  %v1951 = vunpack.c.h.b16 %v1425
  %v1952 = vunpack.c.l.b16 %v1426
  %v1953 = vunpack.c.h.b16 %v1426
  %v1954 = vunpack.c.l.b16 %v1427
  %v1955 = vunpack.c.h.b16 %v1427
  %v1956 = vunpack.c.l.b16 %v1428
  %v1957 = vunpack.c.h.b16 %v1428
  %v1958 = vunpack.c.l.b16 %v1429
  %v1959 = vunpack.c.h.b16 %v1429
  %v1960 = vunpack.c.l.b16 %v1430
  %v1961 = vunpack.c.h.b16 %v1430
  %v1962 = vunpack.c.l.b16 %v1431
  %v1963 = vunpack.c.h.b16 %v1431
  %v1964 = vunpack.c.l.b16 %v1432
  %v1965 = vunpack.c.h.b16 %v1432
  %v1966 = vunpack.c.l.b16 %v1433
  %v1967 = vunpack.c.h.b16 %v1433
  %v1968 = vunpack.c.l.b16 %v1434
  %v1969 = vunpack.c.h.b16 %v1434
  %v1970 = vunpack.c.l.b16 %v1435
  %v1971 = vunpack.c.h.b16 %v1435
  %v1972 = vunpack.c.l.b16 %v1436
  %v1973 = vunpack.c.h.b16 %v1436
  %v1974 = vunpack.c.l.b16 %v1437
  %v1975 = vunpack.c.h.b16 %v1437
  %v1976 = vunpack.c.l.b16 %v1438
  %v1977 = vunpack.c.h.b16 %v1438
  %v1978 = vunpack.c.l.b16 %v1439
  %v1979 = vunpack.c.h.b16 %v1439
  %v1980 = vunpack.c.l.b16 %v1440
  %v1981 = vunpack.c.h.b16 %v1440
  %v1982 = vunpack.c.l.b16 %v1441
  %v1983 = vunpack.c.h.b16 %v1441
  %v1984 = vunpack.c.l.b16 %v1442
  %v1985 = vunpack.c.h.b16 %v1442
  %v1986 = vunpack.c.l.b16 %v1443
  %v1987 = vunpack.c.h.b16 %v1443
  %v1988 = vunpack.c.l.b16 %v1444
  %v1989 = vunpack.c.h.b16 %v1444
  %v1990 = vunpack.c.l.b16 %v1445
  %v1991 = vunpack.c.h.b16 %v1445
  %v1992 = vunpack.c.l.b16 %v1446
  %v1993 = vunpack.c.h.b16 %v1446
  %v1994 = vunpack.c.l.b16 %v1447
  %v1995 = vunpack.c.h.b16 %v1447
  %v1996 = vunpack.c.l.b16 %v1448
  %v1997 = vunpack.c.h.b16 %v1448
  %v1998 = vunpack.c.l.b16 %v1449
  %v1999 = vunpack.c.h.b16 %v1449
  %v2000 = vunpack.c.l.b16 %v1450
  %v2001 = vunpack.c.h.b16 %v1450
  %v2002 = vunpack.c.l.b16 %v1451
  %v2003 = vunpack.c.h.b16 %v1451
  %v2004 = vunpack.c.l.b16 %v1452
  %v2005 = vunpack.c.h.b16 %v1452
  %v2006 = vunpack.c.l.b16 %v1453
  %v2007 = vunpack.c.h.b16 %v1453
  %v2008 = vunpack.c.l.b16 %v1454
  %v2009 = vunpack.c.h.b16 %v1454
  %v2010 = vunpack.c.l.b16 %v1455
  %v2011 = vunpack.c.h.b16 %v1455
  %v2012 = vunpack.c.l.b16 %v1456
  %v2013 = vunpack.c.h.b16 %v1456
  %v2014 = vunpack.c.l.b16 %v1457
  %v2015 = vunpack.c.h.b16 %v1457
  %v2016 = vunpack.c.l.b16 %v1458
  %v2017 = vunpack.c.h.b16 %v1458
  %v2018 = vunpack.c.l.b16 %v1459
  %v2019 = vunpack.c.h.b16 %v1459
  %v2020 = vunpack.c.l.b16 %v1460
  %v2021 = vunpack.c.h.b16 %v1460
  %v2022 = vunpack.c.l.b16 %v1461
  %v2023 = vunpack.c.h.b16 %v1461
  %v2024 = vunpack.c.l.b16 %v1462
  %v2025 = vunpack.c.h.b16 %v1462
  %v2026 = vunpack.c.l.b16 %v1463
  %v2027 = vunpack.c.h.b16 %v1463
  %v2028 = vunpack.c.l.b16 %v1464
  %v2029 = vunpack.c.h.b16 %v1464
  %v2030 = vunpack.c.l.b16 %v1465
  %v2031 = vunpack.c.h.b16 %v1465
  %v2032 = vunpack.c.l.b16 %v1466
  %v2033 = vunpack.c.h.b16 %v1466
  %v2034 = vunpack.c.l.b16 %v1467
  %v2035 = vunpack.c.h.b16 %v1467
  %v2036 = vunpack.c.l.b16 %v1468
  %v2037 = vunpack.c.h.b16 %v1468
  %v2038 = vunpack.c.l.b16 %v1469
  %v2039 = vunpack.c.h.b16 %v1469
  %v2040 = vunpack.c.l.b16 %v1470
  %v2041 = vunpack.c.h.b16 %v1470
  %v2042 = vunpack.c.l.b16 %v1471
  %v2043 = vunpack.c.h.b16 %v1471
  %v2044 = vunpack.c.l.b16 %v1472
  %v2045 = vunpack.c.h.b16 %v1472
  %v2046 = vunpack.c.l.b16 %v1473
  %v2047 = vunpack.c.h.b16 %v1473
  %v2048 = vunpack.c.l.b16 %v1474
  %v2049 = vunpack.c.h.b16 %v1474
  %v2050 = vpack.c.b16 %v1686, %v1682
  %v2051 = vpack.c.b16 %v1687, %v1683
  %v2052 = vpack.c.b16 %v1688, %v1684
  %v2053 = vpack.c.b16 %v1689, %v1685
  %v2054 = vpack.c.b16 %v1694, %v1690
  %v2055 = vpack.c.b16 %v1695, %v1691
  %v2056 = vpack.c.b16 %v1696, %v1692
  %v2057 = vpack.c.b16 %v1697, %v1693
  %v2058 = vpack.c.b16 %v1702, %v1698
  %v2059 = vpack.c.b16 %v1703, %v1699
  %v2060 = vpack.c.b16 %v1704, %v1700
  %v2061 = vpack.c.b16 %v1705, %v1701
  %v2062 = vpack.c.b16 %v1710, %v1706
  %v2063 = vpack.c.b16 %v1711, %v1707
  %v2064 = vpack.c.b16 %v1712, %v1708
  %v2065 = vpack.c.b16 %v1713, %v1709
  %v2066 = vpack.c.b16 %v1718, %v1714
  %v2067 = vpack.c.b16 %v1719, %v1715
  %v2068 = vpack.c.b16 %v1720, %v1716
  %v2069 = vpack.c.b16 %v1721, %v1717
  %v2070 = vpack.c.b16 %v1726, %v1722
  %v2071 = vpack.c.b16 %v1727, %v1723
  %v2072 = vpack.c.b16 %v1728, %v1724
  %v2073 = vpack.c.b16 %v1729, %v1725
  %v2074 = vpack.c.b16 %v1734, %v1730
  %v2075 = vpack.c.b16 %v1735, %v1731
  %v2076 = vpack.c.b16 %v1736, %v1732
  %v2077 = vpack.c.b16 %v1737, %v1733
  %v2078 = vpack.c.b16 %v1742, %v1738
  %v2079 = vpack.c.b16 %v1743, %v1739
  %v2080 = vpack.c.b16 %v1744, %v1740
  %v2081 = vpack.c.b16 %v1745, %v1741
  %v2082 = vpack.c.b16 %v1750, %v1746
  %v2083 = vpack.c.b16 %v1751, %v1747
  %v2084 = vpack.c.b16 %v1752, %v1748
  %v2085 = vpack.c.b16 %v1753, %v1749
  %v2086 = vpack.c.b16 %v1758, %v1754
  %v2087 = vpack.c.b16 %v1759, %v1755
  %v2088 = vpack.c.b16 %v1760, %v1756
  %v2089 = vpack.c.b16 %v1761, %v1757
  %v2090 = vpack.c.b16 %v1766, %v1762
  %v2091 = vpack.c.b16 %v1767, %v1763
  %v2092 = vpack.c.b16 %v1768, %v1764
  %v2093 = vpack.c.b16 %v1769, %v1765
  %v2094 = vpack.c.b16 %v1774, %v1770
  %v2095 = vpack.c.b16 %v1775, %v1771
  %v2096 = vpack.c.b16 %v1776, %v1772
  %v2097 = vpack.c.b16 %v1777, %v1773
  %v2098 = vpack.c.b16 %v1782, %v1778
  %v2099 = vpack.c.b16 %v1783, %v1779
  %v2100 = vpack.c.b16 %v1784, %v1780
  %v2101 = vpack.c.b16 %v1785, %v1781
  %v2102 = vpack.c.b16 %v1790, %v1786
  %v2103 = vpack.c.b16 %v1791, %v1787
  %v2104 = vpack.c.b16 %v1792, %v1788
  %v2105 = vpack.c.b16 %v1793, %v1789
  %v2106 = vpack.c.b16 %v1798, %v1794
  %v2107 = vpack.c.b16 %v1799, %v1795
  %v2108 = vpack.c.b16 %v1800, %v1796
  %v2109 = vpack.c.b16 %v1801, %v1797
  %v2110 = vpack.c.b16 %v1806, %v1802
  %v2111 = vpack.c.b16 %v1807, %v1803
  %v2112 = vpack.c.b16 %v1808, %v1804
  %v2113 = vpack.c.b16 %v1809, %v1805
  %v2114 = vpack.c.b16 %v1814, %v1810
  %v2115 = vpack.c.b16 %v1815, %v1811
  %v2116 = vpack.c.b16 %v1816, %v1812
  %v2117 = vpack.c.b16 %v1817, %v1813
  %v2118 = vpack.c.b16 %v1822, %v1818
  %v2119 = vpack.c.b16 %v1823, %v1819
  %v2120 = vpack.c.b16 %v1824, %v1820
  %v2121 = vpack.c.b16 %v1825, %v1821
  %v2122 = vpack.c.b16 %v1830, %v1826
  %v2123 = vpack.c.b16 %v1831, %v1827
  %v2124 = vpack.c.b16 %v1832, %v1828
  %v2125 = vpack.c.b16 %v1833, %v1829
  %v2126 = vpack.c.b16 %v1838, %v1834
  %v2127 = vpack.c.b16 %v1839, %v1835
  %v2128 = vpack.c.b16 %v1840, %v1836
  %v2129 = vpack.c.b16 %v1841, %v1837
  %v2130 = vpack.c.b16 %v1846, %v1842
  %v2131 = vpack.c.b16 %v1847, %v1843
  %v2132 = vpack.c.b16 %v1848, %v1844
  %v2133 = vpack.c.b16 %v1849, %v1845
  %v2134 = vpack.c.b16 %v1854, %v1850
  %v2135 = vpack.c.b16 %v1855, %v1851
  %v2136 = vpack.c.b16 %v1856, %v1852
  %v2137 = vpack.c.b16 %v1857, %v1853
  %v2138 = vpack.c.b16 %v1862, %v1858
  %v2139 = vpack.c.b16 %v1863, %v1859
  %v2140 = vpack.c.b16 %v1864, %v1860
  %v2141 = vpack.c.b16 %v1865, %v1861
  %v2142 = vpack.c.b16 %v1870, %v1866
  %v2143 = vpack.c.b16 %v1871, %v1867
  %v2144 = vpack.c.b16 %v1872, %v1868
  %v2145 = vpack.c.b16 %v1873, %v1869
  %v2146 = vpack.c.b16 %v1878, %v1874
  %v2147 = vpack.c.b16 %v1879, %v1875
  %v2148 = vpack.c.b16 %v1880, %v1876
  %v2149 = vpack.c.b16 %v1881, %v1877
  %v2150 = vpack.c.b16 %v1886, %v1882
  %v2151 = vpack.c.b16 %v1887, %v1883
  %v2152 = vpack.c.b16 %v1888, %v1884
  %v2153 = vpack.c.b16 %v1889, %v1885
  %v2154 = vpack.c.b16 %v1894, %v1890
  %v2155 = vpack.c.b16 %v1895, %v1891
  %v2156 = vpack.c.b16 %v1896, %v1892
  %v2157 = vpack.c.b16 %v1897, %v1893
  %v2158 = vpack.c.b16 %v1902, %v1898
  %v2159 = vpack.c.b16 %v1903, %v1899
  %v2160 = vpack.c.b16 %v1904, %v1900
  %v2161 = vpack.c.b16 %v1905, %v1901
  %v2162 = vpack.c.b16 %v1910, %v1906
  %v2163 = vpack.c.b16 %v1911, %v1907
  %v2164 = vpack.c.b16 %v1912, %v1908
  %v2165 = vpack.c.b16 %v1913, %v1909
  %v2166 = vpack.c.b16 %v1918, %v1914
  %v2167 = vpack.c.b16 %v1919, %v1915
  %v2168 = vpack.c.b16 %v1920, %v1916
  %v2169 = vpack.c.b16 %v1921, %v1917
  %v2170 = vpack.c.b16 %v1926, %v1922
  %v2171 = vpack.c.b16 %v1927, %v1923
  %v2172 = vpack.c.b16 %v1928, %v1924
  %v2173 = vpack.c.b16 %v1929, %v1925
  %v2174 = vpack.c.b16 %v1934, %v1930
  %v2175 = vpack.c.b16 %v1935, %v1931
  %v2176 = vpack.c.b16 %v1936, %v1932
  %v2177 = vpack.c.b16 %v1937, %v1933
  %v2178 = vpack.c.b16 %v1942, %v1938
  %v2179 = vpack.c.b16 %v1943, %v1939
  %v2180 = vpack.c.b16 %v1944, %v1940
  %v2181 = vpack.c.b16 %v1945, %v1941
  %v2182 = vpack.c.b16 %v1950, %v1946
  %v2183 = vpack.c.b16 %v1951, %v1947
  %v2184 = vpack.c.b16 %v1952, %v1948
  %v2185 = vpack.c.b16 %v1953, %v1949
  %v2186 = vpack.c.b16 %v1958, %v1954
  %v2187 = vpack.c.b16 %v1959, %v1955
  %v2188 = vpack.c.b16 %v1960, %v1956
  %v2189 = vpack.c.b16 %v1961, %v1957
  %v2190 = vpack.c.b16 %v1966, %v1962
  %v2191 = vpack.c.b16 %v1967, %v1963
  %v2192 = vpack.c.b16 %v1968, %v1964
  %v2193 = vpack.c.b16 %v1969, %v1965
  %v2194 = vpack.c.b16 %v1974, %v1970
  %v2195 = vpack.c.b16 %v1975, %v1971
  %v2196 = vpack.c.b16 %v1976, %v1972
  %v2197 = vpack.c.b16 %v1977, %v1973
  %v2198 = vpack.c.b16 %v1982, %v1978
  %v2199 = vpack.c.b16 %v1983, %v1979
  %v2200 = vpack.c.b16 %v1984, %v1980
  %v2201 = vpack.c.b16 %v1985, %v1981
  %v2202 = vpack.c.b16 %v1990, %v1986
  %v2203 = vpack.c.b16 %v1991, %v1987
  %v2204 = vpack.c.b16 %v1992, %v1988
  %v2205 = vpack.c.b16 %v1993, %v1989
  %v2206 = vpack.c.b16 %v1998, %v1994
  %v2207 = vpack.c.b16 %v1999, %v1995
  %v2208 = vpack.c.b16 %v2000, %v1996
  %v2209 = vpack.c.b16 %v2001, %v1997
  %v2210 = vpack.c.b16 %v2006, %v2002
  %v2211 = vpack.c.b16 %v2007, %v2003
  %v2212 = vpack.c.b16 %v2008, %v2004
  %v2213 = vpack.c.b16 %v2009, %v2005
  %v2214 = vpack.c.b16 %v2014, %v2010
  %v2215 = vpack.c.b16 %v2015, %v2011
  %v2216 = vpack.c.b16 %v2016, %v2012
  %v2217 = vpack.c.b16 %v2017, %v2013
  %v2218 = vpack.c.b16 %v2022, %v2018
  %v2219 = vpack.c.b16 %v2023, %v2019
  %v2220 = vpack.c.b16 %v2024, %v2020
  %v2221 = vpack.c.b16 %v2025, %v2021
  %v2222 = vpack.c.b16 %v2030, %v2026
  %v2223 = vpack.c.b16 %v2031, %v2027
  %v2224 = vpack.c.b16 %v2032, %v2028
  %v2225 = vpack.c.b16 %v2033, %v2029
  %v2226 = vpack.c.b16 %v2038, %v2034
  %v2227 = vpack.c.b16 %v2039, %v2035
  %v2228 = vpack.c.b16 %v2040, %v2036
  %v2229 = vpack.c.b16 %v2041, %v2037
  %v2230 = vpack.c.b16 %v2046, %v2042
  %v2231 = vpack.c.b16 %v2047, %v2043
  %v2232 = vpack.c.b16 %v2048, %v2044
  %v2233 = vpack.c.b16 %v2049, %v2045
  %v2419 = vsel %vm876, %v1492, 0
  %2421 = vmatpush.bf16.msra.mxu0 %v2078
  %2422 = vmatpush.bf16.msra.mxu0 %v2074
  %2423 = vmatpush.bf16.msra.mxu0 %v2070
  %2424 = vmatpush.bf16.msra.mxu0 %v2066
  %2425 = vmatpush.bf16.msra.mxu0 %v2062
  %2426 = vmatpush.bf16.msra.mxu0 %v2058
  %2427 = vmatpush.bf16.msra.mxu0 %v2054
  %2428 = vmatpush.bf16.msra.mxu0 %v2050
  %2429 = vmatmul.bf16.gmra.mxu0 %v1487
  %v2430 = vpop.f32.mrf.mxu0
  %v2431 = vadd.f32 0.0, %v2430
  %v2432 = vpop.f32.mrf.mxu0
  %v2433 = vadd.f32 0.0, %v2432
  %2434 = vdwg.mxu0
  %2435 = vmatpush.bf16.msra.mxu0 %v2110
  %2436 = vmatpush.bf16.msra.mxu0 %v2106
  %2437 = vmatpush.bf16.msra.mxu0 %v2102
  %2438 = vmatpush.bf16.msra.mxu0 %v2098
  %2439 = vmatpush.bf16.msra.mxu0 %v2094
  %2440 = vmatpush.bf16.msra.mxu0 %v2090
  %2441 = vmatpush.bf16.msra.mxu0 %v2086
  %2442 = vmatpush.bf16.msra.mxu0 %v2082
  %2443 = vmatmul.bf16.gmra.mxu0 %v1488
  %v2444 = vpop.f32.mrf.mxu0
  %v2445 = vadd.f32 %v2431, %v2444
  %v2446 = vpop.f32.mrf.mxu0
  %v2447 = vadd.f32 %v2433, %v2446
  %2448 = vdwg.mxu0
  %2449 = vmatpush.bf16.msra.mxu0 %v2142
  %2450 = vmatpush.bf16.msra.mxu0 %v2138
  %2451 = vmatpush.bf16.msra.mxu0 %v2134
  %2452 = vmatpush.bf16.msra.mxu0 %v2130
  %2453 = vmatpush.bf16.msra.mxu0 %v2126
  %2454 = vmatpush.bf16.msra.mxu0 %v2122
  %2455 = vmatpush.bf16.msra.mxu0 %v2118
  %2456 = vmatpush.bf16.msra.mxu0 %v2114
  %2457 = vmatmul.bf16.gmra.mxu0 %v1489
  %v2458 = vpop.f32.mrf.mxu0
  %v2459 = vadd.f32 %v2445, %v2458
  %v2460 = vpop.f32.mrf.mxu0
  %v2461 = vadd.f32 %v2447, %v2460
  %2462 = vdwg.mxu0
  %2463 = vmatpush.bf16.msra.mxu0 %v2174
  %2464 = vmatpush.bf16.msra.mxu0 %v2170
  %2465 = vmatpush.bf16.msra.mxu0 %v2166
  %2466 = vmatpush.bf16.msra.mxu0 %v2162
  %2467 = vmatpush.bf16.msra.mxu0 %v2158
  %2468 = vmatpush.bf16.msra.mxu0 %v2154
  %2469 = vmatpush.bf16.msra.mxu0 %v2150
  %2470 = vmatpush.bf16.msra.mxu0 %v2146
  %2471 = vmatmul.bf16.gmra.mxu0 %v1490
  %v2472 = vpop.f32.mrf.mxu0
  %v2473 = vadd.f32 %v2459, %v2472
  %v2474 = vpop.f32.mrf.mxu0
  %v2475 = vadd.f32 %v2461, %v2474
  %2476 = vdwg.mxu0
  %2477 = vmatpush.bf16.msra.mxu0 %v2206
  %2478 = vmatpush.bf16.msra.mxu0 %v2202
  %2479 = vmatpush.bf16.msra.mxu0 %v2198
  %2480 = vmatpush.bf16.msra.mxu0 %v2194
  %2481 = vmatpush.bf16.msra.mxu0 %v2190
  %2482 = vmatpush.bf16.msra.mxu0 %v2186
  %2483 = vmatpush.bf16.msra.mxu0 %v2182
  %2484 = vmatpush.bf16.msra.mxu0 %v2178
  %2485 = vmatmul.bf16.gmra.mxu0 %v1491
  %v2486 = vpop.f32.mrf.mxu0
  %v2487 = vadd.f32 %v2473, %v2486
  %v2488 = vpop.f32.mrf.mxu0
  %v2489 = vadd.f32 %v2475, %v2488
  %2490 = vdwg.mxu0
  %2491 = vmatpush.bf16.msra.mxu0 0
  %2492 = vmatpush.bf16.msra.mxu0 0
  %2493 = vmatpush.bf16.msra.mxu0 %v2230
  %2494 = vmatpush.bf16.msra.mxu0 %v2226
  %2495 = vmatpush.bf16.msra.mxu0 %v2222
  %2496 = vmatpush.bf16.msra.mxu0 %v2218
  %2497 = vmatpush.bf16.msra.mxu0 %v2214
  %2498 = vmatpush.bf16.msra.mxu0 %v2210
  %2499 = vmatmul.bf16.gmra.mxu0 %v2419
  %v2500 = vpop.f32.mrf.mxu0
  %v2501 = vadd.f32 %v2487, %v2500
  %v2502 = vpop.f32.mrf.mxu0
  %v2503 = vadd.f32 %v2489, %v2502
  %2504 = vdwg.mxu0
  %2505 = vmatpush.bf16.msra.mxu0 %v2079
  %2506 = vmatpush.bf16.msra.mxu0 %v2075
  %2507 = vmatpush.bf16.msra.mxu0 %v2071
  %2508 = vmatpush.bf16.msra.mxu0 %v2067
  %2509 = vmatpush.bf16.msra.mxu0 %v2063
  %2510 = vmatpush.bf16.msra.mxu0 %v2059
  %2511 = vmatpush.bf16.msra.mxu0 %v2055
  %2512 = vmatpush.bf16.msra.mxu0 %v2051
  %2513 = vmatmul.bf16.gmra.mxu0 %v1487
  %v2514 = vpop.f32.mrf.mxu0
  %v2515 = vadd.f32 0.0, %v2514
  %v2516 = vpop.f32.mrf.mxu0
  %v2517 = vadd.f32 0.0, %v2516
  %2518 = vdwg.mxu0
  %2519 = vmatpush.bf16.msra.mxu0 %v2111
  %2520 = vmatpush.bf16.msra.mxu0 %v2107
  %2521 = vmatpush.bf16.msra.mxu0 %v2103
  %2522 = vmatpush.bf16.msra.mxu0 %v2099
  %2523 = vmatpush.bf16.msra.mxu0 %v2095
  %2524 = vmatpush.bf16.msra.mxu0 %v2091
  %2525 = vmatpush.bf16.msra.mxu0 %v2087
  %2526 = vmatpush.bf16.msra.mxu0 %v2083
  %2527 = vmatmul.bf16.gmra.mxu0 %v1488
  %v2528 = vpop.f32.mrf.mxu0
  %v2529 = vadd.f32 %v2515, %v2528
  %v2530 = vpop.f32.mrf.mxu0
  %v2531 = vadd.f32 %v2517, %v2530
  %2532 = vdwg.mxu0
  %2533 = vmatpush.bf16.msra.mxu0 %v2143
  %2534 = vmatpush.bf16.msra.mxu0 %v2139
  %2535 = vmatpush.bf16.msra.mxu0 %v2135
  %2536 = vmatpush.bf16.msra.mxu0 %v2131
  %2537 = vmatpush.bf16.msra.mxu0 %v2127
  %2538 = vmatpush.bf16.msra.mxu0 %v2123
  %2539 = vmatpush.bf16.msra.mxu0 %v2119
  %2540 = vmatpush.bf16.msra.mxu0 %v2115
  %2541 = vmatmul.bf16.gmra.mxu0 %v1489
  %v2542 = vpop.f32.mrf.mxu0
  %v2543 = vadd.f32 %v2529, %v2542
  %v2544 = vpop.f32.mrf.mxu0
  %v2545 = vadd.f32 %v2531, %v2544
  %2546 = vdwg.mxu0
  %2547 = vmatpush.bf16.msra.mxu0 %v2175
  %2548 = vmatpush.bf16.msra.mxu0 %v2171
  %2549 = vmatpush.bf16.msra.mxu0 %v2167
  %2550 = vmatpush.bf16.msra.mxu0 %v2163
  %2551 = vmatpush.bf16.msra.mxu0 %v2159
  %2552 = vmatpush.bf16.msra.mxu0 %v2155
  %2553 = vmatpush.bf16.msra.mxu0 %v2151
  %2554 = vmatpush.bf16.msra.mxu0 %v2147
  %2555 = vmatmul.bf16.gmra.mxu0 %v1490
  %v2556 = vpop.f32.mrf.mxu0
  %v2557 = vadd.f32 %v2543, %v2556
  %v2558 = vpop.f32.mrf.mxu0
  %v2559 = vadd.f32 %v2545, %v2558
  %2560 = vdwg.mxu0
  %2561 = vmatpush.bf16.msra.mxu0 %v2207
  %2562 = vmatpush.bf16.msra.mxu0 %v2203
  %2563 = vmatpush.bf16.msra.mxu0 %v2199
  %2564 = vmatpush.bf16.msra.mxu0 %v2195
  %2565 = vmatpush.bf16.msra.mxu0 %v2191
  %2566 = vmatpush.bf16.msra.mxu0 %v2187
  %2567 = vmatpush.bf16.msra.mxu0 %v2183
  %2568 = vmatpush.bf16.msra.mxu0 %v2179
  %2569 = vmatmul.bf16.gmra.mxu0 %v1491
  %v2570 = vpop.f32.mrf.mxu0
  %v2571 = vadd.f32 %v2557, %v2570
  %v2572 = vpop.f32.mrf.mxu0
  %v2573 = vadd.f32 %v2559, %v2572
  %2574 = vdwg.mxu0
  %2575 = vmatpush.bf16.msra.mxu0 0
  %2576 = vmatpush.bf16.msra.mxu0 0
  %2577 = vmatpush.bf16.msra.mxu0 %v2231
  %2578 = vmatpush.bf16.msra.mxu0 %v2227
  %2579 = vmatpush.bf16.msra.mxu0 %v2223
  %2580 = vmatpush.bf16.msra.mxu0 %v2219
  %2581 = vmatpush.bf16.msra.mxu0 %v2215
  %2582 = vmatpush.bf16.msra.mxu0 %v2211
  %2583 = vmatmul.bf16.gmra.mxu0 %v2419
  %v2584 = vpop.f32.mrf.mxu0
  %v2585 = vadd.f32 %v2571, %v2584
  %v2586 = vpop.f32.mrf.mxu0
  %v2587 = vadd.f32 %v2573, %v2586
  %2588 = vdwg.mxu0
  %2589 = vmatpush.bf16.msra.mxu0 %v2080
  %2590 = vmatpush.bf16.msra.mxu0 %v2076
  %2591 = vmatpush.bf16.msra.mxu0 %v2072
  %2592 = vmatpush.bf16.msra.mxu0 %v2068
  %2593 = vmatpush.bf16.msra.mxu0 %v2064
  %2594 = vmatpush.bf16.msra.mxu0 %v2060
  %2595 = vmatpush.bf16.msra.mxu0 %v2056
  %2596 = vmatpush.bf16.msra.mxu0 %v2052
  %2597 = vmatmul.bf16.gmra.mxu0 %v1487
  %v2598 = vpop.f32.mrf.mxu0
  %v2599 = vadd.f32 0.0, %v2598
  %v2600 = vpop.f32.mrf.mxu0
  %v2601 = vadd.f32 0.0, %v2600
  %2602 = vdwg.mxu0
  %2603 = vmatpush.bf16.msra.mxu0 %v2112
  %2604 = vmatpush.bf16.msra.mxu0 %v2108
  %2605 = vmatpush.bf16.msra.mxu0 %v2104
  %2606 = vmatpush.bf16.msra.mxu0 %v2100
  %2607 = vmatpush.bf16.msra.mxu0 %v2096
  %2608 = vmatpush.bf16.msra.mxu0 %v2092
  %2609 = vmatpush.bf16.msra.mxu0 %v2088
  %2610 = vmatpush.bf16.msra.mxu0 %v2084
  %2611 = vmatmul.bf16.gmra.mxu0 %v1488
  %v2612 = vpop.f32.mrf.mxu0
  %v2613 = vadd.f32 %v2599, %v2612
  %v2614 = vpop.f32.mrf.mxu0
  %v2615 = vadd.f32 %v2601, %v2614
  %2616 = vdwg.mxu0
  %2617 = vmatpush.bf16.msra.mxu0 %v2144
  %2618 = vmatpush.bf16.msra.mxu0 %v2140
  %2619 = vmatpush.bf16.msra.mxu0 %v2136
  %2620 = vmatpush.bf16.msra.mxu0 %v2132
  %2621 = vmatpush.bf16.msra.mxu0 %v2128
  %2622 = vmatpush.bf16.msra.mxu0 %v2124
  %2623 = vmatpush.bf16.msra.mxu0 %v2120
  %2624 = vmatpush.bf16.msra.mxu0 %v2116
  %2625 = vmatmul.bf16.gmra.mxu0 %v1489
  %v2626 = vpop.f32.mrf.mxu0
  %v2627 = vadd.f32 %v2613, %v2626
  %v2628 = vpop.f32.mrf.mxu0
  %v2629 = vadd.f32 %v2615, %v2628
  %2630 = vdwg.mxu0
  %2631 = vmatpush.bf16.msra.mxu0 %v2176
  %2632 = vmatpush.bf16.msra.mxu0 %v2172
  %2633 = vmatpush.bf16.msra.mxu0 %v2168
  %2634 = vmatpush.bf16.msra.mxu0 %v2164
  %2635 = vmatpush.bf16.msra.mxu0 %v2160
  %2636 = vmatpush.bf16.msra.mxu0 %v2156
  %2637 = vmatpush.bf16.msra.mxu0 %v2152
  %2638 = vmatpush.bf16.msra.mxu0 %v2148
  %2639 = vmatmul.bf16.gmra.mxu0 %v1490
  %v2640 = vpop.f32.mrf.mxu0
  %v2641 = vadd.f32 %v2627, %v2640
  %v2642 = vpop.f32.mrf.mxu0
  %v2643 = vadd.f32 %v2629, %v2642
  %2644 = vdwg.mxu0
  %2645 = vmatpush.bf16.msra.mxu0 %v2208
  %2646 = vmatpush.bf16.msra.mxu0 %v2204
  %2647 = vmatpush.bf16.msra.mxu0 %v2200
  %2648 = vmatpush.bf16.msra.mxu0 %v2196
  %2649 = vmatpush.bf16.msra.mxu0 %v2192
  %2650 = vmatpush.bf16.msra.mxu0 %v2188
  %2651 = vmatpush.bf16.msra.mxu0 %v2184
  %2652 = vmatpush.bf16.msra.mxu0 %v2180
  %2653 = vmatmul.bf16.gmra.mxu0 %v1491
  %v2654 = vpop.f32.mrf.mxu0
  %v2655 = vadd.f32 %v2641, %v2654
  %v2656 = vpop.f32.mrf.mxu0
  %v2657 = vadd.f32 %v2643, %v2656
  %2658 = vdwg.mxu0
  %2659 = vmatpush.bf16.msra.mxu0 0
  %2660 = vmatpush.bf16.msra.mxu0 0
  %2661 = vmatpush.bf16.msra.mxu0 %v2232
  %2662 = vmatpush.bf16.msra.mxu0 %v2228
  %2663 = vmatpush.bf16.msra.mxu0 %v2224
  %2664 = vmatpush.bf16.msra.mxu0 %v2220
  %2665 = vmatpush.bf16.msra.mxu0 %v2216
  %2666 = vmatpush.bf16.msra.mxu0 %v2212
  %2667 = vmatmul.bf16.gmra.mxu0 %v2419
  %v2668 = vpop.f32.mrf.mxu0
  %v2669 = vadd.f32 %v2655, %v2668
  %v2670 = vpop.f32.mrf.mxu0
  %v2671 = vadd.f32 %v2657, %v2670
  %2672 = vdwg.mxu0
  %2673 = vmatpush.bf16.msra.mxu0 %v2081
  %2674 = vmatpush.bf16.msra.mxu0 %v2077
  %2675 = vmatpush.bf16.msra.mxu0 %v2073
  %2676 = vmatpush.bf16.msra.mxu0 %v2069
  %2677 = vmatpush.bf16.msra.mxu0 %v2065
  %2678 = vmatpush.bf16.msra.mxu0 %v2061
  %2679 = vmatpush.bf16.msra.mxu0 %v2057
  %2680 = vmatpush.bf16.msra.mxu0 %v2053
  %2681 = vmatmul.bf16.gmra.mxu0 %v1487
  %v2682 = vpop.f32.mrf.mxu0
  %v2683 = vadd.f32 0.0, %v2682
  %v2684 = vpop.f32.mrf.mxu0
  %v2685 = vadd.f32 0.0, %v2684
  %2686 = vdwg.mxu0
  %2687 = vmatpush.bf16.msra.mxu0 %v2113
  %2688 = vmatpush.bf16.msra.mxu0 %v2109
  %2689 = vmatpush.bf16.msra.mxu0 %v2105
  %2690 = vmatpush.bf16.msra.mxu0 %v2101
  %2691 = vmatpush.bf16.msra.mxu0 %v2097
  %2692 = vmatpush.bf16.msra.mxu0 %v2093
  %2693 = vmatpush.bf16.msra.mxu0 %v2089
  %2694 = vmatpush.bf16.msra.mxu0 %v2085
  %2695 = vmatmul.bf16.gmra.mxu0 %v1488
  %v2696 = vpop.f32.mrf.mxu0
  %v2697 = vadd.f32 %v2683, %v2696
  %v2698 = vpop.f32.mrf.mxu0
  %v2699 = vadd.f32 %v2685, %v2698
  %2700 = vdwg.mxu0
  %2701 = vmatpush.bf16.msra.mxu0 %v2145
  %2702 = vmatpush.bf16.msra.mxu0 %v2141
  %2703 = vmatpush.bf16.msra.mxu0 %v2137
  %2704 = vmatpush.bf16.msra.mxu0 %v2133
  %2705 = vmatpush.bf16.msra.mxu0 %v2129
  %2706 = vmatpush.bf16.msra.mxu0 %v2125
  %2707 = vmatpush.bf16.msra.mxu0 %v2121
  %2708 = vmatpush.bf16.msra.mxu0 %v2117
  %2709 = vmatmul.bf16.gmra.mxu0 %v1489
  %v2710 = vpop.f32.mrf.mxu0
  %v2711 = vadd.f32 %v2697, %v2710
  %v2712 = vpop.f32.mrf.mxu0
  %v2713 = vadd.f32 %v2699, %v2712
  %2714 = vdwg.mxu0
  %2715 = vmatpush.bf16.msra.mxu0 %v2177
  %2716 = vmatpush.bf16.msra.mxu0 %v2173
  %2717 = vmatpush.bf16.msra.mxu0 %v2169
  %2718 = vmatpush.bf16.msra.mxu0 %v2165
  %2719 = vmatpush.bf16.msra.mxu0 %v2161
  %2720 = vmatpush.bf16.msra.mxu0 %v2157
  %2721 = vmatpush.bf16.msra.mxu0 %v2153
  %2722 = vmatpush.bf16.msra.mxu0 %v2149
  %2723 = vmatmul.bf16.gmra.mxu0 %v1490
  %v2724 = vpop.f32.mrf.mxu0
  %v2725 = vadd.f32 %v2711, %v2724
  %v2726 = vpop.f32.mrf.mxu0
  %v2727 = vadd.f32 %v2713, %v2726
  %2728 = vdwg.mxu0
  %2729 = vmatpush.bf16.msra.mxu0 %v2209
  %2730 = vmatpush.bf16.msra.mxu0 %v2205
  %2731 = vmatpush.bf16.msra.mxu0 %v2201
  %2732 = vmatpush.bf16.msra.mxu0 %v2197
  %2733 = vmatpush.bf16.msra.mxu0 %v2193
  %2734 = vmatpush.bf16.msra.mxu0 %v2189
  %2735 = vmatpush.bf16.msra.mxu0 %v2185
  %2736 = vmatpush.bf16.msra.mxu0 %v2181
  %2737 = vmatmul.bf16.gmra.mxu0 %v1491
  %v2738 = vpop.f32.mrf.mxu0
  %v2739 = vadd.f32 %v2725, %v2738
  %v2740 = vpop.f32.mrf.mxu0
  %v2741 = vadd.f32 %v2727, %v2740
  %2742 = vdwg.mxu0
  %2743 = vmatpush.bf16.msra.mxu0 0
  %2744 = vmatpush.bf16.msra.mxu0 0
  %2745 = vmatpush.bf16.msra.mxu0 %v2233
  %2746 = vmatpush.bf16.msra.mxu0 %v2229
  %2747 = vmatpush.bf16.msra.mxu0 %v2225
  %2748 = vmatpush.bf16.msra.mxu0 %v2221
  %2749 = vmatpush.bf16.msra.mxu0 %v2217
  %2750 = vmatpush.bf16.msra.mxu0 %v2213
  %2751 = vmatmul.bf16.gmra.mxu0 %v2419
  %v2752 = vpop.f32.mrf.mxu0
  %v2753 = vadd.f32 %v2739, %v2752
  %v2754 = vpop.f32.mrf.mxu0
  %v2755 = vadd.f32 %v2741, %v2754
  %2756 = vdwg.mxu0
  %v2763 = vunpack.c.l.b16 %v1007
  %v2764 = vunpack.c.h.b16 %v1007
  %v2765 = vunpack.c.l.b16 %v1008
  %v2766 = vunpack.c.h.b16 %v1008
  %v2767 = vunpack.c.l.b16 %v1009
  %v2768 = vunpack.c.h.b16 %v1009
  %v2769 = vunpack.c.l.b16 %v1013
  %v2770 = vunpack.c.h.b16 %v1013
  %v2771 = vunpack.c.l.b16 %v1014
  %v2772 = vunpack.c.h.b16 %v1014
  %v2773 = vunpack.c.l.b16 %v1015
  %v2774 = vunpack.c.h.b16 %v1015
  %v2775 = vpack.c.b16 %v2769, %v2763
  %v2776 = vpack.c.b16 %v2770, %v2764
  %v2777 = vpack.c.b16 %v2771, %v2765
  %v2778 = vpack.c.b16 %v2772, %v2766
  %v2779 = vpack.c.b16 %v2773, %v2767
  %v2780 = vpack.c.b16 %v2774, %v2768
  %v2970 = vunpack.c.l.b16 %v1019
  %v2971 = vunpack.c.h.b16 %v1019
  %v2972 = vunpack.c.l.b16 %v1020
  %v2973 = vunpack.c.h.b16 %v1020
  %v2974 = vunpack.c.l.b16 %v1021
  %v2975 = vunpack.c.h.b16 %v1021
  %v2976 = vunpack.c.l.b16 %v1022
  %v2977 = vunpack.c.h.b16 %v1022
  %v2978 = vunpack.c.l.b16 %v1023
  %v2979 = vunpack.c.h.b16 %v1023
  %v2980 = vunpack.c.l.b16 %v1024
  %v2981 = vunpack.c.h.b16 %v1024
  %v2982 = vunpack.c.l.b16 %v1025
  %v2983 = vunpack.c.h.b16 %v1025
  %v2984 = vunpack.c.l.b16 %v1026
  %v2985 = vunpack.c.h.b16 %v1026
  %v2986 = vunpack.c.l.b16 %v1027
  %v2987 = vunpack.c.h.b16 %v1027
  %v2988 = vunpack.c.l.b16 %v1028
  %v2989 = vunpack.c.h.b16 %v1028
  %v2990 = vunpack.c.l.b16 %v1029
  %v2991 = vunpack.c.h.b16 %v1029
  %v2992 = vunpack.c.l.b16 %v1030
  %v2993 = vunpack.c.h.b16 %v1030
  %v2994 = vunpack.c.l.b16 %v1031
  %v2995 = vunpack.c.h.b16 %v1031
  %v2996 = vunpack.c.l.b16 %v1032
  %v2997 = vunpack.c.h.b16 %v1032
  %v2998 = vunpack.c.l.b16 %v1033
  %v2999 = vunpack.c.h.b16 %v1033
  %v3000 = vunpack.c.l.b16 %v1034
  %v3001 = vunpack.c.h.b16 %v1034
  %v3002 = vunpack.c.l.b16 %v1035
  %v3003 = vunpack.c.h.b16 %v1035
  %v3004 = vunpack.c.l.b16 %v1036
  %v3005 = vunpack.c.h.b16 %v1036
  %v3006 = vunpack.c.l.b16 %v1037
  %v3007 = vunpack.c.h.b16 %v1037
  %v3008 = vunpack.c.l.b16 %v1038
  %v3009 = vunpack.c.h.b16 %v1038
  %v3010 = vunpack.c.l.b16 %v1039
  %v3011 = vunpack.c.h.b16 %v1039
  %v3012 = vunpack.c.l.b16 %v1040
  %v3013 = vunpack.c.h.b16 %v1040
  %v3014 = vunpack.c.l.b16 %v1041
  %v3015 = vunpack.c.h.b16 %v1041
  %v3016 = vunpack.c.l.b16 %v1042
  %v3017 = vunpack.c.h.b16 %v1042
  %v3018 = vunpack.c.l.b16 %v1043
  %v3019 = vunpack.c.h.b16 %v1043
  %v3020 = vunpack.c.l.b16 %v1044
  %v3021 = vunpack.c.h.b16 %v1044
  %v3022 = vunpack.c.l.b16 %v1045
  %v3023 = vunpack.c.h.b16 %v1045
  %v3024 = vunpack.c.l.b16 %v1046
  %v3025 = vunpack.c.h.b16 %v1046
  %v3026 = vunpack.c.l.b16 %v1047
  %v3027 = vunpack.c.h.b16 %v1047
  %v3028 = vunpack.c.l.b16 %v1048
  %v3029 = vunpack.c.h.b16 %v1048
  %v3030 = vunpack.c.l.b16 %v1049
  %v3031 = vunpack.c.h.b16 %v1049
  %v3032 = vunpack.c.l.b16 %v1050
  %v3033 = vunpack.c.h.b16 %v1050
  %v3034 = vunpack.c.l.b16 %v1051
  %v3035 = vunpack.c.h.b16 %v1051
  %v3036 = vunpack.c.l.b16 %v1052
  %v3037 = vunpack.c.h.b16 %v1052
  %v3038 = vunpack.c.l.b16 %v1053
  %v3039 = vunpack.c.h.b16 %v1053
  %v3040 = vunpack.c.l.b16 %v1054
  %v3041 = vunpack.c.h.b16 %v1054
  %v3042 = vunpack.c.l.b16 %v1055
  %v3043 = vunpack.c.h.b16 %v1055
  %v3044 = vunpack.c.l.b16 %v1056
  %v3045 = vunpack.c.h.b16 %v1056
  %v3046 = vunpack.c.l.b16 %v1057
  %v3047 = vunpack.c.h.b16 %v1057
  %v3048 = vunpack.c.l.b16 %v1058
  %v3049 = vunpack.c.h.b16 %v1058
  %v3050 = vunpack.c.l.b16 %v1059
  %v3051 = vunpack.c.h.b16 %v1059
  %v3052 = vunpack.c.l.b16 %v1060
  %v3053 = vunpack.c.h.b16 %v1060
  %v3054 = vunpack.c.l.b16 %v1061
  %v3055 = vunpack.c.h.b16 %v1061
  %v3056 = vunpack.c.l.b16 %v1062
  %v3057 = vunpack.c.h.b16 %v1062
  %v3058 = vunpack.c.l.b16 %v1063
  %v3059 = vunpack.c.h.b16 %v1063
  %v3060 = vunpack.c.l.b16 %v1064
  %v3061 = vunpack.c.h.b16 %v1064
  %v3062 = vunpack.c.l.b16 %v1065
  %v3063 = vunpack.c.h.b16 %v1065
  %v3064 = vunpack.c.l.b16 %v1066
  %v3065 = vunpack.c.h.b16 %v1066
  %v3066 = vunpack.c.l.b16 %v1067
  %v3067 = vunpack.c.h.b16 %v1067
  %v3068 = vunpack.c.l.b16 %v1068
  %v3069 = vunpack.c.h.b16 %v1068
  %v3070 = vunpack.c.l.b16 %v1069
  %v3071 = vunpack.c.h.b16 %v1069
  %v3072 = vunpack.c.l.b16 %v1070
  %v3073 = vunpack.c.h.b16 %v1070
  %v3074 = vunpack.c.l.b16 %v1071
  %v3075 = vunpack.c.h.b16 %v1071
  %v3076 = vunpack.c.l.b16 %v1072
  %v3077 = vunpack.c.h.b16 %v1072
  %v3078 = vunpack.c.l.b16 %v1073
  %v3079 = vunpack.c.h.b16 %v1073
  %v3080 = vunpack.c.l.b16 %v1074
  %v3081 = vunpack.c.h.b16 %v1074
  %v3082 = vunpack.c.l.b16 %v1075
  %v3083 = vunpack.c.h.b16 %v1075
  %v3084 = vunpack.c.l.b16 %v1076
  %v3085 = vunpack.c.h.b16 %v1076
  %v3086 = vunpack.c.l.b16 %v1077
  %v3087 = vunpack.c.h.b16 %v1077
  %v3088 = vunpack.c.l.b16 %v1078
  %v3089 = vunpack.c.h.b16 %v1078
  %v3090 = vunpack.c.l.b16 %v1079
  %v3091 = vunpack.c.h.b16 %v1079
  %v3092 = vunpack.c.l.b16 %v1080
  %v3093 = vunpack.c.h.b16 %v1080
  %v3094 = vunpack.c.l.b16 %v1081
  %v3095 = vunpack.c.h.b16 %v1081
  %v3096 = vunpack.c.l.b16 %v1082
  %v3097 = vunpack.c.h.b16 %v1082
  %v3098 = vunpack.c.l.b16 %v1083
  %v3099 = vunpack.c.h.b16 %v1083
  %v3100 = vunpack.c.l.b16 %v1084
  %v3101 = vunpack.c.h.b16 %v1084
  %v3102 = vunpack.c.l.b16 %v1085
  %v3103 = vunpack.c.h.b16 %v1085
  %v3104 = vunpack.c.l.b16 %v1086
  %v3105 = vunpack.c.h.b16 %v1086
  %v3106 = vunpack.c.l.b16 %v1087
  %v3107 = vunpack.c.h.b16 %v1087
  %v3108 = vunpack.c.l.b16 %v1088
  %v3109 = vunpack.c.h.b16 %v1088
  %v3110 = vunpack.c.l.b16 %v1089
  %v3111 = vunpack.c.h.b16 %v1089
  %v3112 = vunpack.c.l.b16 %v1090
  %v3113 = vunpack.c.h.b16 %v1090
  %v3114 = vunpack.c.l.b16 %v1091
  %v3115 = vunpack.c.h.b16 %v1091
  %v3116 = vunpack.c.l.b16 %v1092
  %v3117 = vunpack.c.h.b16 %v1092
  %v3118 = vunpack.c.l.b16 %v1093
  %v3119 = vunpack.c.h.b16 %v1093
  %v3120 = vunpack.c.l.b16 %v1094
  %v3121 = vunpack.c.h.b16 %v1094
  %v3122 = vunpack.c.l.b16 %v1095
  %v3123 = vunpack.c.h.b16 %v1095
  %v3124 = vunpack.c.l.b16 %v1096
  %v3125 = vunpack.c.h.b16 %v1096
  %v3126 = vunpack.c.l.b16 %v1097
  %v3127 = vunpack.c.h.b16 %v1097
  %v3128 = vunpack.c.l.b16 %v1098
  %v3129 = vunpack.c.h.b16 %v1098
  %v3130 = vunpack.c.l.b16 %v1099
  %v3131 = vunpack.c.h.b16 %v1099
  %v3132 = vunpack.c.l.b16 %v1100
  %v3133 = vunpack.c.h.b16 %v1100
  %v3134 = vunpack.c.l.b16 %v1101
  %v3135 = vunpack.c.h.b16 %v1101
  %v3136 = vunpack.c.l.b16 %v1102
  %v3137 = vunpack.c.h.b16 %v1102
  %v3138 = vunpack.c.l.b16 %v1103
  %v3139 = vunpack.c.h.b16 %v1103
  %v3140 = vunpack.c.l.b16 %v1104
  %v3141 = vunpack.c.h.b16 %v1104
  %v3142 = vunpack.c.l.b16 %v1105
  %v3143 = vunpack.c.h.b16 %v1105
  %v3144 = vunpack.c.l.b16 %v1106
  %v3145 = vunpack.c.h.b16 %v1106
  %v3146 = vunpack.c.l.b16 %v1107
  %v3147 = vunpack.c.h.b16 %v1107
  %v3148 = vunpack.c.l.b16 %v1108
  %v3149 = vunpack.c.h.b16 %v1108
  %v3150 = vunpack.c.l.b16 %v1109
  %v3151 = vunpack.c.h.b16 %v1109
  %v3152 = vunpack.c.l.b16 %v1110
  %v3153 = vunpack.c.h.b16 %v1110
  %v3154 = vunpack.c.l.b16 %v1111
  %v3155 = vunpack.c.h.b16 %v1111
  %v3156 = vunpack.c.l.b16 %v1112
  %v3157 = vunpack.c.h.b16 %v1112
  %v3158 = vunpack.c.l.b16 %v1113
  %v3159 = vunpack.c.h.b16 %v1113
  %v3160 = vunpack.c.l.b16 %v1114
  %v3161 = vunpack.c.h.b16 %v1114
  %v3162 = vunpack.c.l.b16 %v1115
  %v3163 = vunpack.c.h.b16 %v1115
  %v3164 = vunpack.c.l.b16 %v1116
  %v3165 = vunpack.c.h.b16 %v1116
  %v3166 = vunpack.c.l.b16 %v1117
  %v3167 = vunpack.c.h.b16 %v1117
  %v3168 = vunpack.c.l.b16 %v1118
  %v3169 = vunpack.c.h.b16 %v1118
  %v3170 = vunpack.c.l.b16 %v1119
  %v3171 = vunpack.c.h.b16 %v1119
  %v3172 = vunpack.c.l.b16 %v1120
  %v3173 = vunpack.c.h.b16 %v1120
  %v3174 = vunpack.c.l.b16 %v1121
  %v3175 = vunpack.c.h.b16 %v1121
  %v3176 = vunpack.c.l.b16 %v1122
  %v3177 = vunpack.c.h.b16 %v1122
  %v3178 = vunpack.c.l.b16 %v1123
  %v3179 = vunpack.c.h.b16 %v1123
  %v3180 = vunpack.c.l.b16 %v1124
  %v3181 = vunpack.c.h.b16 %v1124
  %v3182 = vunpack.c.l.b16 %v1125
  %v3183 = vunpack.c.h.b16 %v1125
  %v3184 = vunpack.c.l.b16 %v1126
  %v3185 = vunpack.c.h.b16 %v1126
  %v3186 = vunpack.c.l.b16 %v1127
  %v3187 = vunpack.c.h.b16 %v1127
  %v3188 = vunpack.c.l.b16 %v1128
  %v3189 = vunpack.c.h.b16 %v1128
  %v3190 = vunpack.c.l.b16 %v1129
  %v3191 = vunpack.c.h.b16 %v1129
  %v3192 = vunpack.c.l.b16 %v1130
  %v3193 = vunpack.c.h.b16 %v1130
  %v3194 = vunpack.c.l.b16 %v1131
  %v3195 = vunpack.c.h.b16 %v1131
  %v3196 = vunpack.c.l.b16 %v1132
  %v3197 = vunpack.c.h.b16 %v1132
  %v3198 = vunpack.c.l.b16 %v1133
  %v3199 = vunpack.c.h.b16 %v1133
  %v3200 = vunpack.c.l.b16 %v1134
  %v3201 = vunpack.c.h.b16 %v1134
  %v3202 = vunpack.c.l.b16 %v1135
  %v3203 = vunpack.c.h.b16 %v1135
  %v3204 = vunpack.c.l.b16 %v1136
  %v3205 = vunpack.c.h.b16 %v1136
  %v3206 = vunpack.c.l.b16 %v1137
  %v3207 = vunpack.c.h.b16 %v1137
  %v3208 = vunpack.c.l.b16 %v1138
  %v3209 = vunpack.c.h.b16 %v1138
  %v3210 = vunpack.c.l.b16 %v1139
  %v3211 = vunpack.c.h.b16 %v1139
  %v3212 = vunpack.c.l.b16 %v1140
  %v3213 = vunpack.c.h.b16 %v1140
  %v3214 = vunpack.c.l.b16 %v1141
  %v3215 = vunpack.c.h.b16 %v1141
  %v3216 = vunpack.c.l.b16 %v1142
  %v3217 = vunpack.c.h.b16 %v1142
  %v3218 = vunpack.c.l.b16 %v1143
  %v3219 = vunpack.c.h.b16 %v1143
  %v3220 = vunpack.c.l.b16 %v1144
  %v3221 = vunpack.c.h.b16 %v1144
  %v3222 = vunpack.c.l.b16 %v1145
  %v3223 = vunpack.c.h.b16 %v1145
  %v3224 = vunpack.c.l.b16 %v1146
  %v3225 = vunpack.c.h.b16 %v1146
  %v3226 = vunpack.c.l.b16 %v1147
  %v3227 = vunpack.c.h.b16 %v1147
  %v3228 = vunpack.c.l.b16 %v1148
  %v3229 = vunpack.c.h.b16 %v1148
  %v3230 = vunpack.c.l.b16 %v1149
  %v3231 = vunpack.c.h.b16 %v1149
  %v3232 = vunpack.c.l.b16 %v1150
  %v3233 = vunpack.c.h.b16 %v1150
  %v3234 = vunpack.c.l.b16 %v1151
  %v3235 = vunpack.c.h.b16 %v1151
  %v3236 = vunpack.c.l.b16 %v1152
  %v3237 = vunpack.c.h.b16 %v1152
  %v3238 = vunpack.c.l.b16 %v1153
  %v3239 = vunpack.c.h.b16 %v1153
  %v3240 = vunpack.c.l.b16 %v1154
  %v3241 = vunpack.c.h.b16 %v1154
  %v3242 = vunpack.c.l.b16 %v1155
  %v3243 = vunpack.c.h.b16 %v1155
  %v3244 = vunpack.c.l.b16 %v1156
  %v3245 = vunpack.c.h.b16 %v1156
  %v3246 = vunpack.c.l.b16 %v1157
  %v3247 = vunpack.c.h.b16 %v1157
  %v3248 = vunpack.c.l.b16 %v1158
  %v3249 = vunpack.c.h.b16 %v1158
  %v3250 = vunpack.c.l.b16 %v1159
  %v3251 = vunpack.c.h.b16 %v1159
  %v3252 = vunpack.c.l.b16 %v1160
  %v3253 = vunpack.c.h.b16 %v1160
  %v3254 = vunpack.c.l.b16 %v1161
  %v3255 = vunpack.c.h.b16 %v1161
  %v3256 = vunpack.c.l.b16 %v1162
  %v3257 = vunpack.c.h.b16 %v1162
  %v3258 = vunpack.c.l.b16 %v1163
  %v3259 = vunpack.c.h.b16 %v1163
  %v3260 = vunpack.c.l.b16 %v1164
  %v3261 = vunpack.c.h.b16 %v1164
  %v3262 = vunpack.c.l.b16 %v1165
  %v3263 = vunpack.c.h.b16 %v1165
  %v3264 = vunpack.c.l.b16 %v1166
  %v3265 = vunpack.c.h.b16 %v1166
  %v3266 = vunpack.c.l.b16 %v1167
  %v3267 = vunpack.c.h.b16 %v1167
  %v3268 = vunpack.c.l.b16 %v1168
  %v3269 = vunpack.c.h.b16 %v1168
  %v3270 = vunpack.c.l.b16 %v1169
  %v3271 = vunpack.c.h.b16 %v1169
  %v3272 = vunpack.c.l.b16 %v1170
  %v3273 = vunpack.c.h.b16 %v1170
  %v3274 = vunpack.c.l.b16 %v1171
  %v3275 = vunpack.c.h.b16 %v1171
  %v3276 = vunpack.c.l.b16 %v1172
  %v3277 = vunpack.c.h.b16 %v1172
  %v3278 = vunpack.c.l.b16 %v1173
  %v3279 = vunpack.c.h.b16 %v1173
  %v3280 = vunpack.c.l.b16 %v1174
  %v3281 = vunpack.c.h.b16 %v1174
  %v3282 = vunpack.c.l.b16 %v1175
  %v3283 = vunpack.c.h.b16 %v1175
  %v3284 = vunpack.c.l.b16 %v1176
  %v3285 = vunpack.c.h.b16 %v1176
  %v3286 = vunpack.c.l.b16 %v1177
  %v3287 = vunpack.c.h.b16 %v1177
  %v3288 = vunpack.c.l.b16 %v1178
  %v3289 = vunpack.c.h.b16 %v1178
  %v3290 = vunpack.c.l.b16 %v1179
  %v3291 = vunpack.c.h.b16 %v1179
  %v3292 = vunpack.c.l.b16 %v1180
  %v3293 = vunpack.c.h.b16 %v1180
  %v3294 = vunpack.c.l.b16 %v1181
  %v3295 = vunpack.c.h.b16 %v1181
  %v3296 = vunpack.c.l.b16 %v1182
  %v3297 = vunpack.c.h.b16 %v1182
  %v3298 = vunpack.c.l.b16 %v1183
  %v3299 = vunpack.c.h.b16 %v1183
  %v3300 = vunpack.c.l.b16 %v1184
  %v3301 = vunpack.c.h.b16 %v1184
  %v3302 = vunpack.c.l.b16 %v1185
  %v3303 = vunpack.c.h.b16 %v1185
  %v3304 = vunpack.c.l.b16 %v1186
  %v3305 = vunpack.c.h.b16 %v1186
  %v3306 = vunpack.c.l.b16 %v1187
  %v3307 = vunpack.c.h.b16 %v1187
  %v3308 = vunpack.c.l.b16 %v1188
  %v3309 = vunpack.c.h.b16 %v1188
  %v3310 = vunpack.c.l.b16 %v1189
  %v3311 = vunpack.c.h.b16 %v1189
  %v3312 = vunpack.c.l.b16 %v1190
  %v3313 = vunpack.c.h.b16 %v1190
  %v3314 = vunpack.c.l.b16 %v1191
  %v3315 = vunpack.c.h.b16 %v1191
  %v3316 = vunpack.c.l.b16 %v1192
  %v3317 = vunpack.c.h.b16 %v1192
  %v3318 = vunpack.c.l.b16 %v1193
  %v3319 = vunpack.c.h.b16 %v1193
  %v3320 = vunpack.c.l.b16 %v1194
  %v3321 = vunpack.c.h.b16 %v1194
  %v3322 = vunpack.c.l.b16 %v1195
  %v3323 = vunpack.c.h.b16 %v1195
  %v3324 = vunpack.c.l.b16 %v1196
  %v3325 = vunpack.c.h.b16 %v1196
  %v3326 = vunpack.c.l.b16 %v1197
  %v3327 = vunpack.c.h.b16 %v1197
  %v3328 = vunpack.c.l.b16 %v1198
  %v3329 = vunpack.c.h.b16 %v1198
  %v3330 = vunpack.c.l.b16 %v1199
  %v3331 = vunpack.c.h.b16 %v1199
  %v3332 = vunpack.c.l.b16 %v1200
  %v3333 = vunpack.c.h.b16 %v1200
  %v3334 = vunpack.c.l.b16 %v1201
  %v3335 = vunpack.c.h.b16 %v1201
  %v3336 = vunpack.c.l.b16 %v1202
  %v3337 = vunpack.c.h.b16 %v1202
  %v3338 = vpack.c.b16 %v2974, %v2970
  %v3339 = vpack.c.b16 %v2975, %v2971
  %v3340 = vpack.c.b16 %v2976, %v2972
  %v3341 = vpack.c.b16 %v2977, %v2973
  %v3342 = vpack.c.b16 %v2982, %v2978
  %v3343 = vpack.c.b16 %v2983, %v2979
  %v3344 = vpack.c.b16 %v2984, %v2980
  %v3345 = vpack.c.b16 %v2985, %v2981
  %v3346 = vpack.c.b16 %v2990, %v2986
  %v3347 = vpack.c.b16 %v2991, %v2987
  %v3348 = vpack.c.b16 %v2992, %v2988
  %v3349 = vpack.c.b16 %v2993, %v2989
  %v3350 = vpack.c.b16 %v2998, %v2994
  %v3351 = vpack.c.b16 %v2999, %v2995
  %v3352 = vpack.c.b16 %v3000, %v2996
  %v3353 = vpack.c.b16 %v3001, %v2997
  %v3354 = vpack.c.b16 %v3006, %v3002
  %v3355 = vpack.c.b16 %v3007, %v3003
  %v3356 = vpack.c.b16 %v3008, %v3004
  %v3357 = vpack.c.b16 %v3009, %v3005
  %v3358 = vpack.c.b16 %v3014, %v3010
  %v3359 = vpack.c.b16 %v3015, %v3011
  %v3360 = vpack.c.b16 %v3016, %v3012
  %v3361 = vpack.c.b16 %v3017, %v3013
  %v3362 = vpack.c.b16 %v3022, %v3018
  %v3363 = vpack.c.b16 %v3023, %v3019
  %v3364 = vpack.c.b16 %v3024, %v3020
  %v3365 = vpack.c.b16 %v3025, %v3021
  %v3366 = vpack.c.b16 %v3030, %v3026
  %v3367 = vpack.c.b16 %v3031, %v3027
  %v3368 = vpack.c.b16 %v3032, %v3028
  %v3369 = vpack.c.b16 %v3033, %v3029
  %v3370 = vpack.c.b16 %v3038, %v3034
  %v3371 = vpack.c.b16 %v3039, %v3035
  %v3372 = vpack.c.b16 %v3040, %v3036
  %v3373 = vpack.c.b16 %v3041, %v3037
  %v3374 = vpack.c.b16 %v3046, %v3042
  %v3375 = vpack.c.b16 %v3047, %v3043
  %v3376 = vpack.c.b16 %v3048, %v3044
  %v3377 = vpack.c.b16 %v3049, %v3045
  %v3378 = vpack.c.b16 %v3054, %v3050
  %v3379 = vpack.c.b16 %v3055, %v3051
  %v3380 = vpack.c.b16 %v3056, %v3052
  %v3381 = vpack.c.b16 %v3057, %v3053
  %v3382 = vpack.c.b16 %v3062, %v3058
  %v3383 = vpack.c.b16 %v3063, %v3059
  %v3384 = vpack.c.b16 %v3064, %v3060
  %v3385 = vpack.c.b16 %v3065, %v3061
  %v3386 = vpack.c.b16 %v3070, %v3066
  %v3387 = vpack.c.b16 %v3071, %v3067
  %v3388 = vpack.c.b16 %v3072, %v3068
  %v3389 = vpack.c.b16 %v3073, %v3069
  %v3390 = vpack.c.b16 %v3078, %v3074
  %v3391 = vpack.c.b16 %v3079, %v3075
  %v3392 = vpack.c.b16 %v3080, %v3076
  %v3393 = vpack.c.b16 %v3081, %v3077
  %v3394 = vpack.c.b16 %v3086, %v3082
  %v3395 = vpack.c.b16 %v3087, %v3083
  %v3396 = vpack.c.b16 %v3088, %v3084
  %v3397 = vpack.c.b16 %v3089, %v3085
  %v3398 = vpack.c.b16 %v3094, %v3090
  %v3399 = vpack.c.b16 %v3095, %v3091
  %v3400 = vpack.c.b16 %v3096, %v3092
  %v3401 = vpack.c.b16 %v3097, %v3093
  %v3402 = vpack.c.b16 %v3102, %v3098
  %v3403 = vpack.c.b16 %v3103, %v3099
  %v3404 = vpack.c.b16 %v3104, %v3100
  %v3405 = vpack.c.b16 %v3105, %v3101
  %v3406 = vpack.c.b16 %v3110, %v3106
  %v3407 = vpack.c.b16 %v3111, %v3107
  %v3408 = vpack.c.b16 %v3112, %v3108
  %v3409 = vpack.c.b16 %v3113, %v3109
  %v3410 = vpack.c.b16 %v3118, %v3114
  %v3411 = vpack.c.b16 %v3119, %v3115
  %v3412 = vpack.c.b16 %v3120, %v3116
  %v3413 = vpack.c.b16 %v3121, %v3117
  %v3414 = vpack.c.b16 %v3126, %v3122
  %v3415 = vpack.c.b16 %v3127, %v3123
  %v3416 = vpack.c.b16 %v3128, %v3124
  %v3417 = vpack.c.b16 %v3129, %v3125
  %v3418 = vpack.c.b16 %v3134, %v3130
  %v3419 = vpack.c.b16 %v3135, %v3131
  %v3420 = vpack.c.b16 %v3136, %v3132
  %v3421 = vpack.c.b16 %v3137, %v3133
  %v3422 = vpack.c.b16 %v3142, %v3138
  %v3423 = vpack.c.b16 %v3143, %v3139
  %v3424 = vpack.c.b16 %v3144, %v3140
  %v3425 = vpack.c.b16 %v3145, %v3141
  %v3426 = vpack.c.b16 %v3150, %v3146
  %v3427 = vpack.c.b16 %v3151, %v3147
  %v3428 = vpack.c.b16 %v3152, %v3148
  %v3429 = vpack.c.b16 %v3153, %v3149
  %v3430 = vpack.c.b16 %v3158, %v3154
  %v3431 = vpack.c.b16 %v3159, %v3155
  %v3432 = vpack.c.b16 %v3160, %v3156
  %v3433 = vpack.c.b16 %v3161, %v3157
  %v3434 = vpack.c.b16 %v3166, %v3162
  %v3435 = vpack.c.b16 %v3167, %v3163
  %v3436 = vpack.c.b16 %v3168, %v3164
  %v3437 = vpack.c.b16 %v3169, %v3165
  %v3438 = vpack.c.b16 %v3174, %v3170
  %v3439 = vpack.c.b16 %v3175, %v3171
  %v3440 = vpack.c.b16 %v3176, %v3172
  %v3441 = vpack.c.b16 %v3177, %v3173
  %v3442 = vpack.c.b16 %v3182, %v3178
  %v3443 = vpack.c.b16 %v3183, %v3179
  %v3444 = vpack.c.b16 %v3184, %v3180
  %v3445 = vpack.c.b16 %v3185, %v3181
  %v3446 = vpack.c.b16 %v3190, %v3186
  %v3447 = vpack.c.b16 %v3191, %v3187
  %v3448 = vpack.c.b16 %v3192, %v3188
  %v3449 = vpack.c.b16 %v3193, %v3189
  %v3450 = vpack.c.b16 %v3198, %v3194
  %v3451 = vpack.c.b16 %v3199, %v3195
  %v3452 = vpack.c.b16 %v3200, %v3196
  %v3453 = vpack.c.b16 %v3201, %v3197
  %v3454 = vpack.c.b16 %v3206, %v3202
  %v3455 = vpack.c.b16 %v3207, %v3203
  %v3456 = vpack.c.b16 %v3208, %v3204
  %v3457 = vpack.c.b16 %v3209, %v3205
  %v3458 = vpack.c.b16 %v3214, %v3210
  %v3459 = vpack.c.b16 %v3215, %v3211
  %v3460 = vpack.c.b16 %v3216, %v3212
  %v3461 = vpack.c.b16 %v3217, %v3213
  %v3462 = vpack.c.b16 %v3222, %v3218
  %v3463 = vpack.c.b16 %v3223, %v3219
  %v3464 = vpack.c.b16 %v3224, %v3220
  %v3465 = vpack.c.b16 %v3225, %v3221
  %v3466 = vpack.c.b16 %v3230, %v3226
  %v3467 = vpack.c.b16 %v3231, %v3227
  %v3468 = vpack.c.b16 %v3232, %v3228
  %v3469 = vpack.c.b16 %v3233, %v3229
  %v3470 = vpack.c.b16 %v3238, %v3234
  %v3471 = vpack.c.b16 %v3239, %v3235
  %v3472 = vpack.c.b16 %v3240, %v3236
  %v3473 = vpack.c.b16 %v3241, %v3237
  %v3474 = vpack.c.b16 %v3246, %v3242
  %v3475 = vpack.c.b16 %v3247, %v3243
  %v3476 = vpack.c.b16 %v3248, %v3244
  %v3477 = vpack.c.b16 %v3249, %v3245
  %v3478 = vpack.c.b16 %v3254, %v3250
  %v3479 = vpack.c.b16 %v3255, %v3251
  %v3480 = vpack.c.b16 %v3256, %v3252
  %v3481 = vpack.c.b16 %v3257, %v3253
  %v3482 = vpack.c.b16 %v3262, %v3258
  %v3483 = vpack.c.b16 %v3263, %v3259
  %v3484 = vpack.c.b16 %v3264, %v3260
  %v3485 = vpack.c.b16 %v3265, %v3261
  %v3486 = vpack.c.b16 %v3270, %v3266
  %v3487 = vpack.c.b16 %v3271, %v3267
  %v3488 = vpack.c.b16 %v3272, %v3268
  %v3489 = vpack.c.b16 %v3273, %v3269
  %v3490 = vpack.c.b16 %v3278, %v3274
  %v3491 = vpack.c.b16 %v3279, %v3275
  %v3492 = vpack.c.b16 %v3280, %v3276
  %v3493 = vpack.c.b16 %v3281, %v3277
  %v3494 = vpack.c.b16 %v3286, %v3282
  %v3495 = vpack.c.b16 %v3287, %v3283
  %v3496 = vpack.c.b16 %v3288, %v3284
  %v3497 = vpack.c.b16 %v3289, %v3285
  %v3498 = vpack.c.b16 %v3294, %v3290
  %v3499 = vpack.c.b16 %v3295, %v3291
  %v3500 = vpack.c.b16 %v3296, %v3292
  %v3501 = vpack.c.b16 %v3297, %v3293
  %v3502 = vpack.c.b16 %v3302, %v3298
  %v3503 = vpack.c.b16 %v3303, %v3299
  %v3504 = vpack.c.b16 %v3304, %v3300
  %v3505 = vpack.c.b16 %v3305, %v3301
  %v3506 = vpack.c.b16 %v3310, %v3306
  %v3507 = vpack.c.b16 %v3311, %v3307
  %v3508 = vpack.c.b16 %v3312, %v3308
  %v3509 = vpack.c.b16 %v3313, %v3309
  %v3510 = vpack.c.b16 %v3318, %v3314
  %v3511 = vpack.c.b16 %v3319, %v3315
  %v3512 = vpack.c.b16 %v3320, %v3316
  %v3513 = vpack.c.b16 %v3321, %v3317
  %v3514 = vpack.c.b16 %v3326, %v3322
  %v3515 = vpack.c.b16 %v3327, %v3323
  %v3516 = vpack.c.b16 %v3328, %v3324
  %v3517 = vpack.c.b16 %v3329, %v3325
  %v3518 = vpack.c.b16 %v3334, %v3330
  %v3519 = vpack.c.b16 %v3335, %v3331
  %v3520 = vpack.c.b16 %v3336, %v3332
  %v3521 = vpack.c.b16 %v3337, %v3333
  %v3707 = vsel %vm876, %v2780, 0
  %3709 = vmatpush.bf16.msra.mxu0 %v3366
  %3710 = vmatpush.bf16.msra.mxu0 %v3362
  %3711 = vmatpush.bf16.msra.mxu0 %v3358
  %3712 = vmatpush.bf16.msra.mxu0 %v3354
  %3713 = vmatpush.bf16.msra.mxu0 %v3350
  %3714 = vmatpush.bf16.msra.mxu0 %v3346
  %3715 = vmatpush.bf16.msra.mxu0 %v3342
  %3716 = vmatpush.bf16.msra.mxu0 %v3338
  %3717 = vmatmul.bf16.gmra.mxu0 %v2775
  %v3718 = vpop.f32.mrf.mxu0
  %v3719 = vadd.f32 %v2501, %v3718
  %v3720 = vpop.f32.mrf.mxu0
  %v3721 = vadd.f32 %v2503, %v3720
  %3722 = vdwg.mxu0
  %3723 = vmatpush.bf16.msra.mxu0 %v3398
  %3724 = vmatpush.bf16.msra.mxu0 %v3394
  %3725 = vmatpush.bf16.msra.mxu0 %v3390
  %3726 = vmatpush.bf16.msra.mxu0 %v3386
  %3727 = vmatpush.bf16.msra.mxu0 %v3382
  %3728 = vmatpush.bf16.msra.mxu0 %v3378
  %3729 = vmatpush.bf16.msra.mxu0 %v3374
  %3730 = vmatpush.bf16.msra.mxu0 %v3370
  %3731 = vmatmul.bf16.gmra.mxu0 %v2776
  %v3732 = vpop.f32.mrf.mxu0
  %v3733 = vadd.f32 %v3719, %v3732
  %v3734 = vpop.f32.mrf.mxu0
  %v3735 = vadd.f32 %v3721, %v3734
  %3736 = vdwg.mxu0
  %3737 = vmatpush.bf16.msra.mxu0 %v3430
  %3738 = vmatpush.bf16.msra.mxu0 %v3426
  %3739 = vmatpush.bf16.msra.mxu0 %v3422
  %3740 = vmatpush.bf16.msra.mxu0 %v3418
  %3741 = vmatpush.bf16.msra.mxu0 %v3414
  %3742 = vmatpush.bf16.msra.mxu0 %v3410
  %3743 = vmatpush.bf16.msra.mxu0 %v3406
  %3744 = vmatpush.bf16.msra.mxu0 %v3402
  %3745 = vmatmul.bf16.gmra.mxu0 %v2777
  %v3746 = vpop.f32.mrf.mxu0
  %v3747 = vadd.f32 %v3733, %v3746
  %v3748 = vpop.f32.mrf.mxu0
  %v3749 = vadd.f32 %v3735, %v3748
  %3750 = vdwg.mxu0
  %3751 = vmatpush.bf16.msra.mxu0 %v3462
  %3752 = vmatpush.bf16.msra.mxu0 %v3458
  %3753 = vmatpush.bf16.msra.mxu0 %v3454
  %3754 = vmatpush.bf16.msra.mxu0 %v3450
  %3755 = vmatpush.bf16.msra.mxu0 %v3446
  %3756 = vmatpush.bf16.msra.mxu0 %v3442
  %3757 = vmatpush.bf16.msra.mxu0 %v3438
  %3758 = vmatpush.bf16.msra.mxu0 %v3434
  %3759 = vmatmul.bf16.gmra.mxu0 %v2778
  %v3760 = vpop.f32.mrf.mxu0
  %v3761 = vadd.f32 %v3747, %v3760
  %v3762 = vpop.f32.mrf.mxu0
  %v3763 = vadd.f32 %v3749, %v3762
  %3764 = vdwg.mxu0
  %3765 = vmatpush.bf16.msra.mxu0 %v3494
  %3766 = vmatpush.bf16.msra.mxu0 %v3490
  %3767 = vmatpush.bf16.msra.mxu0 %v3486
  %3768 = vmatpush.bf16.msra.mxu0 %v3482
  %3769 = vmatpush.bf16.msra.mxu0 %v3478
  %3770 = vmatpush.bf16.msra.mxu0 %v3474
  %3771 = vmatpush.bf16.msra.mxu0 %v3470
  %3772 = vmatpush.bf16.msra.mxu0 %v3466
  %3773 = vmatmul.bf16.gmra.mxu0 %v2779
  %v3774 = vpop.f32.mrf.mxu0
  %v3775 = vadd.f32 %v3761, %v3774
  %v3776 = vpop.f32.mrf.mxu0
  %v3777 = vadd.f32 %v3763, %v3776
  %3778 = vdwg.mxu0
  %3779 = vmatpush.bf16.msra.mxu0 0
  %3780 = vmatpush.bf16.msra.mxu0 0
  %3781 = vmatpush.bf16.msra.mxu0 %v3518
  %3782 = vmatpush.bf16.msra.mxu0 %v3514
  %3783 = vmatpush.bf16.msra.mxu0 %v3510
  %3784 = vmatpush.bf16.msra.mxu0 %v3506
  %3785 = vmatpush.bf16.msra.mxu0 %v3502
  %3786 = vmatpush.bf16.msra.mxu0 %v3498
  %3787 = vmatmul.bf16.gmra.mxu0 %v3707
  %v3788 = vpop.f32.mrf.mxu0
  %v3789 = vadd.f32 %v3775, %v3788
  %v3790 = vpop.f32.mrf.mxu0
  %v3791 = vadd.f32 %v3777, %v3790
  %3792 = vdwg.mxu0
  %3793 = vmatpush.bf16.msra.mxu0 %v3367
  %3794 = vmatpush.bf16.msra.mxu0 %v3363
  %3795 = vmatpush.bf16.msra.mxu0 %v3359
  %3796 = vmatpush.bf16.msra.mxu0 %v3355
  %3797 = vmatpush.bf16.msra.mxu0 %v3351
  %3798 = vmatpush.bf16.msra.mxu0 %v3347
  %3799 = vmatpush.bf16.msra.mxu0 %v3343
  %3800 = vmatpush.bf16.msra.mxu0 %v3339
  %3801 = vmatmul.bf16.gmra.mxu0 %v2775
  %v3802 = vpop.f32.mrf.mxu0
  %v3803 = vadd.f32 %v2585, %v3802
  %v3804 = vpop.f32.mrf.mxu0
  %v3805 = vadd.f32 %v2587, %v3804
  %3806 = vdwg.mxu0
  %3807 = vmatpush.bf16.msra.mxu0 %v3399
  %3808 = vmatpush.bf16.msra.mxu0 %v3395
  %3809 = vmatpush.bf16.msra.mxu0 %v3391
  %3810 = vmatpush.bf16.msra.mxu0 %v3387
  %3811 = vmatpush.bf16.msra.mxu0 %v3383
  %3812 = vmatpush.bf16.msra.mxu0 %v3379
  %3813 = vmatpush.bf16.msra.mxu0 %v3375
  %3814 = vmatpush.bf16.msra.mxu0 %v3371
  %3815 = vmatmul.bf16.gmra.mxu0 %v2776
  %v3816 = vpop.f32.mrf.mxu0
  %v3817 = vadd.f32 %v3803, %v3816
  %v3818 = vpop.f32.mrf.mxu0
  %v3819 = vadd.f32 %v3805, %v3818
  %3820 = vdwg.mxu0
  %3821 = vmatpush.bf16.msra.mxu0 %v3431
  %3822 = vmatpush.bf16.msra.mxu0 %v3427
  %3823 = vmatpush.bf16.msra.mxu0 %v3423
  %3824 = vmatpush.bf16.msra.mxu0 %v3419
  %3825 = vmatpush.bf16.msra.mxu0 %v3415
  %3826 = vmatpush.bf16.msra.mxu0 %v3411
  %3827 = vmatpush.bf16.msra.mxu0 %v3407
  %3828 = vmatpush.bf16.msra.mxu0 %v3403
  %3829 = vmatmul.bf16.gmra.mxu0 %v2777
  %v3830 = vpop.f32.mrf.mxu0
  %v3831 = vadd.f32 %v3817, %v3830
  %v3832 = vpop.f32.mrf.mxu0
  %v3833 = vadd.f32 %v3819, %v3832
  %3834 = vdwg.mxu0
  %3835 = vmatpush.bf16.msra.mxu0 %v3463
  %3836 = vmatpush.bf16.msra.mxu0 %v3459
  %3837 = vmatpush.bf16.msra.mxu0 %v3455
  %3838 = vmatpush.bf16.msra.mxu0 %v3451
  %3839 = vmatpush.bf16.msra.mxu0 %v3447
  %3840 = vmatpush.bf16.msra.mxu0 %v3443
  %3841 = vmatpush.bf16.msra.mxu0 %v3439
  %3842 = vmatpush.bf16.msra.mxu0 %v3435
  %3843 = vmatmul.bf16.gmra.mxu0 %v2778
  %v3844 = vpop.f32.mrf.mxu0
  %v3845 = vadd.f32 %v3831, %v3844
  %v3846 = vpop.f32.mrf.mxu0
  %v3847 = vadd.f32 %v3833, %v3846
  %3848 = vdwg.mxu0
  %3849 = vmatpush.bf16.msra.mxu0 %v3495
  %3850 = vmatpush.bf16.msra.mxu0 %v3491
  %3851 = vmatpush.bf16.msra.mxu0 %v3487
  %3852 = vmatpush.bf16.msra.mxu0 %v3483
  %3853 = vmatpush.bf16.msra.mxu0 %v3479
  %3854 = vmatpush.bf16.msra.mxu0 %v3475
  %3855 = vmatpush.bf16.msra.mxu0 %v3471
  %3856 = vmatpush.bf16.msra.mxu0 %v3467
  %3857 = vmatmul.bf16.gmra.mxu0 %v2779
  %v3858 = vpop.f32.mrf.mxu0
  %v3859 = vadd.f32 %v3845, %v3858
  %v3860 = vpop.f32.mrf.mxu0
  %v3861 = vadd.f32 %v3847, %v3860
  %3862 = vdwg.mxu0
  %3863 = vmatpush.bf16.msra.mxu0 0
  %3864 = vmatpush.bf16.msra.mxu0 0
  %3865 = vmatpush.bf16.msra.mxu0 %v3519
  %3866 = vmatpush.bf16.msra.mxu0 %v3515
  %3867 = vmatpush.bf16.msra.mxu0 %v3511
  %3868 = vmatpush.bf16.msra.mxu0 %v3507
  %3869 = vmatpush.bf16.msra.mxu0 %v3503
  %3870 = vmatpush.bf16.msra.mxu0 %v3499
  %3871 = vmatmul.bf16.gmra.mxu0 %v3707
  %v3872 = vpop.f32.mrf.mxu0
  %v3873 = vadd.f32 %v3859, %v3872
  %v3874 = vpop.f32.mrf.mxu0
  %v3875 = vadd.f32 %v3861, %v3874
  %3876 = vdwg.mxu0
  %3877 = vmatpush.bf16.msra.mxu0 %v3368
  %3878 = vmatpush.bf16.msra.mxu0 %v3364
  %3879 = vmatpush.bf16.msra.mxu0 %v3360
  %3880 = vmatpush.bf16.msra.mxu0 %v3356
  %3881 = vmatpush.bf16.msra.mxu0 %v3352
  %3882 = vmatpush.bf16.msra.mxu0 %v3348
  %3883 = vmatpush.bf16.msra.mxu0 %v3344
  %3884 = vmatpush.bf16.msra.mxu0 %v3340
  %3885 = vmatmul.bf16.gmra.mxu0 %v2775
  %v3886 = vpop.f32.mrf.mxu0
  %v3887 = vadd.f32 %v2669, %v3886
  %v3888 = vpop.f32.mrf.mxu0
  %v3889 = vadd.f32 %v2671, %v3888
  %3890 = vdwg.mxu0
  %3891 = vmatpush.bf16.msra.mxu0 %v3400
  %3892 = vmatpush.bf16.msra.mxu0 %v3396
  %3893 = vmatpush.bf16.msra.mxu0 %v3392
  %3894 = vmatpush.bf16.msra.mxu0 %v3388
  %3895 = vmatpush.bf16.msra.mxu0 %v3384
  %3896 = vmatpush.bf16.msra.mxu0 %v3380
  %3897 = vmatpush.bf16.msra.mxu0 %v3376
  %3898 = vmatpush.bf16.msra.mxu0 %v3372
  %3899 = vmatmul.bf16.gmra.mxu0 %v2776
  %v3900 = vpop.f32.mrf.mxu0
  %v3901 = vadd.f32 %v3887, %v3900
  %v3902 = vpop.f32.mrf.mxu0
  %v3903 = vadd.f32 %v3889, %v3902
  %3904 = vdwg.mxu0
  %3905 = vmatpush.bf16.msra.mxu0 %v3432
  %3906 = vmatpush.bf16.msra.mxu0 %v3428
  %3907 = vmatpush.bf16.msra.mxu0 %v3424
  %3908 = vmatpush.bf16.msra.mxu0 %v3420
  %3909 = vmatpush.bf16.msra.mxu0 %v3416
  %3910 = vmatpush.bf16.msra.mxu0 %v3412
  %3911 = vmatpush.bf16.msra.mxu0 %v3408
  %3912 = vmatpush.bf16.msra.mxu0 %v3404
  %3913 = vmatmul.bf16.gmra.mxu0 %v2777
  %v3914 = vpop.f32.mrf.mxu0
  %v3915 = vadd.f32 %v3901, %v3914
  %v3916 = vpop.f32.mrf.mxu0
  %v3917 = vadd.f32 %v3903, %v3916
  %3918 = vdwg.mxu0
  %3919 = vmatpush.bf16.msra.mxu0 %v3464
  %3920 = vmatpush.bf16.msra.mxu0 %v3460
  %3921 = vmatpush.bf16.msra.mxu0 %v3456
  %3922 = vmatpush.bf16.msra.mxu0 %v3452
  %3923 = vmatpush.bf16.msra.mxu0 %v3448
  %3924 = vmatpush.bf16.msra.mxu0 %v3444
  %3925 = vmatpush.bf16.msra.mxu0 %v3440
  %3926 = vmatpush.bf16.msra.mxu0 %v3436
  %3927 = vmatmul.bf16.gmra.mxu0 %v2778
  %v3928 = vpop.f32.mrf.mxu0
  %v3929 = vadd.f32 %v3915, %v3928
  %v3930 = vpop.f32.mrf.mxu0
  %v3931 = vadd.f32 %v3917, %v3930
  %3932 = vdwg.mxu0
  %3933 = vmatpush.bf16.msra.mxu0 %v3496
  %3934 = vmatpush.bf16.msra.mxu0 %v3492
  %3935 = vmatpush.bf16.msra.mxu0 %v3488
  %3936 = vmatpush.bf16.msra.mxu0 %v3484
  %3937 = vmatpush.bf16.msra.mxu0 %v3480
  %3938 = vmatpush.bf16.msra.mxu0 %v3476
  %3939 = vmatpush.bf16.msra.mxu0 %v3472
  %3940 = vmatpush.bf16.msra.mxu0 %v3468
  %3941 = vmatmul.bf16.gmra.mxu0 %v2779
  %v3942 = vpop.f32.mrf.mxu0
  %v3943 = vadd.f32 %v3929, %v3942
  %v3944 = vpop.f32.mrf.mxu0
  %v3945 = vadd.f32 %v3931, %v3944
  %3946 = vdwg.mxu0
  %3947 = vmatpush.bf16.msra.mxu0 0
  %3948 = vmatpush.bf16.msra.mxu0 0
  %3949 = vmatpush.bf16.msra.mxu0 %v3520
  %3950 = vmatpush.bf16.msra.mxu0 %v3516
  %3951 = vmatpush.bf16.msra.mxu0 %v3512
  %3952 = vmatpush.bf16.msra.mxu0 %v3508
  %3953 = vmatpush.bf16.msra.mxu0 %v3504
  %3954 = vmatpush.bf16.msra.mxu0 %v3500
  %3955 = vmatmul.bf16.gmra.mxu0 %v3707
  %v3956 = vpop.f32.mrf.mxu0
  %v3957 = vadd.f32 %v3943, %v3956
  %v3958 = vpop.f32.mrf.mxu0
  %v3959 = vadd.f32 %v3945, %v3958
  %3960 = vdwg.mxu0
  %3961 = vmatpush.bf16.msra.mxu0 %v3369
  %3962 = vmatpush.bf16.msra.mxu0 %v3365
  %3963 = vmatpush.bf16.msra.mxu0 %v3361
  %3964 = vmatpush.bf16.msra.mxu0 %v3357
  %3965 = vmatpush.bf16.msra.mxu0 %v3353
  %3966 = vmatpush.bf16.msra.mxu0 %v3349
  %3967 = vmatpush.bf16.msra.mxu0 %v3345
  %3968 = vmatpush.bf16.msra.mxu0 %v3341
  %3969 = vmatmul.bf16.gmra.mxu0 %v2775
  %v3970 = vpop.f32.mrf.mxu0
  %v3971 = vadd.f32 %v2753, %v3970
  %v3972 = vpop.f32.mrf.mxu0
  %v3973 = vadd.f32 %v2755, %v3972
  %3974 = vdwg.mxu0
  %3975 = vmatpush.bf16.msra.mxu0 %v3401
  %3976 = vmatpush.bf16.msra.mxu0 %v3397
  %3977 = vmatpush.bf16.msra.mxu0 %v3393
  %3978 = vmatpush.bf16.msra.mxu0 %v3389
  %3979 = vmatpush.bf16.msra.mxu0 %v3385
  %3980 = vmatpush.bf16.msra.mxu0 %v3381
  %3981 = vmatpush.bf16.msra.mxu0 %v3377
  %3982 = vmatpush.bf16.msra.mxu0 %v3373
  %3983 = vmatmul.bf16.gmra.mxu0 %v2776
  %v3984 = vpop.f32.mrf.mxu0
  %v3985 = vadd.f32 %v3971, %v3984
  %v3986 = vpop.f32.mrf.mxu0
  %v3987 = vadd.f32 %v3973, %v3986
  %3988 = vdwg.mxu0
  %3989 = vmatpush.bf16.msra.mxu0 %v3433
  %3990 = vmatpush.bf16.msra.mxu0 %v3429
  %3991 = vmatpush.bf16.msra.mxu0 %v3425
  %3992 = vmatpush.bf16.msra.mxu0 %v3421
  %3993 = vmatpush.bf16.msra.mxu0 %v3417
  %3994 = vmatpush.bf16.msra.mxu0 %v3413
  %3995 = vmatpush.bf16.msra.mxu0 %v3409
  %3996 = vmatpush.bf16.msra.mxu0 %v3405
  %3997 = vmatmul.bf16.gmra.mxu0 %v2777
  %v3998 = vpop.f32.mrf.mxu0
  %v3999 = vadd.f32 %v3985, %v3998
  %v4000 = vpop.f32.mrf.mxu0
  %v4001 = vadd.f32 %v3987, %v4000
  %4002 = vdwg.mxu0
  %4003 = vmatpush.bf16.msra.mxu0 %v3465
  %4004 = vmatpush.bf16.msra.mxu0 %v3461
  %4005 = vmatpush.bf16.msra.mxu0 %v3457
  %4006 = vmatpush.bf16.msra.mxu0 %v3453
  %4007 = vmatpush.bf16.msra.mxu0 %v3449
  %4008 = vmatpush.bf16.msra.mxu0 %v3445
  %4009 = vmatpush.bf16.msra.mxu0 %v3441
  %4010 = vmatpush.bf16.msra.mxu0 %v3437
  %4011 = vmatmul.bf16.gmra.mxu0 %v2778
  %v4012 = vpop.f32.mrf.mxu0
  %v4013 = vadd.f32 %v3999, %v4012
  %v4014 = vpop.f32.mrf.mxu0
  %v4015 = vadd.f32 %v4001, %v4014
  %4016 = vdwg.mxu0
  %4017 = vmatpush.bf16.msra.mxu0 %v3497
  %4018 = vmatpush.bf16.msra.mxu0 %v3493
  %4019 = vmatpush.bf16.msra.mxu0 %v3489
  %4020 = vmatpush.bf16.msra.mxu0 %v3485
  %4021 = vmatpush.bf16.msra.mxu0 %v3481
  %4022 = vmatpush.bf16.msra.mxu0 %v3477
  %4023 = vmatpush.bf16.msra.mxu0 %v3473
  %4024 = vmatpush.bf16.msra.mxu0 %v3469
  %4025 = vmatmul.bf16.gmra.mxu0 %v2779
  %v4026 = vpop.f32.mrf.mxu0
  %v4027 = vadd.f32 %v4013, %v4026
  %v4028 = vpop.f32.mrf.mxu0
  %v4029 = vadd.f32 %v4015, %v4028
  %4030 = vdwg.mxu0
  %4031 = vmatpush.bf16.msra.mxu0 0
  %4032 = vmatpush.bf16.msra.mxu0 0
  %4033 = vmatpush.bf16.msra.mxu0 %v3521
  %4034 = vmatpush.bf16.msra.mxu0 %v3517
  %4035 = vmatpush.bf16.msra.mxu0 %v3513
  %4036 = vmatpush.bf16.msra.mxu0 %v3509
  %4037 = vmatpush.bf16.msra.mxu0 %v3505
  %4038 = vmatpush.bf16.msra.mxu0 %v3501
  %4039 = vmatmul.bf16.gmra.mxu0 %v3707
  %v4040 = vpop.f32.mrf.mxu0
  %v4041 = vadd.f32 %v4027, %v4040
  %v4042 = vpop.f32.mrf.mxu0
  %v4043 = vadd.f32 %v4029, %v4042
  %4044 = vdwg.mxu0
  %vm4051 = vcmask 1042432
  %vm4052 = vcmask 1046532
  %vm4053 = vmor %vm4051, %vm4052
  %v4054 = vrot.slane %v1007, 5
  %v4055 = vrot.slane %v4054, 4
  %v4056 = vrot.slane %v1010, 5
  %v4057 = vsel %vm4053, %v4055, %v4056
  %v4058 = vrot.slane %v1008, 5
  %v4059 = vrot.slane %v4058, 4
  %v4060 = vrot.slane %v1011, 5
  %v4061 = vsel %vm4053, %v4059, %v4060
  %v4062 = vrot.slane %v1009, 5
  %v4063 = vrot.slane %v4062, 4
  %v4064 = vrot.slane %v1012, 5
  %v4065 = vsel %vm4053, %v4063, %v4064
  %v4066 = vrot.slane %v1013, 5
  %v4067 = vrot.slane %v4066, 4
  %v4068 = vrot.slane %v1016, 5
  %v4069 = vsel %vm4053, %v4067, %v4068
  %v4070 = vrot.slane %v1014, 5
  %v4071 = vrot.slane %v4070, 4
  %v4072 = vrot.slane %v1017, 5
  %v4073 = vsel %vm4053, %v4071, %v4072
  %v4074 = vrot.slane %v1015, 5
  %v4075 = vrot.slane %v4074, 4
  %v4076 = vrot.slane %v1018, 5
  %v4077 = vsel %vm4053, %v4075, %v4076
  %s4078 = scalar_lea.vmem %s3, 2944
  %v4079 = vld [vmem:[%s4078] sm:$0xff]
  %v4080 = vld [vmem:[%s4078 + $0x8] sm:$0xff]
  %v4081 = vld [vmem:[%s4078 + $0x10] sm:$0xff]
  %v4082 = vld [vmem:[%s4078 + $0x18] sm:$0xff]
  %v4083 = vld [vmem:[%s4078 + $0x20] sm:$0xff]
  %v4084 = vld [vmem:[%s4078 + $0x28] sm:$0xff]
  %v4085 = vld [vmem:[%s4078 + $0x30] sm:$0xff]
  %v4086 = vld [vmem:[%s4078 + $0x38] sm:$0xff]
  %v4087 = vld [vmem:[%s4078 + $0x40] sm:$0xff]
  %v4088 = vld [vmem:[%s4078 + $0x48] sm:$0xff]
  %v4089 = vld [vmem:[%s4078 + $0x50] sm:$0xff]
  %v4090 = vld [vmem:[%s4078 + $0x58] sm:$0xff]
  %v4091 = vld [vmem:[%s4078 + $0x60] sm:$0xff]
  %v4092 = vld [vmem:[%s4078 + $0x68] sm:$0xff]
  %v4093 = vld [vmem:[%s4078 + $0x70] sm:$0xff]
  %v4094 = vld [vmem:[%s4078 + $0x78] sm:$0xff]
  %v4095 = vld [vmem:[%s4078 + $0x80] sm:$0xff]
  %v4096 = vld [vmem:[%s4078 + $0x88] sm:$0xff]
  %v4097 = vld [vmem:[%s4078 + $0x90] sm:$0xff]
  %v4098 = vld [vmem:[%s4078 + $0x98] sm:$0xff]
  %v4099 = vld [vmem:[%s4078 + $0xa0] sm:$0xff]
  %v4100 = vld [vmem:[%s4078 + $0xa8] sm:$0xff]
  %v4101 = vld [vmem:[%s4078 + $0xb0] sm:$0xff]
  %v4102 = vld [vmem:[%s4078 + $0xb8] sm:$0xff]
  %v4103 = vld [vmem:[%s4078 + $0xc0] sm:$0xff]
  %v4104 = vld [vmem:[%s4078 + $0xc8] sm:$0xff]
  %v4105 = vld [vmem:[%s4078 + $0xd0] sm:$0xff]
  %v4106 = vld [vmem:[%s4078 + $0xd8] sm:$0xff]
  %v4107 = vld [vmem:[%s4078 + $0xe0] sm:$0xff]
  %v4108 = vld [vmem:[%s4078 + $0xe8] sm:$0xff]
  %v4109 = vld [vmem:[%s4078 + $0xf0] sm:$0xff]
  %v4110 = vld [vmem:[%s4078 + $0xf8] sm:$0xff]
  %v4111 = vld [vmem:[%s4078 + $0x100] sm:$0xff]
  %v4112 = vld [vmem:[%s4078 + $0x108] sm:$0xff]
  %v4113 = vld [vmem:[%s4078 + $0x110] sm:$0xff]
  %v4114 = vld [vmem:[%s4078 + $0x118] sm:$0xff]
  %v4115 = vld [vmem:[%s4078 + $0x120] sm:$0xff]
  %v4116 = vld [vmem:[%s4078 + $0x128] sm:$0xff]
  %v4117 = vld [vmem:[%s4078 + $0x130] sm:$0xff]
  %v4118 = vld [vmem:[%s4078 + $0x138] sm:$0xff]
  %v4119 = vld [vmem:[%s4078 + $0x140] sm:$0xff]
  %v4120 = vld [vmem:[%s4078 + $0x148] sm:$0xff]
  %v4121 = vld [vmem:[%s4078 + $0x150] sm:$0xff]
  %v4122 = vld [vmem:[%s4078 + $0x158] sm:$0xff]
  %v4123 = vld [vmem:[%s4078 + $0x160] sm:$0xff]
  %v4124 = vld [vmem:[%s4078 + $0x168] sm:$0xff]
  %v4125 = vld [vmem:[%s4078 + $0x170] sm:$0xff]
  %v4126 = vld [vmem:[%s4078 + $0x178] sm:$0xff]
  %v4127 = vld [vmem:[%s4078 + $0x180] sm:$0xff]
  %v4128 = vld [vmem:[%s4078 + $0x188] sm:$0xff]
  %v4129 = vld [vmem:[%s4078 + $0x190] sm:$0xff]
  %v4130 = vld [vmem:[%s4078 + $0x198] sm:$0xff]
  %v4131 = vld [vmem:[%s4078 + $0x1a0] sm:$0xff]
  %v4132 = vld [vmem:[%s4078 + $0x1a8] sm:$0xff]
  %v4133 = vld [vmem:[%s4078 + $0x1b0] sm:$0xff]
  %v4134 = vld [vmem:[%s4078 + $0x1b8] sm:$0xff]
  %v4135 = vld [vmem:[%s4078 + $0x1c0] sm:$0xff]
  %v4136 = vld [vmem:[%s4078 + $0x1c8] sm:$0xff]
  %v4137 = vld [vmem:[%s4078 + $0x1d0] sm:$0xff]
  %v4138 = vld [vmem:[%s4078 + $0x1d8] sm:$0xff]
  %v4139 = vld [vmem:[%s4078 + $0x1e0] sm:$0xff]
  %v4140 = vld [vmem:[%s4078 + $0x1e8] sm:$0xff]
  %v4141 = vld [vmem:[%s4078 + $0x1f0] sm:$0xff]
  %v4142 = vld [vmem:[%s4078 + $0x1f8] sm:$0xff]
  %v4143 = vld [vmem:[%s4078 + $0x200] sm:$0xff]
  %v4144 = vld [vmem:[%s4078 + $0x208] sm:$0xff]
  %v4145 = vld [vmem:[%s4078 + $0x210] sm:$0xff]
  %v4146 = vld [vmem:[%s4078 + $0x218] sm:$0xff]
  %v4147 = vld [vmem:[%s4078 + $0x220] sm:$0xff]
  %v4148 = vld [vmem:[%s4078 + $0x228] sm:$0xff]
  %v4149 = vld [vmem:[%s4078 + $0x230] sm:$0xff]
  %v4150 = vld [vmem:[%s4078 + $0x238] sm:$0xff]
  %v4151 = vld [vmem:[%s4078 + $0x240] sm:$0xff]
  %v4152 = vld [vmem:[%s4078 + $0x248] sm:$0xff]
  %v4153 = vld [vmem:[%s4078 + $0x250] sm:$0xff]
  %v4154 = vld [vmem:[%s4078 + $0x258] sm:$0xff]
  %v4155 = vld [vmem:[%s4078 + $0x260] sm:$0xff]
  %v4156 = vld [vmem:[%s4078 + $0x268] sm:$0xff]
  %v4157 = vld [vmem:[%s4078 + $0x270] sm:$0xff]
  %v4158 = vld [vmem:[%s4078 + $0x278] sm:$0xff]
  %v4159 = vld [vmem:[%s4078 + $0x280] sm:$0xff]
  %v4160 = vld [vmem:[%s4078 + $0x288] sm:$0xff]
  %v4161 = vld [vmem:[%s4078 + $0x290] sm:$0xff]
  %v4162 = vld [vmem:[%s4078 + $0x298] sm:$0xff]
  %v4163 = vld [vmem:[%s4078 + $0x2a0] sm:$0xff]
  %v4164 = vld [vmem:[%s4078 + $0x2a8] sm:$0xff]
  %v4165 = vld [vmem:[%s4078 + $0x2b0] sm:$0xff]
  %v4166 = vld [vmem:[%s4078 + $0x2b8] sm:$0xff]
  %v4167 = vld [vmem:[%s4078 + $0x2c0] sm:$0xff]
  %v4168 = vld [vmem:[%s4078 + $0x2c8] sm:$0xff]
  %v4169 = vld [vmem:[%s4078 + $0x2d0] sm:$0xff]
  %v4170 = vld [vmem:[%s4078 + $0x2d8] sm:$0xff]
  %v4171 = vld [vmem:[%s4078 + $0x2e0] sm:$0xff]
  %v4172 = vld [vmem:[%s4078 + $0x2e8] sm:$0xff]
  %v4173 = vld [vmem:[%s4078 + $0x2f0] sm:$0xff]
  %v4174 = vld [vmem:[%s4078 + $0x2f8] sm:$0xff]
  %v4175 = vld [vmem:[%s4078 + $0x300] sm:$0xff]
  %v4176 = vld [vmem:[%s4078 + $0x308] sm:$0xff]
  %v4177 = vld [vmem:[%s4078 + $0x310] sm:$0xff]
  %v4178 = vld [vmem:[%s4078 + $0x318] sm:$0xff]
  %v4179 = vld [vmem:[%s4078 + $0x320] sm:$0xff]
  %v4180 = vld [vmem:[%s4078 + $0x328] sm:$0xff]
  %v4181 = vld [vmem:[%s4078 + $0x330] sm:$0xff]
  %v4182 = vld [vmem:[%s4078 + $0x338] sm:$0xff]
  %v4183 = vld [vmem:[%s4078 + $0x340] sm:$0xff]
  %v4184 = vld [vmem:[%s4078 + $0x348] sm:$0xff]
  %v4185 = vld [vmem:[%s4078 + $0x350] sm:$0xff]
  %v4186 = vld [vmem:[%s4078 + $0x358] sm:$0xff]
  %v4187 = vld [vmem:[%s4078 + $0x360] sm:$0xff]
  %v4188 = vld [vmem:[%s4078 + $0x368] sm:$0xff]
  %v4189 = vld [vmem:[%s4078 + $0x370] sm:$0xff]
  %v4190 = vld [vmem:[%s4078 + $0x378] sm:$0xff]
  %v4191 = vld [vmem:[%s4078 + $0x380] sm:$0xff]
  %v4192 = vld [vmem:[%s4078 + $0x388] sm:$0xff]
  %v4193 = vld [vmem:[%s4078 + $0x390] sm:$0xff]
  %v4194 = vld [vmem:[%s4078 + $0x398] sm:$0xff]
  %v4195 = vld [vmem:[%s4078 + $0x3a0] sm:$0xff]
  %v4196 = vld [vmem:[%s4078 + $0x3a8] sm:$0xff]
  %v4197 = vld [vmem:[%s4078 + $0x3b0] sm:$0xff]
  %v4198 = vld [vmem:[%s4078 + $0x3b8] sm:$0xff]
  %v4199 = vld [vmem:[%s4078 + $0x3c0] sm:$0xff]
  %v4200 = vld [vmem:[%s4078 + $0x3c8] sm:$0xff]
  %v4201 = vld [vmem:[%s4078 + $0x3d0] sm:$0xff]
  %v4202 = vld [vmem:[%s4078 + $0x3d8] sm:$0xff]
  %v4203 = vld [vmem:[%s4078 + $0x3e0] sm:$0xff]
  %v4204 = vld [vmem:[%s4078 + $0x3e8] sm:$0xff]
  %v4205 = vld [vmem:[%s4078 + $0x3f0] sm:$0xff]
  %v4206 = vld [vmem:[%s4078 + $0x3f8] sm:$0xff]
  %v4207 = vld [vmem:[%s4078 + $0x400] sm:$0xff]
  %v4208 = vld [vmem:[%s4078 + $0x408] sm:$0xff]
  %v4209 = vld [vmem:[%s4078 + $0x410] sm:$0xff]
  %v4210 = vld [vmem:[%s4078 + $0x418] sm:$0xff]
  %v4211 = vld [vmem:[%s4078 + $0x420] sm:$0xff]
  %v4212 = vld [vmem:[%s4078 + $0x428] sm:$0xff]
  %v4213 = vld [vmem:[%s4078 + $0x430] sm:$0xff]
  %v4214 = vld [vmem:[%s4078 + $0x438] sm:$0xff]
  %v4215 = vld [vmem:[%s4078 + $0x440] sm:$0xff]
  %v4216 = vld [vmem:[%s4078 + $0x448] sm:$0xff]
  %v4217 = vld [vmem:[%s4078 + $0x450] sm:$0xff]
  %v4218 = vld [vmem:[%s4078 + $0x458] sm:$0xff]
  %v4219 = vld [vmem:[%s4078 + $0x460] sm:$0xff]
  %v4220 = vld [vmem:[%s4078 + $0x468] sm:$0xff]
  %v4221 = vld [vmem:[%s4078 + $0x470] sm:$0xff]
  %v4222 = vld [vmem:[%s4078 + $0x478] sm:$0xff]
  %v4223 = vld [vmem:[%s4078 + $0x480] sm:$0xff]
  %v4224 = vld [vmem:[%s4078 + $0x488] sm:$0xff]
  %v4225 = vld [vmem:[%s4078 + $0x490] sm:$0xff]
  %v4226 = vld [vmem:[%s4078 + $0x498] sm:$0xff]
  %v4227 = vld [vmem:[%s4078 + $0x4a0] sm:$0xff]
  %v4228 = vld [vmem:[%s4078 + $0x4a8] sm:$0xff]
  %v4229 = vld [vmem:[%s4078 + $0x4b0] sm:$0xff]
  %v4230 = vld [vmem:[%s4078 + $0x4b8] sm:$0xff]
  %v4231 = vld [vmem:[%s4078 + $0x4c0] sm:$0xff]
  %v4232 = vld [vmem:[%s4078 + $0x4c8] sm:$0xff]
  %v4233 = vld [vmem:[%s4078 + $0x4d0] sm:$0xff]
  %v4234 = vld [vmem:[%s4078 + $0x4d8] sm:$0xff]
  %v4235 = vld [vmem:[%s4078 + $0x4e0] sm:$0xff]
  %v4236 = vld [vmem:[%s4078 + $0x4e8] sm:$0xff]
  %v4237 = vld [vmem:[%s4078 + $0x4f0] sm:$0xff]
  %v4238 = vld [vmem:[%s4078 + $0x4f8] sm:$0xff]
  %v4239 = vld [vmem:[%s4078 + $0x500] sm:$0xff]
  %v4240 = vld [vmem:[%s4078 + $0x508] sm:$0xff]
  %v4241 = vld [vmem:[%s4078 + $0x510] sm:$0xff]
  %v4242 = vld [vmem:[%s4078 + $0x518] sm:$0xff]
  %v4243 = vld [vmem:[%s4078 + $0x520] sm:$0xff]
  %v4244 = vld [vmem:[%s4078 + $0x528] sm:$0xff]
  %v4245 = vld [vmem:[%s4078 + $0x530] sm:$0xff]
  %v4246 = vld [vmem:[%s4078 + $0x538] sm:$0xff]
  %v4247 = vld [vmem:[%s4078 + $0x540] sm:$0xff]
  %v4248 = vld [vmem:[%s4078 + $0x548] sm:$0xff]
  %v4249 = vld [vmem:[%s4078 + $0x550] sm:$0xff]
  %v4250 = vld [vmem:[%s4078 + $0x558] sm:$0xff]
  %v4251 = vld [vmem:[%s4078 + $0x560] sm:$0xff]
  %v4252 = vld [vmem:[%s4078 + $0x568] sm:$0xff]
  %v4253 = vld [vmem:[%s4078 + $0x570] sm:$0xff]
  %v4254 = vld [vmem:[%s4078 + $0x578] sm:$0xff]
  %v4255 = vld [vmem:[%s4078 + $0x580] sm:$0xff]
  %v4256 = vld [vmem:[%s4078 + $0x588] sm:$0xff]
  %v4257 = vld [vmem:[%s4078 + $0x590] sm:$0xff]
  %v4258 = vld [vmem:[%s4078 + $0x598] sm:$0xff]
  %v4259 = vld [vmem:[%s4078 + $0x5a0] sm:$0xff]
  %v4260 = vld [vmem:[%s4078 + $0x5a8] sm:$0xff]
  %v4261 = vld [vmem:[%s4078 + $0x5b0] sm:$0xff]
  %v4262 = vld [vmem:[%s4078 + $0x5b8] sm:$0xff]
  %v4263 = vunpack.c.l.b16 %v4057
  %v4264 = vunpack.c.h.b16 %v4057
  %v4265 = vunpack.c.l.b16 %v4061
  %v4266 = vunpack.c.h.b16 %v4061
  %v4267 = vunpack.c.l.b16 %v4065
  %v4268 = vunpack.c.h.b16 %v4065
  %v4269 = vunpack.c.l.b16 %v4069
  %v4270 = vunpack.c.h.b16 %v4069
  %v4271 = vunpack.c.l.b16 %v4073
  %v4272 = vunpack.c.h.b16 %v4073
  %v4273 = vunpack.c.l.b16 %v4077
  %v4274 = vunpack.c.h.b16 %v4077
  %v4275 = vpack.c.b16 %v4269, %v4263
  %v4276 = vpack.c.b16 %v4270, %v4264
  %v4277 = vpack.c.b16 %v4271, %v4265
  %v4278 = vpack.c.b16 %v4272, %v4266
  %v4279 = vpack.c.b16 %v4273, %v4267
  %v4280 = vpack.c.b16 %v4274, %v4268
  %v4470 = vunpack.c.l.b16 %v4079
  %v4471 = vunpack.c.h.b16 %v4079
  %v4472 = vunpack.c.l.b16 %v4080
  %v4473 = vunpack.c.h.b16 %v4080
  %v4474 = vunpack.c.l.b16 %v4081
  %v4475 = vunpack.c.h.b16 %v4081
  %v4476 = vunpack.c.l.b16 %v4082
  %v4477 = vunpack.c.h.b16 %v4082
  %v4478 = vunpack.c.l.b16 %v4083
  %v4479 = vunpack.c.h.b16 %v4083
  %v4480 = vunpack.c.l.b16 %v4084
  %v4481 = vunpack.c.h.b16 %v4084
  %v4482 = vunpack.c.l.b16 %v4085
  %v4483 = vunpack.c.h.b16 %v4085
  %v4484 = vunpack.c.l.b16 %v4086
  %v4485 = vunpack.c.h.b16 %v4086
  %v4486 = vunpack.c.l.b16 %v4087
  %v4487 = vunpack.c.h.b16 %v4087
  %v4488 = vunpack.c.l.b16 %v4088
  %v4489 = vunpack.c.h.b16 %v4088
  %v4490 = vunpack.c.l.b16 %v4089
  %v4491 = vunpack.c.h.b16 %v4089
  %v4492 = vunpack.c.l.b16 %v4090
  %v4493 = vunpack.c.h.b16 %v4090
  %v4494 = vunpack.c.l.b16 %v4091
  %v4495 = vunpack.c.h.b16 %v4091
  %v4496 = vunpack.c.l.b16 %v4092
  %v4497 = vunpack.c.h.b16 %v4092
  %v4498 = vunpack.c.l.b16 %v4093
  %v4499 = vunpack.c.h.b16 %v4093
  %v4500 = vunpack.c.l.b16 %v4094
  %v4501 = vunpack.c.h.b16 %v4094
  %v4502 = vunpack.c.l.b16 %v4095
  %v4503 = vunpack.c.h.b16 %v4095
  %v4504 = vunpack.c.l.b16 %v4096
  %v4505 = vunpack.c.h.b16 %v4096
  %v4506 = vunpack.c.l.b16 %v4097
  %v4507 = vunpack.c.h.b16 %v4097
  %v4508 = vunpack.c.l.b16 %v4098
  %v4509 = vunpack.c.h.b16 %v4098
  %v4510 = vunpack.c.l.b16 %v4099
  %v4511 = vunpack.c.h.b16 %v4099
  %v4512 = vunpack.c.l.b16 %v4100
  %v4513 = vunpack.c.h.b16 %v4100
  %v4514 = vunpack.c.l.b16 %v4101
  %v4515 = vunpack.c.h.b16 %v4101
  %v4516 = vunpack.c.l.b16 %v4102
  %v4517 = vunpack.c.h.b16 %v4102
  %v4518 = vunpack.c.l.b16 %v4103
  %v4519 = vunpack.c.h.b16 %v4103
  %v4520 = vunpack.c.l.b16 %v4104
  %v4521 = vunpack.c.h.b16 %v4104
  %v4522 = vunpack.c.l.b16 %v4105
  %v4523 = vunpack.c.h.b16 %v4105
  %v4524 = vunpack.c.l.b16 %v4106
  %v4525 = vunpack.c.h.b16 %v4106
  %v4526 = vunpack.c.l.b16 %v4107
  %v4527 = vunpack.c.h.b16 %v4107
  %v4528 = vunpack.c.l.b16 %v4108
  %v4529 = vunpack.c.h.b16 %v4108
  %v4530 = vunpack.c.l.b16 %v4109
  %v4531 = vunpack.c.h.b16 %v4109
  %v4532 = vunpack.c.l.b16 %v4110
  %v4533 = vunpack.c.h.b16 %v4110
  %v4534 = vunpack.c.l.b16 %v4111
  %v4535 = vunpack.c.h.b16 %v4111
  %v4536 = vunpack.c.l.b16 %v4112
  %v4537 = vunpack.c.h.b16 %v4112
  %v4538 = vunpack.c.l.b16 %v4113
  %v4539 = vunpack.c.h.b16 %v4113
  %v4540 = vunpack.c.l.b16 %v4114
  %v4541 = vunpack.c.h.b16 %v4114
  %v4542 = vunpack.c.l.b16 %v4115
  %v4543 = vunpack.c.h.b16 %v4115
  %v4544 = vunpack.c.l.b16 %v4116
  %v4545 = vunpack.c.h.b16 %v4116
  %v4546 = vunpack.c.l.b16 %v4117
  %v4547 = vunpack.c.h.b16 %v4117
  %v4548 = vunpack.c.l.b16 %v4118
  %v4549 = vunpack.c.h.b16 %v4118
  %v4550 = vunpack.c.l.b16 %v4119
  %v4551 = vunpack.c.h.b16 %v4119
  %v4552 = vunpack.c.l.b16 %v4120
  %v4553 = vunpack.c.h.b16 %v4120
  %v4554 = vunpack.c.l.b16 %v4121
  %v4555 = vunpack.c.h.b16 %v4121
  %v4556 = vunpack.c.l.b16 %v4122
  %v4557 = vunpack.c.h.b16 %v4122
  %v4558 = vunpack.c.l.b16 %v4123
  %v4559 = vunpack.c.h.b16 %v4123
  %v4560 = vunpack.c.l.b16 %v4124
  %v4561 = vunpack.c.h.b16 %v4124
  %v4562 = vunpack.c.l.b16 %v4125
  %v4563 = vunpack.c.h.b16 %v4125
  %v4564 = vunpack.c.l.b16 %v4126
  %v4565 = vunpack.c.h.b16 %v4126
  %v4566 = vunpack.c.l.b16 %v4127
  %v4567 = vunpack.c.h.b16 %v4127
  %v4568 = vunpack.c.l.b16 %v4128
  %v4569 = vunpack.c.h.b16 %v4128
  %v4570 = vunpack.c.l.b16 %v4129
  %v4571 = vunpack.c.h.b16 %v4129
  %v4572 = vunpack.c.l.b16 %v4130
  %v4573 = vunpack.c.h.b16 %v4130
  %v4574 = vunpack.c.l.b16 %v4131
  %v4575 = vunpack.c.h.b16 %v4131
  %v4576 = vunpack.c.l.b16 %v4132
  %v4577 = vunpack.c.h.b16 %v4132
  %v4578 = vunpack.c.l.b16 %v4133
  %v4579 = vunpack.c.h.b16 %v4133
  %v4580 = vunpack.c.l.b16 %v4134
  %v4581 = vunpack.c.h.b16 %v4134
  %v4582 = vunpack.c.l.b16 %v4135
  %v4583 = vunpack.c.h.b16 %v4135
  %v4584 = vunpack.c.l.b16 %v4136
  %v4585 = vunpack.c.h.b16 %v4136
  %v4586 = vunpack.c.l.b16 %v4137
  %v4587 = vunpack.c.h.b16 %v4137
  %v4588 = vunpack.c.l.b16 %v4138
  %v4589 = vunpack.c.h.b16 %v4138
  %v4590 = vunpack.c.l.b16 %v4139
  %v4591 = vunpack.c.h.b16 %v4139
  %v4592 = vunpack.c.l.b16 %v4140
  %v4593 = vunpack.c.h.b16 %v4140
  %v4594 = vunpack.c.l.b16 %v4141
  %v4595 = vunpack.c.h.b16 %v4141
  %v4596 = vunpack.c.l.b16 %v4142
  %v4597 = vunpack.c.h.b16 %v4142
  %v4598 = vunpack.c.l.b16 %v4143
  %v4599 = vunpack.c.h.b16 %v4143
  %v4600 = vunpack.c.l.b16 %v4144
  %v4601 = vunpack.c.h.b16 %v4144
  %v4602 = vunpack.c.l.b16 %v4145
  %v4603 = vunpack.c.h.b16 %v4145
  %v4604 = vunpack.c.l.b16 %v4146
  %v4605 = vunpack.c.h.b16 %v4146
  %v4606 = vunpack.c.l.b16 %v4147
  %v4607 = vunpack.c.h.b16 %v4147
  %v4608 = vunpack.c.l.b16 %v4148
  %v4609 = vunpack.c.h.b16 %v4148
  %v4610 = vunpack.c.l.b16 %v4149
  %v4611 = vunpack.c.h.b16 %v4149
  %v4612 = vunpack.c.l.b16 %v4150
  %v4613 = vunpack.c.h.b16 %v4150
  %v4614 = vunpack.c.l.b16 %v4151
  %v4615 = vunpack.c.h.b16 %v4151
  %v4616 = vunpack.c.l.b16 %v4152
  %v4617 = vunpack.c.h.b16 %v4152
  %v4618 = vunpack.c.l.b16 %v4153
  %v4619 = vunpack.c.h.b16 %v4153
  %v4620 = vunpack.c.l.b16 %v4154
  %v4621 = vunpack.c.h.b16 %v4154
  %v4622 = vunpack.c.l.b16 %v4155
  %v4623 = vunpack.c.h.b16 %v4155
  %v4624 = vunpack.c.l.b16 %v4156
  %v4625 = vunpack.c.h.b16 %v4156
  %v4626 = vunpack.c.l.b16 %v4157
  %v4627 = vunpack.c.h.b16 %v4157
  %v4628 = vunpack.c.l.b16 %v4158
  %v4629 = vunpack.c.h.b16 %v4158
  %v4630 = vunpack.c.l.b16 %v4159
  %v4631 = vunpack.c.h.b16 %v4159
  %v4632 = vunpack.c.l.b16 %v4160
  %v4633 = vunpack.c.h.b16 %v4160
  %v4634 = vunpack.c.l.b16 %v4161
  %v4635 = vunpack.c.h.b16 %v4161
  %v4636 = vunpack.c.l.b16 %v4162
  %v4637 = vunpack.c.h.b16 %v4162
  %v4638 = vunpack.c.l.b16 %v4163
  %v4639 = vunpack.c.h.b16 %v4163
  %v4640 = vunpack.c.l.b16 %v4164
  %v4641 = vunpack.c.h.b16 %v4164
  %v4642 = vunpack.c.l.b16 %v4165
  %v4643 = vunpack.c.h.b16 %v4165
  %v4644 = vunpack.c.l.b16 %v4166
  %v4645 = vunpack.c.h.b16 %v4166
  %v4646 = vunpack.c.l.b16 %v4167
  %v4647 = vunpack.c.h.b16 %v4167
  %v4648 = vunpack.c.l.b16 %v4168
  %v4649 = vunpack.c.h.b16 %v4168
  %v4650 = vunpack.c.l.b16 %v4169
  %v4651 = vunpack.c.h.b16 %v4169
  %v4652 = vunpack.c.l.b16 %v4170
  %v4653 = vunpack.c.h.b16 %v4170
  %v4654 = vunpack.c.l.b16 %v4171
  %v4655 = vunpack.c.h.b16 %v4171
  %v4656 = vunpack.c.l.b16 %v4172
  %v4657 = vunpack.c.h.b16 %v4172
  %v4658 = vunpack.c.l.b16 %v4173
  %v4659 = vunpack.c.h.b16 %v4173
  %v4660 = vunpack.c.l.b16 %v4174
  %v4661 = vunpack.c.h.b16 %v4174
  %v4662 = vunpack.c.l.b16 %v4175
  %v4663 = vunpack.c.h.b16 %v4175
  %v4664 = vunpack.c.l.b16 %v4176
  %v4665 = vunpack.c.h.b16 %v4176
  %v4666 = vunpack.c.l.b16 %v4177
  %v4667 = vunpack.c.h.b16 %v4177
  %v4668 = vunpack.c.l.b16 %v4178
  %v4669 = vunpack.c.h.b16 %v4178
  %v4670 = vunpack.c.l.b16 %v4179
  %v4671 = vunpack.c.h.b16 %v4179
  %v4672 = vunpack.c.l.b16 %v4180
  %v4673 = vunpack.c.h.b16 %v4180
  %v4674 = vunpack.c.l.b16 %v4181
  %v4675 = vunpack.c.h.b16 %v4181
  %v4676 = vunpack.c.l.b16 %v4182
  %v4677 = vunpack.c.h.b16 %v4182
  %v4678 = vunpack.c.l.b16 %v4183
  %v4679 = vunpack.c.h.b16 %v4183
  %v4680 = vunpack.c.l.b16 %v4184
  %v4681 = vunpack.c.h.b16 %v4184
  %v4682 = vunpack.c.l.b16 %v4185
  %v4683 = vunpack.c.h.b16 %v4185
  %v4684 = vunpack.c.l.b16 %v4186
  %v4685 = vunpack.c.h.b16 %v4186
  %v4686 = vunpack.c.l.b16 %v4187
  %v4687 = vunpack.c.h.b16 %v4187
  %v4688 = vunpack.c.l.b16 %v4188
  %v4689 = vunpack.c.h.b16 %v4188
  %v4690 = vunpack.c.l.b16 %v4189
  %v4691 = vunpack.c.h.b16 %v4189
  %v4692 = vunpack.c.l.b16 %v4190
  %v4693 = vunpack.c.h.b16 %v4190
  %v4694 = vunpack.c.l.b16 %v4191
  %v4695 = vunpack.c.h.b16 %v4191
  %v4696 = vunpack.c.l.b16 %v4192
  %v4697 = vunpack.c.h.b16 %v4192
  %v4698 = vunpack.c.l.b16 %v4193
  %v4699 = vunpack.c.h.b16 %v4193
  %v4700 = vunpack.c.l.b16 %v4194
  %v4701 = vunpack.c.h.b16 %v4194
  %v4702 = vunpack.c.l.b16 %v4195
  %v4703 = vunpack.c.h.b16 %v4195
  %v4704 = vunpack.c.l.b16 %v4196
  %v4705 = vunpack.c.h.b16 %v4196
  %v4706 = vunpack.c.l.b16 %v4197
  %v4707 = vunpack.c.h.b16 %v4197
  %v4708 = vunpack.c.l.b16 %v4198
  %v4709 = vunpack.c.h.b16 %v4198
  %v4710 = vunpack.c.l.b16 %v4199
  %v4711 = vunpack.c.h.b16 %v4199
  %v4712 = vunpack.c.l.b16 %v4200
  %v4713 = vunpack.c.h.b16 %v4200
  %v4714 = vunpack.c.l.b16 %v4201
  %v4715 = vunpack.c.h.b16 %v4201
  %v4716 = vunpack.c.l.b16 %v4202
  %v4717 = vunpack.c.h.b16 %v4202
  %v4718 = vunpack.c.l.b16 %v4203
  %v4719 = vunpack.c.h.b16 %v4203
  %v4720 = vunpack.c.l.b16 %v4204
  %v4721 = vunpack.c.h.b16 %v4204
  %v4722 = vunpack.c.l.b16 %v4205
  %v4723 = vunpack.c.h.b16 %v4205
  %v4724 = vunpack.c.l.b16 %v4206
  %v4725 = vunpack.c.h.b16 %v4206
  %v4726 = vunpack.c.l.b16 %v4207
  %v4727 = vunpack.c.h.b16 %v4207
  %v4728 = vunpack.c.l.b16 %v4208
  %v4729 = vunpack.c.h.b16 %v4208
  %v4730 = vunpack.c.l.b16 %v4209
  %v4731 = vunpack.c.h.b16 %v4209
  %v4732 = vunpack.c.l.b16 %v4210
  %v4733 = vunpack.c.h.b16 %v4210
  %v4734 = vunpack.c.l.b16 %v4211
  %v4735 = vunpack.c.h.b16 %v4211
  %v4736 = vunpack.c.l.b16 %v4212
  %v4737 = vunpack.c.h.b16 %v4212
  %v4738 = vunpack.c.l.b16 %v4213
  %v4739 = vunpack.c.h.b16 %v4213
  %v4740 = vunpack.c.l.b16 %v4214
  %v4741 = vunpack.c.h.b16 %v4214
  %v4742 = vunpack.c.l.b16 %v4215
  %v4743 = vunpack.c.h.b16 %v4215
  %v4744 = vunpack.c.l.b16 %v4216
  %v4745 = vunpack.c.h.b16 %v4216
  %v4746 = vunpack.c.l.b16 %v4217
  %v4747 = vunpack.c.h.b16 %v4217
  %v4748 = vunpack.c.l.b16 %v4218
  %v4749 = vunpack.c.h.b16 %v4218
  %v4750 = vunpack.c.l.b16 %v4219
  %v4751 = vunpack.c.h.b16 %v4219
  %v4752 = vunpack.c.l.b16 %v4220
  %v4753 = vunpack.c.h.b16 %v4220
  %v4754 = vunpack.c.l.b16 %v4221
  %v4755 = vunpack.c.h.b16 %v4221
  %v4756 = vunpack.c.l.b16 %v4222
  %v4757 = vunpack.c.h.b16 %v4222
  %v4758 = vunpack.c.l.b16 %v4223
  %v4759 = vunpack.c.h.b16 %v4223
  %v4760 = vunpack.c.l.b16 %v4224
  %v4761 = vunpack.c.h.b16 %v4224
  %v4762 = vunpack.c.l.b16 %v4225
  %v4763 = vunpack.c.h.b16 %v4225
  %v4764 = vunpack.c.l.b16 %v4226
  %v4765 = vunpack.c.h.b16 %v4226
  %v4766 = vunpack.c.l.b16 %v4227
  %v4767 = vunpack.c.h.b16 %v4227
  %v4768 = vunpack.c.l.b16 %v4228
  %v4769 = vunpack.c.h.b16 %v4228
  %v4770 = vunpack.c.l.b16 %v4229
  %v4771 = vunpack.c.h.b16 %v4229
  %v4772 = vunpack.c.l.b16 %v4230
  %v4773 = vunpack.c.h.b16 %v4230
  %v4774 = vunpack.c.l.b16 %v4231
  %v4775 = vunpack.c.h.b16 %v4231
  %v4776 = vunpack.c.l.b16 %v4232
  %v4777 = vunpack.c.h.b16 %v4232
  %v4778 = vunpack.c.l.b16 %v4233
  %v4779 = vunpack.c.h.b16 %v4233
  %v4780 = vunpack.c.l.b16 %v4234
  %v4781 = vunpack.c.h.b16 %v4234
  %v4782 = vunpack.c.l.b16 %v4235
  %v4783 = vunpack.c.h.b16 %v4235
  %v4784 = vunpack.c.l.b16 %v4236
  %v4785 = vunpack.c.h.b16 %v4236
  %v4786 = vunpack.c.l.b16 %v4237
  %v4787 = vunpack.c.h.b16 %v4237
  %v4788 = vunpack.c.l.b16 %v4238
  %v4789 = vunpack.c.h.b16 %v4238
  %v4790 = vunpack.c.l.b16 %v4239
  %v4791 = vunpack.c.h.b16 %v4239
  %v4792 = vunpack.c.l.b16 %v4240
  %v4793 = vunpack.c.h.b16 %v4240
  %v4794 = vunpack.c.l.b16 %v4241
  %v4795 = vunpack.c.h.b16 %v4241
  %v4796 = vunpack.c.l.b16 %v4242
  %v4797 = vunpack.c.h.b16 %v4242
  %v4798 = vunpack.c.l.b16 %v4243
  %v4799 = vunpack.c.h.b16 %v4243
  %v4800 = vunpack.c.l.b16 %v4244
  %v4801 = vunpack.c.h.b16 %v4244
  %v4802 = vunpack.c.l.b16 %v4245
  %v4803 = vunpack.c.h.b16 %v4245
  %v4804 = vunpack.c.l.b16 %v4246
  %v4805 = vunpack.c.h.b16 %v4246
  %v4806 = vunpack.c.l.b16 %v4247
  %v4807 = vunpack.c.h.b16 %v4247
  %v4808 = vunpack.c.l.b16 %v4248
  %v4809 = vunpack.c.h.b16 %v4248
  %v4810 = vunpack.c.l.b16 %v4249
  %v4811 = vunpack.c.h.b16 %v4249
  %v4812 = vunpack.c.l.b16 %v4250
  %v4813 = vunpack.c.h.b16 %v4250
  %v4814 = vunpack.c.l.b16 %v4251
  %v4815 = vunpack.c.h.b16 %v4251
  %v4816 = vunpack.c.l.b16 %v4252
  %v4817 = vunpack.c.h.b16 %v4252
  %v4818 = vunpack.c.l.b16 %v4253
  %v4819 = vunpack.c.h.b16 %v4253
  %v4820 = vunpack.c.l.b16 %v4254
  %v4821 = vunpack.c.h.b16 %v4254
  %v4822 = vunpack.c.l.b16 %v4255
  %v4823 = vunpack.c.h.b16 %v4255
  %v4824 = vunpack.c.l.b16 %v4256
  %v4825 = vunpack.c.h.b16 %v4256
  %v4826 = vunpack.c.l.b16 %v4257
  %v4827 = vunpack.c.h.b16 %v4257
  %v4828 = vunpack.c.l.b16 %v4258
  %v4829 = vunpack.c.h.b16 %v4258
  %v4830 = vunpack.c.l.b16 %v4259
  %v4831 = vunpack.c.h.b16 %v4259
  %v4832 = vunpack.c.l.b16 %v4260
  %v4833 = vunpack.c.h.b16 %v4260
  %v4834 = vunpack.c.l.b16 %v4261
  %v4835 = vunpack.c.h.b16 %v4261
  %v4836 = vunpack.c.l.b16 %v4262
  %v4837 = vunpack.c.h.b16 %v4262
  %v4838 = vpack.c.b16 %v4474, %v4470
  %v4839 = vpack.c.b16 %v4475, %v4471
  %v4840 = vpack.c.b16 %v4476, %v4472
  %v4841 = vpack.c.b16 %v4477, %v4473
  %v4842 = vpack.c.b16 %v4482, %v4478
  %v4843 = vpack.c.b16 %v4483, %v4479
  %v4844 = vpack.c.b16 %v4484, %v4480
  %v4845 = vpack.c.b16 %v4485, %v4481
  %v4846 = vpack.c.b16 %v4490, %v4486
  %v4847 = vpack.c.b16 %v4491, %v4487
  %v4848 = vpack.c.b16 %v4492, %v4488
  %v4849 = vpack.c.b16 %v4493, %v4489
  %v4850 = vpack.c.b16 %v4498, %v4494
  %v4851 = vpack.c.b16 %v4499, %v4495
  %v4852 = vpack.c.b16 %v4500, %v4496
  %v4853 = vpack.c.b16 %v4501, %v4497
  %v4854 = vpack.c.b16 %v4506, %v4502
  %v4855 = vpack.c.b16 %v4507, %v4503
  %v4856 = vpack.c.b16 %v4508, %v4504
  %v4857 = vpack.c.b16 %v4509, %v4505
  %v4858 = vpack.c.b16 %v4514, %v4510
  %v4859 = vpack.c.b16 %v4515, %v4511
  %v4860 = vpack.c.b16 %v4516, %v4512
  %v4861 = vpack.c.b16 %v4517, %v4513
  %v4862 = vpack.c.b16 %v4522, %v4518
  %v4863 = vpack.c.b16 %v4523, %v4519
  %v4864 = vpack.c.b16 %v4524, %v4520
  %v4865 = vpack.c.b16 %v4525, %v4521
  %v4866 = vpack.c.b16 %v4530, %v4526
  %v4867 = vpack.c.b16 %v4531, %v4527
  %v4868 = vpack.c.b16 %v4532, %v4528
  %v4869 = vpack.c.b16 %v4533, %v4529
  %v4870 = vpack.c.b16 %v4538, %v4534
  %v4871 = vpack.c.b16 %v4539, %v4535
  %v4872 = vpack.c.b16 %v4540, %v4536
  %v4873 = vpack.c.b16 %v4541, %v4537
  %v4874 = vpack.c.b16 %v4546, %v4542
  %v4875 = vpack.c.b16 %v4547, %v4543
  %v4876 = vpack.c.b16 %v4548, %v4544
  %v4877 = vpack.c.b16 %v4549, %v4545
  %v4878 = vpack.c.b16 %v4554, %v4550
  %v4879 = vpack.c.b16 %v4555, %v4551
  %v4880 = vpack.c.b16 %v4556, %v4552
  %v4881 = vpack.c.b16 %v4557, %v4553
  %v4882 = vpack.c.b16 %v4562, %v4558
  %v4883 = vpack.c.b16 %v4563, %v4559
  %v4884 = vpack.c.b16 %v4564, %v4560
  %v4885 = vpack.c.b16 %v4565, %v4561
  %v4886 = vpack.c.b16 %v4570, %v4566
  %v4887 = vpack.c.b16 %v4571, %v4567
  %v4888 = vpack.c.b16 %v4572, %v4568
  %v4889 = vpack.c.b16 %v4573, %v4569
  %v4890 = vpack.c.b16 %v4578, %v4574
  %v4891 = vpack.c.b16 %v4579, %v4575
  %v4892 = vpack.c.b16 %v4580, %v4576
  %v4893 = vpack.c.b16 %v4581, %v4577
  %v4894 = vpack.c.b16 %v4586, %v4582
  %v4895 = vpack.c.b16 %v4587, %v4583
  %v4896 = vpack.c.b16 %v4588, %v4584
  %v4897 = vpack.c.b16 %v4589, %v4585
  %v4898 = vpack.c.b16 %v4594, %v4590
  %v4899 = vpack.c.b16 %v4595, %v4591
  %v4900 = vpack.c.b16 %v4596, %v4592
  %v4901 = vpack.c.b16 %v4597, %v4593
  %v4902 = vpack.c.b16 %v4602, %v4598
  %v4903 = vpack.c.b16 %v4603, %v4599
  %v4904 = vpack.c.b16 %v4604, %v4600
  %v4905 = vpack.c.b16 %v4605, %v4601
  %v4906 = vpack.c.b16 %v4610, %v4606
  %v4907 = vpack.c.b16 %v4611, %v4607
  %v4908 = vpack.c.b16 %v4612, %v4608
  %v4909 = vpack.c.b16 %v4613, %v4609
  %v4910 = vpack.c.b16 %v4618, %v4614
  %v4911 = vpack.c.b16 %v4619, %v4615
  %v4912 = vpack.c.b16 %v4620, %v4616
  %v4913 = vpack.c.b16 %v4621, %v4617
  %v4914 = vpack.c.b16 %v4626, %v4622
  %v4915 = vpack.c.b16 %v4627, %v4623
  %v4916 = vpack.c.b16 %v4628, %v4624
  %v4917 = vpack.c.b16 %v4629, %v4625
  %v4918 = vpack.c.b16 %v4634, %v4630
  %v4919 = vpack.c.b16 %v4635, %v4631
  %v4920 = vpack.c.b16 %v4636, %v4632
  %v4921 = vpack.c.b16 %v4637, %v4633
  %v4922 = vpack.c.b16 %v4642, %v4638
  %v4923 = vpack.c.b16 %v4643, %v4639
  %v4924 = vpack.c.b16 %v4644, %v4640
  %v4925 = vpack.c.b16 %v4645, %v4641
  %v4926 = vpack.c.b16 %v4650, %v4646
  %v4927 = vpack.c.b16 %v4651, %v4647
  %v4928 = vpack.c.b16 %v4652, %v4648
  %v4929 = vpack.c.b16 %v4653, %v4649
  %v4930 = vpack.c.b16 %v4658, %v4654
  %v4931 = vpack.c.b16 %v4659, %v4655
  %v4932 = vpack.c.b16 %v4660, %v4656
  %v4933 = vpack.c.b16 %v4661, %v4657
  %v4934 = vpack.c.b16 %v4666, %v4662
  %v4935 = vpack.c.b16 %v4667, %v4663
  %v4936 = vpack.c.b16 %v4668, %v4664
  %v4937 = vpack.c.b16 %v4669, %v4665
  %v4938 = vpack.c.b16 %v4674, %v4670
  %v4939 = vpack.c.b16 %v4675, %v4671
  %v4940 = vpack.c.b16 %v4676, %v4672
  %v4941 = vpack.c.b16 %v4677, %v4673
  %v4942 = vpack.c.b16 %v4682, %v4678
  %v4943 = vpack.c.b16 %v4683, %v4679
  %v4944 = vpack.c.b16 %v4684, %v4680
  %v4945 = vpack.c.b16 %v4685, %v4681
  %v4946 = vpack.c.b16 %v4690, %v4686
  %v4947 = vpack.c.b16 %v4691, %v4687
  %v4948 = vpack.c.b16 %v4692, %v4688
  %v4949 = vpack.c.b16 %v4693, %v4689
  %v4950 = vpack.c.b16 %v4698, %v4694
  %v4951 = vpack.c.b16 %v4699, %v4695
  %v4952 = vpack.c.b16 %v4700, %v4696
  %v4953 = vpack.c.b16 %v4701, %v4697
  %v4954 = vpack.c.b16 %v4706, %v4702
  %v4955 = vpack.c.b16 %v4707, %v4703
  %v4956 = vpack.c.b16 %v4708, %v4704
  %v4957 = vpack.c.b16 %v4709, %v4705
  %v4958 = vpack.c.b16 %v4714, %v4710
  %v4959 = vpack.c.b16 %v4715, %v4711
  %v4960 = vpack.c.b16 %v4716, %v4712
  %v4961 = vpack.c.b16 %v4717, %v4713
  %v4962 = vpack.c.b16 %v4722, %v4718
  %v4963 = vpack.c.b16 %v4723, %v4719
  %v4964 = vpack.c.b16 %v4724, %v4720
  %v4965 = vpack.c.b16 %v4725, %v4721
  %v4966 = vpack.c.b16 %v4730, %v4726
  %v4967 = vpack.c.b16 %v4731, %v4727
  %v4968 = vpack.c.b16 %v4732, %v4728
  %v4969 = vpack.c.b16 %v4733, %v4729
  %v4970 = vpack.c.b16 %v4738, %v4734
  %v4971 = vpack.c.b16 %v4739, %v4735
  %v4972 = vpack.c.b16 %v4740, %v4736
  %v4973 = vpack.c.b16 %v4741, %v4737
  %v4974 = vpack.c.b16 %v4746, %v4742
  %v4975 = vpack.c.b16 %v4747, %v4743
  %v4976 = vpack.c.b16 %v4748, %v4744
  %v4977 = vpack.c.b16 %v4749, %v4745
  %v4978 = vpack.c.b16 %v4754, %v4750
  %v4979 = vpack.c.b16 %v4755, %v4751
  %v4980 = vpack.c.b16 %v4756, %v4752
  %v4981 = vpack.c.b16 %v4757, %v4753
  %v4982 = vpack.c.b16 %v4762, %v4758
  %v4983 = vpack.c.b16 %v4763, %v4759
  %v4984 = vpack.c.b16 %v4764, %v4760
  %v4985 = vpack.c.b16 %v4765, %v4761
  %v4986 = vpack.c.b16 %v4770, %v4766
  %v4987 = vpack.c.b16 %v4771, %v4767
  %v4988 = vpack.c.b16 %v4772, %v4768
  %v4989 = vpack.c.b16 %v4773, %v4769
  %v4990 = vpack.c.b16 %v4778, %v4774
  %v4991 = vpack.c.b16 %v4779, %v4775
  %v4992 = vpack.c.b16 %v4780, %v4776
  %v4993 = vpack.c.b16 %v4781, %v4777
  %v4994 = vpack.c.b16 %v4786, %v4782
  %v4995 = vpack.c.b16 %v4787, %v4783
  %v4996 = vpack.c.b16 %v4788, %v4784
  %v4997 = vpack.c.b16 %v4789, %v4785
  %v4998 = vpack.c.b16 %v4794, %v4790
  %v4999 = vpack.c.b16 %v4795, %v4791
  %v5000 = vpack.c.b16 %v4796, %v4792
  %v5001 = vpack.c.b16 %v4797, %v4793
  %v5002 = vpack.c.b16 %v4802, %v4798
  %v5003 = vpack.c.b16 %v4803, %v4799
  %v5004 = vpack.c.b16 %v4804, %v4800
  %v5005 = vpack.c.b16 %v4805, %v4801
  %v5006 = vpack.c.b16 %v4810, %v4806
  %v5007 = vpack.c.b16 %v4811, %v4807
  %v5008 = vpack.c.b16 %v4812, %v4808
  %v5009 = vpack.c.b16 %v4813, %v4809
  %v5010 = vpack.c.b16 %v4818, %v4814
  %v5011 = vpack.c.b16 %v4819, %v4815
  %v5012 = vpack.c.b16 %v4820, %v4816
  %v5013 = vpack.c.b16 %v4821, %v4817
  %v5014 = vpack.c.b16 %v4826, %v4822
  %v5015 = vpack.c.b16 %v4827, %v4823
  %v5016 = vpack.c.b16 %v4828, %v4824
  %v5017 = vpack.c.b16 %v4829, %v4825
  %v5018 = vpack.c.b16 %v4834, %v4830
  %v5019 = vpack.c.b16 %v4835, %v4831
  %v5020 = vpack.c.b16 %v4836, %v4832
  %v5021 = vpack.c.b16 %v4837, %v4833
  %v5207 = vsel %vm876, %v4280, 0
  %5209 = vmatpush.bf16.msra.mxu0 %v4866
  %5210 = vmatpush.bf16.msra.mxu0 %v4862
  %5211 = vmatpush.bf16.msra.mxu0 %v4858
  %5212 = vmatpush.bf16.msra.mxu0 %v4854
  %5213 = vmatpush.bf16.msra.mxu0 %v4850
  %5214 = vmatpush.bf16.msra.mxu0 %v4846
  %5215 = vmatpush.bf16.msra.mxu0 %v4842
  %5216 = vmatpush.bf16.msra.mxu0 %v4838
  %5217 = vmatmul.bf16.gmra.mxu0 %v4275
  %v5218 = vpop.f32.mrf.mxu0
  %v5219 = vadd.f32 0.0, %v5218
  %v5220 = vpop.f32.mrf.mxu0
  %v5221 = vadd.f32 0.0, %v5220
  %5222 = vdwg.mxu0
  %5223 = vmatpush.bf16.msra.mxu0 %v4898
  %5224 = vmatpush.bf16.msra.mxu0 %v4894
  %5225 = vmatpush.bf16.msra.mxu0 %v4890
  %5226 = vmatpush.bf16.msra.mxu0 %v4886
  %5227 = vmatpush.bf16.msra.mxu0 %v4882
  %5228 = vmatpush.bf16.msra.mxu0 %v4878
  %5229 = vmatpush.bf16.msra.mxu0 %v4874
  %5230 = vmatpush.bf16.msra.mxu0 %v4870
  %5231 = vmatmul.bf16.gmra.mxu0 %v4276
  %v5232 = vpop.f32.mrf.mxu0
  %v5233 = vadd.f32 %v5219, %v5232
  %v5234 = vpop.f32.mrf.mxu0
  %v5235 = vadd.f32 %v5221, %v5234
  %5236 = vdwg.mxu0
  %5237 = vmatpush.bf16.msra.mxu0 %v4930
  %5238 = vmatpush.bf16.msra.mxu0 %v4926
  %5239 = vmatpush.bf16.msra.mxu0 %v4922
  %5240 = vmatpush.bf16.msra.mxu0 %v4918
  %5241 = vmatpush.bf16.msra.mxu0 %v4914
  %5242 = vmatpush.bf16.msra.mxu0 %v4910
  %5243 = vmatpush.bf16.msra.mxu0 %v4906
  %5244 = vmatpush.bf16.msra.mxu0 %v4902
  %5245 = vmatmul.bf16.gmra.mxu0 %v4277
  %v5246 = vpop.f32.mrf.mxu0
  %v5247 = vadd.f32 %v5233, %v5246
  %v5248 = vpop.f32.mrf.mxu0
  %v5249 = vadd.f32 %v5235, %v5248
  %5250 = vdwg.mxu0
  %5251 = vmatpush.bf16.msra.mxu0 %v4962
  %5252 = vmatpush.bf16.msra.mxu0 %v4958
  %5253 = vmatpush.bf16.msra.mxu0 %v4954
  %5254 = vmatpush.bf16.msra.mxu0 %v4950
  %5255 = vmatpush.bf16.msra.mxu0 %v4946
  %5256 = vmatpush.bf16.msra.mxu0 %v4942
  %5257 = vmatpush.bf16.msra.mxu0 %v4938
  %5258 = vmatpush.bf16.msra.mxu0 %v4934
  %5259 = vmatmul.bf16.gmra.mxu0 %v4278
  %v5260 = vpop.f32.mrf.mxu0
  %v5261 = vadd.f32 %v5247, %v5260
  %v5262 = vpop.f32.mrf.mxu0
  %v5263 = vadd.f32 %v5249, %v5262
  %5264 = vdwg.mxu0
  %5265 = vmatpush.bf16.msra.mxu0 %v4994
  %5266 = vmatpush.bf16.msra.mxu0 %v4990
  %5267 = vmatpush.bf16.msra.mxu0 %v4986
  %5268 = vmatpush.bf16.msra.mxu0 %v4982
  %5269 = vmatpush.bf16.msra.mxu0 %v4978
  %5270 = vmatpush.bf16.msra.mxu0 %v4974
  %5271 = vmatpush.bf16.msra.mxu0 %v4970
  %5272 = vmatpush.bf16.msra.mxu0 %v4966
  %5273 = vmatmul.bf16.gmra.mxu0 %v4279
  %v5274 = vpop.f32.mrf.mxu0
  %v5275 = vadd.f32 %v5261, %v5274
  %v5276 = vpop.f32.mrf.mxu0
  %v5277 = vadd.f32 %v5263, %v5276
  %5278 = vdwg.mxu0
  %5279 = vmatpush.bf16.msra.mxu0 0
  %5280 = vmatpush.bf16.msra.mxu0 0
  %5281 = vmatpush.bf16.msra.mxu0 %v5018
  %5282 = vmatpush.bf16.msra.mxu0 %v5014
  %5283 = vmatpush.bf16.msra.mxu0 %v5010
  %5284 = vmatpush.bf16.msra.mxu0 %v5006
  %5285 = vmatpush.bf16.msra.mxu0 %v5002
  %5286 = vmatpush.bf16.msra.mxu0 %v4998
  %5287 = vmatmul.bf16.gmra.mxu0 %v5207
  %v5288 = vpop.f32.mrf.mxu0
  %v5289 = vadd.f32 %v5275, %v5288
  %v5290 = vpop.f32.mrf.mxu0
  %v5291 = vadd.f32 %v5277, %v5290
  %5292 = vdwg.mxu0
  %5293 = vmatpush.bf16.msra.mxu0 %v4867
  %5294 = vmatpush.bf16.msra.mxu0 %v4863
  %5295 = vmatpush.bf16.msra.mxu0 %v4859
  %5296 = vmatpush.bf16.msra.mxu0 %v4855
  %5297 = vmatpush.bf16.msra.mxu0 %v4851
  %5298 = vmatpush.bf16.msra.mxu0 %v4847
  %5299 = vmatpush.bf16.msra.mxu0 %v4843
  %5300 = vmatpush.bf16.msra.mxu0 %v4839
  %5301 = vmatmul.bf16.gmra.mxu0 %v4275
  %v5302 = vpop.f32.mrf.mxu0
  %v5303 = vadd.f32 0.0, %v5302
  %v5304 = vpop.f32.mrf.mxu0
  %v5305 = vadd.f32 0.0, %v5304
  %5306 = vdwg.mxu0
  %5307 = vmatpush.bf16.msra.mxu0 %v4899
  %5308 = vmatpush.bf16.msra.mxu0 %v4895
  %5309 = vmatpush.bf16.msra.mxu0 %v4891
  %5310 = vmatpush.bf16.msra.mxu0 %v4887
  %5311 = vmatpush.bf16.msra.mxu0 %v4883
  %5312 = vmatpush.bf16.msra.mxu0 %v4879
  %5313 = vmatpush.bf16.msra.mxu0 %v4875
  %5314 = vmatpush.bf16.msra.mxu0 %v4871
  %5315 = vmatmul.bf16.gmra.mxu0 %v4276
  %v5316 = vpop.f32.mrf.mxu0
  %v5317 = vadd.f32 %v5303, %v5316
  %v5318 = vpop.f32.mrf.mxu0
  %v5319 = vadd.f32 %v5305, %v5318
  %5320 = vdwg.mxu0
  %5321 = vmatpush.bf16.msra.mxu0 %v4931
  %5322 = vmatpush.bf16.msra.mxu0 %v4927
  %5323 = vmatpush.bf16.msra.mxu0 %v4923
  %5324 = vmatpush.bf16.msra.mxu0 %v4919
  %5325 = vmatpush.bf16.msra.mxu0 %v4915
  %5326 = vmatpush.bf16.msra.mxu0 %v4911
  %5327 = vmatpush.bf16.msra.mxu0 %v4907
  %5328 = vmatpush.bf16.msra.mxu0 %v4903
  %5329 = vmatmul.bf16.gmra.mxu0 %v4277
  %v5330 = vpop.f32.mrf.mxu0
  %v5331 = vadd.f32 %v5317, %v5330
  %v5332 = vpop.f32.mrf.mxu0
  %v5333 = vadd.f32 %v5319, %v5332
  %5334 = vdwg.mxu0
  %5335 = vmatpush.bf16.msra.mxu0 %v4963
  %5336 = vmatpush.bf16.msra.mxu0 %v4959
  %5337 = vmatpush.bf16.msra.mxu0 %v4955
  %5338 = vmatpush.bf16.msra.mxu0 %v4951
  %5339 = vmatpush.bf16.msra.mxu0 %v4947
  %5340 = vmatpush.bf16.msra.mxu0 %v4943
  %5341 = vmatpush.bf16.msra.mxu0 %v4939
  %5342 = vmatpush.bf16.msra.mxu0 %v4935
  %5343 = vmatmul.bf16.gmra.mxu0 %v4278
  %v5344 = vpop.f32.mrf.mxu0
  %v5345 = vadd.f32 %v5331, %v5344
  %v5346 = vpop.f32.mrf.mxu0
  %v5347 = vadd.f32 %v5333, %v5346
  %5348 = vdwg.mxu0
  %5349 = vmatpush.bf16.msra.mxu0 %v4995
  %5350 = vmatpush.bf16.msra.mxu0 %v4991
  %5351 = vmatpush.bf16.msra.mxu0 %v4987
  %5352 = vmatpush.bf16.msra.mxu0 %v4983
  %5353 = vmatpush.bf16.msra.mxu0 %v4979
  %5354 = vmatpush.bf16.msra.mxu0 %v4975
  %5355 = vmatpush.bf16.msra.mxu0 %v4971
  %5356 = vmatpush.bf16.msra.mxu0 %v4967
  %5357 = vmatmul.bf16.gmra.mxu0 %v4279
  %v5358 = vpop.f32.mrf.mxu0
  %v5359 = vadd.f32 %v5345, %v5358
  %v5360 = vpop.f32.mrf.mxu0
  %v5361 = vadd.f32 %v5347, %v5360
  %5362 = vdwg.mxu0
  %5363 = vmatpush.bf16.msra.mxu0 0
  %5364 = vmatpush.bf16.msra.mxu0 0
  %5365 = vmatpush.bf16.msra.mxu0 %v5019
  %5366 = vmatpush.bf16.msra.mxu0 %v5015
  %5367 = vmatpush.bf16.msra.mxu0 %v5011
  %5368 = vmatpush.bf16.msra.mxu0 %v5007
  %5369 = vmatpush.bf16.msra.mxu0 %v5003
  %5370 = vmatpush.bf16.msra.mxu0 %v4999
  %5371 = vmatmul.bf16.gmra.mxu0 %v5207
  %v5372 = vpop.f32.mrf.mxu0
  %v5373 = vadd.f32 %v5359, %v5372
  %v5374 = vpop.f32.mrf.mxu0
  %v5375 = vadd.f32 %v5361, %v5374
  %5376 = vdwg.mxu0
  %5377 = vmatpush.bf16.msra.mxu0 %v4868
  %5378 = vmatpush.bf16.msra.mxu0 %v4864
  %5379 = vmatpush.bf16.msra.mxu0 %v4860
  %5380 = vmatpush.bf16.msra.mxu0 %v4856
  %5381 = vmatpush.bf16.msra.mxu0 %v4852
  %5382 = vmatpush.bf16.msra.mxu0 %v4848
  %5383 = vmatpush.bf16.msra.mxu0 %v4844
  %5384 = vmatpush.bf16.msra.mxu0 %v4840
  %5385 = vmatmul.bf16.gmra.mxu0 %v4275
  %v5386 = vpop.f32.mrf.mxu0
  %v5387 = vadd.f32 0.0, %v5386
  %v5388 = vpop.f32.mrf.mxu0
  %v5389 = vadd.f32 0.0, %v5388
  %5390 = vdwg.mxu0
  %5391 = vmatpush.bf16.msra.mxu0 %v4900
  %5392 = vmatpush.bf16.msra.mxu0 %v4896
  %5393 = vmatpush.bf16.msra.mxu0 %v4892
  %5394 = vmatpush.bf16.msra.mxu0 %v4888
  %5395 = vmatpush.bf16.msra.mxu0 %v4884
  %5396 = vmatpush.bf16.msra.mxu0 %v4880
  %5397 = vmatpush.bf16.msra.mxu0 %v4876
  %5398 = vmatpush.bf16.msra.mxu0 %v4872
  %5399 = vmatmul.bf16.gmra.mxu0 %v4276
  %v5400 = vpop.f32.mrf.mxu0
  %v5401 = vadd.f32 %v5387, %v5400
  %v5402 = vpop.f32.mrf.mxu0
  %v5403 = vadd.f32 %v5389, %v5402
  %5404 = vdwg.mxu0
  %5405 = vmatpush.bf16.msra.mxu0 %v4932
  %5406 = vmatpush.bf16.msra.mxu0 %v4928
  %5407 = vmatpush.bf16.msra.mxu0 %v4924
  %5408 = vmatpush.bf16.msra.mxu0 %v4920
  %5409 = vmatpush.bf16.msra.mxu0 %v4916
  %5410 = vmatpush.bf16.msra.mxu0 %v4912
  %5411 = vmatpush.bf16.msra.mxu0 %v4908
  %5412 = vmatpush.bf16.msra.mxu0 %v4904
  %5413 = vmatmul.bf16.gmra.mxu0 %v4277
  %v5414 = vpop.f32.mrf.mxu0
  %v5415 = vadd.f32 %v5401, %v5414
  %v5416 = vpop.f32.mrf.mxu0
  %v5417 = vadd.f32 %v5403, %v5416
  %5418 = vdwg.mxu0
  %5419 = vmatpush.bf16.msra.mxu0 %v4964
  %5420 = vmatpush.bf16.msra.mxu0 %v4960
  %5421 = vmatpush.bf16.msra.mxu0 %v4956
  %5422 = vmatpush.bf16.msra.mxu0 %v4952
  %5423 = vmatpush.bf16.msra.mxu0 %v4948
  %5424 = vmatpush.bf16.msra.mxu0 %v4944
  %5425 = vmatpush.bf16.msra.mxu0 %v4940
  %5426 = vmatpush.bf16.msra.mxu0 %v4936
  %5427 = vmatmul.bf16.gmra.mxu0 %v4278
  %v5428 = vpop.f32.mrf.mxu0
  %v5429 = vadd.f32 %v5415, %v5428
  %v5430 = vpop.f32.mrf.mxu0
  %v5431 = vadd.f32 %v5417, %v5430
  %5432 = vdwg.mxu0
  %5433 = vmatpush.bf16.msra.mxu0 %v4996
  %5434 = vmatpush.bf16.msra.mxu0 %v4992
  %5435 = vmatpush.bf16.msra.mxu0 %v4988
  %5436 = vmatpush.bf16.msra.mxu0 %v4984
  %5437 = vmatpush.bf16.msra.mxu0 %v4980
  %5438 = vmatpush.bf16.msra.mxu0 %v4976
  %5439 = vmatpush.bf16.msra.mxu0 %v4972
  %5440 = vmatpush.bf16.msra.mxu0 %v4968
  %5441 = vmatmul.bf16.gmra.mxu0 %v4279
  %v5442 = vpop.f32.mrf.mxu0
  %v5443 = vadd.f32 %v5429, %v5442
  %v5444 = vpop.f32.mrf.mxu0
  %v5445 = vadd.f32 %v5431, %v5444
  %5446 = vdwg.mxu0
  %5447 = vmatpush.bf16.msra.mxu0 0
  %5448 = vmatpush.bf16.msra.mxu0 0
  %5449 = vmatpush.bf16.msra.mxu0 %v5020
  %5450 = vmatpush.bf16.msra.mxu0 %v5016
  %5451 = vmatpush.bf16.msra.mxu0 %v5012
  %5452 = vmatpush.bf16.msra.mxu0 %v5008
  %5453 = vmatpush.bf16.msra.mxu0 %v5004
  %5454 = vmatpush.bf16.msra.mxu0 %v5000
  %5455 = vmatmul.bf16.gmra.mxu0 %v5207
  %v5456 = vpop.f32.mrf.mxu0
  %v5457 = vadd.f32 %v5443, %v5456
  %v5458 = vpop.f32.mrf.mxu0
  %v5459 = vadd.f32 %v5445, %v5458
  %5460 = vdwg.mxu0
  %5461 = vmatpush.bf16.msra.mxu0 %v4869
  %5462 = vmatpush.bf16.msra.mxu0 %v4865
  %5463 = vmatpush.bf16.msra.mxu0 %v4861
  %5464 = vmatpush.bf16.msra.mxu0 %v4857
  %5465 = vmatpush.bf16.msra.mxu0 %v4853
  %5466 = vmatpush.bf16.msra.mxu0 %v4849
  %5467 = vmatpush.bf16.msra.mxu0 %v4845
  %5468 = vmatpush.bf16.msra.mxu0 %v4841
  %5469 = vmatmul.bf16.gmra.mxu0 %v4275
  %v5470 = vpop.f32.mrf.mxu0
  %v5471 = vadd.f32 0.0, %v5470
  %v5472 = vpop.f32.mrf.mxu0
  %v5473 = vadd.f32 0.0, %v5472
  %5474 = vdwg.mxu0
  %5475 = vmatpush.bf16.msra.mxu0 %v4901
  %5476 = vmatpush.bf16.msra.mxu0 %v4897
  %5477 = vmatpush.bf16.msra.mxu0 %v4893
  %5478 = vmatpush.bf16.msra.mxu0 %v4889
  %5479 = vmatpush.bf16.msra.mxu0 %v4885
  %5480 = vmatpush.bf16.msra.mxu0 %v4881
  %5481 = vmatpush.bf16.msra.mxu0 %v4877
  %5482 = vmatpush.bf16.msra.mxu0 %v4873
  %5483 = vmatmul.bf16.gmra.mxu0 %v4276
  %v5484 = vpop.f32.mrf.mxu0
  %v5485 = vadd.f32 %v5471, %v5484
  %v5486 = vpop.f32.mrf.mxu0
  %v5487 = vadd.f32 %v5473, %v5486
  %5488 = vdwg.mxu0
  %5489 = vmatpush.bf16.msra.mxu0 %v4933
  %5490 = vmatpush.bf16.msra.mxu0 %v4929
  %5491 = vmatpush.bf16.msra.mxu0 %v4925
  %5492 = vmatpush.bf16.msra.mxu0 %v4921
  %5493 = vmatpush.bf16.msra.mxu0 %v4917
  %5494 = vmatpush.bf16.msra.mxu0 %v4913
  %5495 = vmatpush.bf16.msra.mxu0 %v4909
  %5496 = vmatpush.bf16.msra.mxu0 %v4905
  %5497 = vmatmul.bf16.gmra.mxu0 %v4277
  %v5498 = vpop.f32.mrf.mxu0
  %v5499 = vadd.f32 %v5485, %v5498
  %v5500 = vpop.f32.mrf.mxu0
  %v5501 = vadd.f32 %v5487, %v5500
  %5502 = vdwg.mxu0
  %5503 = vmatpush.bf16.msra.mxu0 %v4965
  %5504 = vmatpush.bf16.msra.mxu0 %v4961
  %5505 = vmatpush.bf16.msra.mxu0 %v4957
  %5506 = vmatpush.bf16.msra.mxu0 %v4953
  %5507 = vmatpush.bf16.msra.mxu0 %v4949
  %5508 = vmatpush.bf16.msra.mxu0 %v4945
  %5509 = vmatpush.bf16.msra.mxu0 %v4941
  %5510 = vmatpush.bf16.msra.mxu0 %v4937
  %5511 = vmatmul.bf16.gmra.mxu0 %v4278
  %v5512 = vpop.f32.mrf.mxu0
  %v5513 = vadd.f32 %v5499, %v5512
  %v5514 = vpop.f32.mrf.mxu0
  %v5515 = vadd.f32 %v5501, %v5514
  %5516 = vdwg.mxu0
  %5517 = vmatpush.bf16.msra.mxu0 %v4997
  %5518 = vmatpush.bf16.msra.mxu0 %v4993
  %5519 = vmatpush.bf16.msra.mxu0 %v4989
  %5520 = vmatpush.bf16.msra.mxu0 %v4985
  %5521 = vmatpush.bf16.msra.mxu0 %v4981
  %5522 = vmatpush.bf16.msra.mxu0 %v4977
  %5523 = vmatpush.bf16.msra.mxu0 %v4973
  %5524 = vmatpush.bf16.msra.mxu0 %v4969
  %5525 = vmatmul.bf16.gmra.mxu0 %v4279
  %v5526 = vpop.f32.mrf.mxu0
  %v5527 = vadd.f32 %v5513, %v5526
  %v5528 = vpop.f32.mrf.mxu0
  %v5529 = vadd.f32 %v5515, %v5528
  %5530 = vdwg.mxu0
  %5531 = vmatpush.bf16.msra.mxu0 0
  %5532 = vmatpush.bf16.msra.mxu0 0
  %5533 = vmatpush.bf16.msra.mxu0 %v5021
  %5534 = vmatpush.bf16.msra.mxu0 %v5017
  %5535 = vmatpush.bf16.msra.mxu0 %v5013
  %5536 = vmatpush.bf16.msra.mxu0 %v5009
  %5537 = vmatpush.bf16.msra.mxu0 %v5005
  %5538 = vmatpush.bf16.msra.mxu0 %v5001
  %5539 = vmatmul.bf16.gmra.mxu0 %v5207
  %v5540 = vpop.f32.mrf.mxu0
  %v5541 = vadd.f32 %v5527, %v5540
  %v5542 = vpop.f32.mrf.mxu0
  %v5543 = vadd.f32 %v5529, %v5542
  %5544 = vdwg.mxu0
  %v5545 = vadd.f32 %v3789, %v5289
  %v5546 = vadd.f32 %v3873, %v5373
  %v5547 = vadd.f32 %v3957, %v5457
  %v5548 = vadd.f32 %v4041, %v5541
  %v5549 = vadd.f32 %v3791, %v5291
  %v5550 = vadd.f32 %v3875, %v5375
  %v5551 = vadd.f32 %v3959, %v5459
  %v5552 = vadd.f32 %v4043, %v5543
  %vm5553 = vsmask.f32 2304
  %vm5554 = vsmask.f32 6416
  %vm5555 = vmor %vm5553, %vm5554
  %v5556 = vrot.slane %v1207, 5
  %v5557 = vrot.slane %v1210, 6
  %v5558 = vor.u32 %v5556, %v5557
  %v5559 = vrot.slane %v5558, 4
  %v5560 = vshrl.u32 %v1010, 16
  %v5562 = vrot.slane %v5560, 5
  %v5563 = vrot.slane %v1216, 6
  %v5564 = vor.u32 %v5562, %v5563
  %v5565 = vsel %vm5555, %v5559, %v5564
  %v5566 = vrot.slane %v1221, 5
  %v5567 = vrot.slane %v1224, 6
  %v5568 = vor.u32 %v5566, %v5567
  %v5569 = vrot.slane %v5568, 4
  %v5570 = vshrl.u32 %v1011, 16
  %v5572 = vrot.slane %v5570, 5
  %v5573 = vrot.slane %v1230, 6
  %v5574 = vor.u32 %v5572, %v5573
  %v5575 = vsel %vm5555, %v5569, %v5574
  %v5576 = vrot.slane %v1235, 5
  %v5577 = vrot.slane %v1238, 6
  %v5578 = vor.u32 %v5576, %v5577
  %v5579 = vrot.slane %v5578, 4
  %v5580 = vshrl.u32 %v1012, 16
  %v5582 = vrot.slane %v5580, 5
  %v5583 = vrot.slane %v1244, 6
  %v5584 = vor.u32 %v5582, %v5583
  %v5585 = vsel %vm5555, %v5579, %v5584
  %v5586 = vrot.slane %v1249, 5
  %v5587 = vrot.slane %v1252, 6
  %v5588 = vor.u32 %v5586, %v5587
  %v5589 = vrot.slane %v5588, 4
  %v5590 = vshrl.u32 %v1016, 16
  %v5592 = vrot.slane %v5590, 5
  %v5593 = vrot.slane %v1258, 6
  %v5594 = vor.u32 %v5592, %v5593
  %v5595 = vsel %vm5555, %v5589, %v5594
  %v5596 = vrot.slane %v1263, 5
  %v5597 = vrot.slane %v1266, 6
  %v5598 = vor.u32 %v5596, %v5597
  %v5599 = vrot.slane %v5598, 4
  %v5600 = vshrl.u32 %v1017, 16
  %v5602 = vrot.slane %v5600, 5
  %v5603 = vrot.slane %v1272, 6
  %v5604 = vor.u32 %v5602, %v5603
  %v5605 = vsel %vm5555, %v5599, %v5604
  %v5606 = vrot.slane %v1277, 5
  %v5607 = vrot.slane %v1280, 6
  %v5608 = vor.u32 %v5606, %v5607
  %v5609 = vrot.slane %v5608, 4
  %v5610 = vshrl.u32 %v1018, 16
  %v5612 = vrot.slane %v5610, 5
  %v5613 = vrot.slane %v1286, 6
  %v5614 = vor.u32 %v5612, %v5613
  %v5615 = vsel %vm5555, %v5609, %v5614
  %s5616 = scalar_lea.vmem %s3, 4416
  %v5617 = vld [vmem:[%s5616] sm:$0xff]
  %v5618 = vld [vmem:[%s5616 + $0x8] sm:$0xff]
  %v5619 = vld [vmem:[%s5616 + $0x10] sm:$0xff]
  %v5620 = vld [vmem:[%s5616 + $0x18] sm:$0xff]
  %v5621 = vld [vmem:[%s5616 + $0x20] sm:$0xff]
  %v5622 = vld [vmem:[%s5616 + $0x28] sm:$0xff]
  %v5623 = vld [vmem:[%s5616 + $0x30] sm:$0xff]
  %v5624 = vld [vmem:[%s5616 + $0x38] sm:$0xff]
  %v5625 = vld [vmem:[%s5616 + $0x40] sm:$0xff]
  %v5626 = vld [vmem:[%s5616 + $0x48] sm:$0xff]
  %v5627 = vld [vmem:[%s5616 + $0x50] sm:$0xff]
  %v5628 = vld [vmem:[%s5616 + $0x58] sm:$0xff]
  %v5629 = vld [vmem:[%s5616 + $0x60] sm:$0xff]
  %v5630 = vld [vmem:[%s5616 + $0x68] sm:$0xff]
  %v5631 = vld [vmem:[%s5616 + $0x70] sm:$0xff]
  %v5632 = vld [vmem:[%s5616 + $0x78] sm:$0xff]
  %v5633 = vld [vmem:[%s5616 + $0x80] sm:$0xff]
  %v5634 = vld [vmem:[%s5616 + $0x88] sm:$0xff]
  %v5635 = vld [vmem:[%s5616 + $0x90] sm:$0xff]
  %v5636 = vld [vmem:[%s5616 + $0x98] sm:$0xff]
  %v5637 = vld [vmem:[%s5616 + $0xa0] sm:$0xff]
  %v5638 = vld [vmem:[%s5616 + $0xa8] sm:$0xff]
  %v5639 = vld [vmem:[%s5616 + $0xb0] sm:$0xff]
  %v5640 = vld [vmem:[%s5616 + $0xb8] sm:$0xff]
  %v5641 = vld [vmem:[%s5616 + $0xc0] sm:$0xff]
  %v5642 = vld [vmem:[%s5616 + $0xc8] sm:$0xff]
  %v5643 = vld [vmem:[%s5616 + $0xd0] sm:$0xff]
  %v5644 = vld [vmem:[%s5616 + $0xd8] sm:$0xff]
  %v5645 = vld [vmem:[%s5616 + $0xe0] sm:$0xff]
  %v5646 = vld [vmem:[%s5616 + $0xe8] sm:$0xff]
  %v5647 = vld [vmem:[%s5616 + $0xf0] sm:$0xff]
  %v5648 = vld [vmem:[%s5616 + $0xf8] sm:$0xff]
  %v5649 = vld [vmem:[%s5616 + $0x100] sm:$0xff]
  %v5650 = vld [vmem:[%s5616 + $0x108] sm:$0xff]
  %v5651 = vld [vmem:[%s5616 + $0x110] sm:$0xff]
  %v5652 = vld [vmem:[%s5616 + $0x118] sm:$0xff]
  %v5653 = vld [vmem:[%s5616 + $0x120] sm:$0xff]
  %v5654 = vld [vmem:[%s5616 + $0x128] sm:$0xff]
  %v5655 = vld [vmem:[%s5616 + $0x130] sm:$0xff]
  %v5656 = vld [vmem:[%s5616 + $0x138] sm:$0xff]
  %v5657 = vld [vmem:[%s5616 + $0x140] sm:$0xff]
  %v5658 = vld [vmem:[%s5616 + $0x148] sm:$0xff]
  %v5659 = vld [vmem:[%s5616 + $0x150] sm:$0xff]
  %v5660 = vld [vmem:[%s5616 + $0x158] sm:$0xff]
  %v5661 = vld [vmem:[%s5616 + $0x160] sm:$0xff]
  %v5662 = vld [vmem:[%s5616 + $0x168] sm:$0xff]
  %v5663 = vld [vmem:[%s5616 + $0x170] sm:$0xff]
  %v5664 = vld [vmem:[%s5616 + $0x178] sm:$0xff]
  %v5665 = vld [vmem:[%s5616 + $0x180] sm:$0xff]
  %v5666 = vld [vmem:[%s5616 + $0x188] sm:$0xff]
  %v5667 = vld [vmem:[%s5616 + $0x190] sm:$0xff]
  %v5668 = vld [vmem:[%s5616 + $0x198] sm:$0xff]
  %v5669 = vld [vmem:[%s5616 + $0x1a0] sm:$0xff]
  %v5670 = vld [vmem:[%s5616 + $0x1a8] sm:$0xff]
  %v5671 = vld [vmem:[%s5616 + $0x1b0] sm:$0xff]
  %v5672 = vld [vmem:[%s5616 + $0x1b8] sm:$0xff]
  %v5673 = vld [vmem:[%s5616 + $0x1c0] sm:$0xff]
  %v5674 = vld [vmem:[%s5616 + $0x1c8] sm:$0xff]
  %v5675 = vld [vmem:[%s5616 + $0x1d0] sm:$0xff]
  %v5676 = vld [vmem:[%s5616 + $0x1d8] sm:$0xff]
  %v5677 = vld [vmem:[%s5616 + $0x1e0] sm:$0xff]
  %v5678 = vld [vmem:[%s5616 + $0x1e8] sm:$0xff]
  %v5679 = vld [vmem:[%s5616 + $0x1f0] sm:$0xff]
  %v5680 = vld [vmem:[%s5616 + $0x1f8] sm:$0xff]
  %v5681 = vld [vmem:[%s5616 + $0x200] sm:$0xff]
  %v5682 = vld [vmem:[%s5616 + $0x208] sm:$0xff]
  %v5683 = vld [vmem:[%s5616 + $0x210] sm:$0xff]
  %v5684 = vld [vmem:[%s5616 + $0x218] sm:$0xff]
  %v5685 = vld [vmem:[%s5616 + $0x220] sm:$0xff]
  %v5686 = vld [vmem:[%s5616 + $0x228] sm:$0xff]
  %v5687 = vld [vmem:[%s5616 + $0x230] sm:$0xff]
  %v5688 = vld [vmem:[%s5616 + $0x238] sm:$0xff]
  %v5689 = vld [vmem:[%s5616 + $0x240] sm:$0xff]
  %v5690 = vld [vmem:[%s5616 + $0x248] sm:$0xff]
  %v5691 = vld [vmem:[%s5616 + $0x250] sm:$0xff]
  %v5692 = vld [vmem:[%s5616 + $0x258] sm:$0xff]
  %v5693 = vld [vmem:[%s5616 + $0x260] sm:$0xff]
  %v5694 = vld [vmem:[%s5616 + $0x268] sm:$0xff]
  %v5695 = vld [vmem:[%s5616 + $0x270] sm:$0xff]
  %v5696 = vld [vmem:[%s5616 + $0x278] sm:$0xff]
  %v5697 = vld [vmem:[%s5616 + $0x280] sm:$0xff]
  %v5698 = vld [vmem:[%s5616 + $0x288] sm:$0xff]
  %v5699 = vld [vmem:[%s5616 + $0x290] sm:$0xff]
  %v5700 = vld [vmem:[%s5616 + $0x298] sm:$0xff]
  %v5701 = vld [vmem:[%s5616 + $0x2a0] sm:$0xff]
  %v5702 = vld [vmem:[%s5616 + $0x2a8] sm:$0xff]
  %v5703 = vld [vmem:[%s5616 + $0x2b0] sm:$0xff]
  %v5704 = vld [vmem:[%s5616 + $0x2b8] sm:$0xff]
  %v5705 = vld [vmem:[%s5616 + $0x2c0] sm:$0xff]
  %v5706 = vld [vmem:[%s5616 + $0x2c8] sm:$0xff]
  %v5707 = vld [vmem:[%s5616 + $0x2d0] sm:$0xff]
  %v5708 = vld [vmem:[%s5616 + $0x2d8] sm:$0xff]
  %v5709 = vld [vmem:[%s5616 + $0x2e0] sm:$0xff]
  %v5710 = vld [vmem:[%s5616 + $0x2e8] sm:$0xff]
  %v5711 = vld [vmem:[%s5616 + $0x2f0] sm:$0xff]
  %v5712 = vld [vmem:[%s5616 + $0x2f8] sm:$0xff]
  %v5713 = vld [vmem:[%s5616 + $0x300] sm:$0xff]
  %v5714 = vld [vmem:[%s5616 + $0x308] sm:$0xff]
  %v5715 = vld [vmem:[%s5616 + $0x310] sm:$0xff]
  %v5716 = vld [vmem:[%s5616 + $0x318] sm:$0xff]
  %v5717 = vld [vmem:[%s5616 + $0x320] sm:$0xff]
  %v5718 = vld [vmem:[%s5616 + $0x328] sm:$0xff]
  %v5719 = vld [vmem:[%s5616 + $0x330] sm:$0xff]
  %v5720 = vld [vmem:[%s5616 + $0x338] sm:$0xff]
  %v5721 = vld [vmem:[%s5616 + $0x340] sm:$0xff]
  %v5722 = vld [vmem:[%s5616 + $0x348] sm:$0xff]
  %v5723 = vld [vmem:[%s5616 + $0x350] sm:$0xff]
  %v5724 = vld [vmem:[%s5616 + $0x358] sm:$0xff]
  %v5725 = vld [vmem:[%s5616 + $0x360] sm:$0xff]
  %v5726 = vld [vmem:[%s5616 + $0x368] sm:$0xff]
  %v5727 = vld [vmem:[%s5616 + $0x370] sm:$0xff]
  %v5728 = vld [vmem:[%s5616 + $0x378] sm:$0xff]
  %v5729 = vld [vmem:[%s5616 + $0x380] sm:$0xff]
  %v5730 = vld [vmem:[%s5616 + $0x388] sm:$0xff]
  %v5731 = vld [vmem:[%s5616 + $0x390] sm:$0xff]
  %v5732 = vld [vmem:[%s5616 + $0x398] sm:$0xff]
  %v5733 = vld [vmem:[%s5616 + $0x3a0] sm:$0xff]
  %v5734 = vld [vmem:[%s5616 + $0x3a8] sm:$0xff]
  %v5735 = vld [vmem:[%s5616 + $0x3b0] sm:$0xff]
  %v5736 = vld [vmem:[%s5616 + $0x3b8] sm:$0xff]
  %v5737 = vld [vmem:[%s5616 + $0x3c0] sm:$0xff]
  %v5738 = vld [vmem:[%s5616 + $0x3c8] sm:$0xff]
  %v5739 = vld [vmem:[%s5616 + $0x3d0] sm:$0xff]
  %v5740 = vld [vmem:[%s5616 + $0x3d8] sm:$0xff]
  %v5741 = vld [vmem:[%s5616 + $0x3e0] sm:$0xff]
  %v5742 = vld [vmem:[%s5616 + $0x3e8] sm:$0xff]
  %v5743 = vld [vmem:[%s5616 + $0x3f0] sm:$0xff]
  %v5744 = vld [vmem:[%s5616 + $0x3f8] sm:$0xff]
  %v5745 = vld [vmem:[%s5616 + $0x400] sm:$0xff]
  %v5746 = vld [vmem:[%s5616 + $0x408] sm:$0xff]
  %v5747 = vld [vmem:[%s5616 + $0x410] sm:$0xff]
  %v5748 = vld [vmem:[%s5616 + $0x418] sm:$0xff]
  %v5749 = vld [vmem:[%s5616 + $0x420] sm:$0xff]
  %v5750 = vld [vmem:[%s5616 + $0x428] sm:$0xff]
  %v5751 = vld [vmem:[%s5616 + $0x430] sm:$0xff]
  %v5752 = vld [vmem:[%s5616 + $0x438] sm:$0xff]
  %v5753 = vld [vmem:[%s5616 + $0x440] sm:$0xff]
  %v5754 = vld [vmem:[%s5616 + $0x448] sm:$0xff]
  %v5755 = vld [vmem:[%s5616 + $0x450] sm:$0xff]
  %v5756 = vld [vmem:[%s5616 + $0x458] sm:$0xff]
  %v5757 = vld [vmem:[%s5616 + $0x460] sm:$0xff]
  %v5758 = vld [vmem:[%s5616 + $0x468] sm:$0xff]
  %v5759 = vld [vmem:[%s5616 + $0x470] sm:$0xff]
  %v5760 = vld [vmem:[%s5616 + $0x478] sm:$0xff]
  %v5761 = vld [vmem:[%s5616 + $0x480] sm:$0xff]
  %v5762 = vld [vmem:[%s5616 + $0x488] sm:$0xff]
  %v5763 = vld [vmem:[%s5616 + $0x490] sm:$0xff]
  %v5764 = vld [vmem:[%s5616 + $0x498] sm:$0xff]
  %v5765 = vld [vmem:[%s5616 + $0x4a0] sm:$0xff]
  %v5766 = vld [vmem:[%s5616 + $0x4a8] sm:$0xff]
  %v5767 = vld [vmem:[%s5616 + $0x4b0] sm:$0xff]
  %v5768 = vld [vmem:[%s5616 + $0x4b8] sm:$0xff]
  %v5769 = vld [vmem:[%s5616 + $0x4c0] sm:$0xff]
  %v5770 = vld [vmem:[%s5616 + $0x4c8] sm:$0xff]
  %v5771 = vld [vmem:[%s5616 + $0x4d0] sm:$0xff]
  %v5772 = vld [vmem:[%s5616 + $0x4d8] sm:$0xff]
  %v5773 = vld [vmem:[%s5616 + $0x4e0] sm:$0xff]
  %v5774 = vld [vmem:[%s5616 + $0x4e8] sm:$0xff]
  %v5775 = vld [vmem:[%s5616 + $0x4f0] sm:$0xff]
  %v5776 = vld [vmem:[%s5616 + $0x4f8] sm:$0xff]
  %v5777 = vld [vmem:[%s5616 + $0x500] sm:$0xff]
  %v5778 = vld [vmem:[%s5616 + $0x508] sm:$0xff]
  %v5779 = vld [vmem:[%s5616 + $0x510] sm:$0xff]
  %v5780 = vld [vmem:[%s5616 + $0x518] sm:$0xff]
  %v5781 = vld [vmem:[%s5616 + $0x520] sm:$0xff]
  %v5782 = vld [vmem:[%s5616 + $0x528] sm:$0xff]
  %v5783 = vld [vmem:[%s5616 + $0x530] sm:$0xff]
  %v5784 = vld [vmem:[%s5616 + $0x538] sm:$0xff]
  %v5785 = vld [vmem:[%s5616 + $0x540] sm:$0xff]
  %v5786 = vld [vmem:[%s5616 + $0x548] sm:$0xff]
  %v5787 = vld [vmem:[%s5616 + $0x550] sm:$0xff]
  %v5788 = vld [vmem:[%s5616 + $0x558] sm:$0xff]
  %v5789 = vld [vmem:[%s5616 + $0x560] sm:$0xff]
  %v5790 = vld [vmem:[%s5616 + $0x568] sm:$0xff]
  %v5791 = vld [vmem:[%s5616 + $0x570] sm:$0xff]
  %v5792 = vld [vmem:[%s5616 + $0x578] sm:$0xff]
  %v5793 = vld [vmem:[%s5616 + $0x580] sm:$0xff]
  %v5794 = vld [vmem:[%s5616 + $0x588] sm:$0xff]
  %v5795 = vld [vmem:[%s5616 + $0x590] sm:$0xff]
  %v5796 = vld [vmem:[%s5616 + $0x598] sm:$0xff]
  %v5797 = vld [vmem:[%s5616 + $0x5a0] sm:$0xff]
  %v5798 = vld [vmem:[%s5616 + $0x5a8] sm:$0xff]
  %v5799 = vld [vmem:[%s5616 + $0x5b0] sm:$0xff]
  %v5800 = vld [vmem:[%s5616 + $0x5b8] sm:$0xff]
  %v5801 = vunpack.c.l.b16 %v5565
  %v5802 = vunpack.c.h.b16 %v5565
  %v5803 = vunpack.c.l.b16 %v5575
  %v5804 = vunpack.c.h.b16 %v5575
  %v5805 = vunpack.c.l.b16 %v5585
  %v5806 = vunpack.c.h.b16 %v5585
  %v5807 = vunpack.c.l.b16 %v5595
  %v5808 = vunpack.c.h.b16 %v5595
  %v5809 = vunpack.c.l.b16 %v5605
  %v5810 = vunpack.c.h.b16 %v5605
  %v5811 = vunpack.c.l.b16 %v5615
  %v5812 = vunpack.c.h.b16 %v5615
  %v5813 = vpack.c.b16 %v5807, %v5801
  %v5814 = vpack.c.b16 %v5808, %v5802
  %v5815 = vpack.c.b16 %v5809, %v5803
  %v5816 = vpack.c.b16 %v5810, %v5804
  %v5817 = vpack.c.b16 %v5811, %v5805
  %v5818 = vpack.c.b16 %v5812, %v5806
  %v6008 = vunpack.c.l.b16 %v5617
  %v6009 = vunpack.c.h.b16 %v5617
  %v6010 = vunpack.c.l.b16 %v5618
  %v6011 = vunpack.c.h.b16 %v5618
  %v6012 = vunpack.c.l.b16 %v5619
  %v6013 = vunpack.c.h.b16 %v5619
  %v6014 = vunpack.c.l.b16 %v5620
  %v6015 = vunpack.c.h.b16 %v5620
  %v6016 = vunpack.c.l.b16 %v5621
  %v6017 = vunpack.c.h.b16 %v5621
  %v6018 = vunpack.c.l.b16 %v5622
  %v6019 = vunpack.c.h.b16 %v5622
  %v6020 = vunpack.c.l.b16 %v5623
  %v6021 = vunpack.c.h.b16 %v5623
  %v6022 = vunpack.c.l.b16 %v5624
  %v6023 = vunpack.c.h.b16 %v5624
  %v6024 = vunpack.c.l.b16 %v5625
  %v6025 = vunpack.c.h.b16 %v5625
  %v6026 = vunpack.c.l.b16 %v5626
  %v6027 = vunpack.c.h.b16 %v5626
  %v6028 = vunpack.c.l.b16 %v5627
  %v6029 = vunpack.c.h.b16 %v5627
  %v6030 = vunpack.c.l.b16 %v5628
  %v6031 = vunpack.c.h.b16 %v5628
  %v6032 = vunpack.c.l.b16 %v5629
  %v6033 = vunpack.c.h.b16 %v5629
  %v6034 = vunpack.c.l.b16 %v5630
  %v6035 = vunpack.c.h.b16 %v5630
  %v6036 = vunpack.c.l.b16 %v5631
  %v6037 = vunpack.c.h.b16 %v5631
  %v6038 = vunpack.c.l.b16 %v5632
  %v6039 = vunpack.c.h.b16 %v5632
  %v6040 = vunpack.c.l.b16 %v5633
  %v6041 = vunpack.c.h.b16 %v5633
  %v6042 = vunpack.c.l.b16 %v5634
  %v6043 = vunpack.c.h.b16 %v5634
  %v6044 = vunpack.c.l.b16 %v5635
  %v6045 = vunpack.c.h.b16 %v5635
  %v6046 = vunpack.c.l.b16 %v5636
  %v6047 = vunpack.c.h.b16 %v5636
  %v6048 = vunpack.c.l.b16 %v5637
  %v6049 = vunpack.c.h.b16 %v5637
  %v6050 = vunpack.c.l.b16 %v5638
  %v6051 = vunpack.c.h.b16 %v5638
  %v6052 = vunpack.c.l.b16 %v5639
  %v6053 = vunpack.c.h.b16 %v5639
  %v6054 = vunpack.c.l.b16 %v5640
  %v6055 = vunpack.c.h.b16 %v5640
  %v6056 = vunpack.c.l.b16 %v5641
  %v6057 = vunpack.c.h.b16 %v5641
  %v6058 = vunpack.c.l.b16 %v5642
  %v6059 = vunpack.c.h.b16 %v5642
  %v6060 = vunpack.c.l.b16 %v5643
  %v6061 = vunpack.c.h.b16 %v5643
  %v6062 = vunpack.c.l.b16 %v5644
  %v6063 = vunpack.c.h.b16 %v5644
  %v6064 = vunpack.c.l.b16 %v5645
  %v6065 = vunpack.c.h.b16 %v5645
  %v6066 = vunpack.c.l.b16 %v5646
  %v6067 = vunpack.c.h.b16 %v5646
  %v6068 = vunpack.c.l.b16 %v5647
  %v6069 = vunpack.c.h.b16 %v5647
  %v6070 = vunpack.c.l.b16 %v5648
  %v6071 = vunpack.c.h.b16 %v5648
  %v6072 = vunpack.c.l.b16 %v5649
  %v6073 = vunpack.c.h.b16 %v5649
  %v6074 = vunpack.c.l.b16 %v5650
  %v6075 = vunpack.c.h.b16 %v5650
  %v6076 = vunpack.c.l.b16 %v5651
  %v6077 = vunpack.c.h.b16 %v5651
  %v6078 = vunpack.c.l.b16 %v5652
  %v6079 = vunpack.c.h.b16 %v5652
  %v6080 = vunpack.c.l.b16 %v5653
  %v6081 = vunpack.c.h.b16 %v5653
  %v6082 = vunpack.c.l.b16 %v5654
  %v6083 = vunpack.c.h.b16 %v5654
  %v6084 = vunpack.c.l.b16 %v5655
  %v6085 = vunpack.c.h.b16 %v5655
  %v6086 = vunpack.c.l.b16 %v5656
  %v6087 = vunpack.c.h.b16 %v5656
  %v6088 = vunpack.c.l.b16 %v5657
  %v6089 = vunpack.c.h.b16 %v5657
  %v6090 = vunpack.c.l.b16 %v5658
  %v6091 = vunpack.c.h.b16 %v5658
  %v6092 = vunpack.c.l.b16 %v5659
  %v6093 = vunpack.c.h.b16 %v5659
  %v6094 = vunpack.c.l.b16 %v5660
  %v6095 = vunpack.c.h.b16 %v5660
  %v6096 = vunpack.c.l.b16 %v5661
  %v6097 = vunpack.c.h.b16 %v5661
  %v6098 = vunpack.c.l.b16 %v5662
  %v6099 = vunpack.c.h.b16 %v5662
  %v6100 = vunpack.c.l.b16 %v5663
  %v6101 = vunpack.c.h.b16 %v5663
  %v6102 = vunpack.c.l.b16 %v5664
  %v6103 = vunpack.c.h.b16 %v5664
  %v6104 = vunpack.c.l.b16 %v5665
  %v6105 = vunpack.c.h.b16 %v5665
  %v6106 = vunpack.c.l.b16 %v5666
  %v6107 = vunpack.c.h.b16 %v5666
  %v6108 = vunpack.c.l.b16 %v5667
  %v6109 = vunpack.c.h.b16 %v5667
  %v6110 = vunpack.c.l.b16 %v5668
  %v6111 = vunpack.c.h.b16 %v5668
  %v6112 = vunpack.c.l.b16 %v5669
  %v6113 = vunpack.c.h.b16 %v5669
  %v6114 = vunpack.c.l.b16 %v5670
  %v6115 = vunpack.c.h.b16 %v5670
  %v6116 = vunpack.c.l.b16 %v5671
  %v6117 = vunpack.c.h.b16 %v5671
  %v6118 = vunpack.c.l.b16 %v5672
  %v6119 = vunpack.c.h.b16 %v5672
  %v6120 = vunpack.c.l.b16 %v5673
  %v6121 = vunpack.c.h.b16 %v5673
  %v6122 = vunpack.c.l.b16 %v5674
  %v6123 = vunpack.c.h.b16 %v5674
  %v6124 = vunpack.c.l.b16 %v5675
  %v6125 = vunpack.c.h.b16 %v5675
  %v6126 = vunpack.c.l.b16 %v5676
  %v6127 = vunpack.c.h.b16 %v5676
  %v6128 = vunpack.c.l.b16 %v5677
  %v6129 = vunpack.c.h.b16 %v5677
  %v6130 = vunpack.c.l.b16 %v5678
  %v6131 = vunpack.c.h.b16 %v5678
  %v6132 = vunpack.c.l.b16 %v5679
  %v6133 = vunpack.c.h.b16 %v5679
  %v6134 = vunpack.c.l.b16 %v5680
  %v6135 = vunpack.c.h.b16 %v5680
  %v6136 = vunpack.c.l.b16 %v5681
  %v6137 = vunpack.c.h.b16 %v5681
  %v6138 = vunpack.c.l.b16 %v5682
  %v6139 = vunpack.c.h.b16 %v5682
  %v6140 = vunpack.c.l.b16 %v5683
  %v6141 = vunpack.c.h.b16 %v5683
  %v6142 = vunpack.c.l.b16 %v5684
  %v6143 = vunpack.c.h.b16 %v5684
  %v6144 = vunpack.c.l.b16 %v5685
  %v6145 = vunpack.c.h.b16 %v5685
  %v6146 = vunpack.c.l.b16 %v5686
  %v6147 = vunpack.c.h.b16 %v5686
  %v6148 = vunpack.c.l.b16 %v5687
  %v6149 = vunpack.c.h.b16 %v5687
  %v6150 = vunpack.c.l.b16 %v5688
  %v6151 = vunpack.c.h.b16 %v5688
  %v6152 = vunpack.c.l.b16 %v5689
  %v6153 = vunpack.c.h.b16 %v5689
  %v6154 = vunpack.c.l.b16 %v5690
  %v6155 = vunpack.c.h.b16 %v5690
  %v6156 = vunpack.c.l.b16 %v5691
  %v6157 = vunpack.c.h.b16 %v5691
  %v6158 = vunpack.c.l.b16 %v5692
  %v6159 = vunpack.c.h.b16 %v5692
  %v6160 = vunpack.c.l.b16 %v5693
  %v6161 = vunpack.c.h.b16 %v5693
  %v6162 = vunpack.c.l.b16 %v5694
  %v6163 = vunpack.c.h.b16 %v5694
  %v6164 = vunpack.c.l.b16 %v5695
  %v6165 = vunpack.c.h.b16 %v5695
  %v6166 = vunpack.c.l.b16 %v5696
  %v6167 = vunpack.c.h.b16 %v5696
  %v6168 = vunpack.c.l.b16 %v5697
  %v6169 = vunpack.c.h.b16 %v5697
  %v6170 = vunpack.c.l.b16 %v5698
  %v6171 = vunpack.c.h.b16 %v5698
  %v6172 = vunpack.c.l.b16 %v5699
  %v6173 = vunpack.c.h.b16 %v5699
  %v6174 = vunpack.c.l.b16 %v5700
  %v6175 = vunpack.c.h.b16 %v5700
  %v6176 = vunpack.c.l.b16 %v5701
  %v6177 = vunpack.c.h.b16 %v5701
  %v6178 = vunpack.c.l.b16 %v5702
  %v6179 = vunpack.c.h.b16 %v5702
  %v6180 = vunpack.c.l.b16 %v5703
  %v6181 = vunpack.c.h.b16 %v5703
  %v6182 = vunpack.c.l.b16 %v5704
  %v6183 = vunpack.c.h.b16 %v5704
  %v6184 = vunpack.c.l.b16 %v5705
  %v6185 = vunpack.c.h.b16 %v5705
  %v6186 = vunpack.c.l.b16 %v5706
  %v6187 = vunpack.c.h.b16 %v5706
  %v6188 = vunpack.c.l.b16 %v5707
  %v6189 = vunpack.c.h.b16 %v5707
  %v6190 = vunpack.c.l.b16 %v5708
  %v6191 = vunpack.c.h.b16 %v5708
  %v6192 = vunpack.c.l.b16 %v5709
  %v6193 = vunpack.c.h.b16 %v5709
  %v6194 = vunpack.c.l.b16 %v5710
  %v6195 = vunpack.c.h.b16 %v5710
  %v6196 = vunpack.c.l.b16 %v5711
  %v6197 = vunpack.c.h.b16 %v5711
  %v6198 = vunpack.c.l.b16 %v5712
  %v6199 = vunpack.c.h.b16 %v5712
  %v6200 = vunpack.c.l.b16 %v5713
  %v6201 = vunpack.c.h.b16 %v5713
  %v6202 = vunpack.c.l.b16 %v5714
  %v6203 = vunpack.c.h.b16 %v5714
  %v6204 = vunpack.c.l.b16 %v5715
  %v6205 = vunpack.c.h.b16 %v5715
  %v6206 = vunpack.c.l.b16 %v5716
  %v6207 = vunpack.c.h.b16 %v5716
  %v6208 = vunpack.c.l.b16 %v5717
  %v6209 = vunpack.c.h.b16 %v5717
  %v6210 = vunpack.c.l.b16 %v5718
  %v6211 = vunpack.c.h.b16 %v5718
  %v6212 = vunpack.c.l.b16 %v5719
  %v6213 = vunpack.c.h.b16 %v5719
  %v6214 = vunpack.c.l.b16 %v5720
  %v6215 = vunpack.c.h.b16 %v5720
  %v6216 = vunpack.c.l.b16 %v5721
  %v6217 = vunpack.c.h.b16 %v5721
  %v6218 = vunpack.c.l.b16 %v5722
  %v6219 = vunpack.c.h.b16 %v5722
  %v6220 = vunpack.c.l.b16 %v5723
  %v6221 = vunpack.c.h.b16 %v5723
  %v6222 = vunpack.c.l.b16 %v5724
  %v6223 = vunpack.c.h.b16 %v5724
  %v6224 = vunpack.c.l.b16 %v5725
  %v6225 = vunpack.c.h.b16 %v5725
  %v6226 = vunpack.c.l.b16 %v5726
  %v6227 = vunpack.c.h.b16 %v5726
  %v6228 = vunpack.c.l.b16 %v5727
  %v6229 = vunpack.c.h.b16 %v5727
  %v6230 = vunpack.c.l.b16 %v5728
  %v6231 = vunpack.c.h.b16 %v5728
  %v6232 = vunpack.c.l.b16 %v5729
  %v6233 = vunpack.c.h.b16 %v5729
  %v6234 = vunpack.c.l.b16 %v5730
  %v6235 = vunpack.c.h.b16 %v5730
  %v6236 = vunpack.c.l.b16 %v5731
  %v6237 = vunpack.c.h.b16 %v5731
  %v6238 = vunpack.c.l.b16 %v5732
  %v6239 = vunpack.c.h.b16 %v5732
  %v6240 = vunpack.c.l.b16 %v5733
  %v6241 = vunpack.c.h.b16 %v5733
  %v6242 = vunpack.c.l.b16 %v5734
  %v6243 = vunpack.c.h.b16 %v5734
  %v6244 = vunpack.c.l.b16 %v5735
  %v6245 = vunpack.c.h.b16 %v5735
  %v6246 = vunpack.c.l.b16 %v5736
  %v6247 = vunpack.c.h.b16 %v5736
  %v6248 = vunpack.c.l.b16 %v5737
  %v6249 = vunpack.c.h.b16 %v5737
  %v6250 = vunpack.c.l.b16 %v5738
  %v6251 = vunpack.c.h.b16 %v5738
  %v6252 = vunpack.c.l.b16 %v5739
  %v6253 = vunpack.c.h.b16 %v5739
  %v6254 = vunpack.c.l.b16 %v5740
  %v6255 = vunpack.c.h.b16 %v5740
  %v6256 = vunpack.c.l.b16 %v5741
  %v6257 = vunpack.c.h.b16 %v5741
  %v6258 = vunpack.c.l.b16 %v5742
  %v6259 = vunpack.c.h.b16 %v5742
  %v6260 = vunpack.c.l.b16 %v5743
  %v6261 = vunpack.c.h.b16 %v5743
  %v6262 = vunpack.c.l.b16 %v5744
  %v6263 = vunpack.c.h.b16 %v5744
  %v6264 = vunpack.c.l.b16 %v5745
  %v6265 = vunpack.c.h.b16 %v5745
  %v6266 = vunpack.c.l.b16 %v5746
  %v6267 = vunpack.c.h.b16 %v5746
  %v6268 = vunpack.c.l.b16 %v5747
  %v6269 = vunpack.c.h.b16 %v5747
  %v6270 = vunpack.c.l.b16 %v5748
  %v6271 = vunpack.c.h.b16 %v5748
  %v6272 = vunpack.c.l.b16 %v5749
  %v6273 = vunpack.c.h.b16 %v5749
  %v6274 = vunpack.c.l.b16 %v5750
  %v6275 = vunpack.c.h.b16 %v5750
  %v6276 = vunpack.c.l.b16 %v5751
  %v6277 = vunpack.c.h.b16 %v5751
  %v6278 = vunpack.c.l.b16 %v5752
  %v6279 = vunpack.c.h.b16 %v5752
  %v6280 = vunpack.c.l.b16 %v5753
  %v6281 = vunpack.c.h.b16 %v5753
  %v6282 = vunpack.c.l.b16 %v5754
  %v6283 = vunpack.c.h.b16 %v5754
  %v6284 = vunpack.c.l.b16 %v5755
  %v6285 = vunpack.c.h.b16 %v5755
  %v6286 = vunpack.c.l.b16 %v5756
  %v6287 = vunpack.c.h.b16 %v5756
  %v6288 = vunpack.c.l.b16 %v5757
  %v6289 = vunpack.c.h.b16 %v5757
  %v6290 = vunpack.c.l.b16 %v5758
  %v6291 = vunpack.c.h.b16 %v5758
  %v6292 = vunpack.c.l.b16 %v5759
  %v6293 = vunpack.c.h.b16 %v5759
  %v6294 = vunpack.c.l.b16 %v5760
  %v6295 = vunpack.c.h.b16 %v5760
  %v6296 = vunpack.c.l.b16 %v5761
  %v6297 = vunpack.c.h.b16 %v5761
  %v6298 = vunpack.c.l.b16 %v5762
  %v6299 = vunpack.c.h.b16 %v5762
  %v6300 = vunpack.c.l.b16 %v5763
  %v6301 = vunpack.c.h.b16 %v5763
  %v6302 = vunpack.c.l.b16 %v5764
  %v6303 = vunpack.c.h.b16 %v5764
  %v6304 = vunpack.c.l.b16 %v5765
  %v6305 = vunpack.c.h.b16 %v5765
  %v6306 = vunpack.c.l.b16 %v5766
  %v6307 = vunpack.c.h.b16 %v5766
  %v6308 = vunpack.c.l.b16 %v5767
  %v6309 = vunpack.c.h.b16 %v5767
  %v6310 = vunpack.c.l.b16 %v5768
  %v6311 = vunpack.c.h.b16 %v5768
  %v6312 = vunpack.c.l.b16 %v5769
  %v6313 = vunpack.c.h.b16 %v5769
  %v6314 = vunpack.c.l.b16 %v5770
  %v6315 = vunpack.c.h.b16 %v5770
  %v6316 = vunpack.c.l.b16 %v5771
  %v6317 = vunpack.c.h.b16 %v5771
  %v6318 = vunpack.c.l.b16 %v5772
  %v6319 = vunpack.c.h.b16 %v5772
  %v6320 = vunpack.c.l.b16 %v5773
  %v6321 = vunpack.c.h.b16 %v5773
  %v6322 = vunpack.c.l.b16 %v5774
  %v6323 = vunpack.c.h.b16 %v5774
  %v6324 = vunpack.c.l.b16 %v5775
  %v6325 = vunpack.c.h.b16 %v5775
  %v6326 = vunpack.c.l.b16 %v5776
  %v6327 = vunpack.c.h.b16 %v5776
  %v6328 = vunpack.c.l.b16 %v5777
  %v6329 = vunpack.c.h.b16 %v5777
  %v6330 = vunpack.c.l.b16 %v5778
  %v6331 = vunpack.c.h.b16 %v5778
  %v6332 = vunpack.c.l.b16 %v5779
  %v6333 = vunpack.c.h.b16 %v5779
  %v6334 = vunpack.c.l.b16 %v5780
  %v6335 = vunpack.c.h.b16 %v5780
  %v6336 = vunpack.c.l.b16 %v5781
  %v6337 = vunpack.c.h.b16 %v5781
  %v6338 = vunpack.c.l.b16 %v5782
  %v6339 = vunpack.c.h.b16 %v5782
  %v6340 = vunpack.c.l.b16 %v5783
  %v6341 = vunpack.c.h.b16 %v5783
  %v6342 = vunpack.c.l.b16 %v5784
  %v6343 = vunpack.c.h.b16 %v5784
  %v6344 = vunpack.c.l.b16 %v5785
  %v6345 = vunpack.c.h.b16 %v5785
  %v6346 = vunpack.c.l.b16 %v5786
  %v6347 = vunpack.c.h.b16 %v5786
  %v6348 = vunpack.c.l.b16 %v5787
  %v6349 = vunpack.c.h.b16 %v5787
  %v6350 = vunpack.c.l.b16 %v5788
  %v6351 = vunpack.c.h.b16 %v5788
  %v6352 = vunpack.c.l.b16 %v5789
  %v6353 = vunpack.c.h.b16 %v5789
  %v6354 = vunpack.c.l.b16 %v5790
  %v6355 = vunpack.c.h.b16 %v5790
  %v6356 = vunpack.c.l.b16 %v5791
  %v6357 = vunpack.c.h.b16 %v5791
  %v6358 = vunpack.c.l.b16 %v5792
  %v6359 = vunpack.c.h.b16 %v5792
  %v6360 = vunpack.c.l.b16 %v5793
  %v6361 = vunpack.c.h.b16 %v5793
  %v6362 = vunpack.c.l.b16 %v5794
  %v6363 = vunpack.c.h.b16 %v5794
  %v6364 = vunpack.c.l.b16 %v5795
  %v6365 = vunpack.c.h.b16 %v5795
  %v6366 = vunpack.c.l.b16 %v5796
  %v6367 = vunpack.c.h.b16 %v5796
  %v6368 = vunpack.c.l.b16 %v5797
  %v6369 = vunpack.c.h.b16 %v5797
  %v6370 = vunpack.c.l.b16 %v5798
  %v6371 = vunpack.c.h.b16 %v5798
  %v6372 = vunpack.c.l.b16 %v5799
  %v6373 = vunpack.c.h.b16 %v5799
  %v6374 = vunpack.c.l.b16 %v5800
  %v6375 = vunpack.c.h.b16 %v5800
  %v6376 = vpack.c.b16 %v6012, %v6008
  %v6377 = vpack.c.b16 %v6013, %v6009
  %v6378 = vpack.c.b16 %v6014, %v6010
  %v6379 = vpack.c.b16 %v6015, %v6011
  %v6380 = vpack.c.b16 %v6020, %v6016
  %v6381 = vpack.c.b16 %v6021, %v6017
  %v6382 = vpack.c.b16 %v6022, %v6018
  %v6383 = vpack.c.b16 %v6023, %v6019
  %v6384 = vpack.c.b16 %v6028, %v6024
  %v6385 = vpack.c.b16 %v6029, %v6025
  %v6386 = vpack.c.b16 %v6030, %v6026
  %v6387 = vpack.c.b16 %v6031, %v6027
  %v6388 = vpack.c.b16 %v6036, %v6032
  %v6389 = vpack.c.b16 %v6037, %v6033
  %v6390 = vpack.c.b16 %v6038, %v6034
  %v6391 = vpack.c.b16 %v6039, %v6035
  %v6392 = vpack.c.b16 %v6044, %v6040
  %v6393 = vpack.c.b16 %v6045, %v6041
  %v6394 = vpack.c.b16 %v6046, %v6042
  %v6395 = vpack.c.b16 %v6047, %v6043
  %v6396 = vpack.c.b16 %v6052, %v6048
  %v6397 = vpack.c.b16 %v6053, %v6049
  %v6398 = vpack.c.b16 %v6054, %v6050
  %v6399 = vpack.c.b16 %v6055, %v6051
  %v6400 = vpack.c.b16 %v6060, %v6056
  %v6401 = vpack.c.b16 %v6061, %v6057
  %v6402 = vpack.c.b16 %v6062, %v6058
  %v6403 = vpack.c.b16 %v6063, %v6059
  %v6404 = vpack.c.b16 %v6068, %v6064
  %v6405 = vpack.c.b16 %v6069, %v6065
  %v6406 = vpack.c.b16 %v6070, %v6066
  %v6407 = vpack.c.b16 %v6071, %v6067
  %v6408 = vpack.c.b16 %v6076, %v6072
  %v6409 = vpack.c.b16 %v6077, %v6073
  %v6410 = vpack.c.b16 %v6078, %v6074
  %v6411 = vpack.c.b16 %v6079, %v6075
  %v6412 = vpack.c.b16 %v6084, %v6080
  %v6413 = vpack.c.b16 %v6085, %v6081
  %v6414 = vpack.c.b16 %v6086, %v6082
  %v6415 = vpack.c.b16 %v6087, %v6083
  %v6416 = vpack.c.b16 %v6092, %v6088
  %v6417 = vpack.c.b16 %v6093, %v6089
  %v6418 = vpack.c.b16 %v6094, %v6090
  %v6419 = vpack.c.b16 %v6095, %v6091
  %v6420 = vpack.c.b16 %v6100, %v6096
  %v6421 = vpack.c.b16 %v6101, %v6097
  %v6422 = vpack.c.b16 %v6102, %v6098
  %v6423 = vpack.c.b16 %v6103, %v6099
  %v6424 = vpack.c.b16 %v6108, %v6104
  %v6425 = vpack.c.b16 %v6109, %v6105
  %v6426 = vpack.c.b16 %v6110, %v6106
  %v6427 = vpack.c.b16 %v6111, %v6107
  %v6428 = vpack.c.b16 %v6116, %v6112
  %v6429 = vpack.c.b16 %v6117, %v6113
  %v6430 = vpack.c.b16 %v6118, %v6114
  %v6431 = vpack.c.b16 %v6119, %v6115
  %v6432 = vpack.c.b16 %v6124, %v6120
  %v6433 = vpack.c.b16 %v6125, %v6121
  %v6434 = vpack.c.b16 %v6126, %v6122
  %v6435 = vpack.c.b16 %v6127, %v6123
  %v6436 = vpack.c.b16 %v6132, %v6128
  %v6437 = vpack.c.b16 %v6133, %v6129
  %v6438 = vpack.c.b16 %v6134, %v6130
  %v6439 = vpack.c.b16 %v6135, %v6131
  %v6440 = vpack.c.b16 %v6140, %v6136
  %v6441 = vpack.c.b16 %v6141, %v6137
  %v6442 = vpack.c.b16 %v6142, %v6138
  %v6443 = vpack.c.b16 %v6143, %v6139
  %v6444 = vpack.c.b16 %v6148, %v6144
  %v6445 = vpack.c.b16 %v6149, %v6145
  %v6446 = vpack.c.b16 %v6150, %v6146
  %v6447 = vpack.c.b16 %v6151, %v6147
  %v6448 = vpack.c.b16 %v6156, %v6152
  %v6449 = vpack.c.b16 %v6157, %v6153
  %v6450 = vpack.c.b16 %v6158, %v6154
  %v6451 = vpack.c.b16 %v6159, %v6155
  %v6452 = vpack.c.b16 %v6164, %v6160
  %v6453 = vpack.c.b16 %v6165, %v6161
  %v6454 = vpack.c.b16 %v6166, %v6162
  %v6455 = vpack.c.b16 %v6167, %v6163
  %v6456 = vpack.c.b16 %v6172, %v6168
  %v6457 = vpack.c.b16 %v6173, %v6169
  %v6458 = vpack.c.b16 %v6174, %v6170
  %v6459 = vpack.c.b16 %v6175, %v6171
  %v6460 = vpack.c.b16 %v6180, %v6176
  %v6461 = vpack.c.b16 %v6181, %v6177
  %v6462 = vpack.c.b16 %v6182, %v6178
  %v6463 = vpack.c.b16 %v6183, %v6179
  %v6464 = vpack.c.b16 %v6188, %v6184
  %v6465 = vpack.c.b16 %v6189, %v6185
  %v6466 = vpack.c.b16 %v6190, %v6186
  %v6467 = vpack.c.b16 %v6191, %v6187
  %v6468 = vpack.c.b16 %v6196, %v6192
  %v6469 = vpack.c.b16 %v6197, %v6193
  %v6470 = vpack.c.b16 %v6198, %v6194
  %v6471 = vpack.c.b16 %v6199, %v6195
  %v6472 = vpack.c.b16 %v6204, %v6200
  %v6473 = vpack.c.b16 %v6205, %v6201
  %v6474 = vpack.c.b16 %v6206, %v6202
  %v6475 = vpack.c.b16 %v6207, %v6203
  %v6476 = vpack.c.b16 %v6212, %v6208
  %v6477 = vpack.c.b16 %v6213, %v6209
  %v6478 = vpack.c.b16 %v6214, %v6210
  %v6479 = vpack.c.b16 %v6215, %v6211
  %v6480 = vpack.c.b16 %v6220, %v6216
  %v6481 = vpack.c.b16 %v6221, %v6217
  %v6482 = vpack.c.b16 %v6222, %v6218
  %v6483 = vpack.c.b16 %v6223, %v6219
  %v6484 = vpack.c.b16 %v6228, %v6224
  %v6485 = vpack.c.b16 %v6229, %v6225
  %v6486 = vpack.c.b16 %v6230, %v6226
  %v6487 = vpack.c.b16 %v6231, %v6227
  %v6488 = vpack.c.b16 %v6236, %v6232
  %v6489 = vpack.c.b16 %v6237, %v6233
  %v6490 = vpack.c.b16 %v6238, %v6234
  %v6491 = vpack.c.b16 %v6239, %v6235
  %v6492 = vpack.c.b16 %v6244, %v6240
  %v6493 = vpack.c.b16 %v6245, %v6241
  %v6494 = vpack.c.b16 %v6246, %v6242
  %v6495 = vpack.c.b16 %v6247, %v6243
  %v6496 = vpack.c.b16 %v6252, %v6248
  %v6497 = vpack.c.b16 %v6253, %v6249
  %v6498 = vpack.c.b16 %v6254, %v6250
  %v6499 = vpack.c.b16 %v6255, %v6251
  %v6500 = vpack.c.b16 %v6260, %v6256
  %v6501 = vpack.c.b16 %v6261, %v6257
  %v6502 = vpack.c.b16 %v6262, %v6258
  %v6503 = vpack.c.b16 %v6263, %v6259
  %v6504 = vpack.c.b16 %v6268, %v6264
  %v6505 = vpack.c.b16 %v6269, %v6265
  %v6506 = vpack.c.b16 %v6270, %v6266
  %v6507 = vpack.c.b16 %v6271, %v6267
  %v6508 = vpack.c.b16 %v6276, %v6272
  %v6509 = vpack.c.b16 %v6277, %v6273
  %v6510 = vpack.c.b16 %v6278, %v6274
  %v6511 = vpack.c.b16 %v6279, %v6275
  %v6512 = vpack.c.b16 %v6284, %v6280
  %v6513 = vpack.c.b16 %v6285, %v6281
  %v6514 = vpack.c.b16 %v6286, %v6282
  %v6515 = vpack.c.b16 %v6287, %v6283
  %v6516 = vpack.c.b16 %v6292, %v6288
  %v6517 = vpack.c.b16 %v6293, %v6289
  %v6518 = vpack.c.b16 %v6294, %v6290
  %v6519 = vpack.c.b16 %v6295, %v6291
  %v6520 = vpack.c.b16 %v6300, %v6296
  %v6521 = vpack.c.b16 %v6301, %v6297
  %v6522 = vpack.c.b16 %v6302, %v6298
  %v6523 = vpack.c.b16 %v6303, %v6299
  %v6524 = vpack.c.b16 %v6308, %v6304
  %v6525 = vpack.c.b16 %v6309, %v6305
  %v6526 = vpack.c.b16 %v6310, %v6306
  %v6527 = vpack.c.b16 %v6311, %v6307
  %v6528 = vpack.c.b16 %v6316, %v6312
  %v6529 = vpack.c.b16 %v6317, %v6313
  %v6530 = vpack.c.b16 %v6318, %v6314
  %v6531 = vpack.c.b16 %v6319, %v6315
  %v6532 = vpack.c.b16 %v6324, %v6320
  %v6533 = vpack.c.b16 %v6325, %v6321
  %v6534 = vpack.c.b16 %v6326, %v6322
  %v6535 = vpack.c.b16 %v6327, %v6323
  %v6536 = vpack.c.b16 %v6332, %v6328
  %v6537 = vpack.c.b16 %v6333, %v6329
  %v6538 = vpack.c.b16 %v6334, %v6330
  %v6539 = vpack.c.b16 %v6335, %v6331
  %v6540 = vpack.c.b16 %v6340, %v6336
  %v6541 = vpack.c.b16 %v6341, %v6337
  %v6542 = vpack.c.b16 %v6342, %v6338
  %v6543 = vpack.c.b16 %v6343, %v6339
  %v6544 = vpack.c.b16 %v6348, %v6344
  %v6545 = vpack.c.b16 %v6349, %v6345
  %v6546 = vpack.c.b16 %v6350, %v6346
  %v6547 = vpack.c.b16 %v6351, %v6347
  %v6548 = vpack.c.b16 %v6356, %v6352
  %v6549 = vpack.c.b16 %v6357, %v6353
  %v6550 = vpack.c.b16 %v6358, %v6354
  %v6551 = vpack.c.b16 %v6359, %v6355
  %v6552 = vpack.c.b16 %v6364, %v6360
  %v6553 = vpack.c.b16 %v6365, %v6361
  %v6554 = vpack.c.b16 %v6366, %v6362
  %v6555 = vpack.c.b16 %v6367, %v6363
  %v6556 = vpack.c.b16 %v6372, %v6368
  %v6557 = vpack.c.b16 %v6373, %v6369
  %v6558 = vpack.c.b16 %v6374, %v6370
  %v6559 = vpack.c.b16 %v6375, %v6371
  %v6745 = vsel %vm876, %v5818, 0
  %6747 = vmatpush.bf16.msra.mxu0 %v6404
  %6748 = vmatpush.bf16.msra.mxu0 %v6400
  %6749 = vmatpush.bf16.msra.mxu0 %v6396
  %6750 = vmatpush.bf16.msra.mxu0 %v6392
  %6751 = vmatpush.bf16.msra.mxu0 %v6388
  %6752 = vmatpush.bf16.msra.mxu0 %v6384
  %6753 = vmatpush.bf16.msra.mxu0 %v6380
  %6754 = vmatpush.bf16.msra.mxu0 %v6376
  %6755 = vmatmul.bf16.gmra.mxu0 %v5813
  %v6756 = vpop.f32.mrf.mxu0
  %v6757 = vadd.f32 0.0, %v6756
  %v6758 = vpop.f32.mrf.mxu0
  %v6759 = vadd.f32 0.0, %v6758
  %6760 = vdwg.mxu0
  %6761 = vmatpush.bf16.msra.mxu0 %v6436
  %6762 = vmatpush.bf16.msra.mxu0 %v6432
  %6763 = vmatpush.bf16.msra.mxu0 %v6428
  %6764 = vmatpush.bf16.msra.mxu0 %v6424
  %6765 = vmatpush.bf16.msra.mxu0 %v6420
  %6766 = vmatpush.bf16.msra.mxu0 %v6416
  %6767 = vmatpush.bf16.msra.mxu0 %v6412
  %6768 = vmatpush.bf16.msra.mxu0 %v6408
  %6769 = vmatmul.bf16.gmra.mxu0 %v5814
  %v6770 = vpop.f32.mrf.mxu0
  %v6771 = vadd.f32 %v6757, %v6770
  %v6772 = vpop.f32.mrf.mxu0
  %v6773 = vadd.f32 %v6759, %v6772
  %6774 = vdwg.mxu0
  %6775 = vmatpush.bf16.msra.mxu0 %v6468
  %6776 = vmatpush.bf16.msra.mxu0 %v6464
  %6777 = vmatpush.bf16.msra.mxu0 %v6460
  %6778 = vmatpush.bf16.msra.mxu0 %v6456
  %6779 = vmatpush.bf16.msra.mxu0 %v6452
  %6780 = vmatpush.bf16.msra.mxu0 %v6448
  %6781 = vmatpush.bf16.msra.mxu0 %v6444
  %6782 = vmatpush.bf16.msra.mxu0 %v6440
  %6783 = vmatmul.bf16.gmra.mxu0 %v5815
  %v6784 = vpop.f32.mrf.mxu0
  %v6785 = vadd.f32 %v6771, %v6784
  %v6786 = vpop.f32.mrf.mxu0
  %v6787 = vadd.f32 %v6773, %v6786
  %6788 = vdwg.mxu0
  %6789 = vmatpush.bf16.msra.mxu0 %v6500
  %6790 = vmatpush.bf16.msra.mxu0 %v6496
  %6791 = vmatpush.bf16.msra.mxu0 %v6492
  %6792 = vmatpush.bf16.msra.mxu0 %v6488
  %6793 = vmatpush.bf16.msra.mxu0 %v6484
  %6794 = vmatpush.bf16.msra.mxu0 %v6480
  %6795 = vmatpush.bf16.msra.mxu0 %v6476
  %6796 = vmatpush.bf16.msra.mxu0 %v6472
  %6797 = vmatmul.bf16.gmra.mxu0 %v5816
  %v6798 = vpop.f32.mrf.mxu0
  %v6799 = vadd.f32 %v6785, %v6798
  %v6800 = vpop.f32.mrf.mxu0
  %v6801 = vadd.f32 %v6787, %v6800
  %6802 = vdwg.mxu0
  %6803 = vmatpush.bf16.msra.mxu0 %v6532
  %6804 = vmatpush.bf16.msra.mxu0 %v6528
  %6805 = vmatpush.bf16.msra.mxu0 %v6524
  %6806 = vmatpush.bf16.msra.mxu0 %v6520
  %6807 = vmatpush.bf16.msra.mxu0 %v6516
  %6808 = vmatpush.bf16.msra.mxu0 %v6512
  %6809 = vmatpush.bf16.msra.mxu0 %v6508
  %6810 = vmatpush.bf16.msra.mxu0 %v6504
  %6811 = vmatmul.bf16.gmra.mxu0 %v5817
  %v6812 = vpop.f32.mrf.mxu0
  %v6813 = vadd.f32 %v6799, %v6812
  %v6814 = vpop.f32.mrf.mxu0
  %v6815 = vadd.f32 %v6801, %v6814
  %6816 = vdwg.mxu0
  %6817 = vmatpush.bf16.msra.mxu0 0
  %6818 = vmatpush.bf16.msra.mxu0 0
  %6819 = vmatpush.bf16.msra.mxu0 %v6556
  %6820 = vmatpush.bf16.msra.mxu0 %v6552
  %6821 = vmatpush.bf16.msra.mxu0 %v6548
  %6822 = vmatpush.bf16.msra.mxu0 %v6544
  %6823 = vmatpush.bf16.msra.mxu0 %v6540
  %6824 = vmatpush.bf16.msra.mxu0 %v6536
  %6825 = vmatmul.bf16.gmra.mxu0 %v6745
  %v6826 = vpop.f32.mrf.mxu0
  %v6827 = vadd.f32 %v6813, %v6826
  %v6828 = vpop.f32.mrf.mxu0
  %v6829 = vadd.f32 %v6815, %v6828
  %6830 = vdwg.mxu0
  %6831 = vmatpush.bf16.msra.mxu0 %v6405
  %6832 = vmatpush.bf16.msra.mxu0 %v6401
  %6833 = vmatpush.bf16.msra.mxu0 %v6397
  %6834 = vmatpush.bf16.msra.mxu0 %v6393
  %6835 = vmatpush.bf16.msra.mxu0 %v6389
  %6836 = vmatpush.bf16.msra.mxu0 %v6385
  %6837 = vmatpush.bf16.msra.mxu0 %v6381
  %6838 = vmatpush.bf16.msra.mxu0 %v6377
  %6839 = vmatmul.bf16.gmra.mxu0 %v5813
  %v6840 = vpop.f32.mrf.mxu0
  %v6841 = vadd.f32 0.0, %v6840
  %v6842 = vpop.f32.mrf.mxu0
  %v6843 = vadd.f32 0.0, %v6842
  %6844 = vdwg.mxu0
  %6845 = vmatpush.bf16.msra.mxu0 %v6437
  %6846 = vmatpush.bf16.msra.mxu0 %v6433
  %6847 = vmatpush.bf16.msra.mxu0 %v6429
  %6848 = vmatpush.bf16.msra.mxu0 %v6425
  %6849 = vmatpush.bf16.msra.mxu0 %v6421
  %6850 = vmatpush.bf16.msra.mxu0 %v6417
  %6851 = vmatpush.bf16.msra.mxu0 %v6413
  %6852 = vmatpush.bf16.msra.mxu0 %v6409
  %6853 = vmatmul.bf16.gmra.mxu0 %v5814
  %v6854 = vpop.f32.mrf.mxu0
  %v6855 = vadd.f32 %v6841, %v6854
  %v6856 = vpop.f32.mrf.mxu0
  %v6857 = vadd.f32 %v6843, %v6856
  %6858 = vdwg.mxu0
  %6859 = vmatpush.bf16.msra.mxu0 %v6469
  %6860 = vmatpush.bf16.msra.mxu0 %v6465
  %6861 = vmatpush.bf16.msra.mxu0 %v6461
  %6862 = vmatpush.bf16.msra.mxu0 %v6457
  %6863 = vmatpush.bf16.msra.mxu0 %v6453
  %6864 = vmatpush.bf16.msra.mxu0 %v6449
  %6865 = vmatpush.bf16.msra.mxu0 %v6445
  %6866 = vmatpush.bf16.msra.mxu0 %v6441
  %6867 = vmatmul.bf16.gmra.mxu0 %v5815
  %v6868 = vpop.f32.mrf.mxu0
  %v6869 = vadd.f32 %v6855, %v6868
  %v6870 = vpop.f32.mrf.mxu0
  %v6871 = vadd.f32 %v6857, %v6870
  %6872 = vdwg.mxu0
  %6873 = vmatpush.bf16.msra.mxu0 %v6501
  %6874 = vmatpush.bf16.msra.mxu0 %v6497
  %6875 = vmatpush.bf16.msra.mxu0 %v6493
  %6876 = vmatpush.bf16.msra.mxu0 %v6489
  %6877 = vmatpush.bf16.msra.mxu0 %v6485
  %6878 = vmatpush.bf16.msra.mxu0 %v6481
  %6879 = vmatpush.bf16.msra.mxu0 %v6477
  %6880 = vmatpush.bf16.msra.mxu0 %v6473
  %6881 = vmatmul.bf16.gmra.mxu0 %v5816
  %v6882 = vpop.f32.mrf.mxu0
  %v6883 = vadd.f32 %v6869, %v6882
  %v6884 = vpop.f32.mrf.mxu0
  %v6885 = vadd.f32 %v6871, %v6884
  %6886 = vdwg.mxu0
  %6887 = vmatpush.bf16.msra.mxu0 %v6533
  %6888 = vmatpush.bf16.msra.mxu0 %v6529
  %6889 = vmatpush.bf16.msra.mxu0 %v6525
  %6890 = vmatpush.bf16.msra.mxu0 %v6521
  %6891 = vmatpush.bf16.msra.mxu0 %v6517
  %6892 = vmatpush.bf16.msra.mxu0 %v6513
  %6893 = vmatpush.bf16.msra.mxu0 %v6509
  %6894 = vmatpush.bf16.msra.mxu0 %v6505
  %6895 = vmatmul.bf16.gmra.mxu0 %v5817
  %v6896 = vpop.f32.mrf.mxu0
  %v6897 = vadd.f32 %v6883, %v6896
  %v6898 = vpop.f32.mrf.mxu0
  %v6899 = vadd.f32 %v6885, %v6898
  %6900 = vdwg.mxu0
  %6901 = vmatpush.bf16.msra.mxu0 0
  %6902 = vmatpush.bf16.msra.mxu0 0
  %6903 = vmatpush.bf16.msra.mxu0 %v6557
  %6904 = vmatpush.bf16.msra.mxu0 %v6553
  %6905 = vmatpush.bf16.msra.mxu0 %v6549
  %6906 = vmatpush.bf16.msra.mxu0 %v6545
  %6907 = vmatpush.bf16.msra.mxu0 %v6541
  %6908 = vmatpush.bf16.msra.mxu0 %v6537
  %6909 = vmatmul.bf16.gmra.mxu0 %v6745
  %v6910 = vpop.f32.mrf.mxu0
  %v6911 = vadd.f32 %v6897, %v6910
  %v6912 = vpop.f32.mrf.mxu0
  %v6913 = vadd.f32 %v6899, %v6912
  %6914 = vdwg.mxu0
  %6915 = vmatpush.bf16.msra.mxu0 %v6406
  %6916 = vmatpush.bf16.msra.mxu0 %v6402
  %6917 = vmatpush.bf16.msra.mxu0 %v6398
  %6918 = vmatpush.bf16.msra.mxu0 %v6394
  %6919 = vmatpush.bf16.msra.mxu0 %v6390
  %6920 = vmatpush.bf16.msra.mxu0 %v6386
  %6921 = vmatpush.bf16.msra.mxu0 %v6382
  %6922 = vmatpush.bf16.msra.mxu0 %v6378
  %6923 = vmatmul.bf16.gmra.mxu0 %v5813
  %v6924 = vpop.f32.mrf.mxu0
  %v6925 = vadd.f32 0.0, %v6924
  %v6926 = vpop.f32.mrf.mxu0
  %v6927 = vadd.f32 0.0, %v6926
  %6928 = vdwg.mxu0
  %6929 = vmatpush.bf16.msra.mxu0 %v6438
  %6930 = vmatpush.bf16.msra.mxu0 %v6434
  %6931 = vmatpush.bf16.msra.mxu0 %v6430
  %6932 = vmatpush.bf16.msra.mxu0 %v6426
  %6933 = vmatpush.bf16.msra.mxu0 %v6422
  %6934 = vmatpush.bf16.msra.mxu0 %v6418
  %6935 = vmatpush.bf16.msra.mxu0 %v6414
  %6936 = vmatpush.bf16.msra.mxu0 %v6410
  %6937 = vmatmul.bf16.gmra.mxu0 %v5814
  %v6938 = vpop.f32.mrf.mxu0
  %v6939 = vadd.f32 %v6925, %v6938
  %v6940 = vpop.f32.mrf.mxu0
  %v6941 = vadd.f32 %v6927, %v6940
  %6942 = vdwg.mxu0
  %6943 = vmatpush.bf16.msra.mxu0 %v6470
  %6944 = vmatpush.bf16.msra.mxu0 %v6466
  %6945 = vmatpush.bf16.msra.mxu0 %v6462
  %6946 = vmatpush.bf16.msra.mxu0 %v6458
  %6947 = vmatpush.bf16.msra.mxu0 %v6454
  %6948 = vmatpush.bf16.msra.mxu0 %v6450
  %6949 = vmatpush.bf16.msra.mxu0 %v6446
  %6950 = vmatpush.bf16.msra.mxu0 %v6442
  %6951 = vmatmul.bf16.gmra.mxu0 %v5815
  %v6952 = vpop.f32.mrf.mxu0
  %v6953 = vadd.f32 %v6939, %v6952
  %v6954 = vpop.f32.mrf.mxu0
  %v6955 = vadd.f32 %v6941, %v6954
  %6956 = vdwg.mxu0
  %6957 = vmatpush.bf16.msra.mxu0 %v6502
  %6958 = vmatpush.bf16.msra.mxu0 %v6498
  %6959 = vmatpush.bf16.msra.mxu0 %v6494
  %6960 = vmatpush.bf16.msra.mxu0 %v6490
  %6961 = vmatpush.bf16.msra.mxu0 %v6486
  %6962 = vmatpush.bf16.msra.mxu0 %v6482
  %6963 = vmatpush.bf16.msra.mxu0 %v6478
  %6964 = vmatpush.bf16.msra.mxu0 %v6474
  %6965 = vmatmul.bf16.gmra.mxu0 %v5816
  %v6966 = vpop.f32.mrf.mxu0
  %v6967 = vadd.f32 %v6953, %v6966
  %v6968 = vpop.f32.mrf.mxu0
  %v6969 = vadd.f32 %v6955, %v6968
  %6970 = vdwg.mxu0
  %6971 = vmatpush.bf16.msra.mxu0 %v6534
  %6972 = vmatpush.bf16.msra.mxu0 %v6530
  %6973 = vmatpush.bf16.msra.mxu0 %v6526
  %6974 = vmatpush.bf16.msra.mxu0 %v6522
  %6975 = vmatpush.bf16.msra.mxu0 %v6518
  %6976 = vmatpush.bf16.msra.mxu0 %v6514
  %6977 = vmatpush.bf16.msra.mxu0 %v6510
  %6978 = vmatpush.bf16.msra.mxu0 %v6506
  %6979 = vmatmul.bf16.gmra.mxu0 %v5817
  %v6980 = vpop.f32.mrf.mxu0
  %v6981 = vadd.f32 %v6967, %v6980
  %v6982 = vpop.f32.mrf.mxu0
  %v6983 = vadd.f32 %v6969, %v6982
  %6984 = vdwg.mxu0
  %6985 = vmatpush.bf16.msra.mxu0 0
  %6986 = vmatpush.bf16.msra.mxu0 0
  %6987 = vmatpush.bf16.msra.mxu0 %v6558
  %6988 = vmatpush.bf16.msra.mxu0 %v6554
  %6989 = vmatpush.bf16.msra.mxu0 %v6550
  %6990 = vmatpush.bf16.msra.mxu0 %v6546
  %6991 = vmatpush.bf16.msra.mxu0 %v6542
  %6992 = vmatpush.bf16.msra.mxu0 %v6538
  %6993 = vmatmul.bf16.gmra.mxu0 %v6745
  %v6994 = vpop.f32.mrf.mxu0
  %v6995 = vadd.f32 %v6981, %v6994
  %v6996 = vpop.f32.mrf.mxu0
  %v6997 = vadd.f32 %v6983, %v6996
  %6998 = vdwg.mxu0
  %6999 = vmatpush.bf16.msra.mxu0 %v6407
  %7000 = vmatpush.bf16.msra.mxu0 %v6403
  %7001 = vmatpush.bf16.msra.mxu0 %v6399
  %7002 = vmatpush.bf16.msra.mxu0 %v6395
  %7003 = vmatpush.bf16.msra.mxu0 %v6391
  %7004 = vmatpush.bf16.msra.mxu0 %v6387
  %7005 = vmatpush.bf16.msra.mxu0 %v6383
  %7006 = vmatpush.bf16.msra.mxu0 %v6379
  %7007 = vmatmul.bf16.gmra.mxu0 %v5813
  %v7008 = vpop.f32.mrf.mxu0
  %v7009 = vadd.f32 0.0, %v7008
  %v7010 = vpop.f32.mrf.mxu0
  %v7011 = vadd.f32 0.0, %v7010
  %7012 = vdwg.mxu0
  %7013 = vmatpush.bf16.msra.mxu0 %v6439
  %7014 = vmatpush.bf16.msra.mxu0 %v6435
  %7015 = vmatpush.bf16.msra.mxu0 %v6431
  %7016 = vmatpush.bf16.msra.mxu0 %v6427
  %7017 = vmatpush.bf16.msra.mxu0 %v6423
  %7018 = vmatpush.bf16.msra.mxu0 %v6419
  %7019 = vmatpush.bf16.msra.mxu0 %v6415
  %7020 = vmatpush.bf16.msra.mxu0 %v6411
  %7021 = vmatmul.bf16.gmra.mxu0 %v5814
  %v7022 = vpop.f32.mrf.mxu0
  %v7023 = vadd.f32 %v7009, %v7022
  %v7024 = vpop.f32.mrf.mxu0
  %v7025 = vadd.f32 %v7011, %v7024
  %7026 = vdwg.mxu0
  %7027 = vmatpush.bf16.msra.mxu0 %v6471
  %7028 = vmatpush.bf16.msra.mxu0 %v6467
  %7029 = vmatpush.bf16.msra.mxu0 %v6463
  %7030 = vmatpush.bf16.msra.mxu0 %v6459
  %7031 = vmatpush.bf16.msra.mxu0 %v6455
  %7032 = vmatpush.bf16.msra.mxu0 %v6451
  %7033 = vmatpush.bf16.msra.mxu0 %v6447
  %7034 = vmatpush.bf16.msra.mxu0 %v6443
  %7035 = vmatmul.bf16.gmra.mxu0 %v5815
  %v7036 = vpop.f32.mrf.mxu0
  %v7037 = vadd.f32 %v7023, %v7036
  %v7038 = vpop.f32.mrf.mxu0
  %v7039 = vadd.f32 %v7025, %v7038
  %7040 = vdwg.mxu0
  %7041 = vmatpush.bf16.msra.mxu0 %v6503
  %7042 = vmatpush.bf16.msra.mxu0 %v6499
  %7043 = vmatpush.bf16.msra.mxu0 %v6495
  %7044 = vmatpush.bf16.msra.mxu0 %v6491
  %7045 = vmatpush.bf16.msra.mxu0 %v6487
  %7046 = vmatpush.bf16.msra.mxu0 %v6483
  %7047 = vmatpush.bf16.msra.mxu0 %v6479
  %7048 = vmatpush.bf16.msra.mxu0 %v6475
  %7049 = vmatmul.bf16.gmra.mxu0 %v5816
  %v7050 = vpop.f32.mrf.mxu0
  %v7051 = vadd.f32 %v7037, %v7050
  %v7052 = vpop.f32.mrf.mxu0
  %v7053 = vadd.f32 %v7039, %v7052
  %7054 = vdwg.mxu0
  %7055 = vmatpush.bf16.msra.mxu0 %v6535
  %7056 = vmatpush.bf16.msra.mxu0 %v6531
  %7057 = vmatpush.bf16.msra.mxu0 %v6527
  %7058 = vmatpush.bf16.msra.mxu0 %v6523
  %7059 = vmatpush.bf16.msra.mxu0 %v6519
  %7060 = vmatpush.bf16.msra.mxu0 %v6515
  %7061 = vmatpush.bf16.msra.mxu0 %v6511
  %7062 = vmatpush.bf16.msra.mxu0 %v6507
  %7063 = vmatmul.bf16.gmra.mxu0 %v5817
  %v7064 = vpop.f32.mrf.mxu0
  %v7065 = vadd.f32 %v7051, %v7064
  %v7066 = vpop.f32.mrf.mxu0
  %v7067 = vadd.f32 %v7053, %v7066
  %7068 = vdwg.mxu0
  %7069 = vmatpush.bf16.msra.mxu0 0
  %7070 = vmatpush.bf16.msra.mxu0 0
  %7071 = vmatpush.bf16.msra.mxu0 %v6559
  %7072 = vmatpush.bf16.msra.mxu0 %v6555
  %7073 = vmatpush.bf16.msra.mxu0 %v6551
  %7074 = vmatpush.bf16.msra.mxu0 %v6547
  %7075 = vmatpush.bf16.msra.mxu0 %v6543
  %7076 = vmatpush.bf16.msra.mxu0 %v6539
  %7077 = vmatmul.bf16.gmra.mxu0 %v6745
  %v7078 = vpop.f32.mrf.mxu0
  %v7079 = vadd.f32 %v7065, %v7078
  %v7080 = vpop.f32.mrf.mxu0
  %v7081 = vadd.f32 %v7067, %v7080
  %7082 = vdwg.mxu0
  %v7083 = vadd.f32 %v5545, %v6827
  %v7084 = vadd.f32 %v5546, %v6911
  %v7085 = vadd.f32 %v5547, %v6995
  %v7086 = vadd.f32 %v5548, %v7079
  %v7087 = vadd.f32 %v5549, %v6829
  %v7088 = vadd.f32 %v5550, %v6913
  %v7089 = vadd.f32 %v5551, %v6997
  %v7090 = vadd.f32 %v5552, %v7081
  %vm7091 = vcmask 1041408
  %vm7092 = vcmask 1045508
  %vm7093 = vmor %vm7091, %vm7092
  %v7094 = vrot.slane %v1007, 6
  %v7095 = vrot.slane %v7094, 4
  %v7096 = vrot.slane %v1010, 6
  %v7097 = vsel %vm7093, %v7095, %v7096
  %v7098 = vrot.slane %v1008, 6
  %v7099 = vrot.slane %v7098, 4
  %v7100 = vrot.slane %v1011, 6
  %v7101 = vsel %vm7093, %v7099, %v7100
  %v7102 = vrot.slane %v1009, 6
  %v7103 = vrot.slane %v7102, 4
  %v7104 = vrot.slane %v1012, 6
  %v7105 = vsel %vm7093, %v7103, %v7104
  %v7106 = vrot.slane %v1013, 6
  %v7107 = vrot.slane %v7106, 4
  %v7108 = vrot.slane %v1016, 6
  %v7109 = vsel %vm7093, %v7107, %v7108
  %v7110 = vrot.slane %v1014, 6
  %v7111 = vrot.slane %v7110, 4
  %v7112 = vrot.slane %v1017, 6
  %v7113 = vsel %vm7093, %v7111, %v7112
  %v7114 = vrot.slane %v1015, 6
  %v7115 = vrot.slane %v7114, 4
  %v7116 = vrot.slane %v1018, 6
  %v7117 = vsel %vm7093, %v7115, %v7116
  %s7118 = scalar_lea.vmem %s3, 5888
  %v7119 = vld [vmem:[%s7118] sm:$0xff]
  %v7120 = vld [vmem:[%s7118 + $0x8] sm:$0xff]
  %v7121 = vld [vmem:[%s7118 + $0x10] sm:$0xff]
  %v7122 = vld [vmem:[%s7118 + $0x18] sm:$0xff]
  %v7123 = vld [vmem:[%s7118 + $0x20] sm:$0xff]
  %v7124 = vld [vmem:[%s7118 + $0x28] sm:$0xff]
  %v7125 = vld [vmem:[%s7118 + $0x30] sm:$0xff]
  %v7126 = vld [vmem:[%s7118 + $0x38] sm:$0xff]
  %v7127 = vld [vmem:[%s7118 + $0x40] sm:$0xff]
  %v7128 = vld [vmem:[%s7118 + $0x48] sm:$0xff]
  %v7129 = vld [vmem:[%s7118 + $0x50] sm:$0xff]
  %v7130 = vld [vmem:[%s7118 + $0x58] sm:$0xff]
  %v7131 = vld [vmem:[%s7118 + $0x60] sm:$0xff]
  %v7132 = vld [vmem:[%s7118 + $0x68] sm:$0xff]
  %v7133 = vld [vmem:[%s7118 + $0x70] sm:$0xff]
  %v7134 = vld [vmem:[%s7118 + $0x78] sm:$0xff]
  %v7135 = vld [vmem:[%s7118 + $0x80] sm:$0xff]
  %v7136 = vld [vmem:[%s7118 + $0x88] sm:$0xff]
  %v7137 = vld [vmem:[%s7118 + $0x90] sm:$0xff]
  %v7138 = vld [vmem:[%s7118 + $0x98] sm:$0xff]
  %v7139 = vld [vmem:[%s7118 + $0xa0] sm:$0xff]
  %v7140 = vld [vmem:[%s7118 + $0xa8] sm:$0xff]
  %v7141 = vld [vmem:[%s7118 + $0xb0] sm:$0xff]
  %v7142 = vld [vmem:[%s7118 + $0xb8] sm:$0xff]
  %v7143 = vld [vmem:[%s7118 + $0xc0] sm:$0xff]
  %v7144 = vld [vmem:[%s7118 + $0xc8] sm:$0xff]
  %v7145 = vld [vmem:[%s7118 + $0xd0] sm:$0xff]
  %v7146 = vld [vmem:[%s7118 + $0xd8] sm:$0xff]
  %v7147 = vld [vmem:[%s7118 + $0xe0] sm:$0xff]
  %v7148 = vld [vmem:[%s7118 + $0xe8] sm:$0xff]
  %v7149 = vld [vmem:[%s7118 + $0xf0] sm:$0xff]
  %v7150 = vld [vmem:[%s7118 + $0xf8] sm:$0xff]
  %v7151 = vld [vmem:[%s7118 + $0x100] sm:$0xff]
  %v7152 = vld [vmem:[%s7118 + $0x108] sm:$0xff]
  %v7153 = vld [vmem:[%s7118 + $0x110] sm:$0xff]
  %v7154 = vld [vmem:[%s7118 + $0x118] sm:$0xff]
  %v7155 = vld [vmem:[%s7118 + $0x120] sm:$0xff]
  %v7156 = vld [vmem:[%s7118 + $0x128] sm:$0xff]
  %v7157 = vld [vmem:[%s7118 + $0x130] sm:$0xff]
  %v7158 = vld [vmem:[%s7118 + $0x138] sm:$0xff]
  %v7159 = vld [vmem:[%s7118 + $0x140] sm:$0xff]
  %v7160 = vld [vmem:[%s7118 + $0x148] sm:$0xff]
  %v7161 = vld [vmem:[%s7118 + $0x150] sm:$0xff]
  %v7162 = vld [vmem:[%s7118 + $0x158] sm:$0xff]
  %v7163 = vld [vmem:[%s7118 + $0x160] sm:$0xff]
  %v7164 = vld [vmem:[%s7118 + $0x168] sm:$0xff]
  %v7165 = vld [vmem:[%s7118 + $0x170] sm:$0xff]
  %v7166 = vld [vmem:[%s7118 + $0x178] sm:$0xff]
  %v7167 = vld [vmem:[%s7118 + $0x180] sm:$0xff]
  %v7168 = vld [vmem:[%s7118 + $0x188] sm:$0xff]
  %v7169 = vld [vmem:[%s7118 + $0x190] sm:$0xff]
  %v7170 = vld [vmem:[%s7118 + $0x198] sm:$0xff]
  %v7171 = vld [vmem:[%s7118 + $0x1a0] sm:$0xff]
  %v7172 = vld [vmem:[%s7118 + $0x1a8] sm:$0xff]
  %v7173 = vld [vmem:[%s7118 + $0x1b0] sm:$0xff]
  %v7174 = vld [vmem:[%s7118 + $0x1b8] sm:$0xff]
  %v7175 = vld [vmem:[%s7118 + $0x1c0] sm:$0xff]
  %v7176 = vld [vmem:[%s7118 + $0x1c8] sm:$0xff]
  %v7177 = vld [vmem:[%s7118 + $0x1d0] sm:$0xff]
  %v7178 = vld [vmem:[%s7118 + $0x1d8] sm:$0xff]
  %v7179 = vld [vmem:[%s7118 + $0x1e0] sm:$0xff]
  %v7180 = vld [vmem:[%s7118 + $0x1e8] sm:$0xff]
  %v7181 = vld [vmem:[%s7118 + $0x1f0] sm:$0xff]
  %v7182 = vld [vmem:[%s7118 + $0x1f8] sm:$0xff]
  %v7183 = vld [vmem:[%s7118 + $0x200] sm:$0xff]
  %v7184 = vld [vmem:[%s7118 + $0x208] sm:$0xff]
  %v7185 = vld [vmem:[%s7118 + $0x210] sm:$0xff]
  %v7186 = vld [vmem:[%s7118 + $0x218] sm:$0xff]
  %v7187 = vld [vmem:[%s7118 + $0x220] sm:$0xff]
  %v7188 = vld [vmem:[%s7118 + $0x228] sm:$0xff]
  %v7189 = vld [vmem:[%s7118 + $0x230] sm:$0xff]
  %v7190 = vld [vmem:[%s7118 + $0x238] sm:$0xff]
  %v7191 = vld [vmem:[%s7118 + $0x240] sm:$0xff]
  %v7192 = vld [vmem:[%s7118 + $0x248] sm:$0xff]
  %v7193 = vld [vmem:[%s7118 + $0x250] sm:$0xff]
  %v7194 = vld [vmem:[%s7118 + $0x258] sm:$0xff]
  %v7195 = vld [vmem:[%s7118 + $0x260] sm:$0xff]
  %v7196 = vld [vmem:[%s7118 + $0x268] sm:$0xff]
  %v7197 = vld [vmem:[%s7118 + $0x270] sm:$0xff]
  %v7198 = vld [vmem:[%s7118 + $0x278] sm:$0xff]
  %v7199 = vld [vmem:[%s7118 + $0x280] sm:$0xff]
  %v7200 = vld [vmem:[%s7118 + $0x288] sm:$0xff]
  %v7201 = vld [vmem:[%s7118 + $0x290] sm:$0xff]
  %v7202 = vld [vmem:[%s7118 + $0x298] sm:$0xff]
  %v7203 = vld [vmem:[%s7118 + $0x2a0] sm:$0xff]
  %v7204 = vld [vmem:[%s7118 + $0x2a8] sm:$0xff]
  %v7205 = vld [vmem:[%s7118 + $0x2b0] sm:$0xff]
  %v7206 = vld [vmem:[%s7118 + $0x2b8] sm:$0xff]
  %v7207 = vld [vmem:[%s7118 + $0x2c0] sm:$0xff]
  %v7208 = vld [vmem:[%s7118 + $0x2c8] sm:$0xff]
  %v7209 = vld [vmem:[%s7118 + $0x2d0] sm:$0xff]
  %v7210 = vld [vmem:[%s7118 + $0x2d8] sm:$0xff]
  %v7211 = vld [vmem:[%s7118 + $0x2e0] sm:$0xff]
  %v7212 = vld [vmem:[%s7118 + $0x2e8] sm:$0xff]
  %v7213 = vld [vmem:[%s7118 + $0x2f0] sm:$0xff]
  %v7214 = vld [vmem:[%s7118 + $0x2f8] sm:$0xff]
  %v7215 = vld [vmem:[%s7118 + $0x300] sm:$0xff]
  %v7216 = vld [vmem:[%s7118 + $0x308] sm:$0xff]
  %v7217 = vld [vmem:[%s7118 + $0x310] sm:$0xff]
  %v7218 = vld [vmem:[%s7118 + $0x318] sm:$0xff]
  %v7219 = vld [vmem:[%s7118 + $0x320] sm:$0xff]
  %v7220 = vld [vmem:[%s7118 + $0x328] sm:$0xff]
  %v7221 = vld [vmem:[%s7118 + $0x330] sm:$0xff]
  %v7222 = vld [vmem:[%s7118 + $0x338] sm:$0xff]
  %v7223 = vld [vmem:[%s7118 + $0x340] sm:$0xff]
  %v7224 = vld [vmem:[%s7118 + $0x348] sm:$0xff]
  %v7225 = vld [vmem:[%s7118 + $0x350] sm:$0xff]
  %v7226 = vld [vmem:[%s7118 + $0x358] sm:$0xff]
  %v7227 = vld [vmem:[%s7118 + $0x360] sm:$0xff]
  %v7228 = vld [vmem:[%s7118 + $0x368] sm:$0xff]
  %v7229 = vld [vmem:[%s7118 + $0x370] sm:$0xff]
  %v7230 = vld [vmem:[%s7118 + $0x378] sm:$0xff]
  %v7231 = vld [vmem:[%s7118 + $0x380] sm:$0xff]
  %v7232 = vld [vmem:[%s7118 + $0x388] sm:$0xff]
  %v7233 = vld [vmem:[%s7118 + $0x390] sm:$0xff]
  %v7234 = vld [vmem:[%s7118 + $0x398] sm:$0xff]
  %v7235 = vld [vmem:[%s7118 + $0x3a0] sm:$0xff]
  %v7236 = vld [vmem:[%s7118 + $0x3a8] sm:$0xff]
  %v7237 = vld [vmem:[%s7118 + $0x3b0] sm:$0xff]
  %v7238 = vld [vmem:[%s7118 + $0x3b8] sm:$0xff]
  %v7239 = vld [vmem:[%s7118 + $0x3c0] sm:$0xff]
  %v7240 = vld [vmem:[%s7118 + $0x3c8] sm:$0xff]
  %v7241 = vld [vmem:[%s7118 + $0x3d0] sm:$0xff]
  %v7242 = vld [vmem:[%s7118 + $0x3d8] sm:$0xff]
  %v7243 = vld [vmem:[%s7118 + $0x3e0] sm:$0xff]
  %v7244 = vld [vmem:[%s7118 + $0x3e8] sm:$0xff]
  %v7245 = vld [vmem:[%s7118 + $0x3f0] sm:$0xff]
  %v7246 = vld [vmem:[%s7118 + $0x3f8] sm:$0xff]
  %v7247 = vld [vmem:[%s7118 + $0x400] sm:$0xff]
  %v7248 = vld [vmem:[%s7118 + $0x408] sm:$0xff]
  %v7249 = vld [vmem:[%s7118 + $0x410] sm:$0xff]
  %v7250 = vld [vmem:[%s7118 + $0x418] sm:$0xff]
  %v7251 = vld [vmem:[%s7118 + $0x420] sm:$0xff]
  %v7252 = vld [vmem:[%s7118 + $0x428] sm:$0xff]
  %v7253 = vld [vmem:[%s7118 + $0x430] sm:$0xff]
  %v7254 = vld [vmem:[%s7118 + $0x438] sm:$0xff]
  %v7255 = vld [vmem:[%s7118 + $0x440] sm:$0xff]
  %v7256 = vld [vmem:[%s7118 + $0x448] sm:$0xff]
  %v7257 = vld [vmem:[%s7118 + $0x450] sm:$0xff]
  %v7258 = vld [vmem:[%s7118 + $0x458] sm:$0xff]
  %v7259 = vld [vmem:[%s7118 + $0x460] sm:$0xff]
  %v7260 = vld [vmem:[%s7118 + $0x468] sm:$0xff]
  %v7261 = vld [vmem:[%s7118 + $0x470] sm:$0xff]
  %v7262 = vld [vmem:[%s7118 + $0x478] sm:$0xff]
  %v7263 = vld [vmem:[%s7118 + $0x480] sm:$0xff]
  %v7264 = vld [vmem:[%s7118 + $0x488] sm:$0xff]
  %v7265 = vld [vmem:[%s7118 + $0x490] sm:$0xff]
  %v7266 = vld [vmem:[%s7118 + $0x498] sm:$0xff]
  %v7267 = vld [vmem:[%s7118 + $0x4a0] sm:$0xff]
  %v7268 = vld [vmem:[%s7118 + $0x4a8] sm:$0xff]
  %v7269 = vld [vmem:[%s7118 + $0x4b0] sm:$0xff]
  %v7270 = vld [vmem:[%s7118 + $0x4b8] sm:$0xff]
  %v7271 = vld [vmem:[%s7118 + $0x4c0] sm:$0xff]
  %v7272 = vld [vmem:[%s7118 + $0x4c8] sm:$0xff]
  %v7273 = vld [vmem:[%s7118 + $0x4d0] sm:$0xff]
  %v7274 = vld [vmem:[%s7118 + $0x4d8] sm:$0xff]
  %v7275 = vld [vmem:[%s7118 + $0x4e0] sm:$0xff]
  %v7276 = vld [vmem:[%s7118 + $0x4e8] sm:$0xff]
  %v7277 = vld [vmem:[%s7118 + $0x4f0] sm:$0xff]
  %v7278 = vld [vmem:[%s7118 + $0x4f8] sm:$0xff]
  %v7279 = vld [vmem:[%s7118 + $0x500] sm:$0xff]
  %v7280 = vld [vmem:[%s7118 + $0x508] sm:$0xff]
  %v7281 = vld [vmem:[%s7118 + $0x510] sm:$0xff]
  %v7282 = vld [vmem:[%s7118 + $0x518] sm:$0xff]
  %v7283 = vld [vmem:[%s7118 + $0x520] sm:$0xff]
  %v7284 = vld [vmem:[%s7118 + $0x528] sm:$0xff]
  %v7285 = vld [vmem:[%s7118 + $0x530] sm:$0xff]
  %v7286 = vld [vmem:[%s7118 + $0x538] sm:$0xff]
  %v7287 = vld [vmem:[%s7118 + $0x540] sm:$0xff]
  %v7288 = vld [vmem:[%s7118 + $0x548] sm:$0xff]
  %v7289 = vld [vmem:[%s7118 + $0x550] sm:$0xff]
  %v7290 = vld [vmem:[%s7118 + $0x558] sm:$0xff]
  %v7291 = vld [vmem:[%s7118 + $0x560] sm:$0xff]
  %v7292 = vld [vmem:[%s7118 + $0x568] sm:$0xff]
  %v7293 = vld [vmem:[%s7118 + $0x570] sm:$0xff]
  %v7294 = vld [vmem:[%s7118 + $0x578] sm:$0xff]
  %v7295 = vld [vmem:[%s7118 + $0x580] sm:$0xff]
  %v7296 = vld [vmem:[%s7118 + $0x588] sm:$0xff]
  %v7297 = vld [vmem:[%s7118 + $0x590] sm:$0xff]
  %v7298 = vld [vmem:[%s7118 + $0x598] sm:$0xff]
  %v7299 = vld [vmem:[%s7118 + $0x5a0] sm:$0xff]
  %v7300 = vld [vmem:[%s7118 + $0x5a8] sm:$0xff]
  %v7301 = vld [vmem:[%s7118 + $0x5b0] sm:$0xff]
  %v7302 = vld [vmem:[%s7118 + $0x5b8] sm:$0xff]
  %v7303 = vunpack.c.l.b16 %v7097
  %v7304 = vunpack.c.h.b16 %v7097
  %v7305 = vunpack.c.l.b16 %v7101
  %v7306 = vunpack.c.h.b16 %v7101
  %v7307 = vunpack.c.l.b16 %v7105
  %v7308 = vunpack.c.h.b16 %v7105
  %v7309 = vunpack.c.l.b16 %v7109
  %v7310 = vunpack.c.h.b16 %v7109
  %v7311 = vunpack.c.l.b16 %v7113
  %v7312 = vunpack.c.h.b16 %v7113
  %v7313 = vunpack.c.l.b16 %v7117
  %v7314 = vunpack.c.h.b16 %v7117
  %v7315 = vpack.c.b16 %v7309, %v7303
  %v7316 = vpack.c.b16 %v7310, %v7304
  %v7317 = vpack.c.b16 %v7311, %v7305
  %v7318 = vpack.c.b16 %v7312, %v7306
  %v7319 = vpack.c.b16 %v7313, %v7307
  %v7320 = vpack.c.b16 %v7314, %v7308
  %v7510 = vunpack.c.l.b16 %v7119
  %v7511 = vunpack.c.h.b16 %v7119
  %v7512 = vunpack.c.l.b16 %v7120
  %v7513 = vunpack.c.h.b16 %v7120
  %v7514 = vunpack.c.l.b16 %v7121
  %v7515 = vunpack.c.h.b16 %v7121
  %v7516 = vunpack.c.l.b16 %v7122
  %v7517 = vunpack.c.h.b16 %v7122
  %v7518 = vunpack.c.l.b16 %v7123
  %v7519 = vunpack.c.h.b16 %v7123
  %v7520 = vunpack.c.l.b16 %v7124
  %v7521 = vunpack.c.h.b16 %v7124
  %v7522 = vunpack.c.l.b16 %v7125
  %v7523 = vunpack.c.h.b16 %v7125
  %v7524 = vunpack.c.l.b16 %v7126
  %v7525 = vunpack.c.h.b16 %v7126
  %v7526 = vunpack.c.l.b16 %v7127
  %v7527 = vunpack.c.h.b16 %v7127
  %v7528 = vunpack.c.l.b16 %v7128
  %v7529 = vunpack.c.h.b16 %v7128
  %v7530 = vunpack.c.l.b16 %v7129
  %v7531 = vunpack.c.h.b16 %v7129
  %v7532 = vunpack.c.l.b16 %v7130
  %v7533 = vunpack.c.h.b16 %v7130
  %v7534 = vunpack.c.l.b16 %v7131
  %v7535 = vunpack.c.h.b16 %v7131
  %v7536 = vunpack.c.l.b16 %v7132
  %v7537 = vunpack.c.h.b16 %v7132
  %v7538 = vunpack.c.l.b16 %v7133
  %v7539 = vunpack.c.h.b16 %v7133
  %v7540 = vunpack.c.l.b16 %v7134
  %v7541 = vunpack.c.h.b16 %v7134
  %v7542 = vunpack.c.l.b16 %v7135
  %v7543 = vunpack.c.h.b16 %v7135
  %v7544 = vunpack.c.l.b16 %v7136
  %v7545 = vunpack.c.h.b16 %v7136
  %v7546 = vunpack.c.l.b16 %v7137
  %v7547 = vunpack.c.h.b16 %v7137
  %v7548 = vunpack.c.l.b16 %v7138
  %v7549 = vunpack.c.h.b16 %v7138
  %v7550 = vunpack.c.l.b16 %v7139
  %v7551 = vunpack.c.h.b16 %v7139
  %v7552 = vunpack.c.l.b16 %v7140
  %v7553 = vunpack.c.h.b16 %v7140
  %v7554 = vunpack.c.l.b16 %v7141
  %v7555 = vunpack.c.h.b16 %v7141
  %v7556 = vunpack.c.l.b16 %v7142
  %v7557 = vunpack.c.h.b16 %v7142
  %v7558 = vunpack.c.l.b16 %v7143
  %v7559 = vunpack.c.h.b16 %v7143
  %v7560 = vunpack.c.l.b16 %v7144
  %v7561 = vunpack.c.h.b16 %v7144
  %v7562 = vunpack.c.l.b16 %v7145
  %v7563 = vunpack.c.h.b16 %v7145
  %v7564 = vunpack.c.l.b16 %v7146
  %v7565 = vunpack.c.h.b16 %v7146
  %v7566 = vunpack.c.l.b16 %v7147
  %v7567 = vunpack.c.h.b16 %v7147
  %v7568 = vunpack.c.l.b16 %v7148
  %v7569 = vunpack.c.h.b16 %v7148
  %v7570 = vunpack.c.l.b16 %v7149
  %v7571 = vunpack.c.h.b16 %v7149
  %v7572 = vunpack.c.l.b16 %v7150
  %v7573 = vunpack.c.h.b16 %v7150
  %v7574 = vunpack.c.l.b16 %v7151
  %v7575 = vunpack.c.h.b16 %v7151
  %v7576 = vunpack.c.l.b16 %v7152
  %v7577 = vunpack.c.h.b16 %v7152
  %v7578 = vunpack.c.l.b16 %v7153
  %v7579 = vunpack.c.h.b16 %v7153
  %v7580 = vunpack.c.l.b16 %v7154
  %v7581 = vunpack.c.h.b16 %v7154
  %v7582 = vunpack.c.l.b16 %v7155
  %v7583 = vunpack.c.h.b16 %v7155
  %v7584 = vunpack.c.l.b16 %v7156
  %v7585 = vunpack.c.h.b16 %v7156
  %v7586 = vunpack.c.l.b16 %v7157
  %v7587 = vunpack.c.h.b16 %v7157
  %v7588 = vunpack.c.l.b16 %v7158
  %v7589 = vunpack.c.h.b16 %v7158
  %v7590 = vunpack.c.l.b16 %v7159
  %v7591 = vunpack.c.h.b16 %v7159
  %v7592 = vunpack.c.l.b16 %v7160
  %v7593 = vunpack.c.h.b16 %v7160
  %v7594 = vunpack.c.l.b16 %v7161
  %v7595 = vunpack.c.h.b16 %v7161
  %v7596 = vunpack.c.l.b16 %v7162
  %v7597 = vunpack.c.h.b16 %v7162
  %v7598 = vunpack.c.l.b16 %v7163
  %v7599 = vunpack.c.h.b16 %v7163
  %v7600 = vunpack.c.l.b16 %v7164
  %v7601 = vunpack.c.h.b16 %v7164
  %v7602 = vunpack.c.l.b16 %v7165
  %v7603 = vunpack.c.h.b16 %v7165
  %v7604 = vunpack.c.l.b16 %v7166
  %v7605 = vunpack.c.h.b16 %v7166
  %v7606 = vunpack.c.l.b16 %v7167
  %v7607 = vunpack.c.h.b16 %v7167
  %v7608 = vunpack.c.l.b16 %v7168
  %v7609 = vunpack.c.h.b16 %v7168
  %v7610 = vunpack.c.l.b16 %v7169
  %v7611 = vunpack.c.h.b16 %v7169
  %v7612 = vunpack.c.l.b16 %v7170
  %v7613 = vunpack.c.h.b16 %v7170
  %v7614 = vunpack.c.l.b16 %v7171
  %v7615 = vunpack.c.h.b16 %v7171
  %v7616 = vunpack.c.l.b16 %v7172
  %v7617 = vunpack.c.h.b16 %v7172
  %v7618 = vunpack.c.l.b16 %v7173
  %v7619 = vunpack.c.h.b16 %v7173
  %v7620 = vunpack.c.l.b16 %v7174
  %v7621 = vunpack.c.h.b16 %v7174
  %v7622 = vunpack.c.l.b16 %v7175
  %v7623 = vunpack.c.h.b16 %v7175
  %v7624 = vunpack.c.l.b16 %v7176
  %v7625 = vunpack.c.h.b16 %v7176
  %v7626 = vunpack.c.l.b16 %v7177
  %v7627 = vunpack.c.h.b16 %v7177
  %v7628 = vunpack.c.l.b16 %v7178
  %v7629 = vunpack.c.h.b16 %v7178
  %v7630 = vunpack.c.l.b16 %v7179
  %v7631 = vunpack.c.h.b16 %v7179
  %v7632 = vunpack.c.l.b16 %v7180
  %v7633 = vunpack.c.h.b16 %v7180
  %v7634 = vunpack.c.l.b16 %v7181
  %v7635 = vunpack.c.h.b16 %v7181
  %v7636 = vunpack.c.l.b16 %v7182
  %v7637 = vunpack.c.h.b16 %v7182
  %v7638 = vunpack.c.l.b16 %v7183
  %v7639 = vunpack.c.h.b16 %v7183
  %v7640 = vunpack.c.l.b16 %v7184
  %v7641 = vunpack.c.h.b16 %v7184
  %v7642 = vunpack.c.l.b16 %v7185
  %v7643 = vunpack.c.h.b16 %v7185
  %v7644 = vunpack.c.l.b16 %v7186
  %v7645 = vunpack.c.h.b16 %v7186
  %v7646 = vunpack.c.l.b16 %v7187
  %v7647 = vunpack.c.h.b16 %v7187
  %v7648 = vunpack.c.l.b16 %v7188
  %v7649 = vunpack.c.h.b16 %v7188
  %v7650 = vunpack.c.l.b16 %v7189
  %v7651 = vunpack.c.h.b16 %v7189
  %v7652 = vunpack.c.l.b16 %v7190
  %v7653 = vunpack.c.h.b16 %v7190
  %v7654 = vunpack.c.l.b16 %v7191
  %v7655 = vunpack.c.h.b16 %v7191
  %v7656 = vunpack.c.l.b16 %v7192
  %v7657 = vunpack.c.h.b16 %v7192
  %v7658 = vunpack.c.l.b16 %v7193
  %v7659 = vunpack.c.h.b16 %v7193
  %v7660 = vunpack.c.l.b16 %v7194
  %v7661 = vunpack.c.h.b16 %v7194
  %v7662 = vunpack.c.l.b16 %v7195
  %v7663 = vunpack.c.h.b16 %v7195
  %v7664 = vunpack.c.l.b16 %v7196
  %v7665 = vunpack.c.h.b16 %v7196
  %v7666 = vunpack.c.l.b16 %v7197
  %v7667 = vunpack.c.h.b16 %v7197
  %v7668 = vunpack.c.l.b16 %v7198
  %v7669 = vunpack.c.h.b16 %v7198
  %v7670 = vunpack.c.l.b16 %v7199
  %v7671 = vunpack.c.h.b16 %v7199
  %v7672 = vunpack.c.l.b16 %v7200
  %v7673 = vunpack.c.h.b16 %v7200
  %v7674 = vunpack.c.l.b16 %v7201
  %v7675 = vunpack.c.h.b16 %v7201
  %v7676 = vunpack.c.l.b16 %v7202
  %v7677 = vunpack.c.h.b16 %v7202
  %v7678 = vunpack.c.l.b16 %v7203
  %v7679 = vunpack.c.h.b16 %v7203
  %v7680 = vunpack.c.l.b16 %v7204
  %v7681 = vunpack.c.h.b16 %v7204
  %v7682 = vunpack.c.l.b16 %v7205
  %v7683 = vunpack.c.h.b16 %v7205
  %v7684 = vunpack.c.l.b16 %v7206
  %v7685 = vunpack.c.h.b16 %v7206
  %v7686 = vunpack.c.l.b16 %v7207
  %v7687 = vunpack.c.h.b16 %v7207
  %v7688 = vunpack.c.l.b16 %v7208
  %v7689 = vunpack.c.h.b16 %v7208
  %v7690 = vunpack.c.l.b16 %v7209
  %v7691 = vunpack.c.h.b16 %v7209
  %v7692 = vunpack.c.l.b16 %v7210
  %v7693 = vunpack.c.h.b16 %v7210
  %v7694 = vunpack.c.l.b16 %v7211
  %v7695 = vunpack.c.h.b16 %v7211
  %v7696 = vunpack.c.l.b16 %v7212
  %v7697 = vunpack.c.h.b16 %v7212
  %v7698 = vunpack.c.l.b16 %v7213
  %v7699 = vunpack.c.h.b16 %v7213
  %v7700 = vunpack.c.l.b16 %v7214
  %v7701 = vunpack.c.h.b16 %v7214
  %v7702 = vunpack.c.l.b16 %v7215
  %v7703 = vunpack.c.h.b16 %v7215
  %v7704 = vunpack.c.l.b16 %v7216
  %v7705 = vunpack.c.h.b16 %v7216
  %v7706 = vunpack.c.l.b16 %v7217
  %v7707 = vunpack.c.h.b16 %v7217
  %v7708 = vunpack.c.l.b16 %v7218
  %v7709 = vunpack.c.h.b16 %v7218
  %v7710 = vunpack.c.l.b16 %v7219
  %v7711 = vunpack.c.h.b16 %v7219
  %v7712 = vunpack.c.l.b16 %v7220
  %v7713 = vunpack.c.h.b16 %v7220
  %v7714 = vunpack.c.l.b16 %v7221
  %v7715 = vunpack.c.h.b16 %v7221
  %v7716 = vunpack.c.l.b16 %v7222
  %v7717 = vunpack.c.h.b16 %v7222
  %v7718 = vunpack.c.l.b16 %v7223
  %v7719 = vunpack.c.h.b16 %v7223
  %v7720 = vunpack.c.l.b16 %v7224
  %v7721 = vunpack.c.h.b16 %v7224
  %v7722 = vunpack.c.l.b16 %v7225
  %v7723 = vunpack.c.h.b16 %v7225
  %v7724 = vunpack.c.l.b16 %v7226
  %v7725 = vunpack.c.h.b16 %v7226
  %v7726 = vunpack.c.l.b16 %v7227
  %v7727 = vunpack.c.h.b16 %v7227
  %v7728 = vunpack.c.l.b16 %v7228
  %v7729 = vunpack.c.h.b16 %v7228
  %v7730 = vunpack.c.l.b16 %v7229
  %v7731 = vunpack.c.h.b16 %v7229
  %v7732 = vunpack.c.l.b16 %v7230
  %v7733 = vunpack.c.h.b16 %v7230
  %v7734 = vunpack.c.l.b16 %v7231
  %v7735 = vunpack.c.h.b16 %v7231
  %v7736 = vunpack.c.l.b16 %v7232
  %v7737 = vunpack.c.h.b16 %v7232
  %v7738 = vunpack.c.l.b16 %v7233
  %v7739 = vunpack.c.h.b16 %v7233
  %v7740 = vunpack.c.l.b16 %v7234
  %v7741 = vunpack.c.h.b16 %v7234
  %v7742 = vunpack.c.l.b16 %v7235
  %v7743 = vunpack.c.h.b16 %v7235
  %v7744 = vunpack.c.l.b16 %v7236
  %v7745 = vunpack.c.h.b16 %v7236
  %v7746 = vunpack.c.l.b16 %v7237
  %v7747 = vunpack.c.h.b16 %v7237
  %v7748 = vunpack.c.l.b16 %v7238
  %v7749 = vunpack.c.h.b16 %v7238
  %v7750 = vunpack.c.l.b16 %v7239
  %v7751 = vunpack.c.h.b16 %v7239
  %v7752 = vunpack.c.l.b16 %v7240
  %v7753 = vunpack.c.h.b16 %v7240
  %v7754 = vunpack.c.l.b16 %v7241
  %v7755 = vunpack.c.h.b16 %v7241
  %v7756 = vunpack.c.l.b16 %v7242
  %v7757 = vunpack.c.h.b16 %v7242
  %v7758 = vunpack.c.l.b16 %v7243
  %v7759 = vunpack.c.h.b16 %v7243
  %v7760 = vunpack.c.l.b16 %v7244
  %v7761 = vunpack.c.h.b16 %v7244
  %v7762 = vunpack.c.l.b16 %v7245
  %v7763 = vunpack.c.h.b16 %v7245
  %v7764 = vunpack.c.l.b16 %v7246
  %v7765 = vunpack.c.h.b16 %v7246
  %v7766 = vunpack.c.l.b16 %v7247
  %v7767 = vunpack.c.h.b16 %v7247
  %v7768 = vunpack.c.l.b16 %v7248
  %v7769 = vunpack.c.h.b16 %v7248
  %v7770 = vunpack.c.l.b16 %v7249
  %v7771 = vunpack.c.h.b16 %v7249
  %v7772 = vunpack.c.l.b16 %v7250
  %v7773 = vunpack.c.h.b16 %v7250
  %v7774 = vunpack.c.l.b16 %v7251
  %v7775 = vunpack.c.h.b16 %v7251
  %v7776 = vunpack.c.l.b16 %v7252
  %v7777 = vunpack.c.h.b16 %v7252
  %v7778 = vunpack.c.l.b16 %v7253
  %v7779 = vunpack.c.h.b16 %v7253
  %v7780 = vunpack.c.l.b16 %v7254
  %v7781 = vunpack.c.h.b16 %v7254
  %v7782 = vunpack.c.l.b16 %v7255
  %v7783 = vunpack.c.h.b16 %v7255
  %v7784 = vunpack.c.l.b16 %v7256
  %v7785 = vunpack.c.h.b16 %v7256
  %v7786 = vunpack.c.l.b16 %v7257
  %v7787 = vunpack.c.h.b16 %v7257
  %v7788 = vunpack.c.l.b16 %v7258
  %v7789 = vunpack.c.h.b16 %v7258
  %v7790 = vunpack.c.l.b16 %v7259
  %v7791 = vunpack.c.h.b16 %v7259
  %v7792 = vunpack.c.l.b16 %v7260
  %v7793 = vunpack.c.h.b16 %v7260
  %v7794 = vunpack.c.l.b16 %v7261
  %v7795 = vunpack.c.h.b16 %v7261
  %v7796 = vunpack.c.l.b16 %v7262
  %v7797 = vunpack.c.h.b16 %v7262
  %v7798 = vunpack.c.l.b16 %v7263
  %v7799 = vunpack.c.h.b16 %v7263
  %v7800 = vunpack.c.l.b16 %v7264
  %v7801 = vunpack.c.h.b16 %v7264
  %v7802 = vunpack.c.l.b16 %v7265
  %v7803 = vunpack.c.h.b16 %v7265
  %v7804 = vunpack.c.l.b16 %v7266
  %v7805 = vunpack.c.h.b16 %v7266
  %v7806 = vunpack.c.l.b16 %v7267
  %v7807 = vunpack.c.h.b16 %v7267
  %v7808 = vunpack.c.l.b16 %v7268
  %v7809 = vunpack.c.h.b16 %v7268
  %v7810 = vunpack.c.l.b16 %v7269
  %v7811 = vunpack.c.h.b16 %v7269
  %v7812 = vunpack.c.l.b16 %v7270
  %v7813 = vunpack.c.h.b16 %v7270
  %v7814 = vunpack.c.l.b16 %v7271
  %v7815 = vunpack.c.h.b16 %v7271
  %v7816 = vunpack.c.l.b16 %v7272
  %v7817 = vunpack.c.h.b16 %v7272
  %v7818 = vunpack.c.l.b16 %v7273
  %v7819 = vunpack.c.h.b16 %v7273
  %v7820 = vunpack.c.l.b16 %v7274
  %v7821 = vunpack.c.h.b16 %v7274
  %v7822 = vunpack.c.l.b16 %v7275
  %v7823 = vunpack.c.h.b16 %v7275
  %v7824 = vunpack.c.l.b16 %v7276
  %v7825 = vunpack.c.h.b16 %v7276
  %v7826 = vunpack.c.l.b16 %v7277
  %v7827 = vunpack.c.h.b16 %v7277
  %v7828 = vunpack.c.l.b16 %v7278
  %v7829 = vunpack.c.h.b16 %v7278
  %v7830 = vunpack.c.l.b16 %v7279
  %v7831 = vunpack.c.h.b16 %v7279
  %v7832 = vunpack.c.l.b16 %v7280
  %v7833 = vunpack.c.h.b16 %v7280
  %v7834 = vunpack.c.l.b16 %v7281
  %v7835 = vunpack.c.h.b16 %v7281
  %v7836 = vunpack.c.l.b16 %v7282
  %v7837 = vunpack.c.h.b16 %v7282
  %v7838 = vunpack.c.l.b16 %v7283
  %v7839 = vunpack.c.h.b16 %v7283
  %v7840 = vunpack.c.l.b16 %v7284
  %v7841 = vunpack.c.h.b16 %v7284
  %v7842 = vunpack.c.l.b16 %v7285
  %v7843 = vunpack.c.h.b16 %v7285
  %v7844 = vunpack.c.l.b16 %v7286
  %v7845 = vunpack.c.h.b16 %v7286
  %v7846 = vunpack.c.l.b16 %v7287
  %v7847 = vunpack.c.h.b16 %v7287
  %v7848 = vunpack.c.l.b16 %v7288
  %v7849 = vunpack.c.h.b16 %v7288
  %v7850 = vunpack.c.l.b16 %v7289
  %v7851 = vunpack.c.h.b16 %v7289
  %v7852 = vunpack.c.l.b16 %v7290
  %v7853 = vunpack.c.h.b16 %v7290
  %v7854 = vunpack.c.l.b16 %v7291
  %v7855 = vunpack.c.h.b16 %v7291
  %v7856 = vunpack.c.l.b16 %v7292
  %v7857 = vunpack.c.h.b16 %v7292
  %v7858 = vunpack.c.l.b16 %v7293
  %v7859 = vunpack.c.h.b16 %v7293
  %v7860 = vunpack.c.l.b16 %v7294
  %v7861 = vunpack.c.h.b16 %v7294
  %v7862 = vunpack.c.l.b16 %v7295
  %v7863 = vunpack.c.h.b16 %v7295
  %v7864 = vunpack.c.l.b16 %v7296
  %v7865 = vunpack.c.h.b16 %v7296
  %v7866 = vunpack.c.l.b16 %v7297
  %v7867 = vunpack.c.h.b16 %v7297
  %v7868 = vunpack.c.l.b16 %v7298
  %v7869 = vunpack.c.h.b16 %v7298
  %v7870 = vunpack.c.l.b16 %v7299
  %v7871 = vunpack.c.h.b16 %v7299
  %v7872 = vunpack.c.l.b16 %v7300
  %v7873 = vunpack.c.h.b16 %v7300
  %v7874 = vunpack.c.l.b16 %v7301
  %v7875 = vunpack.c.h.b16 %v7301
  %v7876 = vunpack.c.l.b16 %v7302
  %v7877 = vunpack.c.h.b16 %v7302
  %v7878 = vpack.c.b16 %v7514, %v7510
  %v7879 = vpack.c.b16 %v7515, %v7511
  %v7880 = vpack.c.b16 %v7516, %v7512
  %v7881 = vpack.c.b16 %v7517, %v7513
  %v7882 = vpack.c.b16 %v7522, %v7518
  %v7883 = vpack.c.b16 %v7523, %v7519
  %v7884 = vpack.c.b16 %v7524, %v7520
  %v7885 = vpack.c.b16 %v7525, %v7521
  %v7886 = vpack.c.b16 %v7530, %v7526
  %v7887 = vpack.c.b16 %v7531, %v7527
  %v7888 = vpack.c.b16 %v7532, %v7528
  %v7889 = vpack.c.b16 %v7533, %v7529
  %v7890 = vpack.c.b16 %v7538, %v7534
  %v7891 = vpack.c.b16 %v7539, %v7535
  %v7892 = vpack.c.b16 %v7540, %v7536
  %v7893 = vpack.c.b16 %v7541, %v7537
  %v7894 = vpack.c.b16 %v7546, %v7542
  %v7895 = vpack.c.b16 %v7547, %v7543
  %v7896 = vpack.c.b16 %v7548, %v7544
  %v7897 = vpack.c.b16 %v7549, %v7545
  %v7898 = vpack.c.b16 %v7554, %v7550
  %v7899 = vpack.c.b16 %v7555, %v7551
  %v7900 = vpack.c.b16 %v7556, %v7552
  %v7901 = vpack.c.b16 %v7557, %v7553
  %v7902 = vpack.c.b16 %v7562, %v7558
  %v7903 = vpack.c.b16 %v7563, %v7559
  %v7904 = vpack.c.b16 %v7564, %v7560
  %v7905 = vpack.c.b16 %v7565, %v7561
  %v7906 = vpack.c.b16 %v7570, %v7566
  %v7907 = vpack.c.b16 %v7571, %v7567
  %v7908 = vpack.c.b16 %v7572, %v7568
  %v7909 = vpack.c.b16 %v7573, %v7569
  %v7910 = vpack.c.b16 %v7578, %v7574
  %v7911 = vpack.c.b16 %v7579, %v7575
  %v7912 = vpack.c.b16 %v7580, %v7576
  %v7913 = vpack.c.b16 %v7581, %v7577
  %v7914 = vpack.c.b16 %v7586, %v7582
  %v7915 = vpack.c.b16 %v7587, %v7583
  %v7916 = vpack.c.b16 %v7588, %v7584
  %v7917 = vpack.c.b16 %v7589, %v7585
  %v7918 = vpack.c.b16 %v7594, %v7590
  %v7919 = vpack.c.b16 %v7595, %v7591
  %v7920 = vpack.c.b16 %v7596, %v7592
  %v7921 = vpack.c.b16 %v7597, %v7593
  %v7922 = vpack.c.b16 %v7602, %v7598
  %v7923 = vpack.c.b16 %v7603, %v7599
  %v7924 = vpack.c.b16 %v7604, %v7600
  %v7925 = vpack.c.b16 %v7605, %v7601
  %v7926 = vpack.c.b16 %v7610, %v7606
  %v7927 = vpack.c.b16 %v7611, %v7607
  %v7928 = vpack.c.b16 %v7612, %v7608
  %v7929 = vpack.c.b16 %v7613, %v7609
  %v7930 = vpack.c.b16 %v7618, %v7614
  %v7931 = vpack.c.b16 %v7619, %v7615
  %v7932 = vpack.c.b16 %v7620, %v7616
  %v7933 = vpack.c.b16 %v7621, %v7617
  %v7934 = vpack.c.b16 %v7626, %v7622
  %v7935 = vpack.c.b16 %v7627, %v7623
  %v7936 = vpack.c.b16 %v7628, %v7624
  %v7937 = vpack.c.b16 %v7629, %v7625
  %v7938 = vpack.c.b16 %v7634, %v7630
  %v7939 = vpack.c.b16 %v7635, %v7631
  %v7940 = vpack.c.b16 %v7636, %v7632
  %v7941 = vpack.c.b16 %v7637, %v7633
  %v7942 = vpack.c.b16 %v7642, %v7638
  %v7943 = vpack.c.b16 %v7643, %v7639
  %v7944 = vpack.c.b16 %v7644, %v7640
  %v7945 = vpack.c.b16 %v7645, %v7641
  %v7946 = vpack.c.b16 %v7650, %v7646
  %v7947 = vpack.c.b16 %v7651, %v7647
  %v7948 = vpack.c.b16 %v7652, %v7648
  %v7949 = vpack.c.b16 %v7653, %v7649
  %v7950 = vpack.c.b16 %v7658, %v7654
  %v7951 = vpack.c.b16 %v7659, %v7655
  %v7952 = vpack.c.b16 %v7660, %v7656
  %v7953 = vpack.c.b16 %v7661, %v7657
  %v7954 = vpack.c.b16 %v7666, %v7662
  %v7955 = vpack.c.b16 %v7667, %v7663
  %v7956 = vpack.c.b16 %v7668, %v7664
  %v7957 = vpack.c.b16 %v7669, %v7665
  %v7958 = vpack.c.b16 %v7674, %v7670
  %v7959 = vpack.c.b16 %v7675, %v7671
  %v7960 = vpack.c.b16 %v7676, %v7672
  %v7961 = vpack.c.b16 %v7677, %v7673
  %v7962 = vpack.c.b16 %v7682, %v7678
  %v7963 = vpack.c.b16 %v7683, %v7679
  %v7964 = vpack.c.b16 %v7684, %v7680
  %v7965 = vpack.c.b16 %v7685, %v7681
  %v7966 = vpack.c.b16 %v7690, %v7686
  %v7967 = vpack.c.b16 %v7691, %v7687
  %v7968 = vpack.c.b16 %v7692, %v7688
  %v7969 = vpack.c.b16 %v7693, %v7689
  %v7970 = vpack.c.b16 %v7698, %v7694
  %v7971 = vpack.c.b16 %v7699, %v7695
  %v7972 = vpack.c.b16 %v7700, %v7696
  %v7973 = vpack.c.b16 %v7701, %v7697
  %v7974 = vpack.c.b16 %v7706, %v7702
  %v7975 = vpack.c.b16 %v7707, %v7703
  %v7976 = vpack.c.b16 %v7708, %v7704
  %v7977 = vpack.c.b16 %v7709, %v7705
  %v7978 = vpack.c.b16 %v7714, %v7710
  %v7979 = vpack.c.b16 %v7715, %v7711
  %v7980 = vpack.c.b16 %v7716, %v7712
  %v7981 = vpack.c.b16 %v7717, %v7713
  %v7982 = vpack.c.b16 %v7722, %v7718
  %v7983 = vpack.c.b16 %v7723, %v7719
  %v7984 = vpack.c.b16 %v7724, %v7720
  %v7985 = vpack.c.b16 %v7725, %v7721
  %v7986 = vpack.c.b16 %v7730, %v7726
  %v7987 = vpack.c.b16 %v7731, %v7727
  %v7988 = vpack.c.b16 %v7732, %v7728
  %v7989 = vpack.c.b16 %v7733, %v7729
  %v7990 = vpack.c.b16 %v7738, %v7734
  %v7991 = vpack.c.b16 %v7739, %v7735
  %v7992 = vpack.c.b16 %v7740, %v7736
  %v7993 = vpack.c.b16 %v7741, %v7737
  %v7994 = vpack.c.b16 %v7746, %v7742
  %v7995 = vpack.c.b16 %v7747, %v7743
  %v7996 = vpack.c.b16 %v7748, %v7744
  %v7997 = vpack.c.b16 %v7749, %v7745
  %v7998 = vpack.c.b16 %v7754, %v7750
  %v7999 = vpack.c.b16 %v7755, %v7751
  %v8000 = vpack.c.b16 %v7756, %v7752
  %v8001 = vpack.c.b16 %v7757, %v7753
  %v8002 = vpack.c.b16 %v7762, %v7758
  %v8003 = vpack.c.b16 %v7763, %v7759
  %v8004 = vpack.c.b16 %v7764, %v7760
  %v8005 = vpack.c.b16 %v7765, %v7761
  %v8006 = vpack.c.b16 %v7770, %v7766
  %v8007 = vpack.c.b16 %v7771, %v7767
  %v8008 = vpack.c.b16 %v7772, %v7768
  %v8009 = vpack.c.b16 %v7773, %v7769
  %v8010 = vpack.c.b16 %v7778, %v7774
  %v8011 = vpack.c.b16 %v7779, %v7775
  %v8012 = vpack.c.b16 %v7780, %v7776
  %v8013 = vpack.c.b16 %v7781, %v7777
  %v8014 = vpack.c.b16 %v7786, %v7782
  %v8015 = vpack.c.b16 %v7787, %v7783
  %v8016 = vpack.c.b16 %v7788, %v7784
  %v8017 = vpack.c.b16 %v7789, %v7785
  %v8018 = vpack.c.b16 %v7794, %v7790
  %v8019 = vpack.c.b16 %v7795, %v7791
  %v8020 = vpack.c.b16 %v7796, %v7792
  %v8021 = vpack.c.b16 %v7797, %v7793
  %v8022 = vpack.c.b16 %v7802, %v7798
  %v8023 = vpack.c.b16 %v7803, %v7799
  %v8024 = vpack.c.b16 %v7804, %v7800
  %v8025 = vpack.c.b16 %v7805, %v7801
  %v8026 = vpack.c.b16 %v7810, %v7806
  %v8027 = vpack.c.b16 %v7811, %v7807
  %v8028 = vpack.c.b16 %v7812, %v7808
  %v8029 = vpack.c.b16 %v7813, %v7809
  %v8030 = vpack.c.b16 %v7818, %v7814
  %v8031 = vpack.c.b16 %v7819, %v7815
  %v8032 = vpack.c.b16 %v7820, %v7816
  %v8033 = vpack.c.b16 %v7821, %v7817
  %v8034 = vpack.c.b16 %v7826, %v7822
  %v8035 = vpack.c.b16 %v7827, %v7823
  %v8036 = vpack.c.b16 %v7828, %v7824
  %v8037 = vpack.c.b16 %v7829, %v7825
  %v8038 = vpack.c.b16 %v7834, %v7830
  %v8039 = vpack.c.b16 %v7835, %v7831
  %v8040 = vpack.c.b16 %v7836, %v7832
  %v8041 = vpack.c.b16 %v7837, %v7833
  %v8042 = vpack.c.b16 %v7842, %v7838
  %v8043 = vpack.c.b16 %v7843, %v7839
  %v8044 = vpack.c.b16 %v7844, %v7840
  %v8045 = vpack.c.b16 %v7845, %v7841
  %v8046 = vpack.c.b16 %v7850, %v7846
  %v8047 = vpack.c.b16 %v7851, %v7847
  %v8048 = vpack.c.b16 %v7852, %v7848
  %v8049 = vpack.c.b16 %v7853, %v7849
  %v8050 = vpack.c.b16 %v7858, %v7854
  %v8051 = vpack.c.b16 %v7859, %v7855
  %v8052 = vpack.c.b16 %v7860, %v7856
  %v8053 = vpack.c.b16 %v7861, %v7857
  %v8054 = vpack.c.b16 %v7866, %v7862
  %v8055 = vpack.c.b16 %v7867, %v7863
  %v8056 = vpack.c.b16 %v7868, %v7864
  %v8057 = vpack.c.b16 %v7869, %v7865
  %v8058 = vpack.c.b16 %v7874, %v7870
  %v8059 = vpack.c.b16 %v7875, %v7871
  %v8060 = vpack.c.b16 %v7876, %v7872
  %v8061 = vpack.c.b16 %v7877, %v7873
  %v8247 = vsel %vm876, %v7320, 0
  %8249 = vmatpush.bf16.msra.mxu0 %v7906
  %8250 = vmatpush.bf16.msra.mxu0 %v7902
  %8251 = vmatpush.bf16.msra.mxu0 %v7898
  %8252 = vmatpush.bf16.msra.mxu0 %v7894
  %8253 = vmatpush.bf16.msra.mxu0 %v7890
  %8254 = vmatpush.bf16.msra.mxu0 %v7886
  %8255 = vmatpush.bf16.msra.mxu0 %v7882
  %8256 = vmatpush.bf16.msra.mxu0 %v7878
  %8257 = vmatmul.bf16.gmra.mxu0 %v7315
  %v8258 = vpop.f32.mrf.mxu0
  %v8259 = vadd.f32 0.0, %v8258
  %v8260 = vpop.f32.mrf.mxu0
  %v8261 = vadd.f32 0.0, %v8260
  %8262 = vdwg.mxu0
  %8263 = vmatpush.bf16.msra.mxu0 %v7938
  %8264 = vmatpush.bf16.msra.mxu0 %v7934
  %8265 = vmatpush.bf16.msra.mxu0 %v7930
  %8266 = vmatpush.bf16.msra.mxu0 %v7926
  %8267 = vmatpush.bf16.msra.mxu0 %v7922
  %8268 = vmatpush.bf16.msra.mxu0 %v7918
  %8269 = vmatpush.bf16.msra.mxu0 %v7914
  %8270 = vmatpush.bf16.msra.mxu0 %v7910
  %8271 = vmatmul.bf16.gmra.mxu0 %v7316
  %v8272 = vpop.f32.mrf.mxu0
  %v8273 = vadd.f32 %v8259, %v8272
  %v8274 = vpop.f32.mrf.mxu0
  %v8275 = vadd.f32 %v8261, %v8274
  %8276 = vdwg.mxu0
  %8277 = vmatpush.bf16.msra.mxu0 %v7970
  %8278 = vmatpush.bf16.msra.mxu0 %v7966
  %8279 = vmatpush.bf16.msra.mxu0 %v7962
  %8280 = vmatpush.bf16.msra.mxu0 %v7958
  %8281 = vmatpush.bf16.msra.mxu0 %v7954
  %8282 = vmatpush.bf16.msra.mxu0 %v7950
  %8283 = vmatpush.bf16.msra.mxu0 %v7946
  %8284 = vmatpush.bf16.msra.mxu0 %v7942
  %8285 = vmatmul.bf16.gmra.mxu0 %v7317
  %v8286 = vpop.f32.mrf.mxu0
  %v8287 = vadd.f32 %v8273, %v8286
  %v8288 = vpop.f32.mrf.mxu0
  %v8289 = vadd.f32 %v8275, %v8288
  %8290 = vdwg.mxu0
  %8291 = vmatpush.bf16.msra.mxu0 %v8002
  %8292 = vmatpush.bf16.msra.mxu0 %v7998
  %8293 = vmatpush.bf16.msra.mxu0 %v7994
  %8294 = vmatpush.bf16.msra.mxu0 %v7990
  %8295 = vmatpush.bf16.msra.mxu0 %v7986
  %8296 = vmatpush.bf16.msra.mxu0 %v7982
  %8297 = vmatpush.bf16.msra.mxu0 %v7978
  %8298 = vmatpush.bf16.msra.mxu0 %v7974
  %8299 = vmatmul.bf16.gmra.mxu0 %v7318
  %v8300 = vpop.f32.mrf.mxu0
  %v8301 = vadd.f32 %v8287, %v8300
  %v8302 = vpop.f32.mrf.mxu0
  %v8303 = vadd.f32 %v8289, %v8302
  %8304 = vdwg.mxu0
  %8305 = vmatpush.bf16.msra.mxu0 %v8034
  %8306 = vmatpush.bf16.msra.mxu0 %v8030
  %8307 = vmatpush.bf16.msra.mxu0 %v8026
  %8308 = vmatpush.bf16.msra.mxu0 %v8022
  %8309 = vmatpush.bf16.msra.mxu0 %v8018
  %8310 = vmatpush.bf16.msra.mxu0 %v8014
  %8311 = vmatpush.bf16.msra.mxu0 %v8010
  %8312 = vmatpush.bf16.msra.mxu0 %v8006
  %8313 = vmatmul.bf16.gmra.mxu0 %v7319
  %v8314 = vpop.f32.mrf.mxu0
  %v8315 = vadd.f32 %v8301, %v8314
  %v8316 = vpop.f32.mrf.mxu0
  %v8317 = vadd.f32 %v8303, %v8316
  %8318 = vdwg.mxu0
  %8319 = vmatpush.bf16.msra.mxu0 0
  %8320 = vmatpush.bf16.msra.mxu0 0
  %8321 = vmatpush.bf16.msra.mxu0 %v8058
  %8322 = vmatpush.bf16.msra.mxu0 %v8054
  %8323 = vmatpush.bf16.msra.mxu0 %v8050
  %8324 = vmatpush.bf16.msra.mxu0 %v8046
  %8325 = vmatpush.bf16.msra.mxu0 %v8042
  %8326 = vmatpush.bf16.msra.mxu0 %v8038
  %8327 = vmatmul.bf16.gmra.mxu0 %v8247
  %v8328 = vpop.f32.mrf.mxu0
  %v8329 = vadd.f32 %v8315, %v8328
  %v8330 = vpop.f32.mrf.mxu0
  %v8331 = vadd.f32 %v8317, %v8330
  %8332 = vdwg.mxu0
  %8333 = vmatpush.bf16.msra.mxu0 %v7907
  %8334 = vmatpush.bf16.msra.mxu0 %v7903
  %8335 = vmatpush.bf16.msra.mxu0 %v7899
  %8336 = vmatpush.bf16.msra.mxu0 %v7895
  %8337 = vmatpush.bf16.msra.mxu0 %v7891
  %8338 = vmatpush.bf16.msra.mxu0 %v7887
  %8339 = vmatpush.bf16.msra.mxu0 %v7883
  %8340 = vmatpush.bf16.msra.mxu0 %v7879
  %8341 = vmatmul.bf16.gmra.mxu0 %v7315
  %v8342 = vpop.f32.mrf.mxu0
  %v8343 = vadd.f32 0.0, %v8342
  %v8344 = vpop.f32.mrf.mxu0
  %v8345 = vadd.f32 0.0, %v8344
  %8346 = vdwg.mxu0
  %8347 = vmatpush.bf16.msra.mxu0 %v7939
  %8348 = vmatpush.bf16.msra.mxu0 %v7935
  %8349 = vmatpush.bf16.msra.mxu0 %v7931
  %8350 = vmatpush.bf16.msra.mxu0 %v7927
  %8351 = vmatpush.bf16.msra.mxu0 %v7923
  %8352 = vmatpush.bf16.msra.mxu0 %v7919
  %8353 = vmatpush.bf16.msra.mxu0 %v7915
  %8354 = vmatpush.bf16.msra.mxu0 %v7911
  %8355 = vmatmul.bf16.gmra.mxu0 %v7316
  %v8356 = vpop.f32.mrf.mxu0
  %v8357 = vadd.f32 %v8343, %v8356
  %v8358 = vpop.f32.mrf.mxu0
  %v8359 = vadd.f32 %v8345, %v8358
  %8360 = vdwg.mxu0
  %8361 = vmatpush.bf16.msra.mxu0 %v7971
  %8362 = vmatpush.bf16.msra.mxu0 %v7967
  %8363 = vmatpush.bf16.msra.mxu0 %v7963
  %8364 = vmatpush.bf16.msra.mxu0 %v7959
  %8365 = vmatpush.bf16.msra.mxu0 %v7955
  %8366 = vmatpush.bf16.msra.mxu0 %v7951
  %8367 = vmatpush.bf16.msra.mxu0 %v7947
  %8368 = vmatpush.bf16.msra.mxu0 %v7943
  %8369 = vmatmul.bf16.gmra.mxu0 %v7317
  %v8370 = vpop.f32.mrf.mxu0
  %v8371 = vadd.f32 %v8357, %v8370
  %v8372 = vpop.f32.mrf.mxu0
  %v8373 = vadd.f32 %v8359, %v8372
  %8374 = vdwg.mxu0
  %8375 = vmatpush.bf16.msra.mxu0 %v8003
  %8376 = vmatpush.bf16.msra.mxu0 %v7999
  %8377 = vmatpush.bf16.msra.mxu0 %v7995
  %8378 = vmatpush.bf16.msra.mxu0 %v7991
  %8379 = vmatpush.bf16.msra.mxu0 %v7987
  %8380 = vmatpush.bf16.msra.mxu0 %v7983
  %8381 = vmatpush.bf16.msra.mxu0 %v7979
  %8382 = vmatpush.bf16.msra.mxu0 %v7975
  %8383 = vmatmul.bf16.gmra.mxu0 %v7318
  %v8384 = vpop.f32.mrf.mxu0
  %v8385 = vadd.f32 %v8371, %v8384
  %v8386 = vpop.f32.mrf.mxu0
  %v8387 = vadd.f32 %v8373, %v8386
  %8388 = vdwg.mxu0
  %8389 = vmatpush.bf16.msra.mxu0 %v8035
  %8390 = vmatpush.bf16.msra.mxu0 %v8031
  %8391 = vmatpush.bf16.msra.mxu0 %v8027
  %8392 = vmatpush.bf16.msra.mxu0 %v8023
  %8393 = vmatpush.bf16.msra.mxu0 %v8019
  %8394 = vmatpush.bf16.msra.mxu0 %v8015
  %8395 = vmatpush.bf16.msra.mxu0 %v8011
  %8396 = vmatpush.bf16.msra.mxu0 %v8007
  %8397 = vmatmul.bf16.gmra.mxu0 %v7319
  %v8398 = vpop.f32.mrf.mxu0
  %v8399 = vadd.f32 %v8385, %v8398
  %v8400 = vpop.f32.mrf.mxu0
  %v8401 = vadd.f32 %v8387, %v8400
  %8402 = vdwg.mxu0
  %8403 = vmatpush.bf16.msra.mxu0 0
  %8404 = vmatpush.bf16.msra.mxu0 0
  %8405 = vmatpush.bf16.msra.mxu0 %v8059
  %8406 = vmatpush.bf16.msra.mxu0 %v8055
  %8407 = vmatpush.bf16.msra.mxu0 %v8051
  %8408 = vmatpush.bf16.msra.mxu0 %v8047
  %8409 = vmatpush.bf16.msra.mxu0 %v8043
  %8410 = vmatpush.bf16.msra.mxu0 %v8039
  %8411 = vmatmul.bf16.gmra.mxu0 %v8247
  %v8412 = vpop.f32.mrf.mxu0
  %v8413 = vadd.f32 %v8399, %v8412
  %v8414 = vpop.f32.mrf.mxu0
  %v8415 = vadd.f32 %v8401, %v8414
  %8416 = vdwg.mxu0
  %8417 = vmatpush.bf16.msra.mxu0 %v7908
  %8418 = vmatpush.bf16.msra.mxu0 %v7904
  %8419 = vmatpush.bf16.msra.mxu0 %v7900
  %8420 = vmatpush.bf16.msra.mxu0 %v7896
  %8421 = vmatpush.bf16.msra.mxu0 %v7892
  %8422 = vmatpush.bf16.msra.mxu0 %v7888
  %8423 = vmatpush.bf16.msra.mxu0 %v7884
  %8424 = vmatpush.bf16.msra.mxu0 %v7880
  %8425 = vmatmul.bf16.gmra.mxu0 %v7315
  %v8426 = vpop.f32.mrf.mxu0
  %v8427 = vadd.f32 0.0, %v8426
  %v8428 = vpop.f32.mrf.mxu0
  %v8429 = vadd.f32 0.0, %v8428
  %8430 = vdwg.mxu0
  %8431 = vmatpush.bf16.msra.mxu0 %v7940
  %8432 = vmatpush.bf16.msra.mxu0 %v7936
  %8433 = vmatpush.bf16.msra.mxu0 %v7932
  %8434 = vmatpush.bf16.msra.mxu0 %v7928
  %8435 = vmatpush.bf16.msra.mxu0 %v7924
  %8436 = vmatpush.bf16.msra.mxu0 %v7920
  %8437 = vmatpush.bf16.msra.mxu0 %v7916
  %8438 = vmatpush.bf16.msra.mxu0 %v7912
  %8439 = vmatmul.bf16.gmra.mxu0 %v7316
  %v8440 = vpop.f32.mrf.mxu0
  %v8441 = vadd.f32 %v8427, %v8440
  %v8442 = vpop.f32.mrf.mxu0
  %v8443 = vadd.f32 %v8429, %v8442
  %8444 = vdwg.mxu0
  %8445 = vmatpush.bf16.msra.mxu0 %v7972
  %8446 = vmatpush.bf16.msra.mxu0 %v7968
  %8447 = vmatpush.bf16.msra.mxu0 %v7964
  %8448 = vmatpush.bf16.msra.mxu0 %v7960
  %8449 = vmatpush.bf16.msra.mxu0 %v7956
  %8450 = vmatpush.bf16.msra.mxu0 %v7952
  %8451 = vmatpush.bf16.msra.mxu0 %v7948
  %8452 = vmatpush.bf16.msra.mxu0 %v7944
  %8453 = vmatmul.bf16.gmra.mxu0 %v7317
  %v8454 = vpop.f32.mrf.mxu0
  %v8455 = vadd.f32 %v8441, %v8454
  %v8456 = vpop.f32.mrf.mxu0
  %v8457 = vadd.f32 %v8443, %v8456
  %8458 = vdwg.mxu0
  %8459 = vmatpush.bf16.msra.mxu0 %v8004
  %8460 = vmatpush.bf16.msra.mxu0 %v8000
  %8461 = vmatpush.bf16.msra.mxu0 %v7996
  %8462 = vmatpush.bf16.msra.mxu0 %v7992
  %8463 = vmatpush.bf16.msra.mxu0 %v7988
  %8464 = vmatpush.bf16.msra.mxu0 %v7984
  %8465 = vmatpush.bf16.msra.mxu0 %v7980
  %8466 = vmatpush.bf16.msra.mxu0 %v7976
  %8467 = vmatmul.bf16.gmra.mxu0 %v7318
  %v8468 = vpop.f32.mrf.mxu0
  %v8469 = vadd.f32 %v8455, %v8468
  %v8470 = vpop.f32.mrf.mxu0
  %v8471 = vadd.f32 %v8457, %v8470
  %8472 = vdwg.mxu0
  %8473 = vmatpush.bf16.msra.mxu0 %v8036
  %8474 = vmatpush.bf16.msra.mxu0 %v8032
  %8475 = vmatpush.bf16.msra.mxu0 %v8028
  %8476 = vmatpush.bf16.msra.mxu0 %v8024
  %8477 = vmatpush.bf16.msra.mxu0 %v8020
  %8478 = vmatpush.bf16.msra.mxu0 %v8016
  %8479 = vmatpush.bf16.msra.mxu0 %v8012
  %8480 = vmatpush.bf16.msra.mxu0 %v8008
  %8481 = vmatmul.bf16.gmra.mxu0 %v7319
  %v8482 = vpop.f32.mrf.mxu0
  %v8483 = vadd.f32 %v8469, %v8482
  %v8484 = vpop.f32.mrf.mxu0
  %v8485 = vadd.f32 %v8471, %v8484
  %8486 = vdwg.mxu0
  %8487 = vmatpush.bf16.msra.mxu0 0
  %8488 = vmatpush.bf16.msra.mxu0 0
  %8489 = vmatpush.bf16.msra.mxu0 %v8060
  %8490 = vmatpush.bf16.msra.mxu0 %v8056
  %8491 = vmatpush.bf16.msra.mxu0 %v8052
  %8492 = vmatpush.bf16.msra.mxu0 %v8048
  %8493 = vmatpush.bf16.msra.mxu0 %v8044
  %8494 = vmatpush.bf16.msra.mxu0 %v8040
  %8495 = vmatmul.bf16.gmra.mxu0 %v8247
  %v8496 = vpop.f32.mrf.mxu0
  %v8497 = vadd.f32 %v8483, %v8496
  %v8498 = vpop.f32.mrf.mxu0
  %v8499 = vadd.f32 %v8485, %v8498
  %8500 = vdwg.mxu0
  %8501 = vmatpush.bf16.msra.mxu0 %v7909
  %8502 = vmatpush.bf16.msra.mxu0 %v7905
  %8503 = vmatpush.bf16.msra.mxu0 %v7901
  %8504 = vmatpush.bf16.msra.mxu0 %v7897
  %8505 = vmatpush.bf16.msra.mxu0 %v7893
  %8506 = vmatpush.bf16.msra.mxu0 %v7889
  %8507 = vmatpush.bf16.msra.mxu0 %v7885
  %8508 = vmatpush.bf16.msra.mxu0 %v7881
  %8509 = vmatmul.bf16.gmra.mxu0 %v7315
  %v8510 = vpop.f32.mrf.mxu0
  %v8511 = vadd.f32 0.0, %v8510
  %v8512 = vpop.f32.mrf.mxu0
  %v8513 = vadd.f32 0.0, %v8512
  %8514 = vdwg.mxu0
  %8515 = vmatpush.bf16.msra.mxu0 %v7941
  %8516 = vmatpush.bf16.msra.mxu0 %v7937
  %8517 = vmatpush.bf16.msra.mxu0 %v7933
  %8518 = vmatpush.bf16.msra.mxu0 %v7929
  %8519 = vmatpush.bf16.msra.mxu0 %v7925
  %8520 = vmatpush.bf16.msra.mxu0 %v7921
  %8521 = vmatpush.bf16.msra.mxu0 %v7917
  %8522 = vmatpush.bf16.msra.mxu0 %v7913
  %8523 = vmatmul.bf16.gmra.mxu0 %v7316
  %v8524 = vpop.f32.mrf.mxu0
  %v8525 = vadd.f32 %v8511, %v8524
  %v8526 = vpop.f32.mrf.mxu0
  %v8527 = vadd.f32 %v8513, %v8526
  %8528 = vdwg.mxu0
  %8529 = vmatpush.bf16.msra.mxu0 %v7973
  %8530 = vmatpush.bf16.msra.mxu0 %v7969
  %8531 = vmatpush.bf16.msra.mxu0 %v7965
  %8532 = vmatpush.bf16.msra.mxu0 %v7961
  %8533 = vmatpush.bf16.msra.mxu0 %v7957
  %8534 = vmatpush.bf16.msra.mxu0 %v7953
  %8535 = vmatpush.bf16.msra.mxu0 %v7949
  %8536 = vmatpush.bf16.msra.mxu0 %v7945
  %8537 = vmatmul.bf16.gmra.mxu0 %v7317
  %v8538 = vpop.f32.mrf.mxu0
  %v8539 = vadd.f32 %v8525, %v8538
  %v8540 = vpop.f32.mrf.mxu0
  %v8541 = vadd.f32 %v8527, %v8540
  %8542 = vdwg.mxu0
  %8543 = vmatpush.bf16.msra.mxu0 %v8005
  %8544 = vmatpush.bf16.msra.mxu0 %v8001
  %8545 = vmatpush.bf16.msra.mxu0 %v7997
  %8546 = vmatpush.bf16.msra.mxu0 %v7993
  %8547 = vmatpush.bf16.msra.mxu0 %v7989
  %8548 = vmatpush.bf16.msra.mxu0 %v7985
  %8549 = vmatpush.bf16.msra.mxu0 %v7981
  %8550 = vmatpush.bf16.msra.mxu0 %v7977
  %8551 = vmatmul.bf16.gmra.mxu0 %v7318
  %v8552 = vpop.f32.mrf.mxu0
  %v8553 = vadd.f32 %v8539, %v8552
  %v8554 = vpop.f32.mrf.mxu0
  %v8555 = vadd.f32 %v8541, %v8554
  %8556 = vdwg.mxu0
  %8557 = vmatpush.bf16.msra.mxu0 %v8037
  %8558 = vmatpush.bf16.msra.mxu0 %v8033
  %8559 = vmatpush.bf16.msra.mxu0 %v8029
  %8560 = vmatpush.bf16.msra.mxu0 %v8025
  %8561 = vmatpush.bf16.msra.mxu0 %v8021
  %8562 = vmatpush.bf16.msra.mxu0 %v8017
  %8563 = vmatpush.bf16.msra.mxu0 %v8013
  %8564 = vmatpush.bf16.msra.mxu0 %v8009
  %8565 = vmatmul.bf16.gmra.mxu0 %v7319
  %v8566 = vpop.f32.mrf.mxu0
  %v8567 = vadd.f32 %v8553, %v8566
  %v8568 = vpop.f32.mrf.mxu0
  %v8569 = vadd.f32 %v8555, %v8568
  %8570 = vdwg.mxu0
  %8571 = vmatpush.bf16.msra.mxu0 0
  %8572 = vmatpush.bf16.msra.mxu0 0
  %8573 = vmatpush.bf16.msra.mxu0 %v8061
  %8574 = vmatpush.bf16.msra.mxu0 %v8057
  %8575 = vmatpush.bf16.msra.mxu0 %v8053
  %8576 = vmatpush.bf16.msra.mxu0 %v8049
  %8577 = vmatpush.bf16.msra.mxu0 %v8045
  %8578 = vmatpush.bf16.msra.mxu0 %v8041
  %8579 = vmatmul.bf16.gmra.mxu0 %v8247
  %v8580 = vpop.f32.mrf.mxu0
  %v8581 = vadd.f32 %v8567, %v8580
  %v8582 = vpop.f32.mrf.mxu0
  %v8583 = vadd.f32 %v8569, %v8582
  %8584 = vdwg.mxu0
  %v8585 = vadd.f32 %v7083, %v8329
  %v8586 = vadd.f32 %v7084, %v8413
  %v8587 = vadd.f32 %v7085, %v8497
  %v8588 = vadd.f32 %v7086, %v8581
  %v8589 = vadd.f32 %v7087, %v8331
  %v8590 = vadd.f32 %v7088, %v8415
  %v8591 = vadd.f32 %v7089, %v8499
  %v8592 = vadd.f32 %v7090, %v8583
  %v8593 = vld [vmem:[%s4] sm:$0xf]
  %v8595 = vperm.slane %v8593, 0
  %v8596 = vperm.slane %v8593, 1
  %v8597 = vperm.slane %v8593, 2
  %v8598 = vperm.slane %v8593, 3
  %v8603 = vadd.f32 %v8585, %v8595
  %v8604 = vadd.f32 %v8586, %v8596
  %v8605 = vadd.f32 %v8587, %v8597
  %v8606 = vadd.f32 %v8588, %v8598
  %v8607 = vadd.f32 %v8589, %v8595
  %v8608 = vadd.f32 %v8590, %v8596
  %v8609 = vadd.f32 %v8591, %v8597
  %v8610 = vadd.f32 %v8592, %v8598
  %v8611 = vpack.c.bf16 %v8607, %v8603
  %v8612 = vpack.c.bf16 %v8608, %v8604
  %v8613 = vpack.c.bf16 %v8609, %v8605
  %v8614 = vpack.c.bf16 %v8610, %v8606
  %v8615 = vld [vmem:[%s5] sm:$0xf]
  %vm8616 = vcmask 130048
  %v8618 = vsel %vm8616, %v8615, 0
  %8620 = vmatpush.bf16.msra.mxu0 0
  %8621 = vmatpush.bf16.msra.mxu0 0
  %8622 = vmatpush.bf16.msra.mxu0 0
  %8623 = vmatpush.bf16.msra.mxu0 0
  %8624 = vmatpush.bf16.msra.mxu0 0
  %8625 = vmatpush.bf16.msra.mxu0 0
  %8626 = vmatpush.bf16.msra.mxu0 0
  %8627 = vmatpush.bf16.msra.mxu0 %v8611
  %8628 = vmatmul.bf16.gmra.mxu0 %v8618
  %v8629 = vpop.f32.mrf.mxu0
  %v8630 = vadd.f32 0.0, %v8629
  %v8631 = vpop.f32.mrf.mxu0
  %8632 = vdwg.mxu0
  %8633 = vmatpush.bf16.msra.mxu0 0
  %8634 = vmatpush.bf16.msra.mxu0 0
  %8635 = vmatpush.bf16.msra.mxu0 0
  %8636 = vmatpush.bf16.msra.mxu0 0
  %8637 = vmatpush.bf16.msra.mxu0 0
  %8638 = vmatpush.bf16.msra.mxu0 0
  %8639 = vmatpush.bf16.msra.mxu0 0
  %8640 = vmatpush.bf16.msra.mxu0 %v8612
  %8641 = vmatmul.bf16.gmra.mxu0 %v8618
  %v8642 = vpop.f32.mrf.mxu0
  %v8643 = vadd.f32 0.0, %v8642
  %v8644 = vpop.f32.mrf.mxu0
  %8645 = vdwg.mxu0
  %8646 = vmatpush.bf16.msra.mxu0 0
  %8647 = vmatpush.bf16.msra.mxu0 0
  %8648 = vmatpush.bf16.msra.mxu0 0
  %8649 = vmatpush.bf16.msra.mxu0 0
  %8650 = vmatpush.bf16.msra.mxu0 0
  %8651 = vmatpush.bf16.msra.mxu0 0
  %8652 = vmatpush.bf16.msra.mxu0 0
  %8653 = vmatpush.bf16.msra.mxu0 %v8613
  %8654 = vmatmul.bf16.gmra.mxu0 %v8618
  %v8655 = vpop.f32.mrf.mxu0
  %v8656 = vadd.f32 0.0, %v8655
  %v8657 = vpop.f32.mrf.mxu0
  %8658 = vdwg.mxu0
  %8659 = vmatpush.bf16.msra.mxu0 0
  %8660 = vmatpush.bf16.msra.mxu0 0
  %8661 = vmatpush.bf16.msra.mxu0 0
  %8662 = vmatpush.bf16.msra.mxu0 0
  %8663 = vmatpush.bf16.msra.mxu0 0
  %8664 = vmatpush.bf16.msra.mxu0 0
  %8665 = vmatpush.bf16.msra.mxu0 0
  %8666 = vmatpush.bf16.msra.mxu0 %v8614
  %8667 = vmatmul.bf16.gmra.mxu0 %v8618
  %v8668 = vpop.f32.mrf.mxu0
  %v8669 = vadd.f32 0.0, %v8668
  %v8670 = vpop.f32.mrf.mxu0
  %8671 = vdwg.mxu0
  %v8672 = vld [vmem:[%s6] sm:$0xf]
  %v8674 = vsel %vm8616, %v8672, 0
  %8676 = vmatpush.bf16.msra.mxu0 0
  %8677 = vmatpush.bf16.msra.mxu0 0
  %8678 = vmatpush.bf16.msra.mxu0 0
  %8679 = vmatpush.bf16.msra.mxu0 0
  %8680 = vmatpush.bf16.msra.mxu0 0
  %8681 = vmatpush.bf16.msra.mxu0 0
  %8682 = vmatpush.bf16.msra.mxu0 0
  %8683 = vmatpush.bf16.msra.mxu0 %v8611
  %8684 = vmatmul.bf16.gmra.mxu0 %v8674
  %v8685 = vpop.f32.mrf.mxu0
  %v8686 = vadd.f32 0.0, %v8685
  %v8687 = vpop.f32.mrf.mxu0
  %8688 = vdwg.mxu0
  %8689 = vmatpush.bf16.msra.mxu0 0
  %8690 = vmatpush.bf16.msra.mxu0 0
  %8691 = vmatpush.bf16.msra.mxu0 0
  %8692 = vmatpush.bf16.msra.mxu0 0
  %8693 = vmatpush.bf16.msra.mxu0 0
  %8694 = vmatpush.bf16.msra.mxu0 0
  %8695 = vmatpush.bf16.msra.mxu0 0
  %8696 = vmatpush.bf16.msra.mxu0 %v8612
  %8697 = vmatmul.bf16.gmra.mxu0 %v8674
  %v8698 = vpop.f32.mrf.mxu0
  %v8699 = vadd.f32 0.0, %v8698
  %v8700 = vpop.f32.mrf.mxu0
  %8701 = vdwg.mxu0
  %8702 = vmatpush.bf16.msra.mxu0 0
  %8703 = vmatpush.bf16.msra.mxu0 0
  %8704 = vmatpush.bf16.msra.mxu0 0
  %8705 = vmatpush.bf16.msra.mxu0 0
  %8706 = vmatpush.bf16.msra.mxu0 0
  %8707 = vmatpush.bf16.msra.mxu0 0
  %8708 = vmatpush.bf16.msra.mxu0 0
  %8709 = vmatpush.bf16.msra.mxu0 %v8613
  %8710 = vmatmul.bf16.gmra.mxu0 %v8674
  %v8711 = vpop.f32.mrf.mxu0
  %v8712 = vadd.f32 0.0, %v8711
  %v8713 = vpop.f32.mrf.mxu0
  %8714 = vdwg.mxu0
  %8715 = vmatpush.bf16.msra.mxu0 0
  %8716 = vmatpush.bf16.msra.mxu0 0
  %8717 = vmatpush.bf16.msra.mxu0 0
  %8718 = vmatpush.bf16.msra.mxu0 0
  %8719 = vmatpush.bf16.msra.mxu0 0
  %8720 = vmatpush.bf16.msra.mxu0 0
  %8721 = vmatpush.bf16.msra.mxu0 0
  %8722 = vmatpush.bf16.msra.mxu0 %v8614
  %8723 = vmatmul.bf16.gmra.mxu0 %v8674
  %v8724 = vpop.f32.mrf.mxu0
  %v8725 = vadd.f32 0.0, %v8724
  %v8726 = vpop.f32.mrf.mxu0
  %8727 = vdwg.mxu0
  %v8728 = vmax.f32 %v8630, %v8686
  %v8729 = vmax.f32 %v8643, %v8699
  %v8730 = vmax.f32 %v8656, %v8712
  %v8731 = vmax.f32 %v8669, %v8725
  %8736 = vrot.lane.b32.xlu0 %v8728, 64
  %v8737 = vpop.permute.xlu0 %8736
  %8738 = vrot.lane.b32.xlu0 %v8729, 64
  %v8739 = vpop.permute.xlu0 %8738
  %8740 = vrot.lane.b32.xlu0 %v8730, 64
  %v8741 = vpop.permute.xlu0 %8740
  %8742 = vrot.lane.b32.xlu0 %v8731, 64
  %v8743 = vpop.permute.xlu0 %8742
  %vm8744 = vcmask 523264
  %v8745 = vsel %vm8744, %v8737, %v8739
  %v8746 = vsel %vm8744, %v8739, %v8741
  %v8747 = vsel %vm8744, %v8741, %v8743
  %v8752 = vmax.f32 %v8728, %v8745
  %v8753 = vmax.f32 %v8729, %v8746
  %v8754 = vmax.f32 %v8730, %v8747
  %v8755 = vmax.f32 %v8731, %v8743
  %v8756 = vmax.f32 %v8752, 0.0
  %v8757 = vmax.f32 %v8753, 0.0
  %v8758 = vmax.f32 %v8754, 0.0
  %v8759 = vmax.f32 %v8755, 0.0
  %8761 = vrot.lane.b32.xlu0 %v8757, 64
  %v8762 = vpop.permute.xlu0 %8761
  %8765 = vrot.lane.b32.xlu0 %v8759, 64
  %v8766 = vpop.permute.xlu0 %8765
  %v8768 = vsel %vm8744, %v8756, %v8762
  %v8769 = vsel %vm8744, %v8758, %v8766
  %v8772 = vrot.slane %v8769, 4
  %v8773 = vsel %vm719, %v8768, %v8772
  %v8774 = vsel %vm719, %v8772, %v8768
  %v8775 = vrot.slane %v8774, 4
  %8776 = vst [vmem:[#allocation1] ss:$2 sm:$0xff] %v8773
  %v8777 = vld.sshfl [vmem:[#allocation1] sm:$0xff pattern:$0x75316420]
  %v8778 = vld.sshfl [vmem:[#allocation1 + $0x8] sm:$0xff pattern:$0x75316420]
  %s8779 = scalar_lea.vmem [#allocation1], 16
  %8780 = vst [vmem:[%s8779] ss:$2 sm:$0xff] %v8775
  %v8781 = vld.sshfl [vmem:[#allocation1 + $0x10] sm:$0xff pattern:$0x75316420]
  %v8782 = vld.sshfl [vmem:[#allocation1 + $0x18] sm:$0xff pattern:$0x75316420]
  %v8787 = vpack.c.bf16 %v8778, %v8777
  %v8788 = vpack.c.bf16 %v8782, %v8781
  %v8791 = vrot.slane %v8787, 2
  %v8792 = vrot.slane %v8788, 2
  %vm8793 = vcmask 1041408
  %v8796 = vsel %vm8793, %v8787, %v8791
  %v8799 = vsel %vm8793, %v8788, %v8792
  %8802 = vst [vmem:[%s7] sm:$0xf] %v8796
  %8803 = vst [vmem:[%s7 + $0x4] sm:$0xf] %v8799
  // Predicated region
  $region30: #{net_forward.2} parent=0 // pred_check
    _
  $region31: #{net_forward.2} parent=0 // pred_check_branch
    %8805 = sbr.rel (0) target = $region33
  $region32: #{net_forward.2} parent=0 // pred_region
    _
  $region33: #{net_forward.2} parent=0 // pred_fallthru
    _
  // Predicated region
  $region34: #{net_forward.2} parent=0 // pred_check
    _
  $region35: #{net_forward.2} parent=0 // pred_check_branch
    %8807 = sbr.rel (0) target = $region37
  $region36: #{net_forward.2} parent=0 // pred_region
    _
  $region37: #{net_forward.2} parent=0 // pred_fallthru
    _

</llo_original>
